<compile_context>
chip_gen: v6e
topology: v6e:2x2x1
jax: 0.10.0
libtpu: 0.0.40
codegen_flags: <defaults>
</compile_context>

<pallas_src>
import functools
import math

import jax
import jax.numpy as jnp
from jax.experimental import pallas as pl
from jax.experimental.pallas import tpu as pltpu


# ------------------------------------------------------------------ kernels

def _gemm_affine_kernel(w_ref, p_ref, ss_ref, o_ref, *, act):
    # (Cout, K) @ (K, Mtile) on the MXU, f32 accumulate.
    y = jnp.dot(w_ref[...], p_ref[...], preferred_element_type=jnp.float32)
    y = y * ss_ref[:, 0:1] + ss_ref[:, 1:2]          # folded conv-bias + BN
    if act:
        y = jnp.where(y > 0, y, 0.2 * y)             # LeakyReLU(0.2)
    o_ref[...] = y


def _gemm_affine_add_kernel(w_ref, p_ref, ss_ref, r_ref, o_ref, *, act):
    y = jnp.dot(w_ref[...], p_ref[...], preferred_element_type=jnp.float32)
    y = y * ss_ref[:, 0:1] + ss_ref[:, 1:2]
    if act:
        y = jnp.where(y > 0, y, 0.2 * y)
    o_ref[...] = y + r_ref[...]                      # fused residual add


# ------------------------------------------------------------------ conv wrapper

def _round_up(x, m):
    return (x + m - 1) // m * m


def conv3d_bn_act(x, w, b, bn=None, *, stride=(1, 1, 1), dilation=(1, 1, 1),
                  padding=(1, 1, 1), act=True, residual=None,
                  m_tile=1024, eps=1e-5):
    """Fused Conv3d (+ eval-mode BN + LeakyReLU(0.2) + optional residual add).

    x: (N, Cin, D, H, W) f32 (NCDHW, PyTorch layout)
    w: (Cout, Cin, kd, kh, kw) f32, b: (Cout,) f32
    bn: optional (gamma, beta, running_mean, running_var), each (Cout,)
    residual: optional (N, Cout, Do, Ho, Wo), added AFTER the activation.
    """
    N, Cin, D, H, W = x.shape
    Cout, Cin_w, kd, kh, kw = w.shape
    assert Cin == Cin_w
    sd, sh, sw = stride
    dd, dh, dw = dilation
    pd, ph, pw = padding
    Do = (D + 2 * pd - dd * (kd - 1) - 1) // sd + 1
    Ho = (H + 2 * ph - dh * (kh - 1) - 1) // sh + 1
    Wo = (W + 2 * pw - dw * (kw - 1) - 1) // sw + 1

    # ---- im2col: XLA-side data movement only (all FLOPs run in the kernel)
    xp = jnp.pad(x, ((0, 0), (0, 0), (pd, pd), (ph, ph), (pw, pw)))
    taps = []
    for a in range(kd):
        for bb in range(kh):
            for c in range(kw):
                taps.append(jax.lax.slice(
                    xp,
                    (0, 0, a * dd, bb * dh, c * dw),
                    (N, Cin,
                     a * dd + sd * (Do - 1) + 1,
                     bb * dh + sh * (Ho - 1) + 1,
                     c * dw + sw * (Wo - 1) + 1),
                    (1, 1, sd, sh, sw)))
    kt = kd * kh * kw
    kdim = Cin * kt
    m = N * Do * Ho * Wo
    patches = jnp.stack(taps, axis=0)                      # (kt,N,Cin,Do,Ho,Wo)
    patches = jnp.transpose(patches, (2, 0, 1, 3, 4, 5))   # (Cin,kt,N,Do,Ho,Wo)
    patches = patches.reshape(kdim, m)                     # lane-dense: M on lanes

    a_mat = w.reshape(Cout, kdim)

    # ---- fold conv bias + eval-mode BN into one (Cout, 2) scale/shift slab
    if bn is not None:
        gamma, beta, mean, var = bn
        scale = gamma / jnp.sqrt(var + eps)
        shift = beta + (b - mean) * scale
    else:
        scale = jnp.ones((Cout,), jnp.float32)
        shift = b
    ss = jnp.stack([scale, shift], axis=1).astype(jnp.float32)   # (Cout, 2)

    # ---- pad to TPU-friendly tiles (Cout -> x8 sublanes, M -> x128 lanes)
    cout_pad = _round_up(Cout, 8)
    kdim_pad = _round_up(kdim, 8)
    m_tile = min(m_tile, _round_up(m, 128))
    m_pad = _round_up(m, m_tile)

    a_mat = jnp.pad(a_mat, ((0, cout_pad - Cout), (0, kdim_pad - kdim)))
    patches = jnp.pad(patches, ((0, kdim_pad - kdim), (0, m_pad - m)))
    ss = jnp.pad(ss, ((0, cout_pad - Cout), (0, 0)))

    args = [a_mat, patches, ss]
    in_specs = [
        pl.BlockSpec((cout_pad, kdim_pad), lambda i: (0, 0)),   # resident weights
        pl.BlockSpec((kdim_pad, m_tile), lambda i: (0, i)),     # streamed patches
        pl.BlockSpec((cout_pad, 2), lambda i: (0, 0)),          # resident scale/shift
    ]
    if residual is not None:
        r2 = jnp.transpose(residual, (1, 0, 2, 3, 4)).reshape(Cout, m)
        r2 = jnp.pad(r2, ((0, cout_pad - Cout), (0, m_pad - m)))
        args.append(r2)
        in_specs.append(pl.BlockSpec((cout_pad, m_tile), lambda i: (0, i)))
        kernel = functools.partial(_gemm_affine_add_kernel, act=act)
        extra_bytes = cout_pad * m_pad * 4
    else:
        kernel = functools.partial(_gemm_affine_kernel, act=act)
        extra_bytes = 0

    cost = pl.CostEstimate(
        flops=int(2 * cout_pad * kdim_pad * m_pad),
        transcendentals=0,
        bytes_accessed=int(4 * (cout_pad * kdim_pad + kdim_pad * m_pad
                                + cout_pad * m_pad + 2 * cout_pad) + extra_bytes))

    out2d = pl.pallas_call(
        kernel,
        out_shape=jax.ShapeDtypeStruct((cout_pad, m_pad), jnp.float32),
        grid=(m_pad // m_tile,),
        in_specs=in_specs,
        out_specs=pl.BlockSpec((cout_pad, m_tile), lambda i: (0, i)),
        compiler_params=pltpu.CompilerParams(dimension_semantics=("parallel",)),
        cost_estimate=cost,
    )(*args)

    out = out2d[:Cout, :m].reshape(Cout, N, Do, Ho, Wo)
    return jnp.transpose(out, (1, 0, 2, 3, 4))


# ------------------------------------------------------------------ model (Pallas)

def res_block_down(x, p, stride):
    act1 = conv3d_bn_act(x, *p["conv1"], bn=p["bn1"], stride=stride, act=True)
    # shortcut branch first so it fuses as the residual add of the main branch
    act3 = conv3d_bn_act(x, *p["conv3"], bn=p["bn3"], stride=stride, act=True)
    return conv3d_bn_act(act1, *p["conv2"], bn=p["bn2"], act=True, residual=act3)


def encoder_forward(x, params):
    conv1 = conv3d_bn_act(x, *params["conv1"], bn=params["bn1"], act=True)
    r = res_block_down(conv1, params["res1"], (2, 2, 2))
    r = res_block_down(r, params["res2"], (2, 2, 2))
    r = res_block_down(r, params["res3"], (2, 2, 2))
    r = res_block_down(r, params["res4"], (2, 2, 1))
    conv_latent = conv3d_bn_act(r, *params["conv_latent"], bn=None, act=False,
                                padding=(0, 0, 0))
    conv_latent_std = conv3d_bn_act(r, *params["conv_latent_std"], bn=None,
                                    act=False, padding=(0, 0, 0))
    c = conv3d_bn_act(conv1, *params["conv2"], bn=params["bn2"], act=True,
                      dilation=(2, 2, 2), padding=(2, 2, 2))
    c = conv3d_bn_act(c, *params["conv3"], bn=params["bn3"], act=True,
                      dilation=(2, 2, 2), padding=(2, 2, 2))
    c = conv3d_bn_act(c, *params["conv4"], bn=params["bn4"], act=True,
                      dilation=(2, 2, 2), padding=(2, 2, 2))
    conv5 = conv3d_bn_act(c, *params["conv5"], bn=None, act=False,
                          dilation=(2, 2, 2), padding=(2, 2, 2))
    return conv_latent, conv_latent_std, conv5


# ------------------------------------------------------------------ params init

def _init_conv(key, cout, cin, ksize):
    kd, kh, kw = ksize
    fan_in = cin * kd * kh * kw
    bound = 1.0 / math.sqrt(fan_in)
    k_w, k_b = jax.random.split(key)
    w = jax.random.uniform(k_w, (cout, cin, kd, kh, kw), minval=-bound,
                           maxval=bound, dtype=jnp.float32)
    b = jax.random.uniform(k_b, (cout,), minval=-bound, maxval=bound,
                           dtype=jnp.float32)
    return w, b


def _init_bn(key, c):
    k1, k2, k3, k4 = jax.random.split(key, 4)
    gamma = 1.0 + 0.05 * jax.random.normal(k1, (c,), jnp.float32)
    beta = 0.05 * jax.random.normal(k2, (c,), jnp.float32)
    mean = 0.05 * jax.random.normal(k3, (c,), jnp.float32)
    var = 1.0 + 0.1 * jax.random.uniform(k4, (c,), dtype=jnp.float32)
    return gamma, beta, mean, var


def _init_res_block(key, cin, cout):
    ks = jax.random.split(key, 6)
    return {
        "conv1": _init_conv(ks[0], cin, cin, (3, 3, 3)),
        "bn1": _init_bn(ks[1], cin),
        "conv2": _init_conv(ks[2], cout, cin, (3, 3, 3)),
        "bn2": _init_bn(ks[3], cout),
        "conv3": _init_conv(ks[4], cout, cin, (3, 3, 3)),
        "bn3": _init_bn(ks[5], cout),
    }


def init_encoder_params(key, in_channels=1, gf_dim=4):
    ks = jax.random.split(key, 15)
    g = gf_dim
    return {
        "conv1": _init_conv(ks[0], g, in_channels, (3, 3, 3)),
        "bn1": _init_bn(ks[1], g),
        "res1": _init_res_block(ks[2], g, g),
        "res2": _init_res_block(ks[3], g, g * 2),
        "res3": _init_res_block(ks[4], g * 2, g * 4),
        "res4": _init_res_block(ks[5], g * 4, g * 8),
        "conv_latent": _init_conv(ks[6], g * 32, g * 8, (1, 1, 1)),
        "conv_latent_std": _init_conv(ks[7], g * 32, g * 8, (1, 1, 1)),
        "conv2": _init_conv(ks[8], g, g, (3, 3, 3)),
        "bn2": _init_bn(ks[9], g),
        "conv3": _init_conv(ks[10], g * 2, g, (3, 3, 3)),
        "bn3": _init_bn(ks[11], g * 2),
        "conv4": _init_conv(ks[12], g, g * 2, (3, 3, 3)),
        "bn4": _init_bn(ks[13], g),
        "conv5": _init_conv(ks[14], 1, g, (3, 3, 3)),
    }


# ------------------------------------------------------------------ pure-JAX reference

def _conv3d_ref(x, w, b, stride=(1, 1, 1), dilation=(1, 1, 1), padding=(1, 1, 1)):
    dn = jax.lax.conv_dimension_numbers(x.shape, w.shape, ("NCDHW", "OIDHW", "NCDHW"))
    y = jax.lax.conv_general_dilated(
        x, w, window_strides=stride, padding=[(p, p) for p in padding],
        rhs_dilation=dilation, dimension_numbers=dn,
        precision=jax.lax.Precision.HIGHEST)
    return y + b.reshape(1, -1, 1, 1, 1)


def _bn_ref(x, bn, eps=1e-5):
    gamma, beta, mean, var = bn
    rs = lambda v: v.reshape(1, -1, 1, 1, 1)
    return rs(gamma) * (x - rs(mean)) / jnp.sqrt(rs(var) + eps) + rs(beta)


def _leaky(x):
    return jnp.where(x > 0, x, 0.2 * x)


def _res_block_ref(x, p, stride):
    a1 = _leaky(_bn_ref(_conv3d_ref(x, *p["conv1"], stride=stride), p["bn1"]))
    a2 = _leaky(_bn_ref(_conv3d_ref(a1, *p["conv2"]), p["bn2"]))
    a3 = _leaky(_bn_ref(_conv3d_ref(x, *p["conv3"], stride=stride), p["bn3"]))
    return a2 + a3


def encoder_reference(x, params):
    conv1 = _leaky(_bn_ref(_conv3d_ref(x, *params["conv1"]), params["bn1"]))
    r = _res_block_ref(conv1, params["res1"], (2, 2, 2))
    r = _res_block_ref(r, params["res2"], (2, 2, 2))
    r = _res_block_ref(r, params["res3"], (2, 2, 2))
    r = _res_block_ref(r, params["res4"], (2, 2, 1))
    lat = _conv3d_ref(r, *params["conv_latent"], padding=(0, 0, 0))
    lat_std = _conv3d_ref(r, *params["conv_latent_std"], padding=(0, 0, 0))
    c = _leaky(_bn_ref(_conv3d_ref(conv1, *params["conv2"], dilation=(2, 2, 2),
                                   padding=(2, 2, 2)), params["bn2"]))
    c = _leaky(_bn_ref(_conv3d_ref(c, *params["conv3"], dilation=(2, 2, 2),
                                   padding=(2, 2, 2)), params["bn3"]))
    c = _leaky(_bn_ref(_conv3d_ref(c, *params["conv4"], dilation=(2, 2, 2),
                                   padding=(2, 2, 2)), params["bn4"]))
    c5 = _conv3d_ref(c, *params["conv5"], dilation=(2, 2, 2), padding=(2, 2, 2))
    return lat, lat_std, c5


# ------------------------------------------------------------------ main

if __name__ == "__main__":
    key = jax.random.PRNGKey(0)
    k_params, k_x = jax.random.split(key)

    N, C_IN, D, H, W = 2, 1, 16, 16, 16
    GF_DIM = 4

    x = jax.random.normal(k_x, (N, C_IN, D, H, W), dtype=jnp.float32)
    params = init_encoder_params(k_params, in_channels=C_IN, gf_dim=GF_DIM)

    fwd = jax.jit(encoder_forward)
    lat, lat_std, c5 = jax.block_until_ready(fwd(x, params))

    assert lat.shape == (N, GF_DIM * 32, 1, 1, 2), lat.shape
    assert lat_std.shape == (N, GF_DIM * 32, 1, 1, 2), lat_std.shape
    assert c5.shape == (N, 1, D, H, W), c5.shape

    ref_lat, ref_lat_std, ref_c5 = encoder_reference(x, params)
    for got, want, name in ((lat, ref_lat, "conv_latent"),
                            (lat_std, ref_lat_std, "conv_latent_std"),
                            (c5, ref_c5, "conv5")):
        assert jnp.allclose(got, want, atol=2e-3, rtol=2e-3), f"{name} mismatch"

    print("KERNEL_OK")
</pallas_src>

<mosaic_0001>
module attributes {stable_mosaic.version = 11 : i64} {
  func.func @_gemm_affine_kernel(%arg0: i32, %arg1: memref<8x32xf32, #tpu.memory_space<vmem>>, %arg2: memref<32x1024xf32, #tpu.memory_space<vmem>>, %arg3: memref<8x2xf32, #tpu.memory_space<vmem>>, %arg4: memref<8x1024xf32, #tpu.memory_space<vmem>>) attributes {dimension_semantics = [#tpu.dimension_semantics<parallel>], iteration_bounds = array<i64: 8>, scalar_prefetch = 0 : i64, scratch_operands = 0 : i64, tpu.core_type = #tpu.core_type<tc>, window_params = [{pipeline_mode = #tpu.pipeline_mode<synchronous>, transform_indices = @transform_0, window_bounds = array<i64: 8, 32>}, {transform_indices = @transform_1, window_bounds = array<i64: 32, 1024>}, {pipeline_mode = #tpu.pipeline_mode<synchronous>, transform_indices = @transform_2, window_bounds = array<i64: 8, 2>}, {transform_indices = @transform_3, window_bounds = array<i64: 8, 1024>}]} {
    %c0 = arith.constant 0 : index
    %c0_0 = arith.constant 0 : index
    %0 = vector.load %arg1[%c0, %c0_0] : memref<8x32xf32, #tpu.memory_space<vmem>>, vector<8x32xf32>
    %c0_1 = arith.constant 0 : index
    %c0_2 = arith.constant 0 : index
    %1 = vector.load %arg2[%c0_1, %c0_2] : memref<32x1024xf32, #tpu.memory_space<vmem>>, vector<32x1024xf32>
    %cst = arith.constant dense<0.000000e+00> : vector<8x1024xf32>
    %2 = tpu.matmul %0, %1, %cst {dimension_numbers = #tpu.dot_dimension_numbers<[1], [0], [0], [1], [0, 0, 1, 1], [], []>} : vector<8x32xf32>, vector<32x1024xf32>, vector<8x1024xf32> -> vector<8x1024xf32>
    %c0_3 = arith.constant 0 : index
    %c0_4 = arith.constant 0 : index
    %3 = vector.load %arg3[%c0_3, %c0_4] : memref<8x2xf32, #tpu.memory_space<vmem>>, vector<8x1xf32>
    %4 = vector.broadcast %3 : vector<8x1xf32> to vector<8x1024xf32>
    %5 = arith.mulf %2, %4 : vector<8x1024xf32>
    %c0_5 = arith.constant 0 : index
    %c1 = arith.constant 1 : index
    %6 = vector.load %arg3[%c0_5, %c1] : memref<8x2xf32, #tpu.memory_space<vmem>>, vector<8x1xf32>
    %7 = vector.broadcast %6 : vector<8x1xf32> to vector<8x1024xf32>
    %8 = arith.addf %5, %7 : vector<8x1024xf32>
    %cst_6 = arith.constant 0.000000e+00 : f32
    %9 = vector.broadcast %cst_6 : f32 to vector<8x1024xf32>
    %10 = arith.cmpf ogt, %8, %9 : vector<8x1024xf32>
    %cst_7 = arith.constant 2.000000e-01 : f32
    %11 = vector.broadcast %cst_7 : f32 to vector<8x1024xf32>
    %12 = arith.mulf %11, %8 : vector<8x1024xf32>
    %13 = arith.select %10, %8, %12 : vector<8x1024xi1>, vector<8x1024xf32>
    %c0_8 = arith.constant 0 : index
    %c0_9 = arith.constant 0 : index
    %14 = vector.load %arg4[%c0_8, %c0_9] : memref<8x1024xf32, #tpu.memory_space<vmem>>, vector<8x1024xf32>
    tpu.vector_store %arg4[%c0_8, %c0_9], %13 {strides = array<i32>} : memref<8x1024xf32, #tpu.memory_space<vmem>>, vector<8x1024xf32>,
    return
  }
  func.func @transform_0(%arg0: i32) -> (i32, i32) {
    %c0_i32 = arith.constant 0 : i32
    %c0_i32_0 = arith.constant 0 : i32
    %c0_i32_1 = arith.constant 0 : i32
    return %c0_i32, %c0_i32_0 : i32, i32
  }
  func.func @transform_1(%arg0: i32) -> (i32, i32) {
    %c0_i32 = arith.constant 0 : i32
    %c0_i32_0 = arith.constant 0 : i32
    return %c0_i32, %arg0 : i32, i32
  }
  func.func @transform_2(%arg0: i32) -> (i32, i32) {
    %c0_i32 = arith.constant 0 : i32
    %c0_i32_0 = arith.constant 0 : i32
    %c0_i32_1 = arith.constant 0 : i32
    return %c0_i32, %c0_i32_0 : i32, i32
  }
  func.func @transform_3(%arg0: i32) -> (i32, i32) {
    %c0_i32 = arith.constant 0 : i32
    %c0_i32_0 = arith.constant 0 : i32
    return %c0_i32, %arg0 : i32, i32
  }
}

module attributes {stable_mosaic.version = 11 : i64} {
  func.func @_gemm_affine_kernel(%arg0: i32, %arg1: memref<8x112xf32, #tpu.memory_space<vmem>>, %arg2: memref<112x1024xf32, #tpu.memory_space<vmem>>, %arg3: memref<8x2xf32, #tpu.memory_space<vmem>>, %arg4: memref<8x1024xf32, #tpu.memory_space<vmem>>) attributes {dimension_semantics = [#tpu.dimension_semantics<parallel>], iteration_bounds = array<i64: 1>, scalar_prefetch = 0 : i64, scratch_operands = 0 : i64, tpu.core_type = #tpu.core_type<tc>, window_params = [{pipeline_mode = #tpu.pipeline_mode<synchronous>, transform_indices = @transform_0, window_bounds = array<i64: 8, 112>}, {transform_indices = @transform_1, window_bounds = array<i64: 112, 1024>}, {pipeline_mode = #tpu.pipeline_mode<synchronous>, transform_indices = @transform_2, window_bounds = array<i64: 8, 2>}, {transform_indices = @transform_3, window_bounds = array<i64: 8, 1024>}]} {
    %c0 = arith.constant 0 : index
    %c0_0 = arith.constant 0 : index
    %0 = vector.load %arg1[%c0, %c0_0] : memref<8x112xf32, #tpu.memory_space<vmem>>, vector<8x112xf32>
    %c0_1 = arith.constant 0 : index
    %c0_2 = arith.constant 0 : index
    %1 = vector.load %arg2[%c0_1, %c0_2] : memref<112x1024xf32, #tpu.memory_space<vmem>>, vector<112x1024xf32>
    %cst = arith.constant dense<0.000000e+00> : vector<8x1024xf32>
    %2 = tpu.matmul %0, %1, %cst {dimension_numbers = #tpu.dot_dimension_numbers<[1], [0], [0], [1], [0, 0, 1, 1], [], []>} : vector<8x112xf32>, vector<112x1024xf32>, vector<8x1024xf32> -> vector<8x1024xf32>
    %c0_3 = arith.constant 0 : index
    %c0_4 = arith.constant 0 : index
    %3 = vector.load %arg3[%c0_3, %c0_4] : memref<8x2xf32, #tpu.memory_space<vmem>>, vector<8x1xf32>
    %4 = vector.broadcast %3 : vector<8x1xf32> to vector<8x1024xf32>
    %5 = arith.mulf %2, %4 : vector<8x1024xf32>
    %c0_5 = arith.constant 0 : index
    %c1 = arith.constant 1 : index
    %6 = vector.load %arg3[%c0_5, %c1] : memref<8x2xf32, #tpu.memory_space<vmem>>, vector<8x1xf32>
    %7 = vector.broadcast %6 : vector<8x1xf32> to vector<8x1024xf32>
    %8 = arith.addf %5, %7 : vector<8x1024xf32>
    %cst_6 = arith.constant 0.000000e+00 : f32
    %9 = vector.broadcast %cst_6 : f32 to vector<8x1024xf32>
    %10 = arith.cmpf ogt, %8, %9 : vector<8x1024xf32>
    %cst_7 = arith.constant 2.000000e-01 : f32
    %11 = vector.broadcast %cst_7 : f32 to vector<8x1024xf32>
    %12 = arith.mulf %11, %8 : vector<8x1024xf32>
    %13 = arith.select %10, %8, %12 : vector<8x1024xi1>, vector<8x1024xf32>
    %c0_8 = arith.constant 0 : index
    %c0_9 = arith.constant 0 : index
    %14 = vector.load %arg4[%c0_8, %c0_9] : memref<8x1024xf32, #tpu.memory_space<vmem>>, vector<8x1024xf32>
    tpu.vector_store %arg4[%c0_8, %c0_9], %13 {strides = array<i32>} : memref<8x1024xf32, #tpu.memory_space<vmem>>, vector<8x1024xf32>,
    return
  }
  func.func @transform_0(%arg0: i32) -> (i32, i32) {
    %c0_i32 = arith.constant 0 : i32
    %c0_i32_0 = arith.constant 0 : i32
    %c0_i32_1 = arith.constant 0 : i32
    return %c0_i32, %c0_i32_0 : i32, i32
  }
  func.func @transform_1(%arg0: i32) -> (i32, i32) {
    %c0_i32 = arith.constant 0 : i32
    %c0_i32_0 = arith.constant 0 : i32
    return %c0_i32, %arg0 : i32, i32
  }
  func.func @transform_2(%arg0: i32) -> (i32, i32) {
    %c0_i32 = arith.constant 0 : i32
    %c0_i32_0 = arith.constant 0 : i32
    %c0_i32_1 = arith.constant 0 : i32
    return %c0_i32, %c0_i32_0 : i32, i32
  }
  func.func @transform_3(%arg0: i32) -> (i32, i32) {
    %c0_i32 = arith.constant 0 : i32
    %c0_i32_0 = arith.constant 0 : i32
    return %c0_i32, %arg0 : i32, i32
  }
}

module attributes {stable_mosaic.version = 11 : i64} {
  func.func @_gemm_affine_add_kernel(%arg0: i32, %arg1: memref<8x112xf32, #tpu.memory_space<vmem>>, %arg2: memref<112x1024xf32, #tpu.memory_space<vmem>>, %arg3: memref<8x2xf32, #tpu.memory_space<vmem>>, %arg4: memref<8x1024xf32, #tpu.memory_space<vmem>>, %arg5: memref<8x1024xf32, #tpu.memory_space<vmem>>) attributes {dimension_semantics = [#tpu.dimension_semantics<parallel>], iteration_bounds = array<i64: 1>, scalar_prefetch = 0 : i64, scratch_operands = 0 : i64, tpu.core_type = #tpu.core_type<tc>, window_params = [{pipeline_mode = #tpu.pipeline_mode<synchronous>, transform_indices = @transform_0, window_bounds = array<i64: 8, 112>}, {transform_indices = @transform_1, window_bounds = array<i64: 112, 1024>}, {pipeline_mode = #tpu.pipeline_mode<synchronous>, transform_indices = @transform_2, window_bounds = array<i64: 8, 2>}, {transform_indices = @transform_3, window_bounds = array<i64: 8, 1024>}, {transform_indices = @transform_4, window_bounds = array<i64: 8, 1024>}]} {
    %c0 = arith.constant 0 : index
    %c0_0 = arith.constant 0 : index
    %0 = vector.load %arg1[%c0, %c0_0] : memref<8x112xf32, #tpu.memory_space<vmem>>, vector<8x112xf32>
    %c0_1 = arith.constant 0 : index
    %c0_2 = arith.constant 0 : index
    %1 = vector.load %arg2[%c0_1, %c0_2] : memref<112x1024xf32, #tpu.memory_space<vmem>>, vector<112x1024xf32>
    %cst = arith.constant dense<0.000000e+00> : vector<8x1024xf32>
    %2 = tpu.matmul %0, %1, %cst {dimension_numbers = #tpu.dot_dimension_numbers<[1], [0], [0], [1], [0, 0, 1, 1], [], []>} : vector<8x112xf32>, vector<112x1024xf32>, vector<8x1024xf32> -> vector<8x1024xf32>
    %c0_3 = arith.constant 0 : index
    %c0_4 = arith.constant 0 : index
    %3 = vector.load %arg3[%c0_3, %c0_4] : memref<8x2xf32, #tpu.memory_space<vmem>>, vector<8x1xf32>
    %4 = vector.broadcast %3 : vector<8x1xf32> to vector<8x1024xf32>
    %5 = arith.mulf %2, %4 : vector<8x1024xf32>
    %c0_5 = arith.constant 0 : index
    %c1 = arith.constant 1 : index
    %6 = vector.load %arg3[%c0_5, %c1] : memref<8x2xf32, #tpu.memory_space<vmem>>, vector<8x1xf32>
    %7 = vector.broadcast %6 : vector<8x1xf32> to vector<8x1024xf32>
    %8 = arith.addf %5, %7 : vector<8x1024xf32>
    %cst_6 = arith.constant 0.000000e+00 : f32
    %9 = vector.broadcast %cst_6 : f32 to vector<8x1024xf32>
    %10 = arith.cmpf ogt, %8, %9 : vector<8x1024xf32>
    %cst_7 = arith.constant 2.000000e-01 : f32
    %11 = vector.broadcast %cst_7 : f32 to vector<8x1024xf32>
    %12 = arith.mulf %11, %8 : vector<8x1024xf32>
    %13 = arith.select %10, %8, %12 : vector<8x1024xi1>, vector<8x1024xf32>
    %c0_8 = arith.constant 0 : index
    %c0_9 = arith.constant 0 : index
    %14 = vector.load %arg4[%c0_8, %c0_9] : memref<8x1024xf32, #tpu.memory_space<vmem>>, vector<8x1024xf32>
    %15 = arith.addf %13, %14 : vector<8x1024xf32>
    %c0_10 = arith.constant 0 : index
    %c0_11 = arith.constant 0 : index
    %16 = vector.load %arg5[%c0_10, %c0_11] : memref<8x1024xf32, #tpu.memory_space<vmem>>, vector<8x1024xf32>
    tpu.vector_store %arg5[%c0_10, %c0_11], %15 {strides = array<i32>} : memref<8x1024xf32, #tpu.memory_space<vmem>>, vector<8x1024xf32>,
    return
  }
  func.func @transform_0(%arg0: i32) -> (i32, i32) {
    %c0_i32 = arith.constant 0 : i32
    %c0_i32_0 = arith.constant 0 : i32
    %c0_i32_1 = arith.constant 0 : i32
    return %c0_i32, %c0_i32_0 : i32, i32
  }
  func.func @transform_1(%arg0: i32) -> (i32, i32) {
    %c0_i32 = arith.constant 0 : i32
    %c0_i32_0 = arith.constant 0 : i32
    return %c0_i32, %arg0 : i32, i32
  }
  func.func @transform_2(%arg0: i32) -> (i32, i32) {
    %c0_i32 = arith.constant 0 : i32
    %c0_i32_0 = arith.constant 0 : i32
    %c0_i32_1 = arith.constant 0 : i32
    return %c0_i32, %c0_i32_0 : i32, i32
  }
  func.func @transform_3(%arg0: i32) -> (i32, i32) {
    %c0_i32 = arith.constant 0 : i32
    %c0_i32_0 = arith.constant 0 : i32
    return %c0_i32, %arg0 : i32, i32
  }
  func.func @transform_4(%arg0: i32) -> (i32, i32) {
    %c0_i32 = arith.constant 0 : i32
    %c0_i32_0 = arith.constant 0 : i32
    return %c0_i32, %arg0 : i32, i32
  }
}

module attributes {stable_mosaic.version = 11 : i64} {
  func.func @_gemm_affine_kernel(%arg0: i32, %arg1: memref<8x112xf32, #tpu.memory_space<vmem>>, %arg2: memref<112x128xf32, #tpu.memory_space<vmem>>, %arg3: memref<8x2xf32, #tpu.memory_space<vmem>>, %arg4: memref<8x128xf32, #tpu.memory_space<vmem>>) attributes {dimension_semantics = [#tpu.dimension_semantics<parallel>], iteration_bounds = array<i64: 1>, scalar_prefetch = 0 : i64, scratch_operands = 0 : i64, tpu.core_type = #tpu.core_type<tc>, window_params = [{pipeline_mode = #tpu.pipeline_mode<synchronous>, transform_indices = @transform_0, window_bounds = array<i64: 8, 112>}, {transform_indices = @transform_1, window_bounds = array<i64: 112, 128>}, {pipeline_mode = #tpu.pipeline_mode<synchronous>, transform_indices = @transform_2, window_bounds = array<i64: 8, 2>}, {transform_indices = @transform_3, window_bounds = array<i64: 8, 128>}]} {
    %c0 = arith.constant 0 : index
    %c0_0 = arith.constant 0 : index
    %0 = vector.load %arg1[%c0, %c0_0] : memref<8x112xf32, #tpu.memory_space<vmem>>, vector<8x112xf32>
    %c0_1 = arith.constant 0 : index
    %c0_2 = arith.constant 0 : index
    %1 = vector.load %arg2[%c0_1, %c0_2] : memref<112x128xf32, #tpu.memory_space<vmem>>, vector<112x128xf32>
    %cst = arith.constant dense<0.000000e+00> : vector<8x128xf32>
    %2 = tpu.matmul %0, %1, %cst {dimension_numbers = #tpu.dot_dimension_numbers<[1], [0], [0], [1], [0, 0, 1, 1], [], []>} : vector<8x112xf32>, vector<112x128xf32>, vector<8x128xf32> -> vector<8x128xf32>
    %c0_3 = arith.constant 0 : index
    %c0_4 = arith.constant 0 : index
    %3 = vector.load %arg3[%c0_3, %c0_4] : memref<8x2xf32, #tpu.memory_space<vmem>>, vector<8x1xf32>
    %4 = vector.broadcast %3 : vector<8x1xf32> to vector<8x128xf32>
    %5 = arith.mulf %2, %4 : vector<8x128xf32>
    %c0_5 = arith.constant 0 : index
    %c1 = arith.constant 1 : index
    %6 = vector.load %arg3[%c0_5, %c1] : memref<8x2xf32, #tpu.memory_space<vmem>>, vector<8x1xf32>
    %7 = vector.broadcast %6 : vector<8x1xf32> to vector<8x128xf32>
    %8 = arith.addf %5, %7 : vector<8x128xf32>
    %cst_6 = arith.constant 0.000000e+00 : f32
    %9 = vector.broadcast %cst_6 : f32 to vector<8x128xf32>
    %10 = arith.cmpf ogt, %8, %9 : vector<8x128xf32>
    %cst_7 = arith.constant 2.000000e-01 : f32
    %11 = vector.broadcast %cst_7 : f32 to vector<8x128xf32>
    %12 = arith.mulf %11, %8 : vector<8x128xf32>
    %13 = arith.select %10, %8, %12 : vector<8x128xi1>, vector<8x128xf32>
    %c0_8 = arith.constant 0 : index
    %c0_9 = arith.constant 0 : index
    %14 = vector.load %arg4[%c0_8, %c0_9] : memref<8x128xf32, #tpu.memory_space<vmem>>, vector<8x128xf32>
    tpu.vector_store %arg4[%c0_8, %c0_9], %13 {strides = array<i32>} : memref<8x128xf32, #tpu.memory_space<vmem>>, vector<8x128xf32>,
    return
  }
  func.func @transform_0(%arg0: i32) -> (i32, i32) {
    %c0_i32 = arith.constant 0 : i32
    %c0_i32_0 = arith.constant 0 : i32
    %c0_i32_1 = arith.constant 0 : i32
    return %c0_i32, %c0_i32_0 : i32, i32
  }
  func.func @transform_1(%arg0: i32) -> (i32, i32) {
    %c0_i32 = arith.constant 0 : i32
    %c0_i32_0 = arith.constant 0 : i32
    return %c0_i32, %arg0 : i32, i32
  }
  func.func @transform_2(%arg0: i32) -> (i32, i32) {
    %c0_i32 = arith.constant 0 : i32
    %c0_i32_0 = arith.constant 0 : i32
    %c0_i32_1 = arith.constant 0 : i32
    return %c0_i32, %c0_i32_0 : i32, i32
  }
  func.func @transform_3(%arg0: i32) -> (i32, i32) {
    %c0_i32 = arith.constant 0 : i32
    %c0_i32_0 = arith.constant 0 : i32
    return %c0_i32, %arg0 : i32, i32
  }
}

module attributes {stable_mosaic.version = 11 : i64} {
  func.func @_gemm_affine_add_kernel(%arg0: i32, %arg1: memref<8x112xf32, #tpu.memory_space<vmem>>, %arg2: memref<112x128xf32, #tpu.memory_space<vmem>>, %arg3: memref<8x2xf32, #tpu.memory_space<vmem>>, %arg4: memref<8x128xf32, #tpu.memory_space<vmem>>, %arg5: memref<8x128xf32, #tpu.memory_space<vmem>>) attributes {dimension_semantics = [#tpu.dimension_semantics<parallel>], iteration_bounds = array<i64: 1>, scalar_prefetch = 0 : i64, scratch_operands = 0 : i64, tpu.core_type = #tpu.core_type<tc>, window_params = [{pipeline_mode = #tpu.pipeline_mode<synchronous>, transform_indices = @transform_0, window_bounds = array<i64: 8, 112>}, {transform_indices = @transform_1, window_bounds = array<i64: 112, 128>}, {pipeline_mode = #tpu.pipeline_mode<synchronous>, transform_indices = @transform_2, window_bounds = array<i64: 8, 2>}, {transform_indices = @transform_3, window_bounds = array<i64: 8, 128>}, {transform_indices = @transform_4, window_bounds = array<i64: 8, 128>}]} {
    %c0 = arith.constant 0 : index
    %c0_0 = arith.constant 0 : index
    %0 = vector.load %arg1[%c0, %c0_0] : memref<8x112xf32, #tpu.memory_space<vmem>>, vector<8x112xf32>
    %c0_1 = arith.constant 0 : index
    %c0_2 = arith.constant 0 : index
    %1 = vector.load %arg2[%c0_1, %c0_2] : memref<112x128xf32, #tpu.memory_space<vmem>>, vector<112x128xf32>
    %cst = arith.constant dense<0.000000e+00> : vector<8x128xf32>
    %2 = tpu.matmul %0, %1, %cst {dimension_numbers = #tpu.dot_dimension_numbers<[1], [0], [0], [1], [0, 0, 1, 1], [], []>} : vector<8x112xf32>, vector<112x128xf32>, vector<8x128xf32> -> vector<8x128xf32>
    %c0_3 = arith.constant 0 : index
    %c0_4 = arith.constant 0 : index
    %3 = vector.load %arg3[%c0_3, %c0_4] : memref<8x2xf32, #tpu.memory_space<vmem>>, vector<8x1xf32>
    %4 = vector.broadcast %3 : vector<8x1xf32> to vector<8x128xf32>
    %5 = arith.mulf %2, %4 : vector<8x128xf32>
    %c0_5 = arith.constant 0 : index
    %c1 = arith.constant 1 : index
    %6 = vector.load %arg3[%c0_5, %c1] : memref<8x2xf32, #tpu.memory_space<vmem>>, vector<8x1xf32>
    %7 = vector.broadcast %6 : vector<8x1xf32> to vector<8x128xf32>
    %8 = arith.addf %5, %7 : vector<8x128xf32>
    %cst_6 = arith.constant 0.000000e+00 : f32
    %9 = vector.broadcast %cst_6 : f32 to vector<8x128xf32>
    %10 = arith.cmpf ogt, %8, %9 : vector<8x128xf32>
    %cst_7 = arith.constant 2.000000e-01 : f32
    %11 = vector.broadcast %cst_7 : f32 to vector<8x128xf32>
    %12 = arith.mulf %11, %8 : vector<8x128xf32>
    %13 = arith.select %10, %8, %12 : vector<8x128xi1>, vector<8x128xf32>
    %c0_8 = arith.constant 0 : index
    %c0_9 = arith.constant 0 : index
    %14 = vector.load %arg4[%c0_8, %c0_9] : memref<8x128xf32, #tpu.memory_space<vmem>>, vector<8x128xf32>
    %15 = arith.addf %13, %14 : vector<8x128xf32>
    %c0_10 = arith.constant 0 : index
    %c0_11 = arith.constant 0 : index
    %16 = vector.load %arg5[%c0_10, %c0_11] : memref<8x128xf32, #tpu.memory_space<vmem>>, vector<8x128xf32>
    tpu.vector_store %arg5[%c0_10, %c0_11], %15 {strides = array<i32>} : memref<8x128xf32, #tpu.memory_space<vmem>>, vector<8x128xf32>,
    return
  }
  func.func @transform_0(%arg0: i32) -> (i32, i32) {
    %c0_i32 = arith.constant 0 : i32
    %c0_i32_0 = arith.constant 0 : i32
    %c0_i32_1 = arith.constant 0 : i32
    return %c0_i32, %c0_i32_0 : i32, i32
  }
  func.func @transform_1(%arg0: i32) -> (i32, i32) {
    %c0_i32 = arith.constant 0 : i32
    %c0_i32_0 = arith.constant 0 : i32
    return %c0_i32, %arg0 : i32, i32
  }
  func.func @transform_2(%arg0: i32) -> (i32, i32) {
    %c0_i32 = arith.constant 0 : i32
    %c0_i32_0 = arith.constant 0 : i32
    %c0_i32_1 = arith.constant 0 : i32
    return %c0_i32, %c0_i32_0 : i32, i32
  }
  func.func @transform_3(%arg0: i32) -> (i32, i32) {
    %c0_i32 = arith.constant 0 : i32
    %c0_i32_0 = arith.constant 0 : i32
    return %c0_i32, %arg0 : i32, i32
  }
  func.func @transform_4(%arg0: i32) -> (i32, i32) {
    %c0_i32 = arith.constant 0 : i32
    %c0_i32_0 = arith.constant 0 : i32
    return %c0_i32, %arg0 : i32, i32
  }
}

module attributes {stable_mosaic.version = 11 : i64} {
  func.func @_gemm_affine_kernel(%arg0: i32, %arg1: memref<8x216xf32, #tpu.memory_space<vmem>>, %arg2: memref<216x128xf32, #tpu.memory_space<vmem>>, %arg3: memref<8x2xf32, #tpu.memory_space<vmem>>, %arg4: memref<8x128xf32, #tpu.memory_space<vmem>>) attributes {dimension_semantics = [#tpu.dimension_semantics<parallel>], iteration_bounds = array<i64: 1>, scalar_prefetch = 0 : i64, scratch_operands = 0 : i64, tpu.core_type = #tpu.core_type<tc>, window_params = [{pipeline_mode = #tpu.pipeline_mode<synchronous>, transform_indices = @transform_0, window_bounds = array<i64: 8, 216>}, {transform_indices = @transform_1, window_bounds = array<i64: 216, 128>}, {pipeline_mode = #tpu.pipeline_mode<synchronous>, transform_indices = @transform_2, window_bounds = array<i64: 8, 2>}, {transform_indices = @transform_3, window_bounds = array<i64: 8, 128>}]} {
    %c0 = arith.constant 0 : index
    %c0_0 = arith.constant 0 : index
    %0 = vector.load %arg1[%c0, %c0_0] : memref<8x216xf32, #tpu.memory_space<vmem>>, vector<8x216xf32>
    %c0_1 = arith.constant 0 : index
    %c0_2 = arith.constant 0 : index
    %1 = vector.load %arg2[%c0_1, %c0_2] : memref<216x128xf32, #tpu.memory_space<vmem>>, vector<216x128xf32>
    %cst = arith.constant dense<0.000000e+00> : vector<8x128xf32>
    %2 = tpu.matmul %0, %1, %cst {dimension_numbers = #tpu.dot_dimension_numbers<[1], [0], [0], [1], [0, 0, 1, 1], [], []>} : vector<8x216xf32>, vector<216x128xf32>, vector<8x128xf32> -> vector<8x128xf32>
    %c0_3 = arith.constant 0 : index
    %c0_4 = arith.constant 0 : index
    %3 = vector.load %arg3[%c0_3, %c0_4] : memref<8x2xf32, #tpu.memory_space<vmem>>, vector<8x1xf32>
    %4 = vector.broadcast %3 : vector<8x1xf32> to vector<8x128xf32>
    %5 = arith.mulf %2, %4 : vector<8x128xf32>
    %c0_5 = arith.constant 0 : index
    %c1 = arith.constant 1 : index
    %6 = vector.load %arg3[%c0_5, %c1] : memref<8x2xf32, #tpu.memory_space<vmem>>, vector<8x1xf32>
    %7 = vector.broadcast %6 : vector<8x1xf32> to vector<8x128xf32>
    %8 = arith.addf %5, %7 : vector<8x128xf32>
    %cst_6 = arith.constant 0.000000e+00 : f32
    %9 = vector.broadcast %cst_6 : f32 to vector<8x128xf32>
    %10 = arith.cmpf ogt, %8, %9 : vector<8x128xf32>
    %cst_7 = arith.constant 2.000000e-01 : f32
    %11 = vector.broadcast %cst_7 : f32 to vector<8x128xf32>
    %12 = arith.mulf %11, %8 : vector<8x128xf32>
    %13 = arith.select %10, %8, %12 : vector<8x128xi1>, vector<8x128xf32>
    %c0_8 = arith.constant 0 : index
    %c0_9 = arith.constant 0 : index
    %14 = vector.load %arg4[%c0_8, %c0_9] : memref<8x128xf32, #tpu.memory_space<vmem>>, vector<8x128xf32>
    tpu.vector_store %arg4[%c0_8, %c0_9], %13 {strides = array<i32>} : memref<8x128xf32, #tpu.memory_space<vmem>>, vector<8x128xf32>,
    return
  }
  func.func @transform_0(%arg0: i32) -> (i32, i32) {
    %c0_i32 = arith.constant 0 : i32
    %c0_i32_0 = arith.constant 0 : i32
    %c0_i32_1 = arith.constant 0 : i32
    return %c0_i32, %c0_i32_0 : i32, i32
  }
  func.func @transform_1(%arg0: i32) -> (i32, i32) {
    %c0_i32 = arith.constant 0 : i32
    %c0_i32_0 = arith.constant 0 : i32
    return %c0_i32, %arg0 : i32, i32
  }
  func.func @transform_2(%arg0: i32) -> (i32, i32) {
    %c0_i32 = arith.constant 0 : i32
    %c0_i32_0 = arith.constant 0 : i32
    %c0_i32_1 = arith.constant 0 : i32
    return %c0_i32, %c0_i32_0 : i32, i32
  }
  func.func @transform_3(%arg0: i32) -> (i32, i32) {
    %c0_i32 = arith.constant 0 : i32
    %c0_i32_0 = arith.constant 0 : i32
    return %c0_i32, %arg0 : i32, i32
  }
}

module attributes {stable_mosaic.version = 11 : i64} {
  func.func @_gemm_affine_kernel(%arg0: i32, %arg1: memref<16x216xf32, #tpu.memory_space<vmem>>, %arg2: memref<216x128xf32, #tpu.memory_space<vmem>>, %arg3: memref<16x2xf32, #tpu.memory_space<vmem>>, %arg4: memref<16x128xf32, #tpu.memory_space<vmem>>) attributes {dimension_semantics = [#tpu.dimension_semantics<parallel>], iteration_bounds = array<i64: 1>, scalar_prefetch = 0 : i64, scratch_operands = 0 : i64, tpu.core_type = #tpu.core_type<tc>, window_params = [{pipeline_mode = #tpu.pipeline_mode<synchronous>, transform_indices = @transform_0, window_bounds = array<i64: 16, 216>}, {transform_indices = @transform_1, window_bounds = array<i64: 216, 128>}, {pipeline_mode = #tpu.pipeline_mode<synchronous>, transform_indices = @transform_2, window_bounds = array<i64: 16, 2>}, {transform_indices = @transform_3, window_bounds = array<i64: 16, 128>}]} {
    %c0 = arith.constant 0 : index
    %c0_0 = arith.constant 0 : index
    %0 = vector.load %arg1[%c0, %c0_0] : memref<16x216xf32, #tpu.memory_space<vmem>>, vector<16x216xf32>
    %c0_1 = arith.constant 0 : index
    %c0_2 = arith.constant 0 : index
    %1 = vector.load %arg2[%c0_1, %c0_2] : memref<216x128xf32, #tpu.memory_space<vmem>>, vector<216x128xf32>
    %cst = arith.constant dense<0.000000e+00> : vector<16x128xf32>
    %2 = tpu.matmul %0, %1, %cst {dimension_numbers = #tpu.dot_dimension_numbers<[1], [0], [0], [1], [0, 0, 1, 1], [], []>} : vector<16x216xf32>, vector<216x128xf32>, vector<16x128xf32> -> vector<16x128xf32>
    %c0_3 = arith.constant 0 : index
    %c0_4 = arith.constant 0 : index
    %3 = vector.load %arg3[%c0_3, %c0_4] : memref<16x2xf32, #tpu.memory_space<vmem>>, vector<16x1xf32>
    %4 = vector.broadcast %3 : vector<16x1xf32> to vector<16x128xf32>
    %5 = arith.mulf %2, %4 : vector<16x128xf32>
    %c0_5 = arith.constant 0 : index
    %c1 = arith.constant 1 : index
    %6 = vector.load %arg3[%c0_5, %c1] : memref<16x2xf32, #tpu.memory_space<vmem>>, vector<16x1xf32>
    %7 = vector.broadcast %6 : vector<16x1xf32> to vector<16x128xf32>
    %8 = arith.addf %5, %7 : vector<16x128xf32>
    %cst_6 = arith.constant 0.000000e+00 : f32
    %9 = vector.broadcast %cst_6 : f32 to vector<16x128xf32>
    %10 = arith.cmpf ogt, %8, %9 : vector<16x128xf32>
    %cst_7 = arith.constant 2.000000e-01 : f32
    %11 = vector.broadcast %cst_7 : f32 to vector<16x128xf32>
    %12 = arith.mulf %11, %8 : vector<16x128xf32>
    %13 = arith.select %10, %8, %12 : vector<16x128xi1>, vector<16x128xf32>
    %c0_8 = arith.constant 0 : index
    %c0_9 = arith.constant 0 : index
    %14 = vector.load %arg4[%c0_8, %c0_9] : memref<16x128xf32, #tpu.memory_space<vmem>>, vector<16x128xf32>
    tpu.vector_store %arg4[%c0_8, %c0_9], %13 {strides = array<i32>} : memref<16x128xf32, #tpu.memory_space<vmem>>, vector<16x128xf32>,
    return
  }
  func.func @transform_0(%arg0: i32) -> (i32, i32) {
    %c0_i32 = arith.constant 0 : i32
    %c0_i32_0 = arith.constant 0 : i32
    %c0_i32_1 = arith.constant 0 : i32
    return %c0_i32, %c0_i32_0 : i32, i32
  }
  func.func @transform_1(%arg0: i32) -> (i32, i32) {
    %c0_i32 = arith.constant 0 : i32
    %c0_i32_0 = arith.constant 0 : i32
    return %c0_i32, %arg0 : i32, i32
  }
  func.func @transform_2(%arg0: i32) -> (i32, i32) {
    %c0_i32 = arith.constant 0 : i32
    %c0_i32_0 = arith.constant 0 : i32
    %c0_i32_1 = arith.constant 0 : i32
    return %c0_i32, %c0_i32_0 : i32, i32
  }
  func.func @transform_3(%arg0: i32) -> (i32, i32) {
    %c0_i32 = arith.constant 0 : i32
    %c0_i32_0 = arith.constant 0 : i32
    return %c0_i32, %arg0 : i32, i32
  }
}

module attributes {stable_mosaic.version = 11 : i64} {
  func.func @_gemm_affine_add_kernel(%arg0: i32, %arg1: memref<16x216xf32, #tpu.memory_space<vmem>>, %arg2: memref<216x128xf32, #tpu.memory_space<vmem>>, %arg3: memref<16x2xf32, #tpu.memory_space<vmem>>, %arg4: memref<16x128xf32, #tpu.memory_space<vmem>>, %arg5: memref<16x128xf32, #tpu.memory_space<vmem>>) attributes {dimension_semantics = [#tpu.dimension_semantics<parallel>], iteration_bounds = array<i64: 1>, scalar_prefetch = 0 : i64, scratch_operands = 0 : i64, tpu.core_type = #tpu.core_type<tc>, window_params = [{pipeline_mode = #tpu.pipeline_mode<synchronous>, transform_indices = @transform_0, window_bounds = array<i64: 16, 216>}, {transform_indices = @transform_1, window_bounds = array<i64: 216, 128>}, {pipeline_mode = #tpu.pipeline_mode<synchronous>, transform_indices = @transform_2, window_bounds = array<i64: 16, 2>}, {transform_indices = @transform_3, window_bounds = array<i64: 16, 128>}, {transform_indices = @transform_4, window_bounds = array<i64: 16, 128>}]} {
    %c0 = arith.constant 0 : index
    %c0_0 = arith.constant 0 : index
    %0 = vector.load %arg1[%c0, %c0_0] : memref<16x216xf32, #tpu.memory_space<vmem>>, vector<16x216xf32>
    %c0_1 = arith.constant 0 : index
    %c0_2 = arith.constant 0 : index
    %1 = vector.load %arg2[%c0_1, %c0_2] : memref<216x128xf32, #tpu.memory_space<vmem>>, vector<216x128xf32>
    %cst = arith.constant dense<0.000000e+00> : vector<16x128xf32>
    %2 = tpu.matmul %0, %1, %cst {dimension_numbers = #tpu.dot_dimension_numbers<[1], [0], [0], [1], [0, 0, 1, 1], [], []>} : vector<16x216xf32>, vector<216x128xf32>, vector<16x128xf32> -> vector<16x128xf32>
    %c0_3 = arith.constant 0 : index
    %c0_4 = arith.constant 0 : index
    %3 = vector.load %arg3[%c0_3, %c0_4] : memref<16x2xf32, #tpu.memory_space<vmem>>, vector<16x1xf32>
    %4 = vector.broadcast %3 : vector<16x1xf32> to vector<16x128xf32>
    %5 = arith.mulf %2, %4 : vector<16x128xf32>
    %c0_5 = arith.constant 0 : index
    %c1 = arith.constant 1 : index
    %6 = vector.load %arg3[%c0_5, %c1] : memref<16x2xf32, #tpu.memory_space<vmem>>, vector<16x1xf32>
    %7 = vector.broadcast %6 : vector<16x1xf32> to vector<16x128xf32>
    %8 = arith.addf %5, %7 : vector<16x128xf32>
    %cst_6 = arith.constant 0.000000e+00 : f32
    %9 = vector.broadcast %cst_6 : f32 to vector<16x128xf32>
    %10 = arith.cmpf ogt, %8, %9 : vector<16x128xf32>
    %cst_7 = arith.constant 2.000000e-01 : f32
    %11 = vector.broadcast %cst_7 : f32 to vector<16x128xf32>
    %12 = arith.mulf %11, %8 : vector<16x128xf32>
    %13 = arith.select %10, %8, %12 : vector<16x128xi1>, vector<16x128xf32>
    %c0_8 = arith.constant 0 : index
    %c0_9 = arith.constant 0 : index
    %14 = vector.load %arg4[%c0_8, %c0_9] : memref<16x128xf32, #tpu.memory_space<vmem>>, vector<16x128xf32>
    %15 = arith.addf %13, %14 : vector<16x128xf32>
    %c0_10 = arith.constant 0 : index
    %c0_11 = arith.constant 0 : index
    %16 = vector.load %arg5[%c0_10, %c0_11] : memref<16x128xf32, #tpu.memory_space<vmem>>, vector<16x128xf32>
    tpu.vector_store %arg5[%c0_10, %c0_11], %15 {strides = array<i32>} : memref<16x128xf32, #tpu.memory_space<vmem>>, vector<16x128xf32>,
    return
  }
  func.func @transform_0(%arg0: i32) -> (i32, i32) {
    %c0_i32 = arith.constant 0 : i32
    %c0_i32_0 = arith.constant 0 : i32
    %c0_i32_1 = arith.constant 0 : i32
    return %c0_i32, %c0_i32_0 : i32, i32
  }
  func.func @transform_1(%arg0: i32) -> (i32, i32) {
    %c0_i32 = arith.constant 0 : i32
    %c0_i32_0 = arith.constant 0 : i32
    return %c0_i32, %arg0 : i32, i32
  }
  func.func @transform_2(%arg0: i32) -> (i32, i32) {
    %c0_i32 = arith.constant 0 : i32
    %c0_i32_0 = arith.constant 0 : i32
    %c0_i32_1 = arith.constant 0 : i32
    return %c0_i32, %c0_i32_0 : i32, i32
  }
  func.func @transform_3(%arg0: i32) -> (i32, i32) {
    %c0_i32 = arith.constant 0 : i32
    %c0_i32_0 = arith.constant 0 : i32
    return %c0_i32, %arg0 : i32, i32
  }
  func.func @transform_4(%arg0: i32) -> (i32, i32) {
    %c0_i32 = arith.constant 0 : i32
    %c0_i32_0 = arith.constant 0 : i32
    return %c0_i32, %arg0 : i32, i32
  }
}

module attributes {stable_mosaic.version = 11 : i64} {
  func.func @_gemm_affine_kernel(%arg0: i32, %arg1: memref<16x432xf32, #tpu.memory_space<vmem>>, %arg2: memref<432x128xf32, #tpu.memory_space<vmem>>, %arg3: memref<16x2xf32, #tpu.memory_space<vmem>>, %arg4: memref<16x128xf32, #tpu.memory_space<vmem>>) attributes {dimension_semantics = [#tpu.dimension_semantics<parallel>], iteration_bounds = array<i64: 1>, scalar_prefetch = 0 : i64, scratch_operands = 0 : i64, tpu.core_type = #tpu.core_type<tc>, window_params = [{pipeline_mode = #tpu.pipeline_mode<synchronous>, transform_indices = @transform_0, window_bounds = array<i64: 16, 432>}, {transform_indices = @transform_1, window_bounds = array<i64: 432, 128>}, {pipeline_mode = #tpu.pipeline_mode<synchronous>, transform_indices = @transform_2, window_bounds = array<i64: 16, 2>}, {transform_indices = @transform_3, window_bounds = array<i64: 16, 128>}]} {
    %c0 = arith.constant 0 : index
    %c0_0 = arith.constant 0 : index
    %0 = vector.load %arg1[%c0, %c0_0] : memref<16x432xf32, #tpu.memory_space<vmem>>, vector<16x432xf32>
    %c0_1 = arith.constant 0 : index
    %c0_2 = arith.constant 0 : index
    %1 = vector.load %arg2[%c0_1, %c0_2] : memref<432x128xf32, #tpu.memory_space<vmem>>, vector<432x128xf32>
    %cst = arith.constant dense<0.000000e+00> : vector<16x128xf32>
    %2 = tpu.matmul %0, %1, %cst {dimension_numbers = #tpu.dot_dimension_numbers<[1], [0], [0], [1], [0, 0, 1, 1], [], []>} : vector<16x432xf32>, vector<432x128xf32>, vector<16x128xf32> -> vector<16x128xf32>
    %c0_3 = arith.constant 0 : index
    %c0_4 = arith.constant 0 : index
    %3 = vector.load %arg3[%c0_3, %c0_4] : memref<16x2xf32, #tpu.memory_space<vmem>>, vector<16x1xf32>
    %4 = vector.broadcast %3 : vector<16x1xf32> to vector<16x128xf32>
    %5 = arith.mulf %2, %4 : vector<16x128xf32>
    %c0_5 = arith.constant 0 : index
    %c1 = arith.constant 1 : index
    %6 = vector.load %arg3[%c0_5, %c1] : memref<16x2xf32, #tpu.memory_space<vmem>>, vector<16x1xf32>
    %7 = vector.broadcast %6 : vector<16x1xf32> to vector<16x128xf32>
    %8 = arith.addf %5, %7 : vector<16x128xf32>
    %cst_6 = arith.constant 0.000000e+00 : f32
    %9 = vector.broadcast %cst_6 : f32 to vector<16x128xf32>
    %10 = arith.cmpf ogt, %8, %9 : vector<16x128xf32>
    %cst_7 = arith.constant 2.000000e-01 : f32
    %11 = vector.broadcast %cst_7 : f32 to vector<16x128xf32>
    %12 = arith.mulf %11, %8 : vector<16x128xf32>
    %13 = arith.select %10, %8, %12 : vector<16x128xi1>, vector<16x128xf32>
    %c0_8 = arith.constant 0 : index
    %c0_9 = arith.constant 0 : index
    %14 = vector.load %arg4[%c0_8, %c0_9] : memref<16x128xf32, #tpu.memory_space<vmem>>, vector<16x128xf32>
    tpu.vector_store %arg4[%c0_8, %c0_9], %13 {strides = array<i32>} : memref<16x128xf32, #tpu.memory_space<vmem>>, vector<16x128xf32>,
    return
  }
  func.func @transform_0(%arg0: i32) -> (i32, i32) {
    %c0_i32 = arith.constant 0 : i32
    %c0_i32_0 = arith.constant 0 : i32
    %c0_i32_1 = arith.constant 0 : i32
    return %c0_i32, %c0_i32_0 : i32, i32
  }
  func.func @transform_1(%arg0: i32) -> (i32, i32) {
    %c0_i32 = arith.constant 0 : i32
    %c0_i32_0 = arith.constant 0 : i32
    return %c0_i32, %arg0 : i32, i32
  }
  func.func @transform_2(%arg0: i32) -> (i32, i32) {
    %c0_i32 = arith.constant 0 : i32
    %c0_i32_0 = arith.constant 0 : i32
    %c0_i32_1 = arith.constant 0 : i32
    return %c0_i32, %c0_i32_0 : i32, i32
  }
  func.func @transform_3(%arg0: i32) -> (i32, i32) {
    %c0_i32 = arith.constant 0 : i32
    %c0_i32_0 = arith.constant 0 : i32
    return %c0_i32, %arg0 : i32, i32
  }
}

module attributes {stable_mosaic.version = 11 : i64} {
  func.func @_gemm_affine_kernel(%arg0: i32, %arg1: memref<32x432xf32, #tpu.memory_space<vmem>>, %arg2: memref<432x128xf32, #tpu.memory_space<vmem>>, %arg3: memref<32x2xf32, #tpu.memory_space<vmem>>, %arg4: memref<32x128xf32, #tpu.memory_space<vmem>>) attributes {dimension_semantics = [#tpu.dimension_semantics<parallel>], iteration_bounds = array<i64: 1>, scalar_prefetch = 0 : i64, scratch_operands = 0 : i64, tpu.core_type = #tpu.core_type<tc>, window_params = [{pipeline_mode = #tpu.pipeline_mode<synchronous>, transform_indices = @transform_0, window_bounds = array<i64: 32, 432>}, {transform_indices = @transform_1, window_bounds = array<i64: 432, 128>}, {pipeline_mode = #tpu.pipeline_mode<synchronous>, transform_indices = @transform_2, window_bounds = array<i64: 32, 2>}, {transform_indices = @transform_3, window_bounds = array<i64: 32, 128>}]} {
    %c0 = arith.constant 0 : index
    %c0_0 = arith.constant 0 : index
    %0 = vector.load %arg1[%c0, %c0_0] : memref<32x432xf32, #tpu.memory_space<vmem>>, vector<32x432xf32>
    %c0_1 = arith.constant 0 : index
    %c0_2 = arith.constant 0 : index
    %1 = vector.load %arg2[%c0_1, %c0_2] : memref<432x128xf32, #tpu.memory_space<vmem>>, vector<432x128xf32>
    %cst = arith.constant dense<0.000000e+00> : vector<32x128xf32>
    %2 = tpu.matmul %0, %1, %cst {dimension_numbers = #tpu.dot_dimension_numbers<[1], [0], [0], [1], [0, 0, 1, 1], [], []>} : vector<32x432xf32>, vector<432x128xf32>, vector<32x128xf32> -> vector<32x128xf32>
    %c0_3 = arith.constant 0 : index
    %c0_4 = arith.constant 0 : index
    %3 = vector.load %arg3[%c0_3, %c0_4] : memref<32x2xf32, #tpu.memory_space<vmem>>, vector<32x1xf32>
    %4 = vector.broadcast %3 : vector<32x1xf32> to vector<32x128xf32>
    %5 = arith.mulf %2, %4 : vector<32x128xf32>
    %c0_5 = arith.constant 0 : index
    %c1 = arith.constant 1 : index
    %6 = vector.load %arg3[%c0_5, %c1] : memref<32x2xf32, #tpu.memory_space<vmem>>, vector<32x1xf32>
    %7 = vector.broadcast %6 : vector<32x1xf32> to vector<32x128xf32>
    %8 = arith.addf %5, %7 : vector<32x128xf32>
    %cst_6 = arith.constant 0.000000e+00 : f32
    %9 = vector.broadcast %cst_6 : f32 to vector<32x128xf32>
    %10 = arith.cmpf ogt, %8, %9 : vector<32x128xf32>
    %cst_7 = arith.constant 2.000000e-01 : f32
    %11 = vector.broadcast %cst_7 : f32 to vector<32x128xf32>
    %12 = arith.mulf %11, %8 : vector<32x128xf32>
    %13 = arith.select %10, %8, %12 : vector<32x128xi1>, vector<32x128xf32>
    %c0_8 = arith.constant 0 : index
    %c0_9 = arith.constant 0 : index
    %14 = vector.load %arg4[%c0_8, %c0_9] : memref<32x128xf32, #tpu.memory_space<vmem>>, vector<32x128xf32>
    tpu.vector_store %arg4[%c0_8, %c0_9], %13 {strides = array<i32>} : memref<32x128xf32, #tpu.memory_space<vmem>>, vector<32x128xf32>,
    return
  }
  func.func @transform_0(%arg0: i32) -> (i32, i32) {
    %c0_i32 = arith.constant 0 : i32
    %c0_i32_0 = arith.constant 0 : i32
    %c0_i32_1 = arith.constant 0 : i32
    return %c0_i32, %c0_i32_0 : i32, i32
  }
  func.func @transform_1(%arg0: i32) -> (i32, i32) {
    %c0_i32 = arith.constant 0 : i32
    %c0_i32_0 = arith.constant 0 : i32
    return %c0_i32, %arg0 : i32, i32
  }
  func.func @transform_2(%arg0: i32) -> (i32, i32) {
    %c0_i32 = arith.constant 0 : i32
    %c0_i32_0 = arith.constant 0 : i32
    %c0_i32_1 = arith.constant 0 : i32
    return %c0_i32, %c0_i32_0 : i32, i32
  }
  func.func @transform_3(%arg0: i32) -> (i32, i32) {
    %c0_i32 = arith.constant 0 : i32
    %c0_i32_0 = arith.constant 0 : i32
    return %c0_i32, %arg0 : i32, i32
  }
}

module attributes {stable_mosaic.version = 11 : i64} {
  func.func @_gemm_affine_add_kernel(%arg0: i32, %arg1: memref<32x432xf32, #tpu.memory_space<vmem>>, %arg2: memref<432x128xf32, #tpu.memory_space<vmem>>, %arg3: memref<32x2xf32, #tpu.memory_space<vmem>>, %arg4: memref<32x128xf32, #tpu.memory_space<vmem>>, %arg5: memref<32x128xf32, #tpu.memory_space<vmem>>) attributes {dimension_semantics = [#tpu.dimension_semantics<parallel>], iteration_bounds = array<i64: 1>, scalar_prefetch = 0 : i64, scratch_operands = 0 : i64, tpu.core_type = #tpu.core_type<tc>, window_params = [{pipeline_mode = #tpu.pipeline_mode<synchronous>, transform_indices = @transform_0, window_bounds = array<i64: 32, 432>}, {transform_indices = @transform_1, window_bounds = array<i64: 432, 128>}, {pipeline_mode = #tpu.pipeline_mode<synchronous>, transform_indices = @transform_2, window_bounds = array<i64: 32, 2>}, {transform_indices = @transform_3, window_bounds = array<i64: 32, 128>}, {transform_indices = @transform_4, window_bounds = array<i64: 32, 128>}]} {
    %c0 = arith.constant 0 : index
    %c0_0 = arith.constant 0 : index
    %0 = vector.load %arg1[%c0, %c0_0] : memref<32x432xf32, #tpu.memory_space<vmem>>, vector<32x432xf32>
    %c0_1 = arith.constant 0 : index
    %c0_2 = arith.constant 0 : index
    %1 = vector.load %arg2[%c0_1, %c0_2] : memref<432x128xf32, #tpu.memory_space<vmem>>, vector<432x128xf32>
    %cst = arith.constant dense<0.000000e+00> : vector<32x128xf32>
    %2 = tpu.matmul %0, %1, %cst {dimension_numbers = #tpu.dot_dimension_numbers<[1], [0], [0], [1], [0, 0, 1, 1], [], []>} : vector<32x432xf32>, vector<432x128xf32>, vector<32x128xf32> -> vector<32x128xf32>
    %c0_3 = arith.constant 0 : index
    %c0_4 = arith.constant 0 : index
    %3 = vector.load %arg3[%c0_3, %c0_4] : memref<32x2xf32, #tpu.memory_space<vmem>>, vector<32x1xf32>
    %4 = vector.broadcast %3 : vector<32x1xf32> to vector<32x128xf32>
    %5 = arith.mulf %2, %4 : vector<32x128xf32>
    %c0_5 = arith.constant 0 : index
    %c1 = arith.constant 1 : index
    %6 = vector.load %arg3[%c0_5, %c1] : memref<32x2xf32, #tpu.memory_space<vmem>>, vector<32x1xf32>
    %7 = vector.broadcast %6 : vector<32x1xf32> to vector<32x128xf32>
    %8 = arith.addf %5, %7 : vector<32x128xf32>
    %cst_6 = arith.constant 0.000000e+00 : f32
    %9 = vector.broadcast %cst_6 : f32 to vector<32x128xf32>
    %10 = arith.cmpf ogt, %8, %9 : vector<32x128xf32>
    %cst_7 = arith.constant 2.000000e-01 : f32
    %11 = vector.broadcast %cst_7 : f32 to vector<32x128xf32>
    %12 = arith.mulf %11, %8 : vector<32x128xf32>
    %13 = arith.select %10, %8, %12 : vector<32x128xi1>, vector<32x128xf32>
    %c0_8 = arith.constant 0 : index
    %c0_9 = arith.constant 0 : index
    %14 = vector.load %arg4[%c0_8, %c0_9] : memref<32x128xf32, #tpu.memory_space<vmem>>, vector<32x128xf32>
    %15 = arith.addf %13, %14 : vector<32x128xf32>
    %c0_10 = arith.constant 0 : index
    %c0_11 = arith.constant 0 : index
    %16 = vector.load %arg5[%c0_10, %c0_11] : memref<32x128xf32, #tpu.memory_space<vmem>>, vector<32x128xf32>
    tpu.vector_store %arg5[%c0_10, %c0_11], %15 {strides = array<i32>} : memref<32x128xf32, #tpu.memory_space<vmem>>, vector<32x128xf32>,
    return
  }
  func.func @transform_0(%arg0: i32) -> (i32, i32) {
    %c0_i32 = arith.constant 0 : i32
    %c0_i32_0 = arith.constant 0 : i32
    %c0_i32_1 = arith.constant 0 : i32
    return %c0_i32, %c0_i32_0 : i32, i32
  }
  func.func @transform_1(%arg0: i32) -> (i32, i32) {
    %c0_i32 = arith.constant 0 : i32
    %c0_i32_0 = arith.constant 0 : i32
    return %c0_i32, %arg0 : i32, i32
  }
  func.func @transform_2(%arg0: i32) -> (i32, i32) {
    %c0_i32 = arith.constant 0 : i32
    %c0_i32_0 = arith.constant 0 : i32
    %c0_i32_1 = arith.constant 0 : i32
    return %c0_i32, %c0_i32_0 : i32, i32
  }
  func.func @transform_3(%arg0: i32) -> (i32, i32) {
    %c0_i32 = arith.constant 0 : i32
    %c0_i32_0 = arith.constant 0 : i32
    return %c0_i32, %arg0 : i32, i32
  }
  func.func @transform_4(%arg0: i32) -> (i32, i32) {
    %c0_i32 = arith.constant 0 : i32
    %c0_i32_0 = arith.constant 0 : i32
    return %c0_i32, %arg0 : i32, i32
  }
}

module attributes {stable_mosaic.version = 11 : i64} {
  func.func @_gemm_affine_kernel(%arg0: i32, %arg1: memref<128x32xf32, #tpu.memory_space<vmem>>, %arg2: memref<32x128xf32, #tpu.memory_space<vmem>>, %arg3: memref<128x2xf32, #tpu.memory_space<vmem>>, %arg4: memref<128x128xf32, #tpu.memory_space<vmem>>) attributes {dimension_semantics = [#tpu.dimension_semantics<parallel>], iteration_bounds = array<i64: 1>, scalar_prefetch = 0 : i64, scratch_operands = 0 : i64, tpu.core_type = #tpu.core_type<tc>, window_params = [{pipeline_mode = #tpu.pipeline_mode<synchronous>, transform_indices = @transform_0, window_bounds = array<i64: 128, 32>}, {transform_indices = @transform_1, window_bounds = array<i64: 32, 128>}, {pipeline_mode = #tpu.pipeline_mode<synchronous>, transform_indices = @transform_2, window_bounds = array<i64: 128, 2>}, {transform_indices = @transform_3, window_bounds = array<i64: 128, 128>}]} {
    %c0 = arith.constant 0 : index
    %c0_0 = arith.constant 0 : index
    %0 = vector.load %arg1[%c0, %c0_0] : memref<128x32xf32, #tpu.memory_space<vmem>>, vector<128x32xf32>
    %c0_1 = arith.constant 0 : index
    %c0_2 = arith.constant 0 : index
    %1 = vector.load %arg2[%c0_1, %c0_2] : memref<32x128xf32, #tpu.memory_space<vmem>>, vector<32x128xf32>
    %cst = arith.constant dense<0.000000e+00> : vector<128x128xf32>
    %2 = tpu.matmul %0, %1, %cst {dimension_numbers = #tpu.dot_dimension_numbers<[1], [0], [0], [1], [0, 0, 1, 1], [], []>} : vector<128x32xf32>, vector<32x128xf32>, vector<128x128xf32> -> vector<128x128xf32>
    %c0_3 = arith.constant 0 : index
    %c0_4 = arith.constant 0 : index
    %3 = vector.load %arg3[%c0_3, %c0_4] : memref<128x2xf32, #tpu.memory_space<vmem>>, vector<128x1xf32>
    %4 = vector.broadcast %3 : vector<128x1xf32> to vector<128x128xf32>
    %5 = arith.mulf %2, %4 : vector<128x128xf32>
    %c0_5 = arith.constant 0 : index
    %c1 = arith.constant 1 : index
    %6 = vector.load %arg3[%c0_5, %c1] : memref<128x2xf32, #tpu.memory_space<vmem>>, vector<128x1xf32>
    %7 = vector.broadcast %6 : vector<128x1xf32> to vector<128x128xf32>
    %8 = arith.addf %5, %7 : vector<128x128xf32>
    %c0_6 = arith.constant 0 : index
    %c0_7 = arith.constant 0 : index
    %9 = vector.load %arg4[%c0_6, %c0_7] : memref<128x128xf32, #tpu.memory_space<vmem>>, vector<128x128xf32>
    tpu.vector_store %arg4[%c0_6, %c0_7], %8 {strides = array<i32>} : memref<128x128xf32, #tpu.memory_space<vmem>>, vector<128x128xf32>,
    return
  }
  func.func @transform_0(%arg0: i32) -> (i32, i32) {
    %c0_i32 = arith.constant 0 : i32
    %c0_i32_0 = arith.constant 0 : i32
    %c0_i32_1 = arith.constant 0 : i32
    return %c0_i32, %c0_i32_0 : i32, i32
  }
  func.func @transform_1(%arg0: i32) -> (i32, i32) {
    %c0_i32 = arith.constant 0 : i32
    %c0_i32_0 = arith.constant 0 : i32
    return %c0_i32, %arg0 : i32, i32
  }
  func.func @transform_2(%arg0: i32) -> (i32, i32) {
    %c0_i32 = arith.constant 0 : i32
    %c0_i32_0 = arith.constant 0 : i32
    %c0_i32_1 = arith.constant 0 : i32
    return %c0_i32, %c0_i32_0 : i32, i32
  }
  func.func @transform_3(%arg0: i32) -> (i32, i32) {
    %c0_i32 = arith.constant 0 : i32
    %c0_i32_0 = arith.constant 0 : i32
    return %c0_i32, %arg0 : i32, i32
  }
}

module attributes {stable_mosaic.version = 11 : i64} {
  func.func @_gemm_affine_kernel(%arg0: i32, %arg1: memref<8x112xf32, #tpu.memory_space<vmem>>, %arg2: memref<112x1024xf32, #tpu.memory_space<vmem>>, %arg3: memref<8x2xf32, #tpu.memory_space<vmem>>, %arg4: memref<8x1024xf32, #tpu.memory_space<vmem>>) attributes {dimension_semantics = [#tpu.dimension_semantics<parallel>], iteration_bounds = array<i64: 8>, scalar_prefetch = 0 : i64, scratch_operands = 0 : i64, tpu.core_type = #tpu.core_type<tc>, window_params = [{pipeline_mode = #tpu.pipeline_mode<synchronous>, transform_indices = @transform_0, window_bounds = array<i64: 8, 112>}, {transform_indices = @transform_1, window_bounds = array<i64: 112, 1024>}, {pipeline_mode = #tpu.pipeline_mode<synchronous>, transform_indices = @transform_2, window_bounds = array<i64: 8, 2>}, {transform_indices = @transform_3, window_bounds = array<i64: 8, 1024>}]} {
    %c0 = arith.constant 0 : index
    %c0_0 = arith.constant 0 : index
    %0 = vector.load %arg1[%c0, %c0_0] : memref<8x112xf32, #tpu.memory_space<vmem>>, vector<8x112xf32>
    %c0_1 = arith.constant 0 : index
    %c0_2 = arith.constant 0 : index
    %1 = vector.load %arg2[%c0_1, %c0_2] : memref<112x1024xf32, #tpu.memory_space<vmem>>, vector<112x1024xf32>
    %cst = arith.constant dense<0.000000e+00> : vector<8x1024xf32>
    %2 = tpu.matmul %0, %1, %cst {dimension_numbers = #tpu.dot_dimension_numbers<[1], [0], [0], [1], [0, 0, 1, 1], [], []>} : vector<8x112xf32>, vector<112x1024xf32>, vector<8x1024xf32> -> vector<8x1024xf32>
    %c0_3 = arith.constant 0 : index
    %c0_4 = arith.constant 0 : index
    %3 = vector.load %arg3[%c0_3, %c0_4] : memref<8x2xf32, #tpu.memory_space<vmem>>, vector<8x1xf32>
    %4 = vector.broadcast %3 : vector<8x1xf32> to vector<8x1024xf32>
    %5 = arith.mulf %2, %4 : vector<8x1024xf32>
    %c0_5 = arith.constant 0 : index
    %c1 = arith.constant 1 : index
    %6 = vector.load %arg3[%c0_5, %c1] : memref<8x2xf32, #tpu.memory_space<vmem>>, vector<8x1xf32>
    %7 = vector.broadcast %6 : vector<8x1xf32> to vector<8x1024xf32>
    %8 = arith.addf %5, %7 : vector<8x1024xf32>
    %cst_6 = arith.constant 0.000000e+00 : f32
    %9 = vector.broadcast %cst_6 : f32 to vector<8x1024xf32>
    %10 = arith.cmpf ogt, %8, %9 : vector<8x1024xf32>
    %cst_7 = arith.constant 2.000000e-01 : f32
    %11 = vector.broadcast %cst_7 : f32 to vector<8x1024xf32>
    %12 = arith.mulf %11, %8 : vector<8x1024xf32>
    %13 = arith.select %10, %8, %12 : vector<8x1024xi1>, vector<8x1024xf32>
    %c0_8 = arith.constant 0 : index
    %c0_9 = arith.constant 0 : index
    %14 = vector.load %arg4[%c0_8, %c0_9] : memref<8x1024xf32, #tpu.memory_space<vmem>>, vector<8x1024xf32>
    tpu.vector_store %arg4[%c0_8, %c0_9], %13 {strides = array<i32>} : memref<8x1024xf32, #tpu.memory_space<vmem>>, vector<8x1024xf32>,
    return
  }
  func.func @transform_0(%arg0: i32) -> (i32, i32) {
    %c0_i32 = arith.constant 0 : i32
    %c0_i32_0 = arith.constant 0 : i32
    %c0_i32_1 = arith.constant 0 : i32
    return %c0_i32, %c0_i32_0 : i32, i32
  }
  func.func @transform_1(%arg0: i32) -> (i32, i32) {
    %c0_i32 = arith.constant 0 : i32
    %c0_i32_0 = arith.constant 0 : i32
    return %c0_i32, %arg0 : i32, i32
  }
  func.func @transform_2(%arg0: i32) -> (i32, i32) {
    %c0_i32 = arith.constant 0 : i32
    %c0_i32_0 = arith.constant 0 : i32
    %c0_i32_1 = arith.constant 0 : i32
    return %c0_i32, %c0_i32_0 : i32, i32
  }
  func.func @transform_3(%arg0: i32) -> (i32, i32) {
    %c0_i32 = arith.constant 0 : i32
    %c0_i32_0 = arith.constant 0 : i32
    return %c0_i32, %arg0 : i32, i32
  }
}

module attributes {stable_mosaic.version = 11 : i64} {
  func.func @_gemm_affine_kernel(%arg0: i32, %arg1: memref<8x216xf32, #tpu.memory_space<vmem>>, %arg2: memref<216x1024xf32, #tpu.memory_space<vmem>>, %arg3: memref<8x2xf32, #tpu.memory_space<vmem>>, %arg4: memref<8x1024xf32, #tpu.memory_space<vmem>>) attributes {dimension_semantics = [#tpu.dimension_semantics<parallel>], iteration_bounds = array<i64: 8>, scalar_prefetch = 0 : i64, scratch_operands = 0 : i64, tpu.core_type = #tpu.core_type<tc>, window_params = [{pipeline_mode = #tpu.pipeline_mode<synchronous>, transform_indices = @transform_0, window_bounds = array<i64: 8, 216>}, {transform_indices = @transform_1, window_bounds = array<i64: 216, 1024>}, {pipeline_mode = #tpu.pipeline_mode<synchronous>, transform_indices = @transform_2, window_bounds = array<i64: 8, 2>}, {transform_indices = @transform_3, window_bounds = array<i64: 8, 1024>}]} {
    %c0 = arith.constant 0 : index
    %c0_0 = arith.constant 0 : index
    %0 = vector.load %arg1[%c0, %c0_0] : memref<8x216xf32, #tpu.memory_space<vmem>>, vector<8x216xf32>
    %c0_1 = arith.constant 0 : index
    %c0_2 = arith.constant 0 : index
    %1 = vector.load %arg2[%c0_1, %c0_2] : memref<216x1024xf32, #tpu.memory_space<vmem>>, vector<216x1024xf32>
    %cst = arith.constant dense<0.000000e+00> : vector<8x1024xf32>
    %2 = tpu.matmul %0, %1, %cst {dimension_numbers = #tpu.dot_dimension_numbers<[1], [0], [0], [1], [0, 0, 1, 1], [], []>} : vector<8x216xf32>, vector<216x1024xf32>, vector<8x1024xf32> -> vector<8x1024xf32>
    %c0_3 = arith.constant 0 : index
    %c0_4 = arith.constant 0 : index
    %3 = vector.load %arg3[%c0_3, %c0_4] : memref<8x2xf32, #tpu.memory_space<vmem>>, vector<8x1xf32>
    %4 = vector.broadcast %3 : vector<8x1xf32> to vector<8x1024xf32>
    %5 = arith.mulf %2, %4 : vector<8x1024xf32>
    %c0_5 = arith.constant 0 : index
    %c1 = arith.constant 1 : index
    %6 = vector.load %arg3[%c0_5, %c1] : memref<8x2xf32, #tpu.memory_space<vmem>>, vector<8x1xf32>
    %7 = vector.broadcast %6 : vector<8x1xf32> to vector<8x1024xf32>
    %8 = arith.addf %5, %7 : vector<8x1024xf32>
    %cst_6 = arith.constant 0.000000e+00 : f32
    %9 = vector.broadcast %cst_6 : f32 to vector<8x1024xf32>
    %10 = arith.cmpf ogt, %8, %9 : vector<8x1024xf32>
    %cst_7 = arith.constant 2.000000e-01 : f32
    %11 = vector.broadcast %cst_7 : f32 to vector<8x1024xf32>
    %12 = arith.mulf %11, %8 : vector<8x1024xf32>
    %13 = arith.select %10, %8, %12 : vector<8x1024xi1>, vector<8x1024xf32>
    %c0_8 = arith.constant 0 : index
    %c0_9 = arith.constant 0 : index
    %14 = vector.load %arg4[%c0_8, %c0_9] : memref<8x1024xf32, #tpu.memory_space<vmem>>, vector<8x1024xf32>
    tpu.vector_store %arg4[%c0_8, %c0_9], %13 {strides = array<i32>} : memref<8x1024xf32, #tpu.memory_space<vmem>>, vector<8x1024xf32>,
    return
  }
  func.func @transform_0(%arg0: i32) -> (i32, i32) {
    %c0_i32 = arith.constant 0 : i32
    %c0_i32_0 = arith.constant 0 : i32
    %c0_i32_1 = arith.constant 0 : i32
    return %c0_i32, %c0_i32_0 : i32, i32
  }
  func.func @transform_1(%arg0: i32) -> (i32, i32) {
    %c0_i32 = arith.constant 0 : i32
    %c0_i32_0 = arith.constant 0 : i32
    return %c0_i32, %arg0 : i32, i32
  }
  func.func @transform_2(%arg0: i32) -> (i32, i32) {
    %c0_i32 = arith.constant 0 : i32
    %c0_i32_0 = arith.constant 0 : i32
    %c0_i32_1 = arith.constant 0 : i32
    return %c0_i32, %c0_i32_0 : i32, i32
  }
  func.func @transform_3(%arg0: i32) -> (i32, i32) {
    %c0_i32 = arith.constant 0 : i32
    %c0_i32_0 = arith.constant 0 : i32
    return %c0_i32, %arg0 : i32, i32
  }
}

module attributes {stable_mosaic.version = 11 : i64} {
  func.func @_gemm_affine_kernel(%arg0: i32, %arg1: memref<8x112xf32, #tpu.memory_space<vmem>>, %arg2: memref<112x1024xf32, #tpu.memory_space<vmem>>, %arg3: memref<8x2xf32, #tpu.memory_space<vmem>>, %arg4: memref<8x1024xf32, #tpu.memory_space<vmem>>) attributes {dimension_semantics = [#tpu.dimension_semantics<parallel>], iteration_bounds = array<i64: 8>, scalar_prefetch = 0 : i64, scratch_operands = 0 : i64, tpu.core_type = #tpu.core_type<tc>, window_params = [{pipeline_mode = #tpu.pipeline_mode<synchronous>, transform_indices = @transform_0, window_bounds = array<i64: 8, 112>}, {transform_indices = @transform_1, window_bounds = array<i64: 112, 1024>}, {pipeline_mode = #tpu.pipeline_mode<synchronous>, transform_indices = @transform_2, window_bounds = array<i64: 8, 2>}, {transform_indices = @transform_3, window_bounds = array<i64: 8, 1024>}]} {
    %c0 = arith.constant 0 : index
    %c0_0 = arith.constant 0 : index
    %0 = vector.load %arg1[%c0, %c0_0] : memref<8x112xf32, #tpu.memory_space<vmem>>, vector<8x112xf32>
    %c0_1 = arith.constant 0 : index
    %c0_2 = arith.constant 0 : index
    %1 = vector.load %arg2[%c0_1, %c0_2] : memref<112x1024xf32, #tpu.memory_space<vmem>>, vector<112x1024xf32>
    %cst = arith.constant dense<0.000000e+00> : vector<8x1024xf32>
    %2 = tpu.matmul %0, %1, %cst {dimension_numbers = #tpu.dot_dimension_numbers<[1], [0], [0], [1], [0, 0, 1, 1], [], []>} : vector<8x112xf32>, vector<112x1024xf32>, vector<8x1024xf32> -> vector<8x1024xf32>
    %c0_3 = arith.constant 0 : index
    %c0_4 = arith.constant 0 : index
    %3 = vector.load %arg3[%c0_3, %c0_4] : memref<8x2xf32, #tpu.memory_space<vmem>>, vector<8x1xf32>
    %4 = vector.broadcast %3 : vector<8x1xf32> to vector<8x1024xf32>
    %5 = arith.mulf %2, %4 : vector<8x1024xf32>
    %c0_5 = arith.constant 0 : index
    %c1 = arith.constant 1 : index
    %6 = vector.load %arg3[%c0_5, %c1] : memref<8x2xf32, #tpu.memory_space<vmem>>, vector<8x1xf32>
    %7 = vector.broadcast %6 : vector<8x1xf32> to vector<8x1024xf32>
    %8 = arith.addf %5, %7 : vector<8x1024xf32>
    %c0_6 = arith.constant 0 : index
    %c0_7 = arith.constant 0 : index
    %9 = vector.load %arg4[%c0_6, %c0_7] : memref<8x1024xf32, #tpu.memory_space<vmem>>, vector<8x1024xf32>
    tpu.vector_store %arg4[%c0_6, %c0_7], %8 {strides = array<i32>} : memref<8x1024xf32, #tpu.memory_space<vmem>>, vector<8x1024xf32>,
    return
  }
  func.func @transform_0(%arg0: i32) -> (i32, i32) {
    %c0_i32 = arith.constant 0 : i32
    %c0_i32_0 = arith.constant 0 : i32
    %c0_i32_1 = arith.constant 0 : i32
    return %c0_i32, %c0_i32_0 : i32, i32
  }
  func.func @transform_1(%arg0: i32) -> (i32, i32) {
    %c0_i32 = arith.constant 0 : i32
    %c0_i32_0 = arith.constant 0 : i32
    return %c0_i32, %arg0 : i32, i32
  }
  func.func @transform_2(%arg0: i32) -> (i32, i32) {
    %c0_i32 = arith.constant 0 : i32
    %c0_i32_0 = arith.constant 0 : i32
    %c0_i32_1 = arith.constant 0 : i32
    return %c0_i32, %c0_i32_0 : i32, i32
  }
  func.func @transform_3(%arg0: i32) -> (i32, i32) {
    %c0_i32 = arith.constant 0 : i32
    %c0_i32_0 = arith.constant 0 : i32
    return %c0_i32, %arg0 : i32, i32
  }
}

</mosaic_0001>

<llo_original>
// kernel: encoder_forward.19
$region0: #{encoder_forward.19}
  #allocation0 [shape = 'u32[]', space=smem, size = 0x4, offset = 0x4, fixed_abs, tag = 'smem constant byte address 0x4 - core index']
  #allocation1 [shape = 'u32[144,128]{1,0:T(1,128)}', space=vmem, size = 0x12000, scoped, tag = 'internal scratch']
  %s0 = inlined_call_operand.vmem [shape: f32[8,32], index: 0, kind: input, shape index: {}]
  %s1 = inlined_call_operand.vmem [shape: f32[32,8192], index: 1, kind: input, shape index: {}]
  %s2 = inlined_call_operand.vmem [shape: f32[8,2], index: 2, kind: input, shape index: {}]
  %s3 = inlined_call_operand.vmem [shape: f32[8,8192], index: 3, kind: output, shape index: {}]
  %s4 = sld [smem:[#allocation0]]
  $region68: #{encoder_forward.19} parent=0
    _
  %s6 = ssub.s32 1, %s4
  %s7 = scalar_select 0, %s6, %s4
  $region1: #{encoder_forward.19} parent=0
    #allocation2 [shape = 'u8[262144]{0}', space=vmem, size = 0x40000, scoped, tag = 'input window, operand 1']
    loop: start=0, step=1, limit=10
    $region2: #{encoder_forward.19} parent=1 // loop_pre_header
      _
    $region3: #{encoder_forward.19} parent=1 // loop_header
      %s9 = sphi 0, %s13
      %p10 = scmp.ge.s32.totalorder %s9, 10
      %s17 = sphi 0, %s17
      %s19 = sphi 0, %s17
      %s20 = sphi 0, %s19
      %s34 = sphi 0, %s20
      %s40 = sphi 0, %s42
      %s43 = sphi 0, %s40
      %s44 = sphi 0, %s43
      %s60 = sphi 0, %s44
      %s64 = sphi 0, %s64
      %s66 = sphi 0, %s64
      %s67 = sphi 0, %s66
      %s81 = sphi 0, %s67
      %s87 = sphi 0, %s89
      %s90 = sphi 0, %s87
      %s91 = sphi 0, %s90
      %s107 = sphi 0, %s91
    $region4: #{encoder_forward.19} parent=1 // loop_header_branch
      %12 = sbr.rel (%p10) target = $region8
    $region5: #{encoder_forward.19} parent=1 // loop_body
      %s14 = ssub.s32 %s9, 1
      %s15 = ssub.s32 %s9, 2
      %s16 = sadd.s32 %s9, 1
      %s18 = sadd.s32 %s17, 1
      %p21 = scmp.eq.s32.totalorder %s9, 7
      %p22 = scmp.ne.s32.totalorder %s17, %s19
      %p23 = scmp.eq.s32.totalorder %s9, 0
      %p24 = por %p22, %p23
      %p25 = scmp.ne.s32.totalorder %s17, %s19
      %p26 = scmp.eq.s32.totalorder %s14, 7
      %p27 = por %p25, %p26
      %p28 = scmp.ne.s32.totalorder %s19, %s20
      %p29 = scmp.eq.s32.totalorder %s14, 0
      %p30 = por %p28, %p29
      %p31 = scmp.ne.s32.totalorder %s19, %s20
      %p32 = scmp.eq.s32.totalorder %s15, 7
      %p33 = por %p31, %p32
      %p35 = scmp.ne.s32.totalorder %s20, %s34
      %p36 = scmp.eq.s32.totalorder %s15, 0
      %p37 = por %p35, %p36
      %s38 = ssub.s32 %s9, %s16
      %p39 = scmp.eq.s32.totalorder %s38, 0
      %s41 = sadd.s32 %s40, 1
      %s42 = scalar_select %p39, %s40, %s41
      %p45 = pneg %p39
      %p46 = scmp.eq.s32.totalorder %s9, 7
      %p47 = por %p45, %p46
      %p48 = scmp.ne.s32.totalorder %s40, %s43
      %p49 = scmp.eq.s32.totalorder %s9, 0
      %p50 = por %p48, %p49
      %p51 = scmp.ne.s32.totalorder %s40, %s43
      %p52 = scmp.eq.s32.totalorder %s14, 7
      %p53 = por %p51, %p52
      %p54 = scmp.ne.s32.totalorder %s43, %s44
      %p55 = scmp.eq.s32.totalorder %s14, 0
      %p56 = por %p54, %p55
      %p57 = scmp.ne.s32.totalorder %s43, %s44
      %p58 = scmp.eq.s32.totalorder %s15, 7
      %p59 = por %p57, %p58
      %p61 = scmp.ne.s32.totalorder %s44, %s60
      %p62 = scmp.eq.s32.totalorder %s15, 0
      %p63 = por %p61, %p62
      %s65 = sadd.s32 %s64, 1
      %p68 = scmp.eq.s32.totalorder %s9, 7
      %p69 = scmp.ne.s32.totalorder %s64, %s66
      %p70 = scmp.eq.s32.totalorder %s9, 0
      %p71 = por %p69, %p70
      %p72 = scmp.ne.s32.totalorder %s64, %s66
      %p73 = scmp.eq.s32.totalorder %s14, 7
      %p74 = por %p72, %p73
      %p75 = scmp.ne.s32.totalorder %s66, %s67
      %p76 = scmp.eq.s32.totalorder %s14, 0
      %p77 = por %p75, %p76
      %p78 = scmp.ne.s32.totalorder %s66, %s67
      %p79 = scmp.eq.s32.totalorder %s15, 7
      %p80 = por %p78, %p79
      %p82 = scmp.ne.s32.totalorder %s67, %s81
      %p83 = scmp.eq.s32.totalorder %s15, 0
      %p84 = por %p82, %p83
      %s85 = ssub.s32 %s9, %s16
      %p86 = scmp.eq.s32.totalorder %s85, 0
      %s88 = sadd.s32 %s87, 1
      %s89 = scalar_select %p86, %s87, %s88
      %p92 = pneg %p86
      %p93 = scmp.eq.s32.totalorder %s9, 7
      %p94 = por %p92, %p93
      %p95 = scmp.ne.s32.totalorder %s87, %s90
      %p96 = scmp.eq.s32.totalorder %s9, 0
      %p97 = por %p95, %p96
      %p98 = scmp.ne.s32.totalorder %s87, %s90
      %p99 = scmp.eq.s32.totalorder %s14, 7
      %p100 = por %p98, %p99
      %p101 = scmp.ne.s32.totalorder %s90, %s91
      %p102 = scmp.eq.s32.totalorder %s14, 0
      %p103 = por %p101, %p102
      %p104 = scmp.ne.s32.totalorder %s90, %s91
      %p105 = scmp.eq.s32.totalorder %s15, 7
      %p106 = por %p104, %p105
      %p108 = scmp.ne.s32.totalorder %s91, %s107
      %p109 = scmp.eq.s32.totalorder %s15, 0
      %p110 = por %p108, %p109
      %p111 = scmp.le.s32.totalorder 1, %s9
      %p112 = scmp.lt.s32.totalorder %s9, 9
      %p113 = pnand %p111, %p112
      %p114 = pneg %p113
      // Predicated region
      $region9: #{encoder_forward.19} parent=5 // pred_check
        _
      $region10: #{encoder_forward.19} parent=5 // pred_check_branch
        %116 = sbr.rel (%p113) target = $region12
      $region11: #{encoder_forward.19} parent=5 // pred_region
        %s117 = ssub.s32 %s9, 1
        // Predicated region
        $region13: #{encoder_forward.19} parent=11 // pred_check
          %p118 = pneg %p30
        $region14: #{encoder_forward.19} parent=11 // pred_check_branch
          %120 = sbr.rel (%p118) target = $region16
        $region15: #{encoder_forward.19} parent=11 // pred_region
          _
        $region16: #{encoder_forward.19} parent=11 // pred_fallthru
          _
        // Predicated region
        $region17: #{encoder_forward.19} parent=11 // pred_check
          %p121 = pneg %p77
        $region18: #{encoder_forward.19} parent=11 // pred_check_branch
          %123 = sbr.rel (%p121) target = $region20
        $region19: #{encoder_forward.19} parent=11 // pred_region
          _
        $region20: #{encoder_forward.19} parent=11 // pred_fallthru
          _
      $region12: #{encoder_forward.19} parent=5 // pred_fallthru
        _
      %p124 = scmp.lt.s32.totalorder %s9, 8
      // Predicated region
      $region21: #{encoder_forward.19} parent=5 // pred_check
        %p125 = pneg %p124
      $region22: #{encoder_forward.19} parent=5 // pred_check_branch
        %127 = sbr.rel (%p125) target = $region24
      $region23: #{encoder_forward.19} parent=5 // pred_region
        // Predicated region
        $region25: #{encoder_forward.19} parent=23 // pred_check
          %p128 = pneg %p50
        $region26: #{encoder_forward.19} parent=23 // pred_check_branch
          %130 = sbr.rel (%p128) target = $region28
        $region27: #{encoder_forward.19} parent=23 // pred_region
          %s131 = sand.u32 %s40, 1
          %s132 = sand.u32 %s40, 1
          %s133 = smul.addr %s132, 256
          %s134 = scalar_lea.vmem [#allocation2], %s133
          %s135 = smul.u32 8, %s9
          %s136 = smul.addr %s135, 8
          %s137 = scalar_lea.vmem %s1, %s136
          // Predicated region
          $region29: #{encoder_forward.19} parent=27 // pred_check
            _
          $region30: #{encoder_forward.19} parent=27 // pred_check_branch
            %139 = sbr.rel (0) target = $region32
          $region31: #{encoder_forward.19} parent=27 // pred_region
            // Predicated region
            $region33: #{encoder_forward.19} parent=31 // pred_check
              _
            $region34: #{encoder_forward.19} parent=31 // pred_check_branch
              %141 = sbr.rel (0) target = $region36
            $region35: #{encoder_forward.19} parent=31 // pred_region
              loop: start=0, step=1, limit=1
              $region37: #{encoder_forward.19} parent=35 // loop_pre_header
                _
              $region38: #{encoder_forward.19} parent=35 // loop_header
                %s143 = sphi 0, %s147
                %p144 = scmp.ge.s32.totalorder %s143, 1
                %s148 = sphi %s137, %s137
                %s149 = sphi %s134, %s134
              $region39: #{encoder_forward.19} parent=35 // loop_header_branch
                %146 = sbr.rel (%p144) target = $region43
              $region40: #{encoder_forward.19} parent=35 // loop_body
                %v150 = vld [vmem:[%s148] sm:$0xff]
                %151 = vst [vmem:[%s149] sm:$0xff] %v150
                %v152 = vld [vmem:[%s148 + $0x8] sm:$0xff]
                %153 = vst [vmem:[%s149 + $0x8] sm:$0xff] %v152
                %v154 = vld [vmem:[%s148 + $0x10] sm:$0xff]
                %155 = vst [vmem:[%s149 + $0x10] sm:$0xff] %v154
                %v156 = vld [vmem:[%s148 + $0x18] sm:$0xff]
                %157 = vst [vmem:[%s149 + $0x18] sm:$0xff] %v156
                %v158 = vld [vmem:[%s148 + $0x20] sm:$0xff]
                %159 = vst [vmem:[%s149 + $0x20] sm:$0xff] %v158
                %v160 = vld [vmem:[%s148 + $0x28] sm:$0xff]
                %161 = vst [vmem:[%s149 + $0x28] sm:$0xff] %v160
                %v162 = vld [vmem:[%s148 + $0x30] sm:$0xff]
                %163 = vst [vmem:[%s149 + $0x30] sm:$0xff] %v162
                %v164 = vld [vmem:[%s148 + $0x38] sm:$0xff]
                %165 = vst [vmem:[%s149 + $0x38] sm:$0xff] %v164
                %v166 = vld [vmem:[%s148 + $0x200] sm:$0xff]
                %167 = vst [vmem:[%s149 + $0x40] sm:$0xff] %v166
                %v168 = vld [vmem:[%s148 + $0x208] sm:$0xff]
                %169 = vst [vmem:[%s149 + $0x48] sm:$0xff] %v168
                %v170 = vld [vmem:[%s148 + $0x210] sm:$0xff]
                %171 = vst [vmem:[%s149 + $0x50] sm:$0xff] %v170
                %v172 = vld [vmem:[%s148 + $0x218] sm:$0xff]
                %173 = vst [vmem:[%s149 + $0x58] sm:$0xff] %v172
                %v174 = vld [vmem:[%s148 + $0x220] sm:$0xff]
                %175 = vst [vmem:[%s149 + $0x60] sm:$0xff] %v174
                %v176 = vld [vmem:[%s148 + $0x228] sm:$0xff]
                %177 = vst [vmem:[%s149 + $0x68] sm:$0xff] %v176
                %v178 = vld [vmem:[%s148 + $0x230] sm:$0xff]
                %179 = vst [vmem:[%s149 + $0x70] sm:$0xff] %v178
                %v180 = vld [vmem:[%s148 + $0x238] sm:$0xff]
                %181 = vst [vmem:[%s149 + $0x78] sm:$0xff] %v180
                %v182 = vld [vmem:[%s148 + $0x400] sm:$0xff]
                %183 = vst [vmem:[%s149 + $0x80] sm:$0xff] %v182
                %v184 = vld [vmem:[%s148 + $0x408] sm:$0xff]
                %185 = vst [vmem:[%s149 + $0x88] sm:$0xff] %v184
                %v186 = vld [vmem:[%s148 + $0x410] sm:$0xff]
                %187 = vst [vmem:[%s149 + $0x90] sm:$0xff] %v186
                %v188 = vld [vmem:[%s148 + $0x418] sm:$0xff]
                %189 = vst [vmem:[%s149 + $0x98] sm:$0xff] %v188
                %v190 = vld [vmem:[%s148 + $0x420] sm:$0xff]
                %191 = vst [vmem:[%s149 + $0xa0] sm:$0xff] %v190
                %v192 = vld [vmem:[%s148 + $0x428] sm:$0xff]
                %193 = vst [vmem:[%s149 + $0xa8] sm:$0xff] %v192
                %v194 = vld [vmem:[%s148 + $0x430] sm:$0xff]
                %195 = vst [vmem:[%s149 + $0xb0] sm:$0xff] %v194
                %v196 = vld [vmem:[%s148 + $0x438] sm:$0xff]
                %197 = vst [vmem:[%s149 + $0xb8] sm:$0xff] %v196
                %v198 = vld [vmem:[%s148 + $0x600] sm:$0xff]
                %199 = vst [vmem:[%s149 + $0xc0] sm:$0xff] %v198
                %v200 = vld [vmem:[%s148 + $0x608] sm:$0xff]
                %201 = vst [vmem:[%s149 + $0xc8] sm:$0xff] %v200
                %v202 = vld [vmem:[%s148 + $0x610] sm:$0xff]
                %203 = vst [vmem:[%s149 + $0xd0] sm:$0xff] %v202
                %v204 = vld [vmem:[%s148 + $0x618] sm:$0xff]
                %205 = vst [vmem:[%s149 + $0xd8] sm:$0xff] %v204
                %v206 = vld [vmem:[%s148 + $0x620] sm:$0xff]
                %207 = vst [vmem:[%s149 + $0xe0] sm:$0xff] %v206
                %v208 = vld [vmem:[%s148 + $0x628] sm:$0xff]
                %209 = vst [vmem:[%s149 + $0xe8] sm:$0xff] %v208
                %v210 = vld [vmem:[%s148 + $0x630] sm:$0xff]
                %211 = vst [vmem:[%s149 + $0xf0] sm:$0xff] %v210
                %v212 = vld [vmem:[%s148 + $0x638] sm:$0xff]
                %213 = vst [vmem:[%s149 + $0xf8] sm:$0xff] %v212
              $region41: #{encoder_forward.19} parent=35 // loop_footer
                %s147 = sadd.s32 1, %s143
              $region42: #{encoder_forward.19} parent=35 // loop_footer_branch
                %142 = sbr.rel target = $region38
              $region43: #{encoder_forward.19} parent=35 // loop_exit
                _
            $region36: #{encoder_forward.19} parent=31 // pred_fallthru
              _
            // Predicated region
            $region44: #{encoder_forward.19} parent=31 // pred_check
              _
            $region45: #{encoder_forward.19} parent=31 // pred_check_branch
              %215 = sbr.rel target = $region47
            $region46: #{encoder_forward.19} parent=31 // pred_region
              _
            $region47: #{encoder_forward.19} parent=31 // pred_fallthru
              _
          $region32: #{encoder_forward.19} parent=27 // pred_fallthru
            _
          %216 = vnop
        $region28: #{encoder_forward.19} parent=23 // pred_fallthru
          _
      $region24: #{encoder_forward.19} parent=5 // pred_fallthru
        _
      %p217 = scmp.le.s32.totalorder 1, %s9
      %p218 = scmp.lt.s32.totalorder %s9, 9
      %p219 = pnand %p217, %p218
      %p220 = pneg %p219
      // Predicated region
      $region48: #{encoder_forward.19} parent=5 // pred_check
        _
      $region49: #{encoder_forward.19} parent=5 // pred_check_branch
        %222 = sbr.rel (%p219) target = $region51
      $region50: #{encoder_forward.19} parent=5 // pred_region
        %s223 = ssub.s32 %s9, 1
        %s224 = sand.u32 %s43, 1
        %s225 = sand.u32 %s43, 1
        %s226 = smul.addr %s225, 256
        %s227 = scalar_lea.vmem [#allocation2], %s226
        // Predicated region
        $region52: #{encoder_forward.19} parent=50 // pred_check
          %p228 = pneg %p56
        $region53: #{encoder_forward.19} parent=50 // pred_check_branch
          %230 = sbr.rel (%p228) target = $region55
        $region54: #{encoder_forward.19} parent=50 // pred_region
          _
        $region55: #{encoder_forward.19} parent=50 // pred_fallthru
          _
        %p231 = pneg %p30
        %p232 = pneg %p27
        %s233 = sand.u32 %s43, 1
        %s234 = sand.u32 %s43, 1
        %s235 = smul.addr %s234, 256
        %s236 = scalar_lea.vmem [#allocation2], %s235
        %p237 = pneg %p56
        %p238 = pneg %p53
        %p239 = pneg %p77
        %p240 = pneg %p74
        %p241 = pneg %p103
        %p242 = pneg %p100
        %s243 = smul.u32 8, %s14
        %p244 = scmp.lt.s32.totalorder %s243, 63
        %s245 = scalar_select %p244, %s243, 63
        %s246 = smul.addr %s245, 8
        %s247 = scalar_lea.vmem %s3, %s246
        %s248 = smul.u32 8, %s14
        %s249 = smul.u32 8, %s14
        %p250 = scmp.lt.s32.totalorder %s249, 63
        %s251 = scalar_select %p250, %s249, 63
        %s252 = smul.addr %s251, 8
        %s253 = scalar_lea.vmem %s3, %s252
        %s254 = smul.u32 8, %s14
        %v255 = vld [vmem:[%s0] sm:$0xff]
        %v256 = vld [vmem:[%s227] sm:$0xff]
        %v257 = vld [vmem:[%s227 + $0x8] sm:$0xff]
        %v258 = vld [vmem:[%s227 + $0x10] sm:$0xff]
        %v259 = vld [vmem:[%s227 + $0x18] sm:$0xff]
        %v260 = vld [vmem:[%s227 + $0x20] sm:$0xff]
        %v261 = vld [vmem:[%s227 + $0x28] sm:$0xff]
        %v262 = vld [vmem:[%s227 + $0x30] sm:$0xff]
        %v263 = vld [vmem:[%s227 + $0x38] sm:$0xff]
        %v264 = vld [vmem:[%s227 + $0x40] sm:$0xff]
        %v265 = vld [vmem:[%s227 + $0x48] sm:$0xff]
        %v266 = vld [vmem:[%s227 + $0x50] sm:$0xff]
        %v267 = vld [vmem:[%s227 + $0x58] sm:$0xff]
        %v268 = vld [vmem:[%s227 + $0x60] sm:$0xff]
        %v269 = vld [vmem:[%s227 + $0x68] sm:$0xff]
        %v270 = vld [vmem:[%s227 + $0x70] sm:$0xff]
        %v271 = vld [vmem:[%s227 + $0x78] sm:$0xff]
        %v272 = vld [vmem:[%s227 + $0x80] sm:$0xff]
        %v273 = vld [vmem:[%s227 + $0x88] sm:$0xff]
        %v274 = vld [vmem:[%s227 + $0x90] sm:$0xff]
        %v275 = vld [vmem:[%s227 + $0x98] sm:$0xff]
        %v276 = vld [vmem:[%s227 + $0xa0] sm:$0xff]
        %v277 = vld [vmem:[%s227 + $0xa8] sm:$0xff]
        %v278 = vld [vmem:[%s227 + $0xb0] sm:$0xff]
        %v279 = vld [vmem:[%s227 + $0xb8] sm:$0xff]
        %v280 = vld [vmem:[%s227 + $0xc0] sm:$0xff]
        %v281 = vld [vmem:[%s227 + $0xc8] sm:$0xff]
        %v282 = vld [vmem:[%s227 + $0xd0] sm:$0xff]
        %v283 = vld [vmem:[%s227 + $0xd8] sm:$0xff]
        %v284 = vld [vmem:[%s227 + $0xe0] sm:$0xff]
        %v285 = vld [vmem:[%s227 + $0xe8] sm:$0xff]
        %v286 = vld [vmem:[%s227 + $0xf0] sm:$0xff]
        %v287 = vld [vmem:[%s227 + $0xf8] sm:$0xff]
        %vm288 = vcmask 261120
        %v290 = vsel %vm288, %v255, 0
        %292 = vmatprep.subr.mxu0 0.0
        %293 = vmatpush1.msra.mxu0 0.0
        %294 = vmatprep.subr.mxu0 0.0
        %295 = vmatpush1.msra.mxu0 0.0
        %296 = vmatprep.subr.mxu0 0.0
        %297 = vmatpush1.msra.mxu0 0.0
        %298 = vmatprep.subr.mxu0 0.0
        %299 = vmatpush1.msra.mxu0 0.0
        %300 = vmatprep.subr.mxu0 0.0
        %301 = vmatpush1.msra.mxu0 0.0
        %302 = vmatprep.subr.mxu0 0.0
        %303 = vmatpush1.msra.mxu0 0.0
        %304 = vmatprep.subr.mxu0 0.0
        %305 = vmatpush1.msra.mxu0 0.0
        %306 = vmatprep.subr.mxu0 0.0
        %307 = vmatpush1.msra.mxu0 0.0
        %308 = vmatprep.subr.mxu0 0.0
        %309 = vmatpush1.msra.mxu0 0.0
        %310 = vmatprep.subr.mxu0 0.0
        %311 = vmatpush1.msra.mxu0 0.0
        %312 = vmatprep.subr.mxu0 0.0
        %313 = vmatpush1.msra.mxu0 0.0
        %314 = vmatprep.subr.mxu0 0.0
        %315 = vmatpush1.msra.mxu0 0.0
        %316 = vmatprep.subr.mxu0 %v281
        %317 = vmatpush1.msra.mxu0 %v280
        %318 = vmatprep.subr.mxu0 %v273
        %319 = vmatpush1.msra.mxu0 %v272
        %320 = vmatprep.subr.mxu0 %v265
        %321 = vmatpush1.msra.mxu0 %v264
        %322 = vmatprep.subr.mxu0 %v257
        %323 = vmatpush1.msra.mxu0 %v256
        %324 = vmatprep.subr.mxu0 0.0
        %325 = vmatpush2.msra.mxu0 0.0
        %326 = vmatprep.subr.mxu0 0.0
        %327 = vmatpush2.msra.mxu0 0.0
        %328 = vmatprep.subr.mxu0 0.0
        %329 = vmatpush2.msra.mxu0 0.0
        %330 = vmatprep.subr.mxu0 0.0
        %331 = vmatpush2.msra.mxu0 0.0
        %332 = vmatprep.subr.mxu0 0.0
        %333 = vmatpush2.msra.mxu0 0.0
        %334 = vmatprep.subr.mxu0 0.0
        %335 = vmatpush2.msra.mxu0 0.0
        %336 = vmatprep.subr.mxu0 0.0
        %337 = vmatpush2.msra.mxu0 0.0
        %338 = vmatprep.subr.mxu0 0.0
        %339 = vmatpush2.msra.mxu0 0.0
        %340 = vmatprep.subr.mxu0 0.0
        %341 = vmatpush2.msra.mxu0 0.0
        %342 = vmatprep.subr.mxu0 0.0
        %343 = vmatpush2.msra.mxu0 0.0
        %344 = vmatprep.subr.mxu0 0.0
        %345 = vmatpush2.msra.mxu0 0.0
        %346 = vmatprep.subr.mxu0 0.0
        %347 = vmatpush2.msra.mxu0 0.0
        %348 = vmatprep.subr.mxu0 0.0
        %349 = vmatpush2.msra.mxu0 0.0
        %350 = vmatprep.subr.mxu0 0.0
        %351 = vmatpush2.msra.mxu0 0.0
        %352 = vmatprep.subr.mxu0 0.0
        %353 = vmatpush2.msra.mxu0 0.0
        %354 = vmatprep.subr.mxu0 0.0
        %355 = vmatpush2.msra.mxu0 0.0
        %356 = vmatprep.mubr.f32.mxu0 0.0
        %357 = vmatmul.mubr.f32.gmra.mxu0 %v290
        %v358 = vpop.f32.mrf.mxu0
        %v359 = vadd.f32 0.0, %v358
        %v360 = vpop.f32.mrf.mxu0
        %v361 = vadd.f32 0.0, %v360
        %362 = vdwg.mxu0
        %363 = vmatprep.subr.mxu0 0.0
        %364 = vmatpush1.msra.mxu0 0.0
        %365 = vmatprep.subr.mxu0 0.0
        %366 = vmatpush1.msra.mxu0 0.0
        %367 = vmatprep.subr.mxu0 0.0
        %368 = vmatpush1.msra.mxu0 0.0
        %369 = vmatprep.subr.mxu0 0.0
        %370 = vmatpush1.msra.mxu0 0.0
        %371 = vmatprep.subr.mxu0 0.0
        %372 = vmatpush1.msra.mxu0 0.0
        %373 = vmatprep.subr.mxu0 0.0
        %374 = vmatpush1.msra.mxu0 0.0
        %375 = vmatprep.subr.mxu0 0.0
        %376 = vmatpush1.msra.mxu0 0.0
        %377 = vmatprep.subr.mxu0 0.0
        %378 = vmatpush1.msra.mxu0 0.0
        %379 = vmatprep.subr.mxu0 0.0
        %380 = vmatpush1.msra.mxu0 0.0
        %381 = vmatprep.subr.mxu0 0.0
        %382 = vmatpush1.msra.mxu0 0.0
        %383 = vmatprep.subr.mxu0 0.0
        %384 = vmatpush1.msra.mxu0 0.0
        %385 = vmatprep.subr.mxu0 0.0
        %386 = vmatpush1.msra.mxu0 0.0
        %387 = vmatprep.subr.mxu0 %v283
        %388 = vmatpush1.msra.mxu0 %v282
        %389 = vmatprep.subr.mxu0 %v275
        %390 = vmatpush1.msra.mxu0 %v274
        %391 = vmatprep.subr.mxu0 %v267
        %392 = vmatpush1.msra.mxu0 %v266
        %393 = vmatprep.subr.mxu0 %v259
        %394 = vmatpush1.msra.mxu0 %v258
        %395 = vmatprep.subr.mxu0 0.0
        %396 = vmatpush2.msra.mxu0 0.0
        %397 = vmatprep.subr.mxu0 0.0
        %398 = vmatpush2.msra.mxu0 0.0
        %399 = vmatprep.subr.mxu0 0.0
        %400 = vmatpush2.msra.mxu0 0.0
        %401 = vmatprep.subr.mxu0 0.0
        %402 = vmatpush2.msra.mxu0 0.0
        %403 = vmatprep.subr.mxu0 0.0
        %404 = vmatpush2.msra.mxu0 0.0
        %405 = vmatprep.subr.mxu0 0.0
        %406 = vmatpush2.msra.mxu0 0.0
        %407 = vmatprep.subr.mxu0 0.0
        %408 = vmatpush2.msra.mxu0 0.0
        %409 = vmatprep.subr.mxu0 0.0
        %410 = vmatpush2.msra.mxu0 0.0
        %411 = vmatprep.subr.mxu0 0.0
        %412 = vmatpush2.msra.mxu0 0.0
        %413 = vmatprep.subr.mxu0 0.0
        %414 = vmatpush2.msra.mxu0 0.0
        %415 = vmatprep.subr.mxu0 0.0
        %416 = vmatpush2.msra.mxu0 0.0
        %417 = vmatprep.subr.mxu0 0.0
        %418 = vmatpush2.msra.mxu0 0.0
        %419 = vmatprep.subr.mxu0 0.0
        %420 = vmatpush2.msra.mxu0 0.0
        %421 = vmatprep.subr.mxu0 0.0
        %422 = vmatpush2.msra.mxu0 0.0
        %423 = vmatprep.subr.mxu0 0.0
        %424 = vmatpush2.msra.mxu0 0.0
        %425 = vmatprep.subr.mxu0 0.0
        %426 = vmatpush2.msra.mxu0 0.0
        %427 = vmatprep.mubr.f32.mxu0 0.0
        %428 = vmatmul.mubr.f32.gmra.mxu0 %v290
        %v429 = vpop.f32.mrf.mxu0
        %v430 = vadd.f32 0.0, %v429
        %v431 = vpop.f32.mrf.mxu0
        %v432 = vadd.f32 0.0, %v431
        %433 = vdwg.mxu0
        %434 = vmatprep.subr.mxu0 0.0
        %435 = vmatpush1.msra.mxu0 0.0
        %436 = vmatprep.subr.mxu0 0.0
        %437 = vmatpush1.msra.mxu0 0.0
        %438 = vmatprep.subr.mxu0 0.0
        %439 = vmatpush1.msra.mxu0 0.0
        %440 = vmatprep.subr.mxu0 0.0
        %441 = vmatpush1.msra.mxu0 0.0
        %442 = vmatprep.subr.mxu0 0.0
        %443 = vmatpush1.msra.mxu0 0.0
        %444 = vmatprep.subr.mxu0 0.0
        %445 = vmatpush1.msra.mxu0 0.0
        %446 = vmatprep.subr.mxu0 0.0
        %447 = vmatpush1.msra.mxu0 0.0
        %448 = vmatprep.subr.mxu0 0.0
        %449 = vmatpush1.msra.mxu0 0.0
        %450 = vmatprep.subr.mxu0 0.0
        %451 = vmatpush1.msra.mxu0 0.0
        %452 = vmatprep.subr.mxu0 0.0
        %453 = vmatpush1.msra.mxu0 0.0
        %454 = vmatprep.subr.mxu0 0.0
        %455 = vmatpush1.msra.mxu0 0.0
        %456 = vmatprep.subr.mxu0 0.0
        %457 = vmatpush1.msra.mxu0 0.0
        %458 = vmatprep.subr.mxu0 %v285
        %459 = vmatpush1.msra.mxu0 %v284
        %460 = vmatprep.subr.mxu0 %v277
        %461 = vmatpush1.msra.mxu0 %v276
        %462 = vmatprep.subr.mxu0 %v269
        %463 = vmatpush1.msra.mxu0 %v268
        %464 = vmatprep.subr.mxu0 %v261
        %465 = vmatpush1.msra.mxu0 %v260
        %466 = vmatprep.subr.mxu0 0.0
        %467 = vmatpush2.msra.mxu0 0.0
        %468 = vmatprep.subr.mxu0 0.0
        %469 = vmatpush2.msra.mxu0 0.0
        %470 = vmatprep.subr.mxu0 0.0
        %471 = vmatpush2.msra.mxu0 0.0
        %472 = vmatprep.subr.mxu0 0.0
        %473 = vmatpush2.msra.mxu0 0.0
        %474 = vmatprep.subr.mxu0 0.0
        %475 = vmatpush2.msra.mxu0 0.0
        %476 = vmatprep.subr.mxu0 0.0
        %477 = vmatpush2.msra.mxu0 0.0
        %478 = vmatprep.subr.mxu0 0.0
        %479 = vmatpush2.msra.mxu0 0.0
        %480 = vmatprep.subr.mxu0 0.0
        %481 = vmatpush2.msra.mxu0 0.0
        %482 = vmatprep.subr.mxu0 0.0
        %483 = vmatpush2.msra.mxu0 0.0
        %484 = vmatprep.subr.mxu0 0.0
        %485 = vmatpush2.msra.mxu0 0.0
        %486 = vmatprep.subr.mxu0 0.0
        %487 = vmatpush2.msra.mxu0 0.0
        %488 = vmatprep.subr.mxu0 0.0
        %489 = vmatpush2.msra.mxu0 0.0
        %490 = vmatprep.subr.mxu0 0.0
        %491 = vmatpush2.msra.mxu0 0.0
        %492 = vmatprep.subr.mxu0 0.0
        %493 = vmatpush2.msra.mxu0 0.0
        %494 = vmatprep.subr.mxu0 0.0
        %495 = vmatpush2.msra.mxu0 0.0
        %496 = vmatprep.subr.mxu0 0.0
        %497 = vmatpush2.msra.mxu0 0.0
        %498 = vmatprep.mubr.f32.mxu0 0.0
        %499 = vmatmul.mubr.f32.gmra.mxu0 %v290
        %v500 = vpop.f32.mrf.mxu0
        %v501 = vadd.f32 0.0, %v500
        %v502 = vpop.f32.mrf.mxu0
        %v503 = vadd.f32 0.0, %v502
        %504 = vdwg.mxu0
        %505 = vmatprep.subr.mxu0 0.0
        %506 = vmatpush1.msra.mxu0 0.0
        %507 = vmatprep.subr.mxu0 0.0
        %508 = vmatpush1.msra.mxu0 0.0
        %509 = vmatprep.subr.mxu0 0.0
        %510 = vmatpush1.msra.mxu0 0.0
        %511 = vmatprep.subr.mxu0 0.0
        %512 = vmatpush1.msra.mxu0 0.0
        %513 = vmatprep.subr.mxu0 0.0
        %514 = vmatpush1.msra.mxu0 0.0
        %515 = vmatprep.subr.mxu0 0.0
        %516 = vmatpush1.msra.mxu0 0.0
        %517 = vmatprep.subr.mxu0 0.0
        %518 = vmatpush1.msra.mxu0 0.0
        %519 = vmatprep.subr.mxu0 0.0
        %520 = vmatpush1.msra.mxu0 0.0
        %521 = vmatprep.subr.mxu0 0.0
        %522 = vmatpush1.msra.mxu0 0.0
        %523 = vmatprep.subr.mxu0 0.0
        %524 = vmatpush1.msra.mxu0 0.0
        %525 = vmatprep.subr.mxu0 0.0
        %526 = vmatpush1.msra.mxu0 0.0
        %527 = vmatprep.subr.mxu0 0.0
        %528 = vmatpush1.msra.mxu0 0.0
        %529 = vmatprep.subr.mxu0 %v287
        %530 = vmatpush1.msra.mxu0 %v286
        %531 = vmatprep.subr.mxu0 %v279
        %532 = vmatpush1.msra.mxu0 %v278
        %533 = vmatprep.subr.mxu0 %v271
        %534 = vmatpush1.msra.mxu0 %v270
        %535 = vmatprep.subr.mxu0 %v263
        %536 = vmatpush1.msra.mxu0 %v262
        %537 = vmatprep.subr.mxu0 0.0
        %538 = vmatpush2.msra.mxu0 0.0
        %539 = vmatprep.subr.mxu0 0.0
        %540 = vmatpush2.msra.mxu0 0.0
        %541 = vmatprep.subr.mxu0 0.0
        %542 = vmatpush2.msra.mxu0 0.0
        %543 = vmatprep.subr.mxu0 0.0
        %544 = vmatpush2.msra.mxu0 0.0
        %545 = vmatprep.subr.mxu0 0.0
        %546 = vmatpush2.msra.mxu0 0.0
        %547 = vmatprep.subr.mxu0 0.0
        %548 = vmatpush2.msra.mxu0 0.0
        %549 = vmatprep.subr.mxu0 0.0
        %550 = vmatpush2.msra.mxu0 0.0
        %551 = vmatprep.subr.mxu0 0.0
        %552 = vmatpush2.msra.mxu0 0.0
        %553 = vmatprep.subr.mxu0 0.0
        %554 = vmatpush2.msra.mxu0 0.0
        %555 = vmatprep.subr.mxu0 0.0
        %556 = vmatpush2.msra.mxu0 0.0
        %557 = vmatprep.subr.mxu0 0.0
        %558 = vmatpush2.msra.mxu0 0.0
        %559 = vmatprep.subr.mxu0 0.0
        %560 = vmatpush2.msra.mxu0 0.0
        %561 = vmatprep.subr.mxu0 0.0
        %562 = vmatpush2.msra.mxu0 0.0
        %563 = vmatprep.subr.mxu0 0.0
        %564 = vmatpush2.msra.mxu0 0.0
        %565 = vmatprep.subr.mxu0 0.0
        %566 = vmatpush2.msra.mxu0 0.0
        %567 = vmatprep.subr.mxu0 0.0
        %568 = vmatpush2.msra.mxu0 0.0
        %569 = vmatprep.mubr.f32.mxu0 0.0
        %570 = vmatmul.mubr.f32.gmra.mxu0 %v290
        %v571 = vpop.f32.mrf.mxu0
        %v572 = vadd.f32 0.0, %v571
        %v573 = vpop.f32.mrf.mxu0
        %v574 = vadd.f32 0.0, %v573
        %575 = vdwg.mxu0
        %v576 = vld [vmem:[%s2] sm:$0xff]
        %578 = vset.pattern.permute.xlu0 0
        %579 = vperm.xlu0 %578, %v576
        %v580 = vpop.permute.xlu0 %579
        %v582 = vmul.f32 %v359, %v580
        %v583 = vmul.f32 %v361, %v580
        %v584 = vmul.f32 %v430, %v580
        %v585 = vmul.f32 %v432, %v580
        %v586 = vmul.f32 %v501, %v580
        %v587 = vmul.f32 %v503, %v580
        %v588 = vmul.f32 %v572, %v580
        %v589 = vmul.f32 %v574, %v580
        %590 = vset.pattern.permute.xlu0 1
        %591 = vperm.xlu0 %590, %v576
        %v592 = vpop.permute.xlu0 %591
        %v594 = vadd.f32 %v582, %v592
        %v595 = vadd.f32 %v583, %v592
        %v596 = vadd.f32 %v584, %v592
        %v597 = vadd.f32 %v585, %v592
        %v598 = vadd.f32 %v586, %v592
        %v599 = vadd.f32 %v587, %v592
        %v600 = vadd.f32 %v588, %v592
        %v601 = vadd.f32 %v589, %v592
        %vm602 = vcmp.gt.f32.partialorder %v594, 0.0
        %vm603 = vcmp.gt.f32.partialorder %v595, 0.0
        %vm604 = vcmp.gt.f32.partialorder %v596, 0.0
        %vm605 = vcmp.gt.f32.partialorder %v597, 0.0
        %vm606 = vcmp.gt.f32.partialorder %v598, 0.0
        %vm607 = vcmp.gt.f32.partialorder %v599, 0.0
        %vm608 = vcmp.gt.f32.partialorder %v600, 0.0
        %vm609 = vcmp.gt.f32.partialorder %v601, 0.0
        %v610 = vmul.f32 %v594, 0.2
        %v611 = vmul.f32 %v595, 0.2
        %v612 = vmul.f32 %v596, 0.2
        %v613 = vmul.f32 %v597, 0.2
        %v614 = vmul.f32 %v598, 0.2
        %v615 = vmul.f32 %v599, 0.2
        %v616 = vmul.f32 %v600, 0.2
        %v617 = vmul.f32 %v601, 0.2
        %v618 = vsel %vm602, %v594, %v610
        %v619 = vsel %vm603, %v595, %v611
        %v620 = vsel %vm604, %v596, %v612
        %v621 = vsel %vm605, %v597, %v613
        %v622 = vsel %vm606, %v598, %v614
        %v623 = vsel %vm607, %v599, %v615
        %v624 = vsel %vm608, %v600, %v616
        %v625 = vsel %vm609, %v601, %v617
        %626 = vst [vmem:[%s253] sm:$0xff] %v618
        %627 = vst [vmem:[%s253 + $0x8] sm:$0xff] %v619
        %628 = vst [vmem:[%s253 + $0x10] sm:$0xff] %v620
        %629 = vst [vmem:[%s253 + $0x18] sm:$0xff] %v621
        %630 = vst [vmem:[%s253 + $0x20] sm:$0xff] %v622
        %631 = vst [vmem:[%s253 + $0x28] sm:$0xff] %v623
        %632 = vst [vmem:[%s253 + $0x30] sm:$0xff] %v624
        %633 = vst [vmem:[%s253 + $0x38] sm:$0xff] %v625
        %s634 = smul.u32 8, %s14
        %p635 = scmp.lt.s32.totalorder %s634, 63
        %s636 = scalar_select %p635, %s634, 63
        %s637 = smul.addr %s636, 8
        %s638 = scalar_lea.vmem %s3, %s637
        // Predicated region
        $region56: #{encoder_forward.19} parent=50 // pred_check
          %p639 = pneg %p100
        $region57: #{encoder_forward.19} parent=50 // pred_check_branch
          %641 = sbr.rel (%p639) target = $region59
        $region58: #{encoder_forward.19} parent=50 // pred_region
          %s642 = smul.u32 8, %s14
        $region59: #{encoder_forward.19} parent=50 // pred_fallthru
          _
      $region51: #{encoder_forward.19} parent=5 // pred_fallthru
        _
      %p643 = scmp.le.s32.totalorder 2, %s9
      // Predicated region
      $region60: #{encoder_forward.19} parent=5 // pred_check
        %p644 = pneg %p643
      $region61: #{encoder_forward.19} parent=5 // pred_check_branch
        %646 = sbr.rel (%p644) target = $region63
      $region62: #{encoder_forward.19} parent=5 // pred_region
        %s647 = ssub.s32 %s9, 2
        // Predicated region
        $region64: #{encoder_forward.19} parent=62 // pred_check
          %p648 = pneg %p106
        $region65: #{encoder_forward.19} parent=62 // pred_check_branch
          %650 = sbr.rel (%p648) target = $region67
        $region66: #{encoder_forward.19} parent=62 // pred_region
          %s651 = smul.u32 8, %s15
          %p652 = scmp.lt.s32.totalorder %s651, 63
          %s653 = scalar_select %p652, %s651, 63
          %s654 = smul.addr %s653, 8
          %s655 = scalar_lea.vmem %s3, %s654
        $region67: #{encoder_forward.19} parent=62 // pred_fallthru
          _
      $region63: #{encoder_forward.19} parent=5 // pred_fallthru
        _
    $region6: #{encoder_forward.19} parent=1 // loop_footer
      %s13 = sadd.s32 1, %s9
    $region7: #{encoder_forward.19} parent=1 // loop_footer_branch
      %8 = sbr.rel target = $region3
    $region8: #{encoder_forward.19} parent=1 // loop_exit
      _

// kernel: encoder_forward.20
$region0: #{encoder_forward.20}
  #allocation0 [shape = 'u32[]', space=smem, size = 0x4, offset = 0x4, fixed_abs, tag = 'smem constant byte address 0x4 - core index']
  #allocation1 [shape = 'u32[144,128]{1,0:T(1,128)}', space=vmem, size = 0x12000, scoped, tag = 'internal scratch']
  %s0 = inlined_call_operand.vmem [shape: f32[8,112], index: 0, kind: input, shape index: {}]
  %s1 = inlined_call_operand.vmem [shape: f32[112,1024], index: 1, kind: input, shape index: {}]
  %s2 = inlined_call_operand.vmem [shape: f32[8,2], index: 2, kind: input, shape index: {}]
  %s3 = inlined_call_operand.vmem [shape: f32[8,1024], index: 3, kind: output, shape index: {}]
  %s4 = sld [smem:[#allocation0]]
  $region22: #{encoder_forward.20} parent=0
    _
  %s6 = ssub.s32 1, %s4
  %s7 = scalar_select 0, %s6, %s4
  // Predicated region
  $region2: #{encoder_forward.20} parent=0 // pred_check
    _
  $region3: #{encoder_forward.20} parent=0 // pred_check_branch
    %9 = sbr.rel (0) target = $region5
  $region4: #{encoder_forward.20} parent=0 // pred_region
    _
  $region5: #{encoder_forward.20} parent=0 // pred_fallthru
    _
  // Predicated region
  $region6: #{encoder_forward.20} parent=0 // pred_check
    _
  $region7: #{encoder_forward.20} parent=0 // pred_check_branch
    %11 = sbr.rel (0) target = $region9
  $region8: #{encoder_forward.20} parent=0 // pred_region
    _
  $region9: #{encoder_forward.20} parent=0 // pred_fallthru
    _
  // Predicated region
  $region10: #{encoder_forward.20} parent=0 // pred_check
    _
  $region11: #{encoder_forward.20} parent=0 // pred_check_branch
    %13 = sbr.rel (0) target = $region13
  $region12: #{encoder_forward.20} parent=0 // pred_region
    _
  $region13: #{encoder_forward.20} parent=0 // pred_fallthru
    _
  %v14 = vld [vmem:[%s0] sm:$0xff]
  %v15 = vld [vmem:[%s1] sm:$0xff]
  %v16 = vld [vmem:[%s1 + $0x8] sm:$0xff]
  %v17 = vld [vmem:[%s1 + $0x10] sm:$0xff]
  %v18 = vld [vmem:[%s1 + $0x18] sm:$0xff]
  %v19 = vld [vmem:[%s1 + $0x20] sm:$0xff]
  %v20 = vld [vmem:[%s1 + $0x28] sm:$0xff]
  %v21 = vld [vmem:[%s1 + $0x30] sm:$0xff]
  %v22 = vld [vmem:[%s1 + $0x38] sm:$0xff]
  %v23 = vld [vmem:[%s1 + $0x40] sm:$0xff]
  %v24 = vld [vmem:[%s1 + $0x48] sm:$0xff]
  %v25 = vld [vmem:[%s1 + $0x50] sm:$0xff]
  %v26 = vld [vmem:[%s1 + $0x58] sm:$0xff]
  %v27 = vld [vmem:[%s1 + $0x60] sm:$0xff]
  %v28 = vld [vmem:[%s1 + $0x68] sm:$0xff]
  %v29 = vld [vmem:[%s1 + $0x70] sm:$0xff]
  %v30 = vld [vmem:[%s1 + $0x78] sm:$0xff]
  %v31 = vld [vmem:[%s1 + $0x80] sm:$0xff]
  %v32 = vld [vmem:[%s1 + $0x88] sm:$0xff]
  %v33 = vld [vmem:[%s1 + $0x90] sm:$0xff]
  %v34 = vld [vmem:[%s1 + $0x98] sm:$0xff]
  %v35 = vld [vmem:[%s1 + $0xa0] sm:$0xff]
  %v36 = vld [vmem:[%s1 + $0xa8] sm:$0xff]
  %v37 = vld [vmem:[%s1 + $0xb0] sm:$0xff]
  %v38 = vld [vmem:[%s1 + $0xb8] sm:$0xff]
  %v39 = vld [vmem:[%s1 + $0xc0] sm:$0xff]
  %v40 = vld [vmem:[%s1 + $0xc8] sm:$0xff]
  %v41 = vld [vmem:[%s1 + $0xd0] sm:$0xff]
  %v42 = vld [vmem:[%s1 + $0xd8] sm:$0xff]
  %v43 = vld [vmem:[%s1 + $0xe0] sm:$0xff]
  %v44 = vld [vmem:[%s1 + $0xe8] sm:$0xff]
  %v45 = vld [vmem:[%s1 + $0xf0] sm:$0xff]
  %v46 = vld [vmem:[%s1 + $0xf8] sm:$0xff]
  %v47 = vld [vmem:[%s1 + $0x100] sm:$0xff]
  %v48 = vld [vmem:[%s1 + $0x108] sm:$0xff]
  %v49 = vld [vmem:[%s1 + $0x110] sm:$0xff]
  %v50 = vld [vmem:[%s1 + $0x118] sm:$0xff]
  %v51 = vld [vmem:[%s1 + $0x120] sm:$0xff]
  %v52 = vld [vmem:[%s1 + $0x128] sm:$0xff]
  %v53 = vld [vmem:[%s1 + $0x130] sm:$0xff]
  %v54 = vld [vmem:[%s1 + $0x138] sm:$0xff]
  %v55 = vld [vmem:[%s1 + $0x140] sm:$0xff]
  %v56 = vld [vmem:[%s1 + $0x148] sm:$0xff]
  %v57 = vld [vmem:[%s1 + $0x150] sm:$0xff]
  %v58 = vld [vmem:[%s1 + $0x158] sm:$0xff]
  %v59 = vld [vmem:[%s1 + $0x160] sm:$0xff]
  %v60 = vld [vmem:[%s1 + $0x168] sm:$0xff]
  %v61 = vld [vmem:[%s1 + $0x170] sm:$0xff]
  %v62 = vld [vmem:[%s1 + $0x178] sm:$0xff]
  %v63 = vld [vmem:[%s1 + $0x180] sm:$0xff]
  %v64 = vld [vmem:[%s1 + $0x188] sm:$0xff]
  %v65 = vld [vmem:[%s1 + $0x190] sm:$0xff]
  %v66 = vld [vmem:[%s1 + $0x198] sm:$0xff]
  %v67 = vld [vmem:[%s1 + $0x1a0] sm:$0xff]
  %v68 = vld [vmem:[%s1 + $0x1a8] sm:$0xff]
  %v69 = vld [vmem:[%s1 + $0x1b0] sm:$0xff]
  %v70 = vld [vmem:[%s1 + $0x1b8] sm:$0xff]
  %v71 = vld [vmem:[%s1 + $0x1c0] sm:$0xff]
  %v72 = vld [vmem:[%s1 + $0x1c8] sm:$0xff]
  %v73 = vld [vmem:[%s1 + $0x1d0] sm:$0xff]
  %v74 = vld [vmem:[%s1 + $0x1d8] sm:$0xff]
  %v75 = vld [vmem:[%s1 + $0x1e0] sm:$0xff]
  %v76 = vld [vmem:[%s1 + $0x1e8] sm:$0xff]
  %v77 = vld [vmem:[%s1 + $0x1f0] sm:$0xff]
  %v78 = vld [vmem:[%s1 + $0x1f8] sm:$0xff]
  %v79 = vld [vmem:[%s1 + $0x200] sm:$0xff]
  %v80 = vld [vmem:[%s1 + $0x208] sm:$0xff]
  %v81 = vld [vmem:[%s1 + $0x210] sm:$0xff]
  %v82 = vld [vmem:[%s1 + $0x218] sm:$0xff]
  %v83 = vld [vmem:[%s1 + $0x220] sm:$0xff]
  %v84 = vld [vmem:[%s1 + $0x228] sm:$0xff]
  %v85 = vld [vmem:[%s1 + $0x230] sm:$0xff]
  %v86 = vld [vmem:[%s1 + $0x238] sm:$0xff]
  %v87 = vld [vmem:[%s1 + $0x240] sm:$0xff]
  %v88 = vld [vmem:[%s1 + $0x248] sm:$0xff]
  %v89 = vld [vmem:[%s1 + $0x250] sm:$0xff]
  %v90 = vld [vmem:[%s1 + $0x258] sm:$0xff]
  %v91 = vld [vmem:[%s1 + $0x260] sm:$0xff]
  %v92 = vld [vmem:[%s1 + $0x268] sm:$0xff]
  %v93 = vld [vmem:[%s1 + $0x270] sm:$0xff]
  %v94 = vld [vmem:[%s1 + $0x278] sm:$0xff]
  %v95 = vld [vmem:[%s1 + $0x280] sm:$0xff]
  %v96 = vld [vmem:[%s1 + $0x288] sm:$0xff]
  %v97 = vld [vmem:[%s1 + $0x290] sm:$0xff]
  %v98 = vld [vmem:[%s1 + $0x298] sm:$0xff]
  %v99 = vld [vmem:[%s1 + $0x2a0] sm:$0xff]
  %v100 = vld [vmem:[%s1 + $0x2a8] sm:$0xff]
  %v101 = vld [vmem:[%s1 + $0x2b0] sm:$0xff]
  %v102 = vld [vmem:[%s1 + $0x2b8] sm:$0xff]
  %v103 = vld [vmem:[%s1 + $0x2c0] sm:$0xff]
  %v104 = vld [vmem:[%s1 + $0x2c8] sm:$0xff]
  %v105 = vld [vmem:[%s1 + $0x2d0] sm:$0xff]
  %v106 = vld [vmem:[%s1 + $0x2d8] sm:$0xff]
  %v107 = vld [vmem:[%s1 + $0x2e0] sm:$0xff]
  %v108 = vld [vmem:[%s1 + $0x2e8] sm:$0xff]
  %v109 = vld [vmem:[%s1 + $0x2f0] sm:$0xff]
  %v110 = vld [vmem:[%s1 + $0x2f8] sm:$0xff]
  %v111 = vld [vmem:[%s1 + $0x300] sm:$0xff]
  %v112 = vld [vmem:[%s1 + $0x308] sm:$0xff]
  %v113 = vld [vmem:[%s1 + $0x310] sm:$0xff]
  %v114 = vld [vmem:[%s1 + $0x318] sm:$0xff]
  %v115 = vld [vmem:[%s1 + $0x320] sm:$0xff]
  %v116 = vld [vmem:[%s1 + $0x328] sm:$0xff]
  %v117 = vld [vmem:[%s1 + $0x330] sm:$0xff]
  %v118 = vld [vmem:[%s1 + $0x338] sm:$0xff]
  %v119 = vld [vmem:[%s1 + $0x340] sm:$0xff]
  %v120 = vld [vmem:[%s1 + $0x348] sm:$0xff]
  %v121 = vld [vmem:[%s1 + $0x350] sm:$0xff]
  %v122 = vld [vmem:[%s1 + $0x358] sm:$0xff]
  %v123 = vld [vmem:[%s1 + $0x360] sm:$0xff]
  %v124 = vld [vmem:[%s1 + $0x368] sm:$0xff]
  %v125 = vld [vmem:[%s1 + $0x370] sm:$0xff]
  %v126 = vld [vmem:[%s1 + $0x378] sm:$0xff]
  %vm127 = vcmask 916480
  %v129 = vsel %vm127, %v14, 0
  %131 = vmatprep.subr.mxu0 0.0
  %132 = vmatpush1.msra.mxu0 0.0
  %133 = vmatprep.subr.mxu0 0.0
  %134 = vmatpush1.msra.mxu0 0.0
  %135 = vmatprep.subr.mxu0 %v120
  %136 = vmatpush1.msra.mxu0 %v119
  %137 = vmatprep.subr.mxu0 %v112
  %138 = vmatpush1.msra.mxu0 %v111
  %139 = vmatprep.subr.mxu0 %v104
  %140 = vmatpush1.msra.mxu0 %v103
  %141 = vmatprep.subr.mxu0 %v96
  %142 = vmatpush1.msra.mxu0 %v95
  %143 = vmatprep.subr.mxu0 %v88
  %144 = vmatpush1.msra.mxu0 %v87
  %145 = vmatprep.subr.mxu0 %v80
  %146 = vmatpush1.msra.mxu0 %v79
  %147 = vmatprep.subr.mxu0 %v72
  %148 = vmatpush1.msra.mxu0 %v71
  %149 = vmatprep.subr.mxu0 %v64
  %150 = vmatpush1.msra.mxu0 %v63
  %151 = vmatprep.subr.mxu0 %v56
  %152 = vmatpush1.msra.mxu0 %v55
  %153 = vmatprep.subr.mxu0 %v48
  %154 = vmatpush1.msra.mxu0 %v47
  %155 = vmatprep.subr.mxu0 %v40
  %156 = vmatpush1.msra.mxu0 %v39
  %157 = vmatprep.subr.mxu0 %v32
  %158 = vmatpush1.msra.mxu0 %v31
  %159 = vmatprep.subr.mxu0 %v24
  %160 = vmatpush1.msra.mxu0 %v23
  %161 = vmatprep.subr.mxu0 %v16
  %162 = vmatpush1.msra.mxu0 %v15
  %163 = vmatprep.subr.mxu0 0.0
  %164 = vmatpush2.msra.mxu0 0.0
  %165 = vmatprep.subr.mxu0 0.0
  %166 = vmatpush2.msra.mxu0 0.0
  %167 = vmatprep.subr.mxu0 0.0
  %168 = vmatpush2.msra.mxu0 0.0
  %169 = vmatprep.subr.mxu0 0.0
  %170 = vmatpush2.msra.mxu0 0.0
  %171 = vmatprep.subr.mxu0 0.0
  %172 = vmatpush2.msra.mxu0 0.0
  %173 = vmatprep.subr.mxu0 0.0
  %174 = vmatpush2.msra.mxu0 0.0
  %175 = vmatprep.subr.mxu0 0.0
  %176 = vmatpush2.msra.mxu0 0.0
  %177 = vmatprep.subr.mxu0 0.0
  %178 = vmatpush2.msra.mxu0 0.0
  %179 = vmatprep.subr.mxu0 0.0
  %180 = vmatpush2.msra.mxu0 0.0
  %181 = vmatprep.subr.mxu0 0.0
  %182 = vmatpush2.msra.mxu0 0.0
  %183 = vmatprep.subr.mxu0 0.0
  %184 = vmatpush2.msra.mxu0 0.0
  %185 = vmatprep.subr.mxu0 0.0
  %186 = vmatpush2.msra.mxu0 0.0
  %187 = vmatprep.subr.mxu0 0.0
  %188 = vmatpush2.msra.mxu0 0.0
  %189 = vmatprep.subr.mxu0 0.0
  %190 = vmatpush2.msra.mxu0 0.0
  %191 = vmatprep.subr.mxu0 0.0
  %192 = vmatpush2.msra.mxu0 0.0
  %193 = vmatprep.subr.mxu0 0.0
  %194 = vmatpush2.msra.mxu0 0.0
  %195 = vmatprep.mubr.f32.mxu0 0.0
  %196 = vmatmul.mubr.f32.gmra.mxu0 %v129
  %v197 = vpop.f32.mrf.mxu0
  %v198 = vadd.f32 0.0, %v197
  %v199 = vpop.f32.mrf.mxu0
  %v200 = vadd.f32 0.0, %v199
  %201 = vdwg.mxu0
  %202 = vmatprep.subr.mxu0 0.0
  %203 = vmatpush1.msra.mxu0 0.0
  %204 = vmatprep.subr.mxu0 0.0
  %205 = vmatpush1.msra.mxu0 0.0
  %206 = vmatprep.subr.mxu0 %v122
  %207 = vmatpush1.msra.mxu0 %v121
  %208 = vmatprep.subr.mxu0 %v114
  %209 = vmatpush1.msra.mxu0 %v113
  %210 = vmatprep.subr.mxu0 %v106
  %211 = vmatpush1.msra.mxu0 %v105
  %212 = vmatprep.subr.mxu0 %v98
  %213 = vmatpush1.msra.mxu0 %v97
  %214 = vmatprep.subr.mxu0 %v90
  %215 = vmatpush1.msra.mxu0 %v89
  %216 = vmatprep.subr.mxu0 %v82
  %217 = vmatpush1.msra.mxu0 %v81
  %218 = vmatprep.subr.mxu0 %v74
  %219 = vmatpush1.msra.mxu0 %v73
  %220 = vmatprep.subr.mxu0 %v66
  %221 = vmatpush1.msra.mxu0 %v65
  %222 = vmatprep.subr.mxu0 %v58
  %223 = vmatpush1.msra.mxu0 %v57
  %224 = vmatprep.subr.mxu0 %v50
  %225 = vmatpush1.msra.mxu0 %v49
  %226 = vmatprep.subr.mxu0 %v42
  %227 = vmatpush1.msra.mxu0 %v41
  %228 = vmatprep.subr.mxu0 %v34
  %229 = vmatpush1.msra.mxu0 %v33
  %230 = vmatprep.subr.mxu0 %v26
  %231 = vmatpush1.msra.mxu0 %v25
  %232 = vmatprep.subr.mxu0 %v18
  %233 = vmatpush1.msra.mxu0 %v17
  %234 = vmatprep.subr.mxu0 0.0
  %235 = vmatpush2.msra.mxu0 0.0
  %236 = vmatprep.subr.mxu0 0.0
  %237 = vmatpush2.msra.mxu0 0.0
  %238 = vmatprep.subr.mxu0 0.0
  %239 = vmatpush2.msra.mxu0 0.0
  %240 = vmatprep.subr.mxu0 0.0
  %241 = vmatpush2.msra.mxu0 0.0
  %242 = vmatprep.subr.mxu0 0.0
  %243 = vmatpush2.msra.mxu0 0.0
  %244 = vmatprep.subr.mxu0 0.0
  %245 = vmatpush2.msra.mxu0 0.0
  %246 = vmatprep.subr.mxu0 0.0
  %247 = vmatpush2.msra.mxu0 0.0
  %248 = vmatprep.subr.mxu0 0.0
  %249 = vmatpush2.msra.mxu0 0.0
  %250 = vmatprep.subr.mxu0 0.0
  %251 = vmatpush2.msra.mxu0 0.0
  %252 = vmatprep.subr.mxu0 0.0
  %253 = vmatpush2.msra.mxu0 0.0
  %254 = vmatprep.subr.mxu0 0.0
  %255 = vmatpush2.msra.mxu0 0.0
  %256 = vmatprep.subr.mxu0 0.0
  %257 = vmatpush2.msra.mxu0 0.0
  %258 = vmatprep.subr.mxu0 0.0
  %259 = vmatpush2.msra.mxu0 0.0
  %260 = vmatprep.subr.mxu0 0.0
  %261 = vmatpush2.msra.mxu0 0.0
  %262 = vmatprep.subr.mxu0 0.0
  %263 = vmatpush2.msra.mxu0 0.0
  %264 = vmatprep.subr.mxu0 0.0
  %265 = vmatpush2.msra.mxu0 0.0
  %266 = vmatprep.mubr.f32.mxu0 0.0
  %267 = vmatmul.mubr.f32.gmra.mxu0 %v129
  %v268 = vpop.f32.mrf.mxu0
  %v269 = vadd.f32 0.0, %v268
  %v270 = vpop.f32.mrf.mxu0
  %v271 = vadd.f32 0.0, %v270
  %272 = vdwg.mxu0
  %273 = vmatprep.subr.mxu0 0.0
  %274 = vmatpush1.msra.mxu0 0.0
  %275 = vmatprep.subr.mxu0 0.0
  %276 = vmatpush1.msra.mxu0 0.0
  %277 = vmatprep.subr.mxu0 %v124
  %278 = vmatpush1.msra.mxu0 %v123
  %279 = vmatprep.subr.mxu0 %v116
  %280 = vmatpush1.msra.mxu0 %v115
  %281 = vmatprep.subr.mxu0 %v108
  %282 = vmatpush1.msra.mxu0 %v107
  %283 = vmatprep.subr.mxu0 %v100
  %284 = vmatpush1.msra.mxu0 %v99
  %285 = vmatprep.subr.mxu0 %v92
  %286 = vmatpush1.msra.mxu0 %v91
  %287 = vmatprep.subr.mxu0 %v84
  %288 = vmatpush1.msra.mxu0 %v83
  %289 = vmatprep.subr.mxu0 %v76
  %290 = vmatpush1.msra.mxu0 %v75
  %291 = vmatprep.subr.mxu0 %v68
  %292 = vmatpush1.msra.mxu0 %v67
  %293 = vmatprep.subr.mxu0 %v60
  %294 = vmatpush1.msra.mxu0 %v59
  %295 = vmatprep.subr.mxu0 %v52
  %296 = vmatpush1.msra.mxu0 %v51
  %297 = vmatprep.subr.mxu0 %v44
  %298 = vmatpush1.msra.mxu0 %v43
  %299 = vmatprep.subr.mxu0 %v36
  %300 = vmatpush1.msra.mxu0 %v35
  %301 = vmatprep.subr.mxu0 %v28
  %302 = vmatpush1.msra.mxu0 %v27
  %303 = vmatprep.subr.mxu0 %v20
  %304 = vmatpush1.msra.mxu0 %v19
  %305 = vmatprep.subr.mxu0 0.0
  %306 = vmatpush2.msra.mxu0 0.0
  %307 = vmatprep.subr.mxu0 0.0
  %308 = vmatpush2.msra.mxu0 0.0
  %309 = vmatprep.subr.mxu0 0.0
  %310 = vmatpush2.msra.mxu0 0.0
  %311 = vmatprep.subr.mxu0 0.0
  %312 = vmatpush2.msra.mxu0 0.0
  %313 = vmatprep.subr.mxu0 0.0
  %314 = vmatpush2.msra.mxu0 0.0
  %315 = vmatprep.subr.mxu0 0.0
  %316 = vmatpush2.msra.mxu0 0.0
  %317 = vmatprep.subr.mxu0 0.0
  %318 = vmatpush2.msra.mxu0 0.0
  %319 = vmatprep.subr.mxu0 0.0
  %320 = vmatpush2.msra.mxu0 0.0
  %321 = vmatprep.subr.mxu0 0.0
  %322 = vmatpush2.msra.mxu0 0.0
  %323 = vmatprep.subr.mxu0 0.0
  %324 = vmatpush2.msra.mxu0 0.0
  %325 = vmatprep.subr.mxu0 0.0
  %326 = vmatpush2.msra.mxu0 0.0
  %327 = vmatprep.subr.mxu0 0.0
  %328 = vmatpush2.msra.mxu0 0.0
  %329 = vmatprep.subr.mxu0 0.0
  %330 = vmatpush2.msra.mxu0 0.0
  %331 = vmatprep.subr.mxu0 0.0
  %332 = vmatpush2.msra.mxu0 0.0
  %333 = vmatprep.subr.mxu0 0.0
  %334 = vmatpush2.msra.mxu0 0.0
  %335 = vmatprep.subr.mxu0 0.0
  %336 = vmatpush2.msra.mxu0 0.0
  %337 = vmatprep.mubr.f32.mxu0 0.0
  %338 = vmatmul.mubr.f32.gmra.mxu0 %v129
  %v339 = vpop.f32.mrf.mxu0
  %v340 = vadd.f32 0.0, %v339
  %v341 = vpop.f32.mrf.mxu0
  %v342 = vadd.f32 0.0, %v341
  %343 = vdwg.mxu0
  %344 = vmatprep.subr.mxu0 0.0
  %345 = vmatpush1.msra.mxu0 0.0
  %346 = vmatprep.subr.mxu0 0.0
  %347 = vmatpush1.msra.mxu0 0.0
  %348 = vmatprep.subr.mxu0 %v126
  %349 = vmatpush1.msra.mxu0 %v125
  %350 = vmatprep.subr.mxu0 %v118
  %351 = vmatpush1.msra.mxu0 %v117
  %352 = vmatprep.subr.mxu0 %v110
  %353 = vmatpush1.msra.mxu0 %v109
  %354 = vmatprep.subr.mxu0 %v102
  %355 = vmatpush1.msra.mxu0 %v101
  %356 = vmatprep.subr.mxu0 %v94
  %357 = vmatpush1.msra.mxu0 %v93
  %358 = vmatprep.subr.mxu0 %v86
  %359 = vmatpush1.msra.mxu0 %v85
  %360 = vmatprep.subr.mxu0 %v78
  %361 = vmatpush1.msra.mxu0 %v77
  %362 = vmatprep.subr.mxu0 %v70
  %363 = vmatpush1.msra.mxu0 %v69
  %364 = vmatprep.subr.mxu0 %v62
  %365 = vmatpush1.msra.mxu0 %v61
  %366 = vmatprep.subr.mxu0 %v54
  %367 = vmatpush1.msra.mxu0 %v53
  %368 = vmatprep.subr.mxu0 %v46
  %369 = vmatpush1.msra.mxu0 %v45
  %370 = vmatprep.subr.mxu0 %v38
  %371 = vmatpush1.msra.mxu0 %v37
  %372 = vmatprep.subr.mxu0 %v30
  %373 = vmatpush1.msra.mxu0 %v29
  %374 = vmatprep.subr.mxu0 %v22
  %375 = vmatpush1.msra.mxu0 %v21
  %376 = vmatprep.subr.mxu0 0.0
  %377 = vmatpush2.msra.mxu0 0.0
  %378 = vmatprep.subr.mxu0 0.0
  %379 = vmatpush2.msra.mxu0 0.0
  %380 = vmatprep.subr.mxu0 0.0
  %381 = vmatpush2.msra.mxu0 0.0
  %382 = vmatprep.subr.mxu0 0.0
  %383 = vmatpush2.msra.mxu0 0.0
  %384 = vmatprep.subr.mxu0 0.0
  %385 = vmatpush2.msra.mxu0 0.0
  %386 = vmatprep.subr.mxu0 0.0
  %387 = vmatpush2.msra.mxu0 0.0
  %388 = vmatprep.subr.mxu0 0.0
  %389 = vmatpush2.msra.mxu0 0.0
  %390 = vmatprep.subr.mxu0 0.0
  %391 = vmatpush2.msra.mxu0 0.0
  %392 = vmatprep.subr.mxu0 0.0
  %393 = vmatpush2.msra.mxu0 0.0
  %394 = vmatprep.subr.mxu0 0.0
  %395 = vmatpush2.msra.mxu0 0.0
  %396 = vmatprep.subr.mxu0 0.0
  %397 = vmatpush2.msra.mxu0 0.0
  %398 = vmatprep.subr.mxu0 0.0
  %399 = vmatpush2.msra.mxu0 0.0
  %400 = vmatprep.subr.mxu0 0.0
  %401 = vmatpush2.msra.mxu0 0.0
  %402 = vmatprep.subr.mxu0 0.0
  %403 = vmatpush2.msra.mxu0 0.0
  %404 = vmatprep.subr.mxu0 0.0
  %405 = vmatpush2.msra.mxu0 0.0
  %406 = vmatprep.subr.mxu0 0.0
  %407 = vmatpush2.msra.mxu0 0.0
  %408 = vmatprep.mubr.f32.mxu0 0.0
  %409 = vmatmul.mubr.f32.gmra.mxu0 %v129
  %v410 = vpop.f32.mrf.mxu0
  %v411 = vadd.f32 0.0, %v410
  %v412 = vpop.f32.mrf.mxu0
  %v413 = vadd.f32 0.0, %v412
  %414 = vdwg.mxu0
  %v415 = vld [vmem:[%s2] sm:$0xff]
  %417 = vset.pattern.permute.xlu0 0
  %418 = vperm.xlu0 %417, %v415
  %v419 = vpop.permute.xlu0 %418
  %v421 = vmul.f32 %v198, %v419
  %v422 = vmul.f32 %v200, %v419
  %v423 = vmul.f32 %v269, %v419
  %v424 = vmul.f32 %v271, %v419
  %v425 = vmul.f32 %v340, %v419
  %v426 = vmul.f32 %v342, %v419
  %v427 = vmul.f32 %v411, %v419
  %v428 = vmul.f32 %v413, %v419
  %429 = vset.pattern.permute.xlu0 1
  %430 = vperm.xlu0 %429, %v415
  %v431 = vpop.permute.xlu0 %430
  %v433 = vadd.f32 %v421, %v431
  %v434 = vadd.f32 %v422, %v431
  %v435 = vadd.f32 %v423, %v431
  %v436 = vadd.f32 %v424, %v431
  %v437 = vadd.f32 %v425, %v431
  %v438 = vadd.f32 %v426, %v431
  %v439 = vadd.f32 %v427, %v431
  %v440 = vadd.f32 %v428, %v431
  %vm441 = vcmp.gt.f32.partialorder %v433, 0.0
  %vm442 = vcmp.gt.f32.partialorder %v434, 0.0
  %vm443 = vcmp.gt.f32.partialorder %v435, 0.0
  %vm444 = vcmp.gt.f32.partialorder %v436, 0.0
  %vm445 = vcmp.gt.f32.partialorder %v437, 0.0
  %vm446 = vcmp.gt.f32.partialorder %v438, 0.0
  %vm447 = vcmp.gt.f32.partialorder %v439, 0.0
  %vm448 = vcmp.gt.f32.partialorder %v440, 0.0
  %v449 = vmul.f32 %v433, 0.2
  %v450 = vmul.f32 %v434, 0.2
  %v451 = vmul.f32 %v435, 0.2
  %v452 = vmul.f32 %v436, 0.2
  %v453 = vmul.f32 %v437, 0.2
  %v454 = vmul.f32 %v438, 0.2
  %v455 = vmul.f32 %v439, 0.2
  %v456 = vmul.f32 %v440, 0.2
  %v457 = vsel %vm441, %v433, %v449
  %v458 = vsel %vm442, %v434, %v450
  %v459 = vsel %vm443, %v435, %v451
  %v460 = vsel %vm444, %v436, %v452
  %v461 = vsel %vm445, %v437, %v453
  %v462 = vsel %vm446, %v438, %v454
  %v463 = vsel %vm447, %v439, %v455
  %v464 = vsel %vm448, %v440, %v456
  %465 = vst [vmem:[%s3] sm:$0xff] %v457
  %466 = vst [vmem:[%s3 + $0x8] sm:$0xff] %v458
  %467 = vst [vmem:[%s3 + $0x10] sm:$0xff] %v459
  %468 = vst [vmem:[%s3 + $0x18] sm:$0xff] %v460
  %469 = vst [vmem:[%s3 + $0x20] sm:$0xff] %v461
  %470 = vst [vmem:[%s3 + $0x28] sm:$0xff] %v462
  %471 = vst [vmem:[%s3 + $0x30] sm:$0xff] %v463
  %472 = vst [vmem:[%s3 + $0x38] sm:$0xff] %v464
  // Predicated region
  $region14: #{encoder_forward.20} parent=0 // pred_check
    _
  $region15: #{encoder_forward.20} parent=0 // pred_check_branch
    %474 = sbr.rel (0) target = $region17
  $region16: #{encoder_forward.20} parent=0 // pred_region
    _
  $region17: #{encoder_forward.20} parent=0 // pred_fallthru
    _
  // Predicated region
  $region18: #{encoder_forward.20} parent=0 // pred_check
    _
  $region19: #{encoder_forward.20} parent=0 // pred_check_branch
    %476 = sbr.rel (0) target = $region21
  $region20: #{encoder_forward.20} parent=0 // pred_region
    _
  $region21: #{encoder_forward.20} parent=0 // pred_fallthru
    _

// kernel: encoder_forward.22
$region0: #{encoder_forward.22}
  #allocation0 [shape = 'u32[]', space=smem, size = 0x4, offset = 0x4, fixed_abs, tag = 'smem constant byte address 0x4 - core index']
  #allocation1 [shape = 'u32[144,128]{1,0:T(1,128)}', space=vmem, size = 0x12000, scoped, tag = 'internal scratch']
  %s0 = inlined_call_operand.vmem [shape: f32[8,112], index: 0, kind: input, shape index: {}]
  %s1 = inlined_call_operand.vmem [shape: f32[112,1024], index: 1, kind: input, shape index: {}]
  %s2 = inlined_call_operand.vmem [shape: f32[8,2], index: 2, kind: input, shape index: {}]
  %s3 = inlined_call_operand.vmem [shape: f32[8,1024], index: 3, kind: input, shape index: {}]
  %s4 = inlined_call_operand.vmem [shape: f32[8,1024], index: 4, kind: output, shape index: {}]
  %s5 = sld [smem:[#allocation0]]
  $region26: #{encoder_forward.22} parent=0
    _
  %s7 = ssub.s32 1, %s5
  %s8 = scalar_select 0, %s7, %s5
  // Predicated region
  $region2: #{encoder_forward.22} parent=0 // pred_check
    _
  $region3: #{encoder_forward.22} parent=0 // pred_check_branch
    %10 = sbr.rel (0) target = $region5
  $region4: #{encoder_forward.22} parent=0 // pred_region
    _
  $region5: #{encoder_forward.22} parent=0 // pred_fallthru
    _
  // Predicated region
  $region6: #{encoder_forward.22} parent=0 // pred_check
    _
  $region7: #{encoder_forward.22} parent=0 // pred_check_branch
    %12 = sbr.rel (0) target = $region9
  $region8: #{encoder_forward.22} parent=0 // pred_region
    _
  $region9: #{encoder_forward.22} parent=0 // pred_fallthru
    _
  // Predicated region
  $region10: #{encoder_forward.22} parent=0 // pred_check
    _
  $region11: #{encoder_forward.22} parent=0 // pred_check_branch
    %14 = sbr.rel (0) target = $region13
  $region12: #{encoder_forward.22} parent=0 // pred_region
    _
  $region13: #{encoder_forward.22} parent=0 // pred_fallthru
    _
  // Predicated region
  $region14: #{encoder_forward.22} parent=0 // pred_check
    _
  $region15: #{encoder_forward.22} parent=0 // pred_check_branch
    %16 = sbr.rel (0) target = $region17
  $region16: #{encoder_forward.22} parent=0 // pred_region
    _
  $region17: #{encoder_forward.22} parent=0 // pred_fallthru
    _
  %v17 = vld [vmem:[%s0] sm:$0xff]
  %v18 = vld [vmem:[%s1] sm:$0xff]
  %v19 = vld [vmem:[%s1 + $0x8] sm:$0xff]
  %v20 = vld [vmem:[%s1 + $0x10] sm:$0xff]
  %v21 = vld [vmem:[%s1 + $0x18] sm:$0xff]
  %v22 = vld [vmem:[%s1 + $0x20] sm:$0xff]
  %v23 = vld [vmem:[%s1 + $0x28] sm:$0xff]
  %v24 = vld [vmem:[%s1 + $0x30] sm:$0xff]
  %v25 = vld [vmem:[%s1 + $0x38] sm:$0xff]
  %v26 = vld [vmem:[%s1 + $0x40] sm:$0xff]
  %v27 = vld [vmem:[%s1 + $0x48] sm:$0xff]
  %v28 = vld [vmem:[%s1 + $0x50] sm:$0xff]
  %v29 = vld [vmem:[%s1 + $0x58] sm:$0xff]
  %v30 = vld [vmem:[%s1 + $0x60] sm:$0xff]
  %v31 = vld [vmem:[%s1 + $0x68] sm:$0xff]
  %v32 = vld [vmem:[%s1 + $0x70] sm:$0xff]
  %v33 = vld [vmem:[%s1 + $0x78] sm:$0xff]
  %v34 = vld [vmem:[%s1 + $0x80] sm:$0xff]
  %v35 = vld [vmem:[%s1 + $0x88] sm:$0xff]
  %v36 = vld [vmem:[%s1 + $0x90] sm:$0xff]
  %v37 = vld [vmem:[%s1 + $0x98] sm:$0xff]
  %v38 = vld [vmem:[%s1 + $0xa0] sm:$0xff]
  %v39 = vld [vmem:[%s1 + $0xa8] sm:$0xff]
  %v40 = vld [vmem:[%s1 + $0xb0] sm:$0xff]
  %v41 = vld [vmem:[%s1 + $0xb8] sm:$0xff]
  %v42 = vld [vmem:[%s1 + $0xc0] sm:$0xff]
  %v43 = vld [vmem:[%s1 + $0xc8] sm:$0xff]
  %v44 = vld [vmem:[%s1 + $0xd0] sm:$0xff]
  %v45 = vld [vmem:[%s1 + $0xd8] sm:$0xff]
  %v46 = vld [vmem:[%s1 + $0xe0] sm:$0xff]
  %v47 = vld [vmem:[%s1 + $0xe8] sm:$0xff]
  %v48 = vld [vmem:[%s1 + $0xf0] sm:$0xff]
  %v49 = vld [vmem:[%s1 + $0xf8] sm:$0xff]
  %v50 = vld [vmem:[%s1 + $0x100] sm:$0xff]
  %v51 = vld [vmem:[%s1 + $0x108] sm:$0xff]
  %v52 = vld [vmem:[%s1 + $0x110] sm:$0xff]
  %v53 = vld [vmem:[%s1 + $0x118] sm:$0xff]
  %v54 = vld [vmem:[%s1 + $0x120] sm:$0xff]
  %v55 = vld [vmem:[%s1 + $0x128] sm:$0xff]
  %v56 = vld [vmem:[%s1 + $0x130] sm:$0xff]
  %v57 = vld [vmem:[%s1 + $0x138] sm:$0xff]
  %v58 = vld [vmem:[%s1 + $0x140] sm:$0xff]
  %v59 = vld [vmem:[%s1 + $0x148] sm:$0xff]
  %v60 = vld [vmem:[%s1 + $0x150] sm:$0xff]
  %v61 = vld [vmem:[%s1 + $0x158] sm:$0xff]
  %v62 = vld [vmem:[%s1 + $0x160] sm:$0xff]
  %v63 = vld [vmem:[%s1 + $0x168] sm:$0xff]
  %v64 = vld [vmem:[%s1 + $0x170] sm:$0xff]
  %v65 = vld [vmem:[%s1 + $0x178] sm:$0xff]
  %v66 = vld [vmem:[%s1 + $0x180] sm:$0xff]
  %v67 = vld [vmem:[%s1 + $0x188] sm:$0xff]
  %v68 = vld [vmem:[%s1 + $0x190] sm:$0xff]
  %v69 = vld [vmem:[%s1 + $0x198] sm:$0xff]
  %v70 = vld [vmem:[%s1 + $0x1a0] sm:$0xff]
  %v71 = vld [vmem:[%s1 + $0x1a8] sm:$0xff]
  %v72 = vld [vmem:[%s1 + $0x1b0] sm:$0xff]
  %v73 = vld [vmem:[%s1 + $0x1b8] sm:$0xff]
  %v74 = vld [vmem:[%s1 + $0x1c0] sm:$0xff]
  %v75 = vld [vmem:[%s1 + $0x1c8] sm:$0xff]
  %v76 = vld [vmem:[%s1 + $0x1d0] sm:$0xff]
  %v77 = vld [vmem:[%s1 + $0x1d8] sm:$0xff]
  %v78 = vld [vmem:[%s1 + $0x1e0] sm:$0xff]
  %v79 = vld [vmem:[%s1 + $0x1e8] sm:$0xff]
  %v80 = vld [vmem:[%s1 + $0x1f0] sm:$0xff]
  %v81 = vld [vmem:[%s1 + $0x1f8] sm:$0xff]
  %v82 = vld [vmem:[%s1 + $0x200] sm:$0xff]
  %v83 = vld [vmem:[%s1 + $0x208] sm:$0xff]
  %v84 = vld [vmem:[%s1 + $0x210] sm:$0xff]
  %v85 = vld [vmem:[%s1 + $0x218] sm:$0xff]
  %v86 = vld [vmem:[%s1 + $0x220] sm:$0xff]
  %v87 = vld [vmem:[%s1 + $0x228] sm:$0xff]
  %v88 = vld [vmem:[%s1 + $0x230] sm:$0xff]
  %v89 = vld [vmem:[%s1 + $0x238] sm:$0xff]
  %v90 = vld [vmem:[%s1 + $0x240] sm:$0xff]
  %v91 = vld [vmem:[%s1 + $0x248] sm:$0xff]
  %v92 = vld [vmem:[%s1 + $0x250] sm:$0xff]
  %v93 = vld [vmem:[%s1 + $0x258] sm:$0xff]
  %v94 = vld [vmem:[%s1 + $0x260] sm:$0xff]
  %v95 = vld [vmem:[%s1 + $0x268] sm:$0xff]
  %v96 = vld [vmem:[%s1 + $0x270] sm:$0xff]
  %v97 = vld [vmem:[%s1 + $0x278] sm:$0xff]
  %v98 = vld [vmem:[%s1 + $0x280] sm:$0xff]
  %v99 = vld [vmem:[%s1 + $0x288] sm:$0xff]
  %v100 = vld [vmem:[%s1 + $0x290] sm:$0xff]
  %v101 = vld [vmem:[%s1 + $0x298] sm:$0xff]
  %v102 = vld [vmem:[%s1 + $0x2a0] sm:$0xff]
  %v103 = vld [vmem:[%s1 + $0x2a8] sm:$0xff]
  %v104 = vld [vmem:[%s1 + $0x2b0] sm:$0xff]
  %v105 = vld [vmem:[%s1 + $0x2b8] sm:$0xff]
  %v106 = vld [vmem:[%s1 + $0x2c0] sm:$0xff]
  %v107 = vld [vmem:[%s1 + $0x2c8] sm:$0xff]
  %v108 = vld [vmem:[%s1 + $0x2d0] sm:$0xff]
  %v109 = vld [vmem:[%s1 + $0x2d8] sm:$0xff]
  %v110 = vld [vmem:[%s1 + $0x2e0] sm:$0xff]
  %v111 = vld [vmem:[%s1 + $0x2e8] sm:$0xff]
  %v112 = vld [vmem:[%s1 + $0x2f0] sm:$0xff]
  %v113 = vld [vmem:[%s1 + $0x2f8] sm:$0xff]
  %v114 = vld [vmem:[%s1 + $0x300] sm:$0xff]
  %v115 = vld [vmem:[%s1 + $0x308] sm:$0xff]
  %v116 = vld [vmem:[%s1 + $0x310] sm:$0xff]
  %v117 = vld [vmem:[%s1 + $0x318] sm:$0xff]
  %v118 = vld [vmem:[%s1 + $0x320] sm:$0xff]
  %v119 = vld [vmem:[%s1 + $0x328] sm:$0xff]
  %v120 = vld [vmem:[%s1 + $0x330] sm:$0xff]
  %v121 = vld [vmem:[%s1 + $0x338] sm:$0xff]
  %v122 = vld [vmem:[%s1 + $0x340] sm:$0xff]
  %v123 = vld [vmem:[%s1 + $0x348] sm:$0xff]
  %v124 = vld [vmem:[%s1 + $0x350] sm:$0xff]
  %v125 = vld [vmem:[%s1 + $0x358] sm:$0xff]
  %v126 = vld [vmem:[%s1 + $0x360] sm:$0xff]
  %v127 = vld [vmem:[%s1 + $0x368] sm:$0xff]
  %v128 = vld [vmem:[%s1 + $0x370] sm:$0xff]
  %v129 = vld [vmem:[%s1 + $0x378] sm:$0xff]
  %vm130 = vcmask 916480
  %v132 = vsel %vm130, %v17, 0
  %134 = vmatprep.subr.mxu0 0.0
  %135 = vmatpush1.msra.mxu0 0.0
  %136 = vmatprep.subr.mxu0 0.0
  %137 = vmatpush1.msra.mxu0 0.0
  %138 = vmatprep.subr.mxu0 %v123
  %139 = vmatpush1.msra.mxu0 %v122
  %140 = vmatprep.subr.mxu0 %v115
  %141 = vmatpush1.msra.mxu0 %v114
  %142 = vmatprep.subr.mxu0 %v107
  %143 = vmatpush1.msra.mxu0 %v106
  %144 = vmatprep.subr.mxu0 %v99
  %145 = vmatpush1.msra.mxu0 %v98
  %146 = vmatprep.subr.mxu0 %v91
  %147 = vmatpush1.msra.mxu0 %v90
  %148 = vmatprep.subr.mxu0 %v83
  %149 = vmatpush1.msra.mxu0 %v82
  %150 = vmatprep.subr.mxu0 %v75
  %151 = vmatpush1.msra.mxu0 %v74
  %152 = vmatprep.subr.mxu0 %v67
  %153 = vmatpush1.msra.mxu0 %v66
  %154 = vmatprep.subr.mxu0 %v59
  %155 = vmatpush1.msra.mxu0 %v58
  %156 = vmatprep.subr.mxu0 %v51
  %157 = vmatpush1.msra.mxu0 %v50
  %158 = vmatprep.subr.mxu0 %v43
  %159 = vmatpush1.msra.mxu0 %v42
  %160 = vmatprep.subr.mxu0 %v35
  %161 = vmatpush1.msra.mxu0 %v34
  %162 = vmatprep.subr.mxu0 %v27
  %163 = vmatpush1.msra.mxu0 %v26
  %164 = vmatprep.subr.mxu0 %v19
  %165 = vmatpush1.msra.mxu0 %v18
  %166 = vmatprep.subr.mxu0 0.0
  %167 = vmatpush2.msra.mxu0 0.0
  %168 = vmatprep.subr.mxu0 0.0
  %169 = vmatpush2.msra.mxu0 0.0
  %170 = vmatprep.subr.mxu0 0.0
  %171 = vmatpush2.msra.mxu0 0.0
  %172 = vmatprep.subr.mxu0 0.0
  %173 = vmatpush2.msra.mxu0 0.0
  %174 = vmatprep.subr.mxu0 0.0
  %175 = vmatpush2.msra.mxu0 0.0
  %176 = vmatprep.subr.mxu0 0.0
  %177 = vmatpush2.msra.mxu0 0.0
  %178 = vmatprep.subr.mxu0 0.0
  %179 = vmatpush2.msra.mxu0 0.0
  %180 = vmatprep.subr.mxu0 0.0
  %181 = vmatpush2.msra.mxu0 0.0
  %182 = vmatprep.subr.mxu0 0.0
  %183 = vmatpush2.msra.mxu0 0.0
  %184 = vmatprep.subr.mxu0 0.0
  %185 = vmatpush2.msra.mxu0 0.0
  %186 = vmatprep.subr.mxu0 0.0
  %187 = vmatpush2.msra.mxu0 0.0
  %188 = vmatprep.subr.mxu0 0.0
  %189 = vmatpush2.msra.mxu0 0.0
  %190 = vmatprep.subr.mxu0 0.0
  %191 = vmatpush2.msra.mxu0 0.0
  %192 = vmatprep.subr.mxu0 0.0
  %193 = vmatpush2.msra.mxu0 0.0
  %194 = vmatprep.subr.mxu0 0.0
  %195 = vmatpush2.msra.mxu0 0.0
  %196 = vmatprep.subr.mxu0 0.0
  %197 = vmatpush2.msra.mxu0 0.0
  %198 = vmatprep.mubr.f32.mxu0 0.0
  %199 = vmatmul.mubr.f32.gmra.mxu0 %v132
  %v200 = vpop.f32.mrf.mxu0
  %v201 = vadd.f32 0.0, %v200
  %v202 = vpop.f32.mrf.mxu0
  %v203 = vadd.f32 0.0, %v202
  %204 = vdwg.mxu0
  %205 = vmatprep.subr.mxu0 0.0
  %206 = vmatpush1.msra.mxu0 0.0
  %207 = vmatprep.subr.mxu0 0.0
  %208 = vmatpush1.msra.mxu0 0.0
  %209 = vmatprep.subr.mxu0 %v125
  %210 = vmatpush1.msra.mxu0 %v124
  %211 = vmatprep.subr.mxu0 %v117
  %212 = vmatpush1.msra.mxu0 %v116
  %213 = vmatprep.subr.mxu0 %v109
  %214 = vmatpush1.msra.mxu0 %v108
  %215 = vmatprep.subr.mxu0 %v101
  %216 = vmatpush1.msra.mxu0 %v100
  %217 = vmatprep.subr.mxu0 %v93
  %218 = vmatpush1.msra.mxu0 %v92
  %219 = vmatprep.subr.mxu0 %v85
  %220 = vmatpush1.msra.mxu0 %v84
  %221 = vmatprep.subr.mxu0 %v77
  %222 = vmatpush1.msra.mxu0 %v76
  %223 = vmatprep.subr.mxu0 %v69
  %224 = vmatpush1.msra.mxu0 %v68
  %225 = vmatprep.subr.mxu0 %v61
  %226 = vmatpush1.msra.mxu0 %v60
  %227 = vmatprep.subr.mxu0 %v53
  %228 = vmatpush1.msra.mxu0 %v52
  %229 = vmatprep.subr.mxu0 %v45
  %230 = vmatpush1.msra.mxu0 %v44
  %231 = vmatprep.subr.mxu0 %v37
  %232 = vmatpush1.msra.mxu0 %v36
  %233 = vmatprep.subr.mxu0 %v29
  %234 = vmatpush1.msra.mxu0 %v28
  %235 = vmatprep.subr.mxu0 %v21
  %236 = vmatpush1.msra.mxu0 %v20
  %237 = vmatprep.subr.mxu0 0.0
  %238 = vmatpush2.msra.mxu0 0.0
  %239 = vmatprep.subr.mxu0 0.0
  %240 = vmatpush2.msra.mxu0 0.0
  %241 = vmatprep.subr.mxu0 0.0
  %242 = vmatpush2.msra.mxu0 0.0
  %243 = vmatprep.subr.mxu0 0.0
  %244 = vmatpush2.msra.mxu0 0.0
  %245 = vmatprep.subr.mxu0 0.0
  %246 = vmatpush2.msra.mxu0 0.0
  %247 = vmatprep.subr.mxu0 0.0
  %248 = vmatpush2.msra.mxu0 0.0
  %249 = vmatprep.subr.mxu0 0.0
  %250 = vmatpush2.msra.mxu0 0.0
  %251 = vmatprep.subr.mxu0 0.0
  %252 = vmatpush2.msra.mxu0 0.0
  %253 = vmatprep.subr.mxu0 0.0
  %254 = vmatpush2.msra.mxu0 0.0
  %255 = vmatprep.subr.mxu0 0.0
  %256 = vmatpush2.msra.mxu0 0.0
  %257 = vmatprep.subr.mxu0 0.0
  %258 = vmatpush2.msra.mxu0 0.0
  %259 = vmatprep.subr.mxu0 0.0
  %260 = vmatpush2.msra.mxu0 0.0
  %261 = vmatprep.subr.mxu0 0.0
  %262 = vmatpush2.msra.mxu0 0.0
  %263 = vmatprep.subr.mxu0 0.0
  %264 = vmatpush2.msra.mxu0 0.0
  %265 = vmatprep.subr.mxu0 0.0
  %266 = vmatpush2.msra.mxu0 0.0
  %267 = vmatprep.subr.mxu0 0.0
  %268 = vmatpush2.msra.mxu0 0.0
  %269 = vmatprep.mubr.f32.mxu0 0.0
  %270 = vmatmul.mubr.f32.gmra.mxu0 %v132
  %v271 = vpop.f32.mrf.mxu0
  %v272 = vadd.f32 0.0, %v271
  %v273 = vpop.f32.mrf.mxu0
  %v274 = vadd.f32 0.0, %v273
  %275 = vdwg.mxu0
  %276 = vmatprep.subr.mxu0 0.0
  %277 = vmatpush1.msra.mxu0 0.0
  %278 = vmatprep.subr.mxu0 0.0
  %279 = vmatpush1.msra.mxu0 0.0
  %280 = vmatprep.subr.mxu0 %v127
  %281 = vmatpush1.msra.mxu0 %v126
  %282 = vmatprep.subr.mxu0 %v119
  %283 = vmatpush1.msra.mxu0 %v118
  %284 = vmatprep.subr.mxu0 %v111
  %285 = vmatpush1.msra.mxu0 %v110
  %286 = vmatprep.subr.mxu0 %v103
  %287 = vmatpush1.msra.mxu0 %v102
  %288 = vmatprep.subr.mxu0 %v95
  %289 = vmatpush1.msra.mxu0 %v94
  %290 = vmatprep.subr.mxu0 %v87
  %291 = vmatpush1.msra.mxu0 %v86
  %292 = vmatprep.subr.mxu0 %v79
  %293 = vmatpush1.msra.mxu0 %v78
  %294 = vmatprep.subr.mxu0 %v71
  %295 = vmatpush1.msra.mxu0 %v70
  %296 = vmatprep.subr.mxu0 %v63
  %297 = vmatpush1.msra.mxu0 %v62
  %298 = vmatprep.subr.mxu0 %v55
  %299 = vmatpush1.msra.mxu0 %v54
  %300 = vmatprep.subr.mxu0 %v47
  %301 = vmatpush1.msra.mxu0 %v46
  %302 = vmatprep.subr.mxu0 %v39
  %303 = vmatpush1.msra.mxu0 %v38
  %304 = vmatprep.subr.mxu0 %v31
  %305 = vmatpush1.msra.mxu0 %v30
  %306 = vmatprep.subr.mxu0 %v23
  %307 = vmatpush1.msra.mxu0 %v22
  %308 = vmatprep.subr.mxu0 0.0
  %309 = vmatpush2.msra.mxu0 0.0
  %310 = vmatprep.subr.mxu0 0.0
  %311 = vmatpush2.msra.mxu0 0.0
  %312 = vmatprep.subr.mxu0 0.0
  %313 = vmatpush2.msra.mxu0 0.0
  %314 = vmatprep.subr.mxu0 0.0
  %315 = vmatpush2.msra.mxu0 0.0
  %316 = vmatprep.subr.mxu0 0.0
  %317 = vmatpush2.msra.mxu0 0.0
  %318 = vmatprep.subr.mxu0 0.0
  %319 = vmatpush2.msra.mxu0 0.0
  %320 = vmatprep.subr.mxu0 0.0
  %321 = vmatpush2.msra.mxu0 0.0
  %322 = vmatprep.subr.mxu0 0.0
  %323 = vmatpush2.msra.mxu0 0.0
  %324 = vmatprep.subr.mxu0 0.0
  %325 = vmatpush2.msra.mxu0 0.0
  %326 = vmatprep.subr.mxu0 0.0
  %327 = vmatpush2.msra.mxu0 0.0
  %328 = vmatprep.subr.mxu0 0.0
  %329 = vmatpush2.msra.mxu0 0.0
  %330 = vmatprep.subr.mxu0 0.0
  %331 = vmatpush2.msra.mxu0 0.0
  %332 = vmatprep.subr.mxu0 0.0
  %333 = vmatpush2.msra.mxu0 0.0
  %334 = vmatprep.subr.mxu0 0.0
  %335 = vmatpush2.msra.mxu0 0.0
  %336 = vmatprep.subr.mxu0 0.0
  %337 = vmatpush2.msra.mxu0 0.0
  %338 = vmatprep.subr.mxu0 0.0
  %339 = vmatpush2.msra.mxu0 0.0
  %340 = vmatprep.mubr.f32.mxu0 0.0
  %341 = vmatmul.mubr.f32.gmra.mxu0 %v132
  %v342 = vpop.f32.mrf.mxu0
  %v343 = vadd.f32 0.0, %v342
  %v344 = vpop.f32.mrf.mxu0
  %v345 = vadd.f32 0.0, %v344
  %346 = vdwg.mxu0
  %347 = vmatprep.subr.mxu0 0.0
  %348 = vmatpush1.msra.mxu0 0.0
  %349 = vmatprep.subr.mxu0 0.0
  %350 = vmatpush1.msra.mxu0 0.0
  %351 = vmatprep.subr.mxu0 %v129
  %352 = vmatpush1.msra.mxu0 %v128
  %353 = vmatprep.subr.mxu0 %v121
  %354 = vmatpush1.msra.mxu0 %v120
  %355 = vmatprep.subr.mxu0 %v113
  %356 = vmatpush1.msra.mxu0 %v112
  %357 = vmatprep.subr.mxu0 %v105
  %358 = vmatpush1.msra.mxu0 %v104
  %359 = vmatprep.subr.mxu0 %v97
  %360 = vmatpush1.msra.mxu0 %v96
  %361 = vmatprep.subr.mxu0 %v89
  %362 = vmatpush1.msra.mxu0 %v88
  %363 = vmatprep.subr.mxu0 %v81
  %364 = vmatpush1.msra.mxu0 %v80
  %365 = vmatprep.subr.mxu0 %v73
  %366 = vmatpush1.msra.mxu0 %v72
  %367 = vmatprep.subr.mxu0 %v65
  %368 = vmatpush1.msra.mxu0 %v64
  %369 = vmatprep.subr.mxu0 %v57
  %370 = vmatpush1.msra.mxu0 %v56
  %371 = vmatprep.subr.mxu0 %v49
  %372 = vmatpush1.msra.mxu0 %v48
  %373 = vmatprep.subr.mxu0 %v41
  %374 = vmatpush1.msra.mxu0 %v40
  %375 = vmatprep.subr.mxu0 %v33
  %376 = vmatpush1.msra.mxu0 %v32
  %377 = vmatprep.subr.mxu0 %v25
  %378 = vmatpush1.msra.mxu0 %v24
  %379 = vmatprep.subr.mxu0 0.0
  %380 = vmatpush2.msra.mxu0 0.0
  %381 = vmatprep.subr.mxu0 0.0
  %382 = vmatpush2.msra.mxu0 0.0
  %383 = vmatprep.subr.mxu0 0.0
  %384 = vmatpush2.msra.mxu0 0.0
  %385 = vmatprep.subr.mxu0 0.0
  %386 = vmatpush2.msra.mxu0 0.0
  %387 = vmatprep.subr.mxu0 0.0
  %388 = vmatpush2.msra.mxu0 0.0
  %389 = vmatprep.subr.mxu0 0.0
  %390 = vmatpush2.msra.mxu0 0.0
  %391 = vmatprep.subr.mxu0 0.0
  %392 = vmatpush2.msra.mxu0 0.0
  %393 = vmatprep.subr.mxu0 0.0
  %394 = vmatpush2.msra.mxu0 0.0
  %395 = vmatprep.subr.mxu0 0.0
  %396 = vmatpush2.msra.mxu0 0.0
  %397 = vmatprep.subr.mxu0 0.0
  %398 = vmatpush2.msra.mxu0 0.0
  %399 = vmatprep.subr.mxu0 0.0
  %400 = vmatpush2.msra.mxu0 0.0
  %401 = vmatprep.subr.mxu0 0.0
  %402 = vmatpush2.msra.mxu0 0.0
  %403 = vmatprep.subr.mxu0 0.0
  %404 = vmatpush2.msra.mxu0 0.0
  %405 = vmatprep.subr.mxu0 0.0
  %406 = vmatpush2.msra.mxu0 0.0
  %407 = vmatprep.subr.mxu0 0.0
  %408 = vmatpush2.msra.mxu0 0.0
  %409 = vmatprep.subr.mxu0 0.0
  %410 = vmatpush2.msra.mxu0 0.0
  %411 = vmatprep.mubr.f32.mxu0 0.0
  %412 = vmatmul.mubr.f32.gmra.mxu0 %v132
  %v413 = vpop.f32.mrf.mxu0
  %v414 = vadd.f32 0.0, %v413
  %v415 = vpop.f32.mrf.mxu0
  %v416 = vadd.f32 0.0, %v415
  %417 = vdwg.mxu0
  %v418 = vld [vmem:[%s2] sm:$0xff]
  %420 = vset.pattern.permute.xlu0 0
  %421 = vperm.xlu0 %420, %v418
  %v422 = vpop.permute.xlu0 %421
  %v424 = vmul.f32 %v201, %v422
  %v425 = vmul.f32 %v203, %v422
  %v426 = vmul.f32 %v272, %v422
  %v427 = vmul.f32 %v274, %v422
  %v428 = vmul.f32 %v343, %v422
  %v429 = vmul.f32 %v345, %v422
  %v430 = vmul.f32 %v414, %v422
  %v431 = vmul.f32 %v416, %v422
  %432 = vset.pattern.permute.xlu0 1
  %433 = vperm.xlu0 %432, %v418
  %v434 = vpop.permute.xlu0 %433
  %v436 = vadd.f32 %v424, %v434
  %v437 = vadd.f32 %v425, %v434
  %v438 = vadd.f32 %v426, %v434
  %v439 = vadd.f32 %v427, %v434
  %v440 = vadd.f32 %v428, %v434
  %v441 = vadd.f32 %v429, %v434
  %v442 = vadd.f32 %v430, %v434
  %v443 = vadd.f32 %v431, %v434
  %vm444 = vcmp.gt.f32.partialorder %v436, 0.0
  %vm445 = vcmp.gt.f32.partialorder %v437, 0.0
  %vm446 = vcmp.gt.f32.partialorder %v438, 0.0
  %vm447 = vcmp.gt.f32.partialorder %v439, 0.0
  %vm448 = vcmp.gt.f32.partialorder %v440, 0.0
  %vm449 = vcmp.gt.f32.partialorder %v441, 0.0
  %vm450 = vcmp.gt.f32.partialorder %v442, 0.0
  %vm451 = vcmp.gt.f32.partialorder %v443, 0.0
  %v452 = vmul.f32 %v436, 0.2
  %v453 = vmul.f32 %v437, 0.2
  %v454 = vmul.f32 %v438, 0.2
  %v455 = vmul.f32 %v439, 0.2
  %v456 = vmul.f32 %v440, 0.2
  %v457 = vmul.f32 %v441, 0.2
  %v458 = vmul.f32 %v442, 0.2
  %v459 = vmul.f32 %v443, 0.2
  %v460 = vsel %vm444, %v436, %v452
  %v461 = vsel %vm445, %v437, %v453
  %v462 = vsel %vm446, %v438, %v454
  %v463 = vsel %vm447, %v439, %v455
  %v464 = vsel %vm448, %v440, %v456
  %v465 = vsel %vm449, %v441, %v457
  %v466 = vsel %vm450, %v442, %v458
  %v467 = vsel %vm451, %v443, %v459
  %v468 = vld [vmem:[%s3] sm:$0xff]
  %v469 = vld [vmem:[%s3 + $0x8] sm:$0xff]
  %v470 = vld [vmem:[%s3 + $0x10] sm:$0xff]
  %v471 = vld [vmem:[%s3 + $0x18] sm:$0xff]
  %v472 = vld [vmem:[%s3 + $0x20] sm:$0xff]
  %v473 = vld [vmem:[%s3 + $0x28] sm:$0xff]
  %v474 = vld [vmem:[%s3 + $0x30] sm:$0xff]
  %v475 = vld [vmem:[%s3 + $0x38] sm:$0xff]
  %v476 = vadd.f32 %v460, %v468
  %v477 = vadd.f32 %v461, %v469
  %v478 = vadd.f32 %v462, %v470
  %v479 = vadd.f32 %v463, %v471
  %v480 = vadd.f32 %v464, %v472
  %v481 = vadd.f32 %v465, %v473
  %v482 = vadd.f32 %v466, %v474
  %v483 = vadd.f32 %v467, %v475
  %484 = vst [vmem:[%s4] sm:$0xff] %v476
  %485 = vst [vmem:[%s4 + $0x8] sm:$0xff] %v477
  %486 = vst [vmem:[%s4 + $0x10] sm:$0xff] %v478
  %487 = vst [vmem:[%s4 + $0x18] sm:$0xff] %v479
  %488 = vst [vmem:[%s4 + $0x20] sm:$0xff] %v480
  %489 = vst [vmem:[%s4 + $0x28] sm:$0xff] %v481
  %490 = vst [vmem:[%s4 + $0x30] sm:$0xff] %v482
  %491 = vst [vmem:[%s4 + $0x38] sm:$0xff] %v483
  // Predicated region
  $region18: #{encoder_forward.22} parent=0 // pred_check
    _
  $region19: #{encoder_forward.22} parent=0 // pred_check_branch
    %493 = sbr.rel (0) target = $region21
  $region20: #{encoder_forward.22} parent=0 // pred_region
    _
  $region21: #{encoder_forward.22} parent=0 // pred_fallthru
    _
  // Predicated region
  $region22: #{encoder_forward.22} parent=0 // pred_check
    _
  $region23: #{encoder_forward.22} parent=0 // pred_check_branch
    %495 = sbr.rel (0) target = $region25
  $region24: #{encoder_forward.22} parent=0 // pred_region
    _
  $region25: #{encoder_forward.22} parent=0 // pred_fallthru
    _

// kernel: encoder_forward.23
$region0: #{encoder_forward.23}
  #allocation0 [shape = 'u32[]', space=smem, size = 0x4, offset = 0x4, fixed_abs, tag = 'smem constant byte address 0x4 - core index']
  #allocation1 [shape = 'u32[144,128]{1,0:T(1,128)}', space=vmem, size = 0x12000, scoped, tag = 'internal scratch']
  %s0 = inlined_call_operand.vmem [shape: f32[8,112], index: 0, kind: input, shape index: {}]
  %s1 = inlined_call_operand.vmem [shape: f32[112,128], index: 1, kind: input, shape index: {}]
  %s2 = inlined_call_operand.vmem [shape: f32[8,2], index: 2, kind: input, shape index: {}]
  %s3 = inlined_call_operand.vmem [shape: f32[8,128], index: 3, kind: output, shape index: {}]
  %s4 = sld [smem:[#allocation0]]
  $region22: #{encoder_forward.23} parent=0
    _
  %s6 = ssub.s32 1, %s4
  %s7 = scalar_select 0, %s6, %s4
  // Predicated region
  $region2: #{encoder_forward.23} parent=0 // pred_check
    _
  $region3: #{encoder_forward.23} parent=0 // pred_check_branch
    %9 = sbr.rel (0) target = $region5
  $region4: #{encoder_forward.23} parent=0 // pred_region
    _
  $region5: #{encoder_forward.23} parent=0 // pred_fallthru
    _
  // Predicated region
  $region6: #{encoder_forward.23} parent=0 // pred_check
    _
  $region7: #{encoder_forward.23} parent=0 // pred_check_branch
    %11 = sbr.rel (0) target = $region9
  $region8: #{encoder_forward.23} parent=0 // pred_region
    _
  $region9: #{encoder_forward.23} parent=0 // pred_fallthru
    _
  // Predicated region
  $region10: #{encoder_forward.23} parent=0 // pred_check
    _
  $region11: #{encoder_forward.23} parent=0 // pred_check_branch
    %13 = sbr.rel (0) target = $region13
  $region12: #{encoder_forward.23} parent=0 // pred_region
    _
  $region13: #{encoder_forward.23} parent=0 // pred_fallthru
    _
  %v14 = vld [vmem:[%s0] sm:$0xff]
  %v15 = vld [vmem:[%s1] sm:$0xff]
  %v16 = vld [vmem:[%s1 + $0x8] sm:$0xff]
  %v17 = vld [vmem:[%s1 + $0x10] sm:$0xff]
  %v18 = vld [vmem:[%s1 + $0x18] sm:$0xff]
  %v19 = vld [vmem:[%s1 + $0x20] sm:$0xff]
  %v20 = vld [vmem:[%s1 + $0x28] sm:$0xff]
  %v21 = vld [vmem:[%s1 + $0x30] sm:$0xff]
  %v22 = vld [vmem:[%s1 + $0x38] sm:$0xff]
  %v23 = vld [vmem:[%s1 + $0x40] sm:$0xff]
  %v24 = vld [vmem:[%s1 + $0x48] sm:$0xff]
  %v25 = vld [vmem:[%s1 + $0x50] sm:$0xff]
  %v26 = vld [vmem:[%s1 + $0x58] sm:$0xff]
  %v27 = vld [vmem:[%s1 + $0x60] sm:$0xff]
  %v28 = vld [vmem:[%s1 + $0x68] sm:$0xff]
  %vm29 = vcmask 916480
  %v31 = vsel %vm29, %v14, 0
  %33 = vmatprep.subr.mxu0 0.0
  %34 = vmatpush1.msra.mxu0 0.0
  %35 = vmatprep.subr.mxu0 0.0
  %36 = vmatpush1.msra.mxu0 0.0
  %37 = vmatprep.subr.mxu0 0.0
  %38 = vmatpush1.msra.mxu0 %v28
  %39 = vmatprep.subr.mxu0 0.0
  %40 = vmatpush1.msra.mxu0 %v27
  %41 = vmatprep.subr.mxu0 0.0
  %42 = vmatpush1.msra.mxu0 %v26
  %43 = vmatprep.subr.mxu0 0.0
  %44 = vmatpush1.msra.mxu0 %v25
  %45 = vmatprep.subr.mxu0 0.0
  %46 = vmatpush1.msra.mxu0 %v24
  %47 = vmatprep.subr.mxu0 0.0
  %48 = vmatpush1.msra.mxu0 %v23
  %49 = vmatprep.subr.mxu0 0.0
  %50 = vmatpush1.msra.mxu0 %v22
  %51 = vmatprep.subr.mxu0 0.0
  %52 = vmatpush1.msra.mxu0 %v21
  %53 = vmatprep.subr.mxu0 0.0
  %54 = vmatpush1.msra.mxu0 %v20
  %55 = vmatprep.subr.mxu0 0.0
  %56 = vmatpush1.msra.mxu0 %v19
  %57 = vmatprep.subr.mxu0 0.0
  %58 = vmatpush1.msra.mxu0 %v18
  %59 = vmatprep.subr.mxu0 0.0
  %60 = vmatpush1.msra.mxu0 %v17
  %61 = vmatprep.subr.mxu0 0.0
  %62 = vmatpush1.msra.mxu0 %v16
  %63 = vmatprep.subr.mxu0 0.0
  %64 = vmatpush1.msra.mxu0 %v15
  %65 = vmatprep.subr.mxu0 0.0
  %66 = vmatpush2.msra.mxu0 0.0
  %67 = vmatprep.subr.mxu0 0.0
  %68 = vmatpush2.msra.mxu0 0.0
  %69 = vmatprep.subr.mxu0 0.0
  %70 = vmatpush2.msra.mxu0 0.0
  %71 = vmatprep.subr.mxu0 0.0
  %72 = vmatpush2.msra.mxu0 0.0
  %73 = vmatprep.subr.mxu0 0.0
  %74 = vmatpush2.msra.mxu0 0.0
  %75 = vmatprep.subr.mxu0 0.0
  %76 = vmatpush2.msra.mxu0 0.0
  %77 = vmatprep.subr.mxu0 0.0
  %78 = vmatpush2.msra.mxu0 0.0
  %79 = vmatprep.subr.mxu0 0.0
  %80 = vmatpush2.msra.mxu0 0.0
  %81 = vmatprep.subr.mxu0 0.0
  %82 = vmatpush2.msra.mxu0 0.0
  %83 = vmatprep.subr.mxu0 0.0
  %84 = vmatpush2.msra.mxu0 0.0
  %85 = vmatprep.subr.mxu0 0.0
  %86 = vmatpush2.msra.mxu0 0.0
  %87 = vmatprep.subr.mxu0 0.0
  %88 = vmatpush2.msra.mxu0 0.0
  %89 = vmatprep.subr.mxu0 0.0
  %90 = vmatpush2.msra.mxu0 0.0
  %91 = vmatprep.subr.mxu0 0.0
  %92 = vmatpush2.msra.mxu0 0.0
  %93 = vmatprep.subr.mxu0 0.0
  %94 = vmatpush2.msra.mxu0 0.0
  %95 = vmatprep.subr.mxu0 0.0
  %96 = vmatpush2.msra.mxu0 0.0
  %97 = vmatprep.mubr.f32.mxu0 0.0
  %98 = vmatmul.mubr.f32.gmra.mxu0 %v31
  %v99 = vpop.f32.mrf.mxu0
  %v100 = vadd.f32 0.0, %v99
  %v101 = vpop.f32.mrf.mxu0
  %102 = vdwg.mxu0
  %v103 = vld [vmem:[%s2] sm:$0xff]
  %105 = vset.pattern.permute.xlu0 0
  %106 = vperm.xlu0 %105, %v103
  %v107 = vpop.permute.xlu0 %106
  %v109 = vmul.f32 %v100, %v107
  %110 = vset.pattern.permute.xlu0 1
  %111 = vperm.xlu0 %110, %v103
  %v112 = vpop.permute.xlu0 %111
  %v114 = vadd.f32 %v109, %v112
  %vm115 = vcmp.gt.f32.partialorder %v114, 0.0
  %v116 = vmul.f32 %v114, 0.2
  %v117 = vsel %vm115, %v114, %v116
  %118 = vst [vmem:[%s3] sm:$0xff] %v117
  // Predicated region
  $region14: #{encoder_forward.23} parent=0 // pred_check
    _
  $region15: #{encoder_forward.23} parent=0 // pred_check_branch
    %120 = sbr.rel (0) target = $region17
  $region16: #{encoder_forward.23} parent=0 // pred_region
    _
  $region17: #{encoder_forward.23} parent=0 // pred_fallthru
    _
  // Predicated region
  $region18: #{encoder_forward.23} parent=0 // pred_check
    _
  $region19: #{encoder_forward.23} parent=0 // pred_check_branch
    %122 = sbr.rel (0) target = $region21
  $region20: #{encoder_forward.23} parent=0 // pred_region
    _
  $region21: #{encoder_forward.23} parent=0 // pred_fallthru
    _

// kernel: encoder_forward.25
$region0: #{encoder_forward.25}
  #allocation0 [shape = 'u32[]', space=smem, size = 0x4, offset = 0x4, fixed_abs, tag = 'smem constant byte address 0x4 - core index']
  #allocation1 [shape = 'u32[144,128]{1,0:T(1,128)}', space=vmem, size = 0x12000, scoped, tag = 'internal scratch']
  %s0 = inlined_call_operand.vmem [shape: f32[8,112], index: 0, kind: input, shape index: {}]
  %s1 = inlined_call_operand.vmem [shape: f32[112,128], index: 1, kind: input, shape index: {}]
  %s2 = inlined_call_operand.vmem [shape: f32[8,2], index: 2, kind: input, shape index: {}]
  %s3 = inlined_call_operand.vmem [shape: f32[8,128], index: 3, kind: input, shape index: {}]
  %s4 = inlined_call_operand.vmem [shape: f32[8,128], index: 4, kind: output, shape index: {}]
  %s5 = sld [smem:[#allocation0]]
  $region26: #{encoder_forward.25} parent=0
    _
  %s7 = ssub.s32 1, %s5
  %s8 = scalar_select 0, %s7, %s5
  // Predicated region
  $region2: #{encoder_forward.25} parent=0 // pred_check
    _
  $region3: #{encoder_forward.25} parent=0 // pred_check_branch
    %10 = sbr.rel (0) target = $region5
  $region4: #{encoder_forward.25} parent=0 // pred_region
    _
  $region5: #{encoder_forward.25} parent=0 // pred_fallthru
    _
  // Predicated region
  $region6: #{encoder_forward.25} parent=0 // pred_check
    _
  $region7: #{encoder_forward.25} parent=0 // pred_check_branch
    %12 = sbr.rel (0) target = $region9
  $region8: #{encoder_forward.25} parent=0 // pred_region
    _
  $region9: #{encoder_forward.25} parent=0 // pred_fallthru
    _
  // Predicated region
  $region10: #{encoder_forward.25} parent=0 // pred_check
    _
  $region11: #{encoder_forward.25} parent=0 // pred_check_branch
    %14 = sbr.rel (0) target = $region13
  $region12: #{encoder_forward.25} parent=0 // pred_region
    _
  $region13: #{encoder_forward.25} parent=0 // pred_fallthru
    _
  // Predicated region
  $region14: #{encoder_forward.25} parent=0 // pred_check
    _
  $region15: #{encoder_forward.25} parent=0 // pred_check_branch
    %16 = sbr.rel (0) target = $region17
  $region16: #{encoder_forward.25} parent=0 // pred_region
    _
  $region17: #{encoder_forward.25} parent=0 // pred_fallthru
    _
  %v17 = vld [vmem:[%s0] sm:$0xff]
  %v18 = vld [vmem:[%s1] sm:$0xff]
  %v19 = vld [vmem:[%s1 + $0x8] sm:$0xff]
  %v20 = vld [vmem:[%s1 + $0x10] sm:$0xff]
  %v21 = vld [vmem:[%s1 + $0x18] sm:$0xff]
  %v22 = vld [vmem:[%s1 + $0x20] sm:$0xff]
  %v23 = vld [vmem:[%s1 + $0x28] sm:$0xff]
  %v24 = vld [vmem:[%s1 + $0x30] sm:$0xff]
  %v25 = vld [vmem:[%s1 + $0x38] sm:$0xff]
  %v26 = vld [vmem:[%s1 + $0x40] sm:$0xff]
  %v27 = vld [vmem:[%s1 + $0x48] sm:$0xff]
  %v28 = vld [vmem:[%s1 + $0x50] sm:$0xff]
  %v29 = vld [vmem:[%s1 + $0x58] sm:$0xff]
  %v30 = vld [vmem:[%s1 + $0x60] sm:$0xff]
  %v31 = vld [vmem:[%s1 + $0x68] sm:$0xff]
  %vm32 = vcmask 916480
  %v34 = vsel %vm32, %v17, 0
  %36 = vmatprep.subr.mxu0 0.0
  %37 = vmatpush1.msra.mxu0 0.0
  %38 = vmatprep.subr.mxu0 0.0
  %39 = vmatpush1.msra.mxu0 0.0
  %40 = vmatprep.subr.mxu0 0.0
  %41 = vmatpush1.msra.mxu0 %v31
  %42 = vmatprep.subr.mxu0 0.0
  %43 = vmatpush1.msra.mxu0 %v30
  %44 = vmatprep.subr.mxu0 0.0
  %45 = vmatpush1.msra.mxu0 %v29
  %46 = vmatprep.subr.mxu0 0.0
  %47 = vmatpush1.msra.mxu0 %v28
  %48 = vmatprep.subr.mxu0 0.0
  %49 = vmatpush1.msra.mxu0 %v27
  %50 = vmatprep.subr.mxu0 0.0
  %51 = vmatpush1.msra.mxu0 %v26
  %52 = vmatprep.subr.mxu0 0.0
  %53 = vmatpush1.msra.mxu0 %v25
  %54 = vmatprep.subr.mxu0 0.0
  %55 = vmatpush1.msra.mxu0 %v24
  %56 = vmatprep.subr.mxu0 0.0
  %57 = vmatpush1.msra.mxu0 %v23
  %58 = vmatprep.subr.mxu0 0.0
  %59 = vmatpush1.msra.mxu0 %v22
  %60 = vmatprep.subr.mxu0 0.0
  %61 = vmatpush1.msra.mxu0 %v21
  %62 = vmatprep.subr.mxu0 0.0
  %63 = vmatpush1.msra.mxu0 %v20
  %64 = vmatprep.subr.mxu0 0.0
  %65 = vmatpush1.msra.mxu0 %v19
  %66 = vmatprep.subr.mxu0 0.0
  %67 = vmatpush1.msra.mxu0 %v18
  %68 = vmatprep.subr.mxu0 0.0
  %69 = vmatpush2.msra.mxu0 0.0
  %70 = vmatprep.subr.mxu0 0.0
  %71 = vmatpush2.msra.mxu0 0.0
  %72 = vmatprep.subr.mxu0 0.0
  %73 = vmatpush2.msra.mxu0 0.0
  %74 = vmatprep.subr.mxu0 0.0
  %75 = vmatpush2.msra.mxu0 0.0
  %76 = vmatprep.subr.mxu0 0.0
  %77 = vmatpush2.msra.mxu0 0.0
  %78 = vmatprep.subr.mxu0 0.0
  %79 = vmatpush2.msra.mxu0 0.0
  %80 = vmatprep.subr.mxu0 0.0
  %81 = vmatpush2.msra.mxu0 0.0
  %82 = vmatprep.subr.mxu0 0.0
  %83 = vmatpush2.msra.mxu0 0.0
  %84 = vmatprep.subr.mxu0 0.0
  %85 = vmatpush2.msra.mxu0 0.0
  %86 = vmatprep.subr.mxu0 0.0
  %87 = vmatpush2.msra.mxu0 0.0
  %88 = vmatprep.subr.mxu0 0.0
  %89 = vmatpush2.msra.mxu0 0.0
  %90 = vmatprep.subr.mxu0 0.0
  %91 = vmatpush2.msra.mxu0 0.0
  %92 = vmatprep.subr.mxu0 0.0
  %93 = vmatpush2.msra.mxu0 0.0
  %94 = vmatprep.subr.mxu0 0.0
  %95 = vmatpush2.msra.mxu0 0.0
  %96 = vmatprep.subr.mxu0 0.0
  %97 = vmatpush2.msra.mxu0 0.0
  %98 = vmatprep.subr.mxu0 0.0
  %99 = vmatpush2.msra.mxu0 0.0
  %100 = vmatprep.mubr.f32.mxu0 0.0
  %101 = vmatmul.mubr.f32.gmra.mxu0 %v34
  %v102 = vpop.f32.mrf.mxu0
  %v103 = vadd.f32 0.0, %v102
  %v104 = vpop.f32.mrf.mxu0
  %105 = vdwg.mxu0
  %v106 = vld [vmem:[%s2] sm:$0xff]
  %108 = vset.pattern.permute.xlu0 0
  %109 = vperm.xlu0 %108, %v106
  %v110 = vpop.permute.xlu0 %109
  %v112 = vmul.f32 %v103, %v110
  %113 = vset.pattern.permute.xlu0 1
  %114 = vperm.xlu0 %113, %v106
  %v115 = vpop.permute.xlu0 %114
  %v117 = vadd.f32 %v112, %v115
  %vm118 = vcmp.gt.f32.partialorder %v117, 0.0
  %v119 = vmul.f32 %v117, 0.2
  %v120 = vsel %vm118, %v117, %v119
  %v121 = vld [vmem:[%s3] sm:$0xff]
  %v122 = vadd.f32 %v120, %v121
  %123 = vst [vmem:[%s4] sm:$0xff] %v122
  // Predicated region
  $region18: #{encoder_forward.25} parent=0 // pred_check
    _
  $region19: #{encoder_forward.25} parent=0 // pred_check_branch
    %125 = sbr.rel (0) target = $region21
  $region20: #{encoder_forward.25} parent=0 // pred_region
    _
  $region21: #{encoder_forward.25} parent=0 // pred_fallthru
    _
  // Predicated region
  $region22: #{encoder_forward.25} parent=0 // pred_check
    _
  $region23: #{encoder_forward.25} parent=0 // pred_check_branch
    %127 = sbr.rel (0) target = $region25
  $region24: #{encoder_forward.25} parent=0 // pred_region
    _
  $region25: #{encoder_forward.25} parent=0 // pred_fallthru
    _

// kernel: encoder_forward.26
$region0: #{encoder_forward.26}
  #allocation0 [shape = 'u32[]', space=smem, size = 0x4, offset = 0x4, fixed_abs, tag = 'smem constant byte address 0x4 - core index']
  #allocation1 [shape = 'u32[144,128]{1,0:T(1,128)}', space=vmem, size = 0x12000, scoped, tag = 'internal scratch']
  %s0 = inlined_call_operand.vmem [shape: f32[8,216], index: 0, kind: input, shape index: {}]
  %s1 = inlined_call_operand.vmem [shape: f32[216,128], index: 1, kind: input, shape index: {}]
  %s2 = inlined_call_operand.vmem [shape: f32[8,2], index: 2, kind: input, shape index: {}]
  %s3 = inlined_call_operand.vmem [shape: f32[8,128], index: 3, kind: output, shape index: {}]
  %s4 = sld [smem:[#allocation0]]
  $region22: #{encoder_forward.26} parent=0
    _
  %s6 = ssub.s32 1, %s4
  %s7 = scalar_select 0, %s6, %s4
  // Predicated region
  $region2: #{encoder_forward.26} parent=0 // pred_check
    _
  $region3: #{encoder_forward.26} parent=0 // pred_check_branch
    %9 = sbr.rel (0) target = $region5
  $region4: #{encoder_forward.26} parent=0 // pred_region
    _
  $region5: #{encoder_forward.26} parent=0 // pred_fallthru
    _
  // Predicated region
  $region6: #{encoder_forward.26} parent=0 // pred_check
    _
  $region7: #{encoder_forward.26} parent=0 // pred_check_branch
    %11 = sbr.rel (0) target = $region9
  $region8: #{encoder_forward.26} parent=0 // pred_region
    _
  $region9: #{encoder_forward.26} parent=0 // pred_fallthru
    _
  // Predicated region
  $region10: #{encoder_forward.26} parent=0 // pred_check
    _
  $region11: #{encoder_forward.26} parent=0 // pred_check_branch
    %13 = sbr.rel (0) target = $region13
  $region12: #{encoder_forward.26} parent=0 // pred_region
    _
  $region13: #{encoder_forward.26} parent=0 // pred_fallthru
    _
  %v14 = vld [vmem:[%s0] sm:$0xff]
  %v15 = vld [vmem:[%s0 + $0x8] sm:$0xff]
  %v16 = vld [vmem:[%s1] sm:$0xff]
  %v17 = vld [vmem:[%s1 + $0x8] sm:$0xff]
  %v18 = vld [vmem:[%s1 + $0x10] sm:$0xff]
  %v19 = vld [vmem:[%s1 + $0x18] sm:$0xff]
  %v20 = vld [vmem:[%s1 + $0x20] sm:$0xff]
  %v21 = vld [vmem:[%s1 + $0x28] sm:$0xff]
  %v22 = vld [vmem:[%s1 + $0x30] sm:$0xff]
  %v23 = vld [vmem:[%s1 + $0x38] sm:$0xff]
  %v24 = vld [vmem:[%s1 + $0x40] sm:$0xff]
  %v25 = vld [vmem:[%s1 + $0x48] sm:$0xff]
  %v26 = vld [vmem:[%s1 + $0x50] sm:$0xff]
  %v27 = vld [vmem:[%s1 + $0x58] sm:$0xff]
  %v28 = vld [vmem:[%s1 + $0x60] sm:$0xff]
  %v29 = vld [vmem:[%s1 + $0x68] sm:$0xff]
  %v30 = vld [vmem:[%s1 + $0x70] sm:$0xff]
  %v31 = vld [vmem:[%s1 + $0x78] sm:$0xff]
  %v32 = vld [vmem:[%s1 + $0x80] sm:$0xff]
  %v33 = vld [vmem:[%s1 + $0x88] sm:$0xff]
  %v34 = vld [vmem:[%s1 + $0x90] sm:$0xff]
  %v35 = vld [vmem:[%s1 + $0x98] sm:$0xff]
  %v36 = vld [vmem:[%s1 + $0xa0] sm:$0xff]
  %v37 = vld [vmem:[%s1 + $0xa8] sm:$0xff]
  %v38 = vld [vmem:[%s1 + $0xb0] sm:$0xff]
  %v39 = vld [vmem:[%s1 + $0xb8] sm:$0xff]
  %v40 = vld [vmem:[%s1 + $0xc0] sm:$0xff]
  %v41 = vld [vmem:[%s1 + $0xc8] sm:$0xff]
  %v42 = vld [vmem:[%s1 + $0xd0] sm:$0xff]
  %vm43 = vcmask 719872
  %v45 = vsel %vm43, %v15, 0
  %47 = vmatprep.subr.mxu0 0.0
  %48 = vmatpush1.msra.mxu0 %v31
  %49 = vmatprep.subr.mxu0 0.0
  %50 = vmatpush1.msra.mxu0 %v30
  %51 = vmatprep.subr.mxu0 0.0
  %52 = vmatpush1.msra.mxu0 %v29
  %53 = vmatprep.subr.mxu0 0.0
  %54 = vmatpush1.msra.mxu0 %v28
  %55 = vmatprep.subr.mxu0 0.0
  %56 = vmatpush1.msra.mxu0 %v27
  %57 = vmatprep.subr.mxu0 0.0
  %58 = vmatpush1.msra.mxu0 %v26
  %59 = vmatprep.subr.mxu0 0.0
  %60 = vmatpush1.msra.mxu0 %v25
  %61 = vmatprep.subr.mxu0 0.0
  %62 = vmatpush1.msra.mxu0 %v24
  %63 = vmatprep.subr.mxu0 0.0
  %64 = vmatpush1.msra.mxu0 %v23
  %65 = vmatprep.subr.mxu0 0.0
  %66 = vmatpush1.msra.mxu0 %v22
  %67 = vmatprep.subr.mxu0 0.0
  %68 = vmatpush1.msra.mxu0 %v21
  %69 = vmatprep.subr.mxu0 0.0
  %70 = vmatpush1.msra.mxu0 %v20
  %71 = vmatprep.subr.mxu0 0.0
  %72 = vmatpush1.msra.mxu0 %v19
  %73 = vmatprep.subr.mxu0 0.0
  %74 = vmatpush1.msra.mxu0 %v18
  %75 = vmatprep.subr.mxu0 0.0
  %76 = vmatpush1.msra.mxu0 %v17
  %77 = vmatprep.subr.mxu0 0.0
  %78 = vmatpush1.msra.mxu0 %v16
  %79 = vmatprep.subr.mxu0 0.0
  %80 = vmatpush2.msra.mxu0 0.0
  %81 = vmatprep.subr.mxu0 0.0
  %82 = vmatpush2.msra.mxu0 0.0
  %83 = vmatprep.subr.mxu0 0.0
  %84 = vmatpush2.msra.mxu0 0.0
  %85 = vmatprep.subr.mxu0 0.0
  %86 = vmatpush2.msra.mxu0 0.0
  %87 = vmatprep.subr.mxu0 0.0
  %88 = vmatpush2.msra.mxu0 0.0
  %89 = vmatprep.subr.mxu0 0.0
  %90 = vmatpush2.msra.mxu0 %v42
  %91 = vmatprep.subr.mxu0 0.0
  %92 = vmatpush2.msra.mxu0 %v41
  %93 = vmatprep.subr.mxu0 0.0
  %94 = vmatpush2.msra.mxu0 %v40
  %95 = vmatprep.subr.mxu0 0.0
  %96 = vmatpush2.msra.mxu0 %v39
  %97 = vmatprep.subr.mxu0 0.0
  %98 = vmatpush2.msra.mxu0 %v38
  %99 = vmatprep.subr.mxu0 0.0
  %100 = vmatpush2.msra.mxu0 %v37
  %101 = vmatprep.subr.mxu0 0.0
  %102 = vmatpush2.msra.mxu0 %v36
  %103 = vmatprep.subr.mxu0 0.0
  %104 = vmatpush2.msra.mxu0 %v35
  %105 = vmatprep.subr.mxu0 0.0
  %106 = vmatpush2.msra.mxu0 %v34
  %107 = vmatprep.subr.mxu0 0.0
  %108 = vmatpush2.msra.mxu0 %v33
  %109 = vmatprep.subr.mxu0 0.0
  %110 = vmatpush2.msra.mxu0 %v32
  %111 = vmatprep.mubr.f32.mxu0 %v45
  %112 = vmatmul.mubr.f32.gmra.mxu0 %v14
  %v113 = vpop.f32.mrf.mxu0
  %v114 = vadd.f32 0.0, %v113
  %v115 = vpop.f32.mrf.mxu0
  %116 = vdwg.mxu0
  %v117 = vld [vmem:[%s2] sm:$0xff]
  %119 = vset.pattern.permute.xlu0 0
  %120 = vperm.xlu0 %119, %v117
  %v121 = vpop.permute.xlu0 %120
  %v123 = vmul.f32 %v114, %v121
  %124 = vset.pattern.permute.xlu0 1
  %125 = vperm.xlu0 %124, %v117
  %v126 = vpop.permute.xlu0 %125
  %v128 = vadd.f32 %v123, %v126
  %vm129 = vcmp.gt.f32.partialorder %v128, 0.0
  %v130 = vmul.f32 %v128, 0.2
  %v131 = vsel %vm129, %v128, %v130
  %132 = vst [vmem:[%s3] sm:$0xff] %v131
  // Predicated region
  $region14: #{encoder_forward.26} parent=0 // pred_check
    _
  $region15: #{encoder_forward.26} parent=0 // pred_check_branch
    %134 = sbr.rel (0) target = $region17
  $region16: #{encoder_forward.26} parent=0 // pred_region
    _
  $region17: #{encoder_forward.26} parent=0 // pred_fallthru
    _
  // Predicated region
  $region18: #{encoder_forward.26} parent=0 // pred_check
    _
  $region19: #{encoder_forward.26} parent=0 // pred_check_branch
    %136 = sbr.rel (0) target = $region21
  $region20: #{encoder_forward.26} parent=0 // pred_region
    _
  $region21: #{encoder_forward.26} parent=0 // pred_fallthru
    _

// kernel: encoder_forward.27
$region0: #{encoder_forward.27}
  #allocation0 [shape = 'u32[]', space=smem, size = 0x4, offset = 0x4, fixed_abs, tag = 'smem constant byte address 0x4 - core index']
  #allocation1 [shape = 'u32[144,128]{1,0:T(1,128)}', space=vmem, size = 0x12000, scoped, tag = 'internal scratch']
  %s0 = inlined_call_operand.vmem [shape: f32[16,216], index: 0, kind: input, shape index: {}]
  %s1 = inlined_call_operand.vmem [shape: f32[216,128], index: 1, kind: input, shape index: {}]
  %s2 = inlined_call_operand.vmem [shape: f32[16,2], index: 2, kind: input, shape index: {}]
  %s3 = inlined_call_operand.vmem [shape: f32[16,128], index: 3, kind: output, shape index: {}]
  %s4 = sld [smem:[#allocation0]]
  $region22: #{encoder_forward.27} parent=0
    _
  %s6 = ssub.s32 1, %s4
  %s7 = scalar_select 0, %s6, %s4
  // Predicated region
  $region2: #{encoder_forward.27} parent=0 // pred_check
    _
  $region3: #{encoder_forward.27} parent=0 // pred_check_branch
    %9 = sbr.rel (0) target = $region5
  $region4: #{encoder_forward.27} parent=0 // pred_region
    _
  $region5: #{encoder_forward.27} parent=0 // pred_fallthru
    _
  // Predicated region
  $region6: #{encoder_forward.27} parent=0 // pred_check
    _
  $region7: #{encoder_forward.27} parent=0 // pred_check_branch
    %11 = sbr.rel (0) target = $region9
  $region8: #{encoder_forward.27} parent=0 // pred_region
    _
  $region9: #{encoder_forward.27} parent=0 // pred_fallthru
    _
  // Predicated region
  $region10: #{encoder_forward.27} parent=0 // pred_check
    _
  $region11: #{encoder_forward.27} parent=0 // pred_check_branch
    %13 = sbr.rel (0) target = $region13
  $region12: #{encoder_forward.27} parent=0 // pred_region
    _
  $region13: #{encoder_forward.27} parent=0 // pred_fallthru
    _
  %v14 = vld [vmem:[%s0] sm:$0xff]
  %v15 = vld [vmem:[%s0 + $0x8] sm:$0xff]
  %v16 = vld [vmem:[%s0 + $0x10] sm:$0xff]
  %v17 = vld [vmem:[%s0 + $0x18] sm:$0xff]
  %v18 = vld [vmem:[%s1] sm:$0xff]
  %v19 = vld [vmem:[%s1 + $0x8] sm:$0xff]
  %v20 = vld [vmem:[%s1 + $0x10] sm:$0xff]
  %v21 = vld [vmem:[%s1 + $0x18] sm:$0xff]
  %v22 = vld [vmem:[%s1 + $0x20] sm:$0xff]
  %v23 = vld [vmem:[%s1 + $0x28] sm:$0xff]
  %v24 = vld [vmem:[%s1 + $0x30] sm:$0xff]
  %v25 = vld [vmem:[%s1 + $0x38] sm:$0xff]
  %v26 = vld [vmem:[%s1 + $0x40] sm:$0xff]
  %v27 = vld [vmem:[%s1 + $0x48] sm:$0xff]
  %v28 = vld [vmem:[%s1 + $0x50] sm:$0xff]
  %v29 = vld [vmem:[%s1 + $0x58] sm:$0xff]
  %v30 = vld [vmem:[%s1 + $0x60] sm:$0xff]
  %v31 = vld [vmem:[%s1 + $0x68] sm:$0xff]
  %v32 = vld [vmem:[%s1 + $0x70] sm:$0xff]
  %v33 = vld [vmem:[%s1 + $0x78] sm:$0xff]
  %v34 = vld [vmem:[%s1 + $0x80] sm:$0xff]
  %v35 = vld [vmem:[%s1 + $0x88] sm:$0xff]
  %v36 = vld [vmem:[%s1 + $0x90] sm:$0xff]
  %v37 = vld [vmem:[%s1 + $0x98] sm:$0xff]
  %v38 = vld [vmem:[%s1 + $0xa0] sm:$0xff]
  %v39 = vld [vmem:[%s1 + $0xa8] sm:$0xff]
  %v40 = vld [vmem:[%s1 + $0xb0] sm:$0xff]
  %v41 = vld [vmem:[%s1 + $0xb8] sm:$0xff]
  %v42 = vld [vmem:[%s1 + $0xc0] sm:$0xff]
  %v43 = vld [vmem:[%s1 + $0xc8] sm:$0xff]
  %v44 = vld [vmem:[%s1 + $0xd0] sm:$0xff]
  %vm45 = vcmask 719872
  %v47 = vsel %vm45, %v15, 0
  %v50 = vsel %vm45, %v17, 0
  %52 = vmatprep.subr.mxu0 0.0
  %53 = vmatpush1.msra.mxu0 %v33
  %54 = vmatprep.subr.mxu0 0.0
  %55 = vmatpush1.msra.mxu0 %v32
  %56 = vmatprep.subr.mxu0 0.0
  %57 = vmatpush1.msra.mxu0 %v31
  %58 = vmatprep.subr.mxu0 0.0
  %59 = vmatpush1.msra.mxu0 %v30
  %60 = vmatprep.subr.mxu0 0.0
  %61 = vmatpush1.msra.mxu0 %v29
  %62 = vmatprep.subr.mxu0 0.0
  %63 = vmatpush1.msra.mxu0 %v28
  %64 = vmatprep.subr.mxu0 0.0
  %65 = vmatpush1.msra.mxu0 %v27
  %66 = vmatprep.subr.mxu0 0.0
  %67 = vmatpush1.msra.mxu0 %v26
  %68 = vmatprep.subr.mxu0 0.0
  %69 = vmatpush1.msra.mxu0 %v25
  %70 = vmatprep.subr.mxu0 0.0
  %71 = vmatpush1.msra.mxu0 %v24
  %72 = vmatprep.subr.mxu0 0.0
  %73 = vmatpush1.msra.mxu0 %v23
  %74 = vmatprep.subr.mxu0 0.0
  %75 = vmatpush1.msra.mxu0 %v22
  %76 = vmatprep.subr.mxu0 0.0
  %77 = vmatpush1.msra.mxu0 %v21
  %78 = vmatprep.subr.mxu0 0.0
  %79 = vmatpush1.msra.mxu0 %v20
  %80 = vmatprep.subr.mxu0 0.0
  %81 = vmatpush1.msra.mxu0 %v19
  %82 = vmatprep.subr.mxu0 0.0
  %83 = vmatpush1.msra.mxu0 %v18
  %84 = vmatprep.subr.mxu0 0.0
  %85 = vmatpush2.msra.mxu0 0.0
  %86 = vmatprep.subr.mxu0 0.0
  %87 = vmatpush2.msra.mxu0 0.0
  %88 = vmatprep.subr.mxu0 0.0
  %89 = vmatpush2.msra.mxu0 0.0
  %90 = vmatprep.subr.mxu0 0.0
  %91 = vmatpush2.msra.mxu0 0.0
  %92 = vmatprep.subr.mxu0 0.0
  %93 = vmatpush2.msra.mxu0 0.0
  %94 = vmatprep.subr.mxu0 0.0
  %95 = vmatpush2.msra.mxu0 %v44
  %96 = vmatprep.subr.mxu0 0.0
  %97 = vmatpush2.msra.mxu0 %v43
  %98 = vmatprep.subr.mxu0 0.0
  %99 = vmatpush2.msra.mxu0 %v42
  %100 = vmatprep.subr.mxu0 0.0
  %101 = vmatpush2.msra.mxu0 %v41
  %102 = vmatprep.subr.mxu0 0.0
  %103 = vmatpush2.msra.mxu0 %v40
  %104 = vmatprep.subr.mxu0 0.0
  %105 = vmatpush2.msra.mxu0 %v39
  %106 = vmatprep.subr.mxu0 0.0
  %107 = vmatpush2.msra.mxu0 %v38
  %108 = vmatprep.subr.mxu0 0.0
  %109 = vmatpush2.msra.mxu0 %v37
  %110 = vmatprep.subr.mxu0 0.0
  %111 = vmatpush2.msra.mxu0 %v36
  %112 = vmatprep.subr.mxu0 0.0
  %113 = vmatpush2.msra.mxu0 %v35
  %114 = vmatprep.subr.mxu0 0.0
  %115 = vmatpush2.msra.mxu0 %v34
  %116 = vmatprep.mubr.f32.mxu0 %v47
  %117 = vmatmul.mubr.f32.gmra.mxu0 %v14
  %v118 = vpop.f32.mrf.mxu0
  %v119 = vadd.f32 0.0, %v118
  %v120 = vpop.f32.mrf.mxu0
  %121 = vmatprep.mubr.f32.mxu0 %v50
  %122 = vmatmul.mubr.f32.gmra.mxu0 %v16
  %v123 = vpop.f32.mrf.mxu0
  %v124 = vadd.f32 0.0, %v123
  %v125 = vpop.f32.mrf.mxu0
  %126 = vdwg.mxu0
  %v127 = vld [vmem:[%s2] sm:$0xff]
  %v128 = vld [vmem:[%s2 + $0x8] sm:$0xff]
  %130 = vset.pattern.permute.xlu0 0
  %131 = vperm.xlu0 %130, %v127
  %v132 = vpop.permute.xlu0 %131
  %135 = vset.pattern.permute.xlu0 0
  %136 = vperm.xlu0 %135, %v128
  %v137 = vpop.permute.xlu0 %136
  %v139 = vmul.f32 %v119, %v132
  %v140 = vmul.f32 %v124, %v137
  %141 = vset.pattern.permute.xlu0 1
  %142 = vperm.xlu0 %141, %v127
  %v143 = vpop.permute.xlu0 %142
  %145 = vset.pattern.permute.xlu0 1
  %146 = vperm.xlu0 %145, %v128
  %v147 = vpop.permute.xlu0 %146
  %v149 = vadd.f32 %v139, %v143
  %v150 = vadd.f32 %v140, %v147
  %vm151 = vcmp.gt.f32.partialorder %v149, 0.0
  %vm152 = vcmp.gt.f32.partialorder %v150, 0.0
  %v153 = vmul.f32 %v149, 0.2
  %v154 = vmul.f32 %v150, 0.2
  %v155 = vsel %vm151, %v149, %v153
  %v156 = vsel %vm152, %v150, %v154
  %157 = vst [vmem:[%s3] sm:$0xff] %v155
  %158 = vst [vmem:[%s3 + $0x8] sm:$0xff] %v156
  // Predicated region
  $region14: #{encoder_forward.27} parent=0 // pred_check
    _
  $region15: #{encoder_forward.27} parent=0 // pred_check_branch
    %160 = sbr.rel (0) target = $region17
  $region16: #{encoder_forward.27} parent=0 // pred_region
    _
  $region17: #{encoder_forward.27} parent=0 // pred_fallthru
    _
  // Predicated region
  $region18: #{encoder_forward.27} parent=0 // pred_check
    _
  $region19: #{encoder_forward.27} parent=0 // pred_check_branch
    %162 = sbr.rel (0) target = $region21
  $region20: #{encoder_forward.27} parent=0 // pred_region
    _
  $region21: #{encoder_forward.27} parent=0 // pred_fallthru
    _

// kernel: encoder_forward.28
$region0: #{encoder_forward.28}
  #allocation0 [shape = 'u32[]', space=smem, size = 0x4, offset = 0x4, fixed_abs, tag = 'smem constant byte address 0x4 - core index']
  #allocation1 [shape = 'u32[144,128]{1,0:T(1,128)}', space=vmem, size = 0x12000, scoped, tag = 'internal scratch']
  %s0 = inlined_call_operand.vmem [shape: f32[16,216], index: 0, kind: input, shape index: {}]
  %s1 = inlined_call_operand.vmem [shape: f32[216,128], index: 1, kind: input, shape index: {}]
  %s2 = inlined_call_operand.vmem [shape: f32[16,2], index: 2, kind: input, shape index: {}]
  %s3 = inlined_call_operand.vmem [shape: f32[16,128], index: 3, kind: input, shape index: {}]
  %s4 = inlined_call_operand.vmem [shape: f32[16,128], index: 4, kind: output, shape index: {}]
  %s5 = sld [smem:[#allocation0]]
  $region26: #{encoder_forward.28} parent=0
    _
  %s7 = ssub.s32 1, %s5
  %s8 = scalar_select 0, %s7, %s5
  // Predicated region
  $region2: #{encoder_forward.28} parent=0 // pred_check
    _
  $region3: #{encoder_forward.28} parent=0 // pred_check_branch
    %10 = sbr.rel (0) target = $region5
  $region4: #{encoder_forward.28} parent=0 // pred_region
    _
  $region5: #{encoder_forward.28} parent=0 // pred_fallthru
    _
  // Predicated region
  $region6: #{encoder_forward.28} parent=0 // pred_check
    _
  $region7: #{encoder_forward.28} parent=0 // pred_check_branch
    %12 = sbr.rel (0) target = $region9
  $region8: #{encoder_forward.28} parent=0 // pred_region
    _
  $region9: #{encoder_forward.28} parent=0 // pred_fallthru
    _
  // Predicated region
  $region10: #{encoder_forward.28} parent=0 // pred_check
    _
  $region11: #{encoder_forward.28} parent=0 // pred_check_branch
    %14 = sbr.rel (0) target = $region13
  $region12: #{encoder_forward.28} parent=0 // pred_region
    _
  $region13: #{encoder_forward.28} parent=0 // pred_fallthru
    _
  // Predicated region
  $region14: #{encoder_forward.28} parent=0 // pred_check
    _
  $region15: #{encoder_forward.28} parent=0 // pred_check_branch
    %16 = sbr.rel (0) target = $region17
  $region16: #{encoder_forward.28} parent=0 // pred_region
    _
  $region17: #{encoder_forward.28} parent=0 // pred_fallthru
    _
  %v17 = vld [vmem:[%s0] sm:$0xff]
  %v18 = vld [vmem:[%s0 + $0x8] sm:$0xff]
  %v19 = vld [vmem:[%s0 + $0x10] sm:$0xff]
  %v20 = vld [vmem:[%s0 + $0x18] sm:$0xff]
  %v21 = vld [vmem:[%s1] sm:$0xff]
  %v22 = vld [vmem:[%s1 + $0x8] sm:$0xff]
  %v23 = vld [vmem:[%s1 + $0x10] sm:$0xff]
  %v24 = vld [vmem:[%s1 + $0x18] sm:$0xff]
  %v25 = vld [vmem:[%s1 + $0x20] sm:$0xff]
  %v26 = vld [vmem:[%s1 + $0x28] sm:$0xff]
  %v27 = vld [vmem:[%s1 + $0x30] sm:$0xff]
  %v28 = vld [vmem:[%s1 + $0x38] sm:$0xff]
  %v29 = vld [vmem:[%s1 + $0x40] sm:$0xff]
  %v30 = vld [vmem:[%s1 + $0x48] sm:$0xff]
  %v31 = vld [vmem:[%s1 + $0x50] sm:$0xff]
  %v32 = vld [vmem:[%s1 + $0x58] sm:$0xff]
  %v33 = vld [vmem:[%s1 + $0x60] sm:$0xff]
  %v34 = vld [vmem:[%s1 + $0x68] sm:$0xff]
  %v35 = vld [vmem:[%s1 + $0x70] sm:$0xff]
  %v36 = vld [vmem:[%s1 + $0x78] sm:$0xff]
  %v37 = vld [vmem:[%s1 + $0x80] sm:$0xff]
  %v38 = vld [vmem:[%s1 + $0x88] sm:$0xff]
  %v39 = vld [vmem:[%s1 + $0x90] sm:$0xff]
  %v40 = vld [vmem:[%s1 + $0x98] sm:$0xff]
  %v41 = vld [vmem:[%s1 + $0xa0] sm:$0xff]
  %v42 = vld [vmem:[%s1 + $0xa8] sm:$0xff]
  %v43 = vld [vmem:[%s1 + $0xb0] sm:$0xff]
  %v44 = vld [vmem:[%s1 + $0xb8] sm:$0xff]
  %v45 = vld [vmem:[%s1 + $0xc0] sm:$0xff]
  %v46 = vld [vmem:[%s1 + $0xc8] sm:$0xff]
  %v47 = vld [vmem:[%s1 + $0xd0] sm:$0xff]
  %vm48 = vcmask 719872
  %v50 = vsel %vm48, %v18, 0
  %v53 = vsel %vm48, %v20, 0
  %55 = vmatprep.subr.mxu0 0.0
  %56 = vmatpush1.msra.mxu0 %v36
  %57 = vmatprep.subr.mxu0 0.0
  %58 = vmatpush1.msra.mxu0 %v35
  %59 = vmatprep.subr.mxu0 0.0
  %60 = vmatpush1.msra.mxu0 %v34
  %61 = vmatprep.subr.mxu0 0.0
  %62 = vmatpush1.msra.mxu0 %v33
  %63 = vmatprep.subr.mxu0 0.0
  %64 = vmatpush1.msra.mxu0 %v32
  %65 = vmatprep.subr.mxu0 0.0
  %66 = vmatpush1.msra.mxu0 %v31
  %67 = vmatprep.subr.mxu0 0.0
  %68 = vmatpush1.msra.mxu0 %v30
  %69 = vmatprep.subr.mxu0 0.0
  %70 = vmatpush1.msra.mxu0 %v29
  %71 = vmatprep.subr.mxu0 0.0
  %72 = vmatpush1.msra.mxu0 %v28
  %73 = vmatprep.subr.mxu0 0.0
  %74 = vmatpush1.msra.mxu0 %v27
  %75 = vmatprep.subr.mxu0 0.0
  %76 = vmatpush1.msra.mxu0 %v26
  %77 = vmatprep.subr.mxu0 0.0
  %78 = vmatpush1.msra.mxu0 %v25
  %79 = vmatprep.subr.mxu0 0.0
  %80 = vmatpush1.msra.mxu0 %v24
  %81 = vmatprep.subr.mxu0 0.0
  %82 = vmatpush1.msra.mxu0 %v23
  %83 = vmatprep.subr.mxu0 0.0
  %84 = vmatpush1.msra.mxu0 %v22
  %85 = vmatprep.subr.mxu0 0.0
  %86 = vmatpush1.msra.mxu0 %v21
  %87 = vmatprep.subr.mxu0 0.0
  %88 = vmatpush2.msra.mxu0 0.0
  %89 = vmatprep.subr.mxu0 0.0
  %90 = vmatpush2.msra.mxu0 0.0
  %91 = vmatprep.subr.mxu0 0.0
  %92 = vmatpush2.msra.mxu0 0.0
  %93 = vmatprep.subr.mxu0 0.0
  %94 = vmatpush2.msra.mxu0 0.0
  %95 = vmatprep.subr.mxu0 0.0
  %96 = vmatpush2.msra.mxu0 0.0
  %97 = vmatprep.subr.mxu0 0.0
  %98 = vmatpush2.msra.mxu0 %v47
  %99 = vmatprep.subr.mxu0 0.0
  %100 = vmatpush2.msra.mxu0 %v46
  %101 = vmatprep.subr.mxu0 0.0
  %102 = vmatpush2.msra.mxu0 %v45
  %103 = vmatprep.subr.mxu0 0.0
  %104 = vmatpush2.msra.mxu0 %v44
  %105 = vmatprep.subr.mxu0 0.0
  %106 = vmatpush2.msra.mxu0 %v43
  %107 = vmatprep.subr.mxu0 0.0
  %108 = vmatpush2.msra.mxu0 %v42
  %109 = vmatprep.subr.mxu0 0.0
  %110 = vmatpush2.msra.mxu0 %v41
  %111 = vmatprep.subr.mxu0 0.0
  %112 = vmatpush2.msra.mxu0 %v40
  %113 = vmatprep.subr.mxu0 0.0
  %114 = vmatpush2.msra.mxu0 %v39
  %115 = vmatprep.subr.mxu0 0.0
  %116 = vmatpush2.msra.mxu0 %v38
  %117 = vmatprep.subr.mxu0 0.0
  %118 = vmatpush2.msra.mxu0 %v37
  %119 = vmatprep.mubr.f32.mxu0 %v50
  %120 = vmatmul.mubr.f32.gmra.mxu0 %v17
  %v121 = vpop.f32.mrf.mxu0
  %v122 = vadd.f32 0.0, %v121
  %v123 = vpop.f32.mrf.mxu0
  %124 = vmatprep.mubr.f32.mxu0 %v53
  %125 = vmatmul.mubr.f32.gmra.mxu0 %v19
  %v126 = vpop.f32.mrf.mxu0
  %v127 = vadd.f32 0.0, %v126
  %v128 = vpop.f32.mrf.mxu0
  %129 = vdwg.mxu0
  %v130 = vld [vmem:[%s2] sm:$0xff]
  %v131 = vld [vmem:[%s2 + $0x8] sm:$0xff]
  %133 = vset.pattern.permute.xlu0 0
  %134 = vperm.xlu0 %133, %v130
  %v135 = vpop.permute.xlu0 %134
  %138 = vset.pattern.permute.xlu0 0
  %139 = vperm.xlu0 %138, %v131
  %v140 = vpop.permute.xlu0 %139
  %v142 = vmul.f32 %v122, %v135
  %v143 = vmul.f32 %v127, %v140
  %144 = vset.pattern.permute.xlu0 1
  %145 = vperm.xlu0 %144, %v130
  %v146 = vpop.permute.xlu0 %145
  %148 = vset.pattern.permute.xlu0 1
  %149 = vperm.xlu0 %148, %v131
  %v150 = vpop.permute.xlu0 %149
  %v152 = vadd.f32 %v142, %v146
  %v153 = vadd.f32 %v143, %v150
  %vm154 = vcmp.gt.f32.partialorder %v152, 0.0
  %vm155 = vcmp.gt.f32.partialorder %v153, 0.0
  %v156 = vmul.f32 %v152, 0.2
  %v157 = vmul.f32 %v153, 0.2
  %v158 = vsel %vm154, %v152, %v156
  %v159 = vsel %vm155, %v153, %v157
  %v160 = vld [vmem:[%s3] sm:$0xff]
  %v161 = vld [vmem:[%s3 + $0x8] sm:$0xff]
  %v162 = vadd.f32 %v158, %v160
  %v163 = vadd.f32 %v159, %v161
  %164 = vst [vmem:[%s4] sm:$0xff] %v162
  %165 = vst [vmem:[%s4 + $0x8] sm:$0xff] %v163
  // Predicated region
  $region18: #{encoder_forward.28} parent=0 // pred_check
    _
  $region19: #{encoder_forward.28} parent=0 // pred_check_branch
    %167 = sbr.rel (0) target = $region21
  $region20: #{encoder_forward.28} parent=0 // pred_region
    _
  $region21: #{encoder_forward.28} parent=0 // pred_fallthru
    _
  // Predicated region
  $region22: #{encoder_forward.28} parent=0 // pred_check
    _
  $region23: #{encoder_forward.28} parent=0 // pred_check_branch
    %169 = sbr.rel (0) target = $region25
  $region24: #{encoder_forward.28} parent=0 // pred_region
    _
  $region25: #{encoder_forward.28} parent=0 // pred_fallthru
    _

// kernel: encoder_forward.29
$region0: #{encoder_forward.29}
  #allocation0 [shape = 'u32[]', space=smem, size = 0x4, offset = 0x4, fixed_abs, tag = 'smem constant byte address 0x4 - core index']
  #allocation1 [shape = 'u32[144,128]{1,0:T(1,128)}', space=vmem, size = 0x12000, scoped, tag = 'internal scratch']
  %s0 = inlined_call_operand.vmem [shape: f32[16,432], index: 0, kind: input, shape index: {}]
  %s1 = inlined_call_operand.vmem [shape: f32[432,128], index: 1, kind: input, shape index: {}]
  %s2 = inlined_call_operand.vmem [shape: f32[16,2], index: 2, kind: input, shape index: {}]
  %s3 = inlined_call_operand.vmem [shape: f32[16,128], index: 3, kind: output, shape index: {}]
  %s4 = sld [smem:[#allocation0]]
  $region22: #{encoder_forward.29} parent=0
    _
  %s6 = ssub.s32 1, %s4
  %s7 = scalar_select 0, %s6, %s4
  // Predicated region
  $region2: #{encoder_forward.29} parent=0 // pred_check
    _
  $region3: #{encoder_forward.29} parent=0 // pred_check_branch
    %9 = sbr.rel (0) target = $region5
  $region4: #{encoder_forward.29} parent=0 // pred_region
    _
  $region5: #{encoder_forward.29} parent=0 // pred_fallthru
    _
  // Predicated region
  $region6: #{encoder_forward.29} parent=0 // pred_check
    _
  $region7: #{encoder_forward.29} parent=0 // pred_check_branch
    %11 = sbr.rel (0) target = $region9
  $region8: #{encoder_forward.29} parent=0 // pred_region
    _
  $region9: #{encoder_forward.29} parent=0 // pred_fallthru
    _
  // Predicated region
  $region10: #{encoder_forward.29} parent=0 // pred_check
    _
  $region11: #{encoder_forward.29} parent=0 // pred_check_branch
    %13 = sbr.rel (0) target = $region13
  $region12: #{encoder_forward.29} parent=0 // pred_region
    _
  $region13: #{encoder_forward.29} parent=0 // pred_fallthru
    _
  %v14 = vld [vmem:[%s0] sm:$0xff]
  %v15 = vld [vmem:[%s0 + $0x8] sm:$0xff]
  %v16 = vld [vmem:[%s0 + $0x10] sm:$0xff]
  %v17 = vld [vmem:[%s0 + $0x18] sm:$0xff]
  %v18 = vld [vmem:[%s0 + $0x20] sm:$0xff]
  %v19 = vld [vmem:[%s0 + $0x28] sm:$0xff]
  %v20 = vld [vmem:[%s0 + $0x30] sm:$0xff]
  %v21 = vld [vmem:[%s0 + $0x38] sm:$0xff]
  %v22 = vld [vmem:[%s1] sm:$0xff]
  %v23 = vld [vmem:[%s1 + $0x8] sm:$0xff]
  %v24 = vld [vmem:[%s1 + $0x10] sm:$0xff]
  %v25 = vld [vmem:[%s1 + $0x18] sm:$0xff]
  %v26 = vld [vmem:[%s1 + $0x20] sm:$0xff]
  %v27 = vld [vmem:[%s1 + $0x28] sm:$0xff]
  %v28 = vld [vmem:[%s1 + $0x30] sm:$0xff]
  %v29 = vld [vmem:[%s1 + $0x38] sm:$0xff]
  %v30 = vld [vmem:[%s1 + $0x40] sm:$0xff]
  %v31 = vld [vmem:[%s1 + $0x48] sm:$0xff]
  %v32 = vld [vmem:[%s1 + $0x50] sm:$0xff]
  %v33 = vld [vmem:[%s1 + $0x58] sm:$0xff]
  %v34 = vld [vmem:[%s1 + $0x60] sm:$0xff]
  %v35 = vld [vmem:[%s1 + $0x68] sm:$0xff]
  %v36 = vld [vmem:[%s1 + $0x70] sm:$0xff]
  %v37 = vld [vmem:[%s1 + $0x78] sm:$0xff]
  %v38 = vld [vmem:[%s1 + $0x80] sm:$0xff]
  %v39 = vld [vmem:[%s1 + $0x88] sm:$0xff]
  %v40 = vld [vmem:[%s1 + $0x90] sm:$0xff]
  %v41 = vld [vmem:[%s1 + $0x98] sm:$0xff]
  %v42 = vld [vmem:[%s1 + $0xa0] sm:$0xff]
  %v43 = vld [vmem:[%s1 + $0xa8] sm:$0xff]
  %v44 = vld [vmem:[%s1 + $0xb0] sm:$0xff]
  %v45 = vld [vmem:[%s1 + $0xb8] sm:$0xff]
  %v46 = vld [vmem:[%s1 + $0xc0] sm:$0xff]
  %v47 = vld [vmem:[%s1 + $0xc8] sm:$0xff]
  %v48 = vld [vmem:[%s1 + $0xd0] sm:$0xff]
  %v49 = vld [vmem:[%s1 + $0xd8] sm:$0xff]
  %v50 = vld [vmem:[%s1 + $0xe0] sm:$0xff]
  %v51 = vld [vmem:[%s1 + $0xe8] sm:$0xff]
  %v52 = vld [vmem:[%s1 + $0xf0] sm:$0xff]
  %v53 = vld [vmem:[%s1 + $0xf8] sm:$0xff]
  %v54 = vld [vmem:[%s1 + $0x100] sm:$0xff]
  %v55 = vld [vmem:[%s1 + $0x108] sm:$0xff]
  %v56 = vld [vmem:[%s1 + $0x110] sm:$0xff]
  %v57 = vld [vmem:[%s1 + $0x118] sm:$0xff]
  %v58 = vld [vmem:[%s1 + $0x120] sm:$0xff]
  %v59 = vld [vmem:[%s1 + $0x128] sm:$0xff]
  %v60 = vld [vmem:[%s1 + $0x130] sm:$0xff]
  %v61 = vld [vmem:[%s1 + $0x138] sm:$0xff]
  %v62 = vld [vmem:[%s1 + $0x140] sm:$0xff]
  %v63 = vld [vmem:[%s1 + $0x148] sm:$0xff]
  %v64 = vld [vmem:[%s1 + $0x150] sm:$0xff]
  %v65 = vld [vmem:[%s1 + $0x158] sm:$0xff]
  %v66 = vld [vmem:[%s1 + $0x160] sm:$0xff]
  %v67 = vld [vmem:[%s1 + $0x168] sm:$0xff]
  %v68 = vld [vmem:[%s1 + $0x170] sm:$0xff]
  %v69 = vld [vmem:[%s1 + $0x178] sm:$0xff]
  %v70 = vld [vmem:[%s1 + $0x180] sm:$0xff]
  %v71 = vld [vmem:[%s1 + $0x188] sm:$0xff]
  %v72 = vld [vmem:[%s1 + $0x190] sm:$0xff]
  %v73 = vld [vmem:[%s1 + $0x198] sm:$0xff]
  %v74 = vld [vmem:[%s1 + $0x1a0] sm:$0xff]
  %v75 = vld [vmem:[%s1 + $0x1a8] sm:$0xff]
  %vm76 = vcmask 392192
  %v78 = vsel %vm76, %v17, 0
  %v81 = vsel %vm76, %v21, 0
  %83 = vmatprep.subr.mxu0 0.0
  %84 = vmatpush1.msra.mxu0 %v37
  %85 = vmatprep.subr.mxu0 0.0
  %86 = vmatpush1.msra.mxu0 %v36
  %87 = vmatprep.subr.mxu0 0.0
  %88 = vmatpush1.msra.mxu0 %v35
  %89 = vmatprep.subr.mxu0 0.0
  %90 = vmatpush1.msra.mxu0 %v34
  %91 = vmatprep.subr.mxu0 0.0
  %92 = vmatpush1.msra.mxu0 %v33
  %93 = vmatprep.subr.mxu0 0.0
  %94 = vmatpush1.msra.mxu0 %v32
  %95 = vmatprep.subr.mxu0 0.0
  %96 = vmatpush1.msra.mxu0 %v31
  %97 = vmatprep.subr.mxu0 0.0
  %98 = vmatpush1.msra.mxu0 %v30
  %99 = vmatprep.subr.mxu0 0.0
  %100 = vmatpush1.msra.mxu0 %v29
  %101 = vmatprep.subr.mxu0 0.0
  %102 = vmatpush1.msra.mxu0 %v28
  %103 = vmatprep.subr.mxu0 0.0
  %104 = vmatpush1.msra.mxu0 %v27
  %105 = vmatprep.subr.mxu0 0.0
  %106 = vmatpush1.msra.mxu0 %v26
  %107 = vmatprep.subr.mxu0 0.0
  %108 = vmatpush1.msra.mxu0 %v25
  %109 = vmatprep.subr.mxu0 0.0
  %110 = vmatpush1.msra.mxu0 %v24
  %111 = vmatprep.subr.mxu0 0.0
  %112 = vmatpush1.msra.mxu0 %v23
  %113 = vmatprep.subr.mxu0 0.0
  %114 = vmatpush1.msra.mxu0 %v22
  %115 = vmatprep.subr.mxu0 0.0
  %116 = vmatpush2.msra.mxu0 %v53
  %117 = vmatprep.subr.mxu0 0.0
  %118 = vmatpush2.msra.mxu0 %v52
  %119 = vmatprep.subr.mxu0 0.0
  %120 = vmatpush2.msra.mxu0 %v51
  %121 = vmatprep.subr.mxu0 0.0
  %122 = vmatpush2.msra.mxu0 %v50
  %123 = vmatprep.subr.mxu0 0.0
  %124 = vmatpush2.msra.mxu0 %v49
  %125 = vmatprep.subr.mxu0 0.0
  %126 = vmatpush2.msra.mxu0 %v48
  %127 = vmatprep.subr.mxu0 0.0
  %128 = vmatpush2.msra.mxu0 %v47
  %129 = vmatprep.subr.mxu0 0.0
  %130 = vmatpush2.msra.mxu0 %v46
  %131 = vmatprep.subr.mxu0 0.0
  %132 = vmatpush2.msra.mxu0 %v45
  %133 = vmatprep.subr.mxu0 0.0
  %134 = vmatpush2.msra.mxu0 %v44
  %135 = vmatprep.subr.mxu0 0.0
  %136 = vmatpush2.msra.mxu0 %v43
  %137 = vmatprep.subr.mxu0 0.0
  %138 = vmatpush2.msra.mxu0 %v42
  %139 = vmatprep.subr.mxu0 0.0
  %140 = vmatpush2.msra.mxu0 %v41
  %141 = vmatprep.subr.mxu0 0.0
  %142 = vmatpush2.msra.mxu0 %v40
  %143 = vmatprep.subr.mxu0 0.0
  %144 = vmatpush2.msra.mxu0 %v39
  %145 = vmatprep.subr.mxu0 0.0
  %146 = vmatpush2.msra.mxu0 %v38
  %147 = vmatprep.mubr.f32.mxu0 %v15
  %148 = vmatmul.mubr.f32.gmra.mxu0 %v14
  %v149 = vpop.f32.mrf.mxu0
  %v150 = vadd.f32 0.0, %v149
  %v151 = vpop.f32.mrf.mxu0
  %152 = vmatprep.mubr.f32.mxu0 %v19
  %153 = vmatmul.mubr.f32.gmra.mxu0 %v18
  %v154 = vpop.f32.mrf.mxu0
  %v155 = vadd.f32 0.0, %v154
  %v156 = vpop.f32.mrf.mxu0
  %157 = vdwg.mxu0
  %158 = vmatprep.subr.mxu0 0.0
  %159 = vmatpush1.msra.mxu0 %v69
  %160 = vmatprep.subr.mxu0 0.0
  %161 = vmatpush1.msra.mxu0 %v68
  %162 = vmatprep.subr.mxu0 0.0
  %163 = vmatpush1.msra.mxu0 %v67
  %164 = vmatprep.subr.mxu0 0.0
  %165 = vmatpush1.msra.mxu0 %v66
  %166 = vmatprep.subr.mxu0 0.0
  %167 = vmatpush1.msra.mxu0 %v65
  %168 = vmatprep.subr.mxu0 0.0
  %169 = vmatpush1.msra.mxu0 %v64
  %170 = vmatprep.subr.mxu0 0.0
  %171 = vmatpush1.msra.mxu0 %v63
  %172 = vmatprep.subr.mxu0 0.0
  %173 = vmatpush1.msra.mxu0 %v62
  %174 = vmatprep.subr.mxu0 0.0
  %175 = vmatpush1.msra.mxu0 %v61
  %176 = vmatprep.subr.mxu0 0.0
  %177 = vmatpush1.msra.mxu0 %v60
  %178 = vmatprep.subr.mxu0 0.0
  %179 = vmatpush1.msra.mxu0 %v59
  %180 = vmatprep.subr.mxu0 0.0
  %181 = vmatpush1.msra.mxu0 %v58
  %182 = vmatprep.subr.mxu0 0.0
  %183 = vmatpush1.msra.mxu0 %v57
  %184 = vmatprep.subr.mxu0 0.0
  %185 = vmatpush1.msra.mxu0 %v56
  %186 = vmatprep.subr.mxu0 0.0
  %187 = vmatpush1.msra.mxu0 %v55
  %188 = vmatprep.subr.mxu0 0.0
  %189 = vmatpush1.msra.mxu0 %v54
  %190 = vmatprep.subr.mxu0 0.0
  %191 = vmatpush2.msra.mxu0 0.0
  %192 = vmatprep.subr.mxu0 0.0
  %193 = vmatpush2.msra.mxu0 0.0
  %194 = vmatprep.subr.mxu0 0.0
  %195 = vmatpush2.msra.mxu0 0.0
  %196 = vmatprep.subr.mxu0 0.0
  %197 = vmatpush2.msra.mxu0 0.0
  %198 = vmatprep.subr.mxu0 0.0
  %199 = vmatpush2.msra.mxu0 0.0
  %200 = vmatprep.subr.mxu0 0.0
  %201 = vmatpush2.msra.mxu0 0.0
  %202 = vmatprep.subr.mxu0 0.0
  %203 = vmatpush2.msra.mxu0 0.0
  %204 = vmatprep.subr.mxu0 0.0
  %205 = vmatpush2.msra.mxu0 0.0
  %206 = vmatprep.subr.mxu0 0.0
  %207 = vmatpush2.msra.mxu0 0.0
  %208 = vmatprep.subr.mxu0 0.0
  %209 = vmatpush2.msra.mxu0 0.0
  %210 = vmatprep.subr.mxu0 0.0
  %211 = vmatpush2.msra.mxu0 %v75
  %212 = vmatprep.subr.mxu0 0.0
  %213 = vmatpush2.msra.mxu0 %v74
  %214 = vmatprep.subr.mxu0 0.0
  %215 = vmatpush2.msra.mxu0 %v73
  %216 = vmatprep.subr.mxu0 0.0
  %217 = vmatpush2.msra.mxu0 %v72
  %218 = vmatprep.subr.mxu0 0.0
  %219 = vmatpush2.msra.mxu0 %v71
  %220 = vmatprep.subr.mxu0 0.0
  %221 = vmatpush2.msra.mxu0 %v70
  %222 = vmatprep.mubr.f32.mxu0 %v78
  %223 = vmatmul.mubr.f32.gmra.mxu0 %v16
  %v224 = vpop.f32.mrf.mxu0
  %v225 = vadd.f32 %v150, %v224
  %v226 = vpop.f32.mrf.mxu0
  %227 = vmatprep.mubr.f32.mxu0 %v81
  %228 = vmatmul.mubr.f32.gmra.mxu0 %v20
  %v229 = vpop.f32.mrf.mxu0
  %v230 = vadd.f32 %v155, %v229
  %v231 = vpop.f32.mrf.mxu0
  %232 = vdwg.mxu0
  %v233 = vld [vmem:[%s2] sm:$0xff]
  %v234 = vld [vmem:[%s2 + $0x8] sm:$0xff]
  %236 = vset.pattern.permute.xlu0 0
  %237 = vperm.xlu0 %236, %v233
  %v238 = vpop.permute.xlu0 %237
  %241 = vset.pattern.permute.xlu0 0
  %242 = vperm.xlu0 %241, %v234
  %v243 = vpop.permute.xlu0 %242
  %v245 = vmul.f32 %v225, %v238
  %v246 = vmul.f32 %v230, %v243
  %247 = vset.pattern.permute.xlu0 1
  %248 = vperm.xlu0 %247, %v233
  %v249 = vpop.permute.xlu0 %248
  %251 = vset.pattern.permute.xlu0 1
  %252 = vperm.xlu0 %251, %v234
  %v253 = vpop.permute.xlu0 %252
  %v255 = vadd.f32 %v245, %v249
  %v256 = vadd.f32 %v246, %v253
  %vm257 = vcmp.gt.f32.partialorder %v255, 0.0
  %vm258 = vcmp.gt.f32.partialorder %v256, 0.0
  %v259 = vmul.f32 %v255, 0.2
  %v260 = vmul.f32 %v256, 0.2
  %v261 = vsel %vm257, %v255, %v259
  %v262 = vsel %vm258, %v256, %v260
  %263 = vst [vmem:[%s3] sm:$0xff] %v261
  %264 = vst [vmem:[%s3 + $0x8] sm:$0xff] %v262
  // Predicated region
  $region14: #{encoder_forward.29} parent=0 // pred_check
    _
  $region15: #{encoder_forward.29} parent=0 // pred_check_branch
    %266 = sbr.rel (0) target = $region17
  $region16: #{encoder_forward.29} parent=0 // pred_region
    _
  $region17: #{encoder_forward.29} parent=0 // pred_fallthru
    _
  // Predicated region
  $region18: #{encoder_forward.29} parent=0 // pred_check
    _
  $region19: #{encoder_forward.29} parent=0 // pred_check_branch
    %268 = sbr.rel (0) target = $region21
  $region20: #{encoder_forward.29} parent=0 // pred_region
    _
  $region21: #{encoder_forward.29} parent=0 // pred_fallthru
    _

// kernel: encoder_forward.30
$region0: #{encoder_forward.30}
  #allocation0 [shape = 'u32[]', space=smem, size = 0x4, offset = 0x4, fixed_abs, tag = 'smem constant byte address 0x4 - core index']
  #allocation1 [shape = 'u32[144,128]{1,0:T(1,128)}', space=vmem, size = 0x12000, scoped, tag = 'internal scratch']
  %s0 = inlined_call_operand.vmem [shape: f32[32,432], index: 0, kind: input, shape index: {}]
  %s1 = inlined_call_operand.vmem [shape: f32[432,128], index: 1, kind: input, shape index: {}]
  %s2 = inlined_call_operand.vmem [shape: f32[32,2], index: 2, kind: input, shape index: {}]
  %s3 = inlined_call_operand.vmem [shape: f32[32,128], index: 3, kind: output, shape index: {}]
  %s4 = sld [smem:[#allocation0]]
  $region22: #{encoder_forward.30} parent=0
    _
  %s6 = ssub.s32 1, %s4
  %s7 = scalar_select 0, %s6, %s4
  // Predicated region
  $region2: #{encoder_forward.30} parent=0 // pred_check
    _
  $region3: #{encoder_forward.30} parent=0 // pred_check_branch
    %9 = sbr.rel (0) target = $region5
  $region4: #{encoder_forward.30} parent=0 // pred_region
    _
  $region5: #{encoder_forward.30} parent=0 // pred_fallthru
    _
  // Predicated region
  $region6: #{encoder_forward.30} parent=0 // pred_check
    _
  $region7: #{encoder_forward.30} parent=0 // pred_check_branch
    %11 = sbr.rel (0) target = $region9
  $region8: #{encoder_forward.30} parent=0 // pred_region
    _
  $region9: #{encoder_forward.30} parent=0 // pred_fallthru
    _
  // Predicated region
  $region10: #{encoder_forward.30} parent=0 // pred_check
    _
  $region11: #{encoder_forward.30} parent=0 // pred_check_branch
    %13 = sbr.rel (0) target = $region13
  $region12: #{encoder_forward.30} parent=0 // pred_region
    _
  $region13: #{encoder_forward.30} parent=0 // pred_fallthru
    _
  %v14 = vld [vmem:[%s0] sm:$0xff]
  %v15 = vld [vmem:[%s0 + $0x8] sm:$0xff]
  %v16 = vld [vmem:[%s0 + $0x10] sm:$0xff]
  %v17 = vld [vmem:[%s0 + $0x18] sm:$0xff]
  %v18 = vld [vmem:[%s0 + $0x20] sm:$0xff]
  %v19 = vld [vmem:[%s0 + $0x28] sm:$0xff]
  %v20 = vld [vmem:[%s0 + $0x30] sm:$0xff]
  %v21 = vld [vmem:[%s0 + $0x38] sm:$0xff]
  %v22 = vld [vmem:[%s0 + $0x40] sm:$0xff]
  %v23 = vld [vmem:[%s0 + $0x48] sm:$0xff]
  %v24 = vld [vmem:[%s0 + $0x50] sm:$0xff]
  %v25 = vld [vmem:[%s0 + $0x58] sm:$0xff]
  %v26 = vld [vmem:[%s0 + $0x60] sm:$0xff]
  %v27 = vld [vmem:[%s0 + $0x68] sm:$0xff]
  %v28 = vld [vmem:[%s0 + $0x70] sm:$0xff]
  %v29 = vld [vmem:[%s0 + $0x78] sm:$0xff]
  %v30 = vld [vmem:[%s1] sm:$0xff]
  %v31 = vld [vmem:[%s1 + $0x8] sm:$0xff]
  %v32 = vld [vmem:[%s1 + $0x10] sm:$0xff]
  %v33 = vld [vmem:[%s1 + $0x18] sm:$0xff]
  %v34 = vld [vmem:[%s1 + $0x20] sm:$0xff]
  %v35 = vld [vmem:[%s1 + $0x28] sm:$0xff]
  %v36 = vld [vmem:[%s1 + $0x30] sm:$0xff]
  %v37 = vld [vmem:[%s1 + $0x38] sm:$0xff]
  %v38 = vld [vmem:[%s1 + $0x40] sm:$0xff]
  %v39 = vld [vmem:[%s1 + $0x48] sm:$0xff]
  %v40 = vld [vmem:[%s1 + $0x50] sm:$0xff]
  %v41 = vld [vmem:[%s1 + $0x58] sm:$0xff]
  %v42 = vld [vmem:[%s1 + $0x60] sm:$0xff]
  %v43 = vld [vmem:[%s1 + $0x68] sm:$0xff]
  %v44 = vld [vmem:[%s1 + $0x70] sm:$0xff]
  %v45 = vld [vmem:[%s1 + $0x78] sm:$0xff]
  %v46 = vld [vmem:[%s1 + $0x80] sm:$0xff]
  %v47 = vld [vmem:[%s1 + $0x88] sm:$0xff]
  %v48 = vld [vmem:[%s1 + $0x90] sm:$0xff]
  %v49 = vld [vmem:[%s1 + $0x98] sm:$0xff]
  %v50 = vld [vmem:[%s1 + $0xa0] sm:$0xff]
  %v51 = vld [vmem:[%s1 + $0xa8] sm:$0xff]
  %v52 = vld [vmem:[%s1 + $0xb0] sm:$0xff]
  %v53 = vld [vmem:[%s1 + $0xb8] sm:$0xff]
  %v54 = vld [vmem:[%s1 + $0xc0] sm:$0xff]
  %v55 = vld [vmem:[%s1 + $0xc8] sm:$0xff]
  %v56 = vld [vmem:[%s1 + $0xd0] sm:$0xff]
  %v57 = vld [vmem:[%s1 + $0xd8] sm:$0xff]
  %v58 = vld [vmem:[%s1 + $0xe0] sm:$0xff]
  %v59 = vld [vmem:[%s1 + $0xe8] sm:$0xff]
  %v60 = vld [vmem:[%s1 + $0xf0] sm:$0xff]
  %v61 = vld [vmem:[%s1 + $0xf8] sm:$0xff]
  %v62 = vld [vmem:[%s1 + $0x100] sm:$0xff]
  %v63 = vld [vmem:[%s1 + $0x108] sm:$0xff]
  %v64 = vld [vmem:[%s1 + $0x110] sm:$0xff]
  %v65 = vld [vmem:[%s1 + $0x118] sm:$0xff]
  %v66 = vld [vmem:[%s1 + $0x120] sm:$0xff]
  %v67 = vld [vmem:[%s1 + $0x128] sm:$0xff]
  %v68 = vld [vmem:[%s1 + $0x130] sm:$0xff]
  %v69 = vld [vmem:[%s1 + $0x138] sm:$0xff]
  %v70 = vld [vmem:[%s1 + $0x140] sm:$0xff]
  %v71 = vld [vmem:[%s1 + $0x148] sm:$0xff]
  %v72 = vld [vmem:[%s1 + $0x150] sm:$0xff]
  %v73 = vld [vmem:[%s1 + $0x158] sm:$0xff]
  %v74 = vld [vmem:[%s1 + $0x160] sm:$0xff]
  %v75 = vld [vmem:[%s1 + $0x168] sm:$0xff]
  %v76 = vld [vmem:[%s1 + $0x170] sm:$0xff]
  %v77 = vld [vmem:[%s1 + $0x178] sm:$0xff]
  %v78 = vld [vmem:[%s1 + $0x180] sm:$0xff]
  %v79 = vld [vmem:[%s1 + $0x188] sm:$0xff]
  %v80 = vld [vmem:[%s1 + $0x190] sm:$0xff]
  %v81 = vld [vmem:[%s1 + $0x198] sm:$0xff]
  %v82 = vld [vmem:[%s1 + $0x1a0] sm:$0xff]
  %v83 = vld [vmem:[%s1 + $0x1a8] sm:$0xff]
  %vm84 = vcmask 392192
  %v86 = vsel %vm84, %v17, 0
  %v89 = vsel %vm84, %v21, 0
  %v92 = vsel %vm84, %v25, 0
  %v95 = vsel %vm84, %v29, 0
  %97 = vmatprep.subr.mxu0 0.0
  %98 = vmatpush1.msra.mxu0 %v45
  %99 = vmatprep.subr.mxu0 0.0
  %100 = vmatpush1.msra.mxu0 %v44
  %101 = vmatprep.subr.mxu0 0.0
  %102 = vmatpush1.msra.mxu0 %v43
  %103 = vmatprep.subr.mxu0 0.0
  %104 = vmatpush1.msra.mxu0 %v42
  %105 = vmatprep.subr.mxu0 0.0
  %106 = vmatpush1.msra.mxu0 %v41
  %107 = vmatprep.subr.mxu0 0.0
  %108 = vmatpush1.msra.mxu0 %v40
  %109 = vmatprep.subr.mxu0 0.0
  %110 = vmatpush1.msra.mxu0 %v39
  %111 = vmatprep.subr.mxu0 0.0
  %112 = vmatpush1.msra.mxu0 %v38
  %113 = vmatprep.subr.mxu0 0.0
  %114 = vmatpush1.msra.mxu0 %v37
  %115 = vmatprep.subr.mxu0 0.0
  %116 = vmatpush1.msra.mxu0 %v36
  %117 = vmatprep.subr.mxu0 0.0
  %118 = vmatpush1.msra.mxu0 %v35
  %119 = vmatprep.subr.mxu0 0.0
  %120 = vmatpush1.msra.mxu0 %v34
  %121 = vmatprep.subr.mxu0 0.0
  %122 = vmatpush1.msra.mxu0 %v33
  %123 = vmatprep.subr.mxu0 0.0
  %124 = vmatpush1.msra.mxu0 %v32
  %125 = vmatprep.subr.mxu0 0.0
  %126 = vmatpush1.msra.mxu0 %v31
  %127 = vmatprep.subr.mxu0 0.0
  %128 = vmatpush1.msra.mxu0 %v30
  %129 = vmatprep.subr.mxu0 0.0
  %130 = vmatpush2.msra.mxu0 %v61
  %131 = vmatprep.subr.mxu0 0.0
  %132 = vmatpush2.msra.mxu0 %v60
  %133 = vmatprep.subr.mxu0 0.0
  %134 = vmatpush2.msra.mxu0 %v59
  %135 = vmatprep.subr.mxu0 0.0
  %136 = vmatpush2.msra.mxu0 %v58
  %137 = vmatprep.subr.mxu0 0.0
  %138 = vmatpush2.msra.mxu0 %v57
  %139 = vmatprep.subr.mxu0 0.0
  %140 = vmatpush2.msra.mxu0 %v56
  %141 = vmatprep.subr.mxu0 0.0
  %142 = vmatpush2.msra.mxu0 %v55
  %143 = vmatprep.subr.mxu0 0.0
  %144 = vmatpush2.msra.mxu0 %v54
  %145 = vmatprep.subr.mxu0 0.0
  %146 = vmatpush2.msra.mxu0 %v53
  %147 = vmatprep.subr.mxu0 0.0
  %148 = vmatpush2.msra.mxu0 %v52
  %149 = vmatprep.subr.mxu0 0.0
  %150 = vmatpush2.msra.mxu0 %v51
  %151 = vmatprep.subr.mxu0 0.0
  %152 = vmatpush2.msra.mxu0 %v50
  %153 = vmatprep.subr.mxu0 0.0
  %154 = vmatpush2.msra.mxu0 %v49
  %155 = vmatprep.subr.mxu0 0.0
  %156 = vmatpush2.msra.mxu0 %v48
  %157 = vmatprep.subr.mxu0 0.0
  %158 = vmatpush2.msra.mxu0 %v47
  %159 = vmatprep.subr.mxu0 0.0
  %160 = vmatpush2.msra.mxu0 %v46
  %161 = vmatprep.mubr.f32.mxu0 %v15
  %162 = vmatmul.mubr.f32.gmra.mxu0 %v14
  %v163 = vpop.f32.mrf.mxu0
  %v164 = vadd.f32 0.0, %v163
  %v165 = vpop.f32.mrf.mxu0
  %166 = vmatprep.mubr.f32.mxu0 %v19
  %167 = vmatmul.mubr.f32.gmra.mxu0 %v18
  %v168 = vpop.f32.mrf.mxu0
  %v169 = vadd.f32 0.0, %v168
  %v170 = vpop.f32.mrf.mxu0
  %171 = vmatprep.mubr.f32.mxu0 %v23
  %172 = vmatmul.mubr.f32.gmra.mxu0 %v22
  %v173 = vpop.f32.mrf.mxu0
  %v174 = vadd.f32 0.0, %v173
  %v175 = vpop.f32.mrf.mxu0
  %176 = vmatprep.mubr.f32.mxu0 %v27
  %177 = vmatmul.mubr.f32.gmra.mxu0 %v26
  %v178 = vpop.f32.mrf.mxu0
  %v179 = vadd.f32 0.0, %v178
  %v180 = vpop.f32.mrf.mxu0
  %181 = vdwg.mxu0
  %182 = vmatprep.subr.mxu0 0.0
  %183 = vmatpush1.msra.mxu0 %v77
  %184 = vmatprep.subr.mxu0 0.0
  %185 = vmatpush1.msra.mxu0 %v76
  %186 = vmatprep.subr.mxu0 0.0
  %187 = vmatpush1.msra.mxu0 %v75
  %188 = vmatprep.subr.mxu0 0.0
  %189 = vmatpush1.msra.mxu0 %v74
  %190 = vmatprep.subr.mxu0 0.0
  %191 = vmatpush1.msra.mxu0 %v73
  %192 = vmatprep.subr.mxu0 0.0
  %193 = vmatpush1.msra.mxu0 %v72
  %194 = vmatprep.subr.mxu0 0.0
  %195 = vmatpush1.msra.mxu0 %v71
  %196 = vmatprep.subr.mxu0 0.0
  %197 = vmatpush1.msra.mxu0 %v70
  %198 = vmatprep.subr.mxu0 0.0
  %199 = vmatpush1.msra.mxu0 %v69
  %200 = vmatprep.subr.mxu0 0.0
  %201 = vmatpush1.msra.mxu0 %v68
  %202 = vmatprep.subr.mxu0 0.0
  %203 = vmatpush1.msra.mxu0 %v67
  %204 = vmatprep.subr.mxu0 0.0
  %205 = vmatpush1.msra.mxu0 %v66
  %206 = vmatprep.subr.mxu0 0.0
  %207 = vmatpush1.msra.mxu0 %v65
  %208 = vmatprep.subr.mxu0 0.0
  %209 = vmatpush1.msra.mxu0 %v64
  %210 = vmatprep.subr.mxu0 0.0
  %211 = vmatpush1.msra.mxu0 %v63
  %212 = vmatprep.subr.mxu0 0.0
  %213 = vmatpush1.msra.mxu0 %v62
  %214 = vmatprep.subr.mxu0 0.0
  %215 = vmatpush2.msra.mxu0 0.0
  %216 = vmatprep.subr.mxu0 0.0
  %217 = vmatpush2.msra.mxu0 0.0
  %218 = vmatprep.subr.mxu0 0.0
  %219 = vmatpush2.msra.mxu0 0.0
  %220 = vmatprep.subr.mxu0 0.0
  %221 = vmatpush2.msra.mxu0 0.0
  %222 = vmatprep.subr.mxu0 0.0
  %223 = vmatpush2.msra.mxu0 0.0
  %224 = vmatprep.subr.mxu0 0.0
  %225 = vmatpush2.msra.mxu0 0.0
  %226 = vmatprep.subr.mxu0 0.0
  %227 = vmatpush2.msra.mxu0 0.0
  %228 = vmatprep.subr.mxu0 0.0
  %229 = vmatpush2.msra.mxu0 0.0
  %230 = vmatprep.subr.mxu0 0.0
  %231 = vmatpush2.msra.mxu0 0.0
  %232 = vmatprep.subr.mxu0 0.0
  %233 = vmatpush2.msra.mxu0 0.0
  %234 = vmatprep.subr.mxu0 0.0
  %235 = vmatpush2.msra.mxu0 %v83
  %236 = vmatprep.subr.mxu0 0.0
  %237 = vmatpush2.msra.mxu0 %v82
  %238 = vmatprep.subr.mxu0 0.0
  %239 = vmatpush2.msra.mxu0 %v81
  %240 = vmatprep.subr.mxu0 0.0
  %241 = vmatpush2.msra.mxu0 %v80
  %242 = vmatprep.subr.mxu0 0.0
  %243 = vmatpush2.msra.mxu0 %v79
  %244 = vmatprep.subr.mxu0 0.0
  %245 = vmatpush2.msra.mxu0 %v78
  %246 = vmatprep.mubr.f32.mxu0 %v86
  %247 = vmatmul.mubr.f32.gmra.mxu0 %v16
  %v248 = vpop.f32.mrf.mxu0
  %v249 = vadd.f32 %v164, %v248
  %v250 = vpop.f32.mrf.mxu0
  %251 = vmatprep.mubr.f32.mxu0 %v89
  %252 = vmatmul.mubr.f32.gmra.mxu0 %v20
  %v253 = vpop.f32.mrf.mxu0
  %v254 = vadd.f32 %v169, %v253
  %v255 = vpop.f32.mrf.mxu0
  %256 = vmatprep.mubr.f32.mxu0 %v92
  %257 = vmatmul.mubr.f32.gmra.mxu0 %v24
  %v258 = vpop.f32.mrf.mxu0
  %v259 = vadd.f32 %v174, %v258
  %v260 = vpop.f32.mrf.mxu0
  %261 = vmatprep.mubr.f32.mxu0 %v95
  %262 = vmatmul.mubr.f32.gmra.mxu0 %v28
  %v263 = vpop.f32.mrf.mxu0
  %v264 = vadd.f32 %v179, %v263
  %v265 = vpop.f32.mrf.mxu0
  %266 = vdwg.mxu0
  %v267 = vld [vmem:[%s2] sm:$0xff]
  %v268 = vld [vmem:[%s2 + $0x8] sm:$0xff]
  %v269 = vld [vmem:[%s2 + $0x10] sm:$0xff]
  %v270 = vld [vmem:[%s2 + $0x18] sm:$0xff]
  %272 = vset.pattern.permute.xlu0 0
  %273 = vperm.xlu0 %272, %v267
  %v274 = vpop.permute.xlu0 %273
  %277 = vset.pattern.permute.xlu0 0
  %278 = vperm.xlu0 %277, %v268
  %v279 = vpop.permute.xlu0 %278
  %282 = vset.pattern.permute.xlu0 0
  %283 = vperm.xlu0 %282, %v269
  %v284 = vpop.permute.xlu0 %283
  %287 = vset.pattern.permute.xlu0 0
  %288 = vperm.xlu0 %287, %v270
  %v289 = vpop.permute.xlu0 %288
  %v291 = vmul.f32 %v249, %v274
  %v292 = vmul.f32 %v254, %v279
  %v293 = vmul.f32 %v259, %v284
  %v294 = vmul.f32 %v264, %v289
  %295 = vset.pattern.permute.xlu0 1
  %296 = vperm.xlu0 %295, %v267
  %v297 = vpop.permute.xlu0 %296
  %299 = vset.pattern.permute.xlu0 1
  %300 = vperm.xlu0 %299, %v268
  %v301 = vpop.permute.xlu0 %300
  %303 = vset.pattern.permute.xlu0 1
  %304 = vperm.xlu0 %303, %v269
  %v305 = vpop.permute.xlu0 %304
  %307 = vset.pattern.permute.xlu0 1
  %308 = vperm.xlu0 %307, %v270
  %v309 = vpop.permute.xlu0 %308
  %v311 = vadd.f32 %v291, %v297
  %v312 = vadd.f32 %v292, %v301
  %v313 = vadd.f32 %v293, %v305
  %v314 = vadd.f32 %v294, %v309
  %vm315 = vcmp.gt.f32.partialorder %v311, 0.0
  %vm316 = vcmp.gt.f32.partialorder %v312, 0.0
  %vm317 = vcmp.gt.f32.partialorder %v313, 0.0
  %vm318 = vcmp.gt.f32.partialorder %v314, 0.0
  %v319 = vmul.f32 %v311, 0.2
  %v320 = vmul.f32 %v312, 0.2
  %v321 = vmul.f32 %v313, 0.2
  %v322 = vmul.f32 %v314, 0.2
  %v323 = vsel %vm315, %v311, %v319
  %v324 = vsel %vm316, %v312, %v320
  %v325 = vsel %vm317, %v313, %v321
  %v326 = vsel %vm318, %v314, %v322
  %327 = vst [vmem:[%s3] sm:$0xff] %v323
  %328 = vst [vmem:[%s3 + $0x8] sm:$0xff] %v324
  %329 = vst [vmem:[%s3 + $0x10] sm:$0xff] %v325
  %330 = vst [vmem:[%s3 + $0x18] sm:$0xff] %v326
  // Predicated region
  $region14: #{encoder_forward.30} parent=0 // pred_check
    _
  $region15: #{encoder_forward.30} parent=0 // pred_check_branch
    %332 = sbr.rel (0) target = $region17
  $region16: #{encoder_forward.30} parent=0 // pred_region
    _
  $region17: #{encoder_forward.30} parent=0 // pred_fallthru
    _
  // Predicated region
  $region18: #{encoder_forward.30} parent=0 // pred_check
    _
  $region19: #{encoder_forward.30} parent=0 // pred_check_branch
    %334 = sbr.rel (0) target = $region21
  $region20: #{encoder_forward.30} parent=0 // pred_region
    _
  $region21: #{encoder_forward.30} parent=0 // pred_fallthru
    _

// kernel: encoder_forward.31
$region0: #{encoder_forward.31}
  #allocation0 [shape = 'u32[]', space=smem, size = 0x4, offset = 0x4, fixed_abs, tag = 'smem constant byte address 0x4 - core index']
  #allocation1 [shape = 'u32[144,128]{1,0:T(1,128)}', space=vmem, size = 0x12000, scoped, tag = 'internal scratch']
  %s0 = inlined_call_operand.vmem [shape: f32[32,432], index: 0, kind: input, shape index: {}]
  %s1 = inlined_call_operand.vmem [shape: f32[432,128], index: 1, kind: input, shape index: {}]
  %s2 = inlined_call_operand.vmem [shape: f32[32,2], index: 2, kind: input, shape index: {}]
  %s3 = inlined_call_operand.vmem [shape: f32[32,128], index: 3, kind: input, shape index: {}]
  %s4 = inlined_call_operand.vmem [shape: f32[32,128], index: 4, kind: output, shape index: {}]
  %s5 = sld [smem:[#allocation0]]
  $region26: #{encoder_forward.31} parent=0
    _
  %s7 = ssub.s32 1, %s5
  %s8 = scalar_select 0, %s7, %s5
  // Predicated region
  $region2: #{encoder_forward.31} parent=0 // pred_check
    _
  $region3: #{encoder_forward.31} parent=0 // pred_check_branch
    %10 = sbr.rel (0) target = $region5
  $region4: #{encoder_forward.31} parent=0 // pred_region
    _
  $region5: #{encoder_forward.31} parent=0 // pred_fallthru
    _
  // Predicated region
  $region6: #{encoder_forward.31} parent=0 // pred_check
    _
  $region7: #{encoder_forward.31} parent=0 // pred_check_branch
    %12 = sbr.rel (0) target = $region9
  $region8: #{encoder_forward.31} parent=0 // pred_region
    _
  $region9: #{encoder_forward.31} parent=0 // pred_fallthru
    _
  // Predicated region
  $region10: #{encoder_forward.31} parent=0 // pred_check
    _
  $region11: #{encoder_forward.31} parent=0 // pred_check_branch
    %14 = sbr.rel (0) target = $region13
  $region12: #{encoder_forward.31} parent=0 // pred_region
    _
  $region13: #{encoder_forward.31} parent=0 // pred_fallthru
    _
  // Predicated region
  $region14: #{encoder_forward.31} parent=0 // pred_check
    _
  $region15: #{encoder_forward.31} parent=0 // pred_check_branch
    %16 = sbr.rel (0) target = $region17
  $region16: #{encoder_forward.31} parent=0 // pred_region
    _
  $region17: #{encoder_forward.31} parent=0 // pred_fallthru
    _
  %v17 = vld [vmem:[%s0] sm:$0xff]
  %v18 = vld [vmem:[%s0 + $0x8] sm:$0xff]
  %v19 = vld [vmem:[%s0 + $0x10] sm:$0xff]
  %v20 = vld [vmem:[%s0 + $0x18] sm:$0xff]
  %v21 = vld [vmem:[%s0 + $0x20] sm:$0xff]
  %v22 = vld [vmem:[%s0 + $0x28] sm:$0xff]
  %v23 = vld [vmem:[%s0 + $0x30] sm:$0xff]
  %v24 = vld [vmem:[%s0 + $0x38] sm:$0xff]
  %v25 = vld [vmem:[%s0 + $0x40] sm:$0xff]
  %v26 = vld [vmem:[%s0 + $0x48] sm:$0xff]
  %v27 = vld [vmem:[%s0 + $0x50] sm:$0xff]
  %v28 = vld [vmem:[%s0 + $0x58] sm:$0xff]
  %v29 = vld [vmem:[%s0 + $0x60] sm:$0xff]
  %v30 = vld [vmem:[%s0 + $0x68] sm:$0xff]
  %v31 = vld [vmem:[%s0 + $0x70] sm:$0xff]
  %v32 = vld [vmem:[%s0 + $0x78] sm:$0xff]
  %v33 = vld [vmem:[%s1] sm:$0xff]
  %v34 = vld [vmem:[%s1 + $0x8] sm:$0xff]
  %v35 = vld [vmem:[%s1 + $0x10] sm:$0xff]
  %v36 = vld [vmem:[%s1 + $0x18] sm:$0xff]
  %v37 = vld [vmem:[%s1 + $0x20] sm:$0xff]
  %v38 = vld [vmem:[%s1 + $0x28] sm:$0xff]
  %v39 = vld [vmem:[%s1 + $0x30] sm:$0xff]
  %v40 = vld [vmem:[%s1 + $0x38] sm:$0xff]
  %v41 = vld [vmem:[%s1 + $0x40] sm:$0xff]
  %v42 = vld [vmem:[%s1 + $0x48] sm:$0xff]
  %v43 = vld [vmem:[%s1 + $0x50] sm:$0xff]
  %v44 = vld [vmem:[%s1 + $0x58] sm:$0xff]
  %v45 = vld [vmem:[%s1 + $0x60] sm:$0xff]
  %v46 = vld [vmem:[%s1 + $0x68] sm:$0xff]
  %v47 = vld [vmem:[%s1 + $0x70] sm:$0xff]
  %v48 = vld [vmem:[%s1 + $0x78] sm:$0xff]
  %v49 = vld [vmem:[%s1 + $0x80] sm:$0xff]
  %v50 = vld [vmem:[%s1 + $0x88] sm:$0xff]
  %v51 = vld [vmem:[%s1 + $0x90] sm:$0xff]
  %v52 = vld [vmem:[%s1 + $0x98] sm:$0xff]
  %v53 = vld [vmem:[%s1 + $0xa0] sm:$0xff]
  %v54 = vld [vmem:[%s1 + $0xa8] sm:$0xff]
  %v55 = vld [vmem:[%s1 + $0xb0] sm:$0xff]
  %v56 = vld [vmem:[%s1 + $0xb8] sm:$0xff]
  %v57 = vld [vmem:[%s1 + $0xc0] sm:$0xff]
  %v58 = vld [vmem:[%s1 + $0xc8] sm:$0xff]
  %v59 = vld [vmem:[%s1 + $0xd0] sm:$0xff]
  %v60 = vld [vmem:[%s1 + $0xd8] sm:$0xff]
  %v61 = vld [vmem:[%s1 + $0xe0] sm:$0xff]
  %v62 = vld [vmem:[%s1 + $0xe8] sm:$0xff]
  %v63 = vld [vmem:[%s1 + $0xf0] sm:$0xff]
  %v64 = vld [vmem:[%s1 + $0xf8] sm:$0xff]
  %v65 = vld [vmem:[%s1 + $0x100] sm:$0xff]
  %v66 = vld [vmem:[%s1 + $0x108] sm:$0xff]
  %v67 = vld [vmem:[%s1 + $0x110] sm:$0xff]
  %v68 = vld [vmem:[%s1 + $0x118] sm:$0xff]
  %v69 = vld [vmem:[%s1 + $0x120] sm:$0xff]
  %v70 = vld [vmem:[%s1 + $0x128] sm:$0xff]
  %v71 = vld [vmem:[%s1 + $0x130] sm:$0xff]
  %v72 = vld [vmem:[%s1 + $0x138] sm:$0xff]
  %v73 = vld [vmem:[%s1 + $0x140] sm:$0xff]
  %v74 = vld [vmem:[%s1 + $0x148] sm:$0xff]
  %v75 = vld [vmem:[%s1 + $0x150] sm:$0xff]
  %v76 = vld [vmem:[%s1 + $0x158] sm:$0xff]
  %v77 = vld [vmem:[%s1 + $0x160] sm:$0xff]
  %v78 = vld [vmem:[%s1 + $0x168] sm:$0xff]
  %v79 = vld [vmem:[%s1 + $0x170] sm:$0xff]
  %v80 = vld [vmem:[%s1 + $0x178] sm:$0xff]
  %v81 = vld [vmem:[%s1 + $0x180] sm:$0xff]
  %v82 = vld [vmem:[%s1 + $0x188] sm:$0xff]
  %v83 = vld [vmem:[%s1 + $0x190] sm:$0xff]
  %v84 = vld [vmem:[%s1 + $0x198] sm:$0xff]
  %v85 = vld [vmem:[%s1 + $0x1a0] sm:$0xff]
  %v86 = vld [vmem:[%s1 + $0x1a8] sm:$0xff]
  %vm87 = vcmask 392192
  %v89 = vsel %vm87, %v20, 0
  %v92 = vsel %vm87, %v24, 0
  %v95 = vsel %vm87, %v28, 0
  %v98 = vsel %vm87, %v32, 0
  %100 = vmatprep.subr.mxu0 0.0
  %101 = vmatpush1.msra.mxu0 %v48
  %102 = vmatprep.subr.mxu0 0.0
  %103 = vmatpush1.msra.mxu0 %v47
  %104 = vmatprep.subr.mxu0 0.0
  %105 = vmatpush1.msra.mxu0 %v46
  %106 = vmatprep.subr.mxu0 0.0
  %107 = vmatpush1.msra.mxu0 %v45
  %108 = vmatprep.subr.mxu0 0.0
  %109 = vmatpush1.msra.mxu0 %v44
  %110 = vmatprep.subr.mxu0 0.0
  %111 = vmatpush1.msra.mxu0 %v43
  %112 = vmatprep.subr.mxu0 0.0
  %113 = vmatpush1.msra.mxu0 %v42
  %114 = vmatprep.subr.mxu0 0.0
  %115 = vmatpush1.msra.mxu0 %v41
  %116 = vmatprep.subr.mxu0 0.0
  %117 = vmatpush1.msra.mxu0 %v40
  %118 = vmatprep.subr.mxu0 0.0
  %119 = vmatpush1.msra.mxu0 %v39
  %120 = vmatprep.subr.mxu0 0.0
  %121 = vmatpush1.msra.mxu0 %v38
  %122 = vmatprep.subr.mxu0 0.0
  %123 = vmatpush1.msra.mxu0 %v37
  %124 = vmatprep.subr.mxu0 0.0
  %125 = vmatpush1.msra.mxu0 %v36
  %126 = vmatprep.subr.mxu0 0.0
  %127 = vmatpush1.msra.mxu0 %v35
  %128 = vmatprep.subr.mxu0 0.0
  %129 = vmatpush1.msra.mxu0 %v34
  %130 = vmatprep.subr.mxu0 0.0
  %131 = vmatpush1.msra.mxu0 %v33
  %132 = vmatprep.subr.mxu0 0.0
  %133 = vmatpush2.msra.mxu0 %v64
  %134 = vmatprep.subr.mxu0 0.0
  %135 = vmatpush2.msra.mxu0 %v63
  %136 = vmatprep.subr.mxu0 0.0
  %137 = vmatpush2.msra.mxu0 %v62
  %138 = vmatprep.subr.mxu0 0.0
  %139 = vmatpush2.msra.mxu0 %v61
  %140 = vmatprep.subr.mxu0 0.0
  %141 = vmatpush2.msra.mxu0 %v60
  %142 = vmatprep.subr.mxu0 0.0
  %143 = vmatpush2.msra.mxu0 %v59
  %144 = vmatprep.subr.mxu0 0.0
  %145 = vmatpush2.msra.mxu0 %v58
  %146 = vmatprep.subr.mxu0 0.0
  %147 = vmatpush2.msra.mxu0 %v57
  %148 = vmatprep.subr.mxu0 0.0
  %149 = vmatpush2.msra.mxu0 %v56
  %150 = vmatprep.subr.mxu0 0.0
  %151 = vmatpush2.msra.mxu0 %v55
  %152 = vmatprep.subr.mxu0 0.0
  %153 = vmatpush2.msra.mxu0 %v54
  %154 = vmatprep.subr.mxu0 0.0
  %155 = vmatpush2.msra.mxu0 %v53
  %156 = vmatprep.subr.mxu0 0.0
  %157 = vmatpush2.msra.mxu0 %v52
  %158 = vmatprep.subr.mxu0 0.0
  %159 = vmatpush2.msra.mxu0 %v51
  %160 = vmatprep.subr.mxu0 0.0
  %161 = vmatpush2.msra.mxu0 %v50
  %162 = vmatprep.subr.mxu0 0.0
  %163 = vmatpush2.msra.mxu0 %v49
  %164 = vmatprep.mubr.f32.mxu0 %v18
  %165 = vmatmul.mubr.f32.gmra.mxu0 %v17
  %v166 = vpop.f32.mrf.mxu0
  %v167 = vadd.f32 0.0, %v166
  %v168 = vpop.f32.mrf.mxu0
  %169 = vmatprep.mubr.f32.mxu0 %v22
  %170 = vmatmul.mubr.f32.gmra.mxu0 %v21
  %v171 = vpop.f32.mrf.mxu0
  %v172 = vadd.f32 0.0, %v171
  %v173 = vpop.f32.mrf.mxu0
  %174 = vmatprep.mubr.f32.mxu0 %v26
  %175 = vmatmul.mubr.f32.gmra.mxu0 %v25
  %v176 = vpop.f32.mrf.mxu0
  %v177 = vadd.f32 0.0, %v176
  %v178 = vpop.f32.mrf.mxu0
  %179 = vmatprep.mubr.f32.mxu0 %v30
  %180 = vmatmul.mubr.f32.gmra.mxu0 %v29
  %v181 = vpop.f32.mrf.mxu0
  %v182 = vadd.f32 0.0, %v181
  %v183 = vpop.f32.mrf.mxu0
  %184 = vdwg.mxu0
  %185 = vmatprep.subr.mxu0 0.0
  %186 = vmatpush1.msra.mxu0 %v80
  %187 = vmatprep.subr.mxu0 0.0
  %188 = vmatpush1.msra.mxu0 %v79
  %189 = vmatprep.subr.mxu0 0.0
  %190 = vmatpush1.msra.mxu0 %v78
  %191 = vmatprep.subr.mxu0 0.0
  %192 = vmatpush1.msra.mxu0 %v77
  %193 = vmatprep.subr.mxu0 0.0
  %194 = vmatpush1.msra.mxu0 %v76
  %195 = vmatprep.subr.mxu0 0.0
  %196 = vmatpush1.msra.mxu0 %v75
  %197 = vmatprep.subr.mxu0 0.0
  %198 = vmatpush1.msra.mxu0 %v74
  %199 = vmatprep.subr.mxu0 0.0
  %200 = vmatpush1.msra.mxu0 %v73
  %201 = vmatprep.subr.mxu0 0.0
  %202 = vmatpush1.msra.mxu0 %v72
  %203 = vmatprep.subr.mxu0 0.0
  %204 = vmatpush1.msra.mxu0 %v71
  %205 = vmatprep.subr.mxu0 0.0
  %206 = vmatpush1.msra.mxu0 %v70
  %207 = vmatprep.subr.mxu0 0.0
  %208 = vmatpush1.msra.mxu0 %v69
  %209 = vmatprep.subr.mxu0 0.0
  %210 = vmatpush1.msra.mxu0 %v68
  %211 = vmatprep.subr.mxu0 0.0
  %212 = vmatpush1.msra.mxu0 %v67
  %213 = vmatprep.subr.mxu0 0.0
  %214 = vmatpush1.msra.mxu0 %v66
  %215 = vmatprep.subr.mxu0 0.0
  %216 = vmatpush1.msra.mxu0 %v65
  %217 = vmatprep.subr.mxu0 0.0
  %218 = vmatpush2.msra.mxu0 0.0
  %219 = vmatprep.subr.mxu0 0.0
  %220 = vmatpush2.msra.mxu0 0.0
  %221 = vmatprep.subr.mxu0 0.0
  %222 = vmatpush2.msra.mxu0 0.0
  %223 = vmatprep.subr.mxu0 0.0
  %224 = vmatpush2.msra.mxu0 0.0
  %225 = vmatprep.subr.mxu0 0.0
  %226 = vmatpush2.msra.mxu0 0.0
  %227 = vmatprep.subr.mxu0 0.0
  %228 = vmatpush2.msra.mxu0 0.0
  %229 = vmatprep.subr.mxu0 0.0
  %230 = vmatpush2.msra.mxu0 0.0
  %231 = vmatprep.subr.mxu0 0.0
  %232 = vmatpush2.msra.mxu0 0.0
  %233 = vmatprep.subr.mxu0 0.0
  %234 = vmatpush2.msra.mxu0 0.0
  %235 = vmatprep.subr.mxu0 0.0
  %236 = vmatpush2.msra.mxu0 0.0
  %237 = vmatprep.subr.mxu0 0.0
  %238 = vmatpush2.msra.mxu0 %v86
  %239 = vmatprep.subr.mxu0 0.0
  %240 = vmatpush2.msra.mxu0 %v85
  %241 = vmatprep.subr.mxu0 0.0
  %242 = vmatpush2.msra.mxu0 %v84
  %243 = vmatprep.subr.mxu0 0.0
  %244 = vmatpush2.msra.mxu0 %v83
  %245 = vmatprep.subr.mxu0 0.0
  %246 = vmatpush2.msra.mxu0 %v82
  %247 = vmatprep.subr.mxu0 0.0
  %248 = vmatpush2.msra.mxu0 %v81
  %249 = vmatprep.mubr.f32.mxu0 %v89
  %250 = vmatmul.mubr.f32.gmra.mxu0 %v19
  %v251 = vpop.f32.mrf.mxu0
  %v252 = vadd.f32 %v167, %v251
  %v253 = vpop.f32.mrf.mxu0
  %254 = vmatprep.mubr.f32.mxu0 %v92
  %255 = vmatmul.mubr.f32.gmra.mxu0 %v23
  %v256 = vpop.f32.mrf.mxu0
  %v257 = vadd.f32 %v172, %v256
  %v258 = vpop.f32.mrf.mxu0
  %259 = vmatprep.mubr.f32.mxu0 %v95
  %260 = vmatmul.mubr.f32.gmra.mxu0 %v27
  %v261 = vpop.f32.mrf.mxu0
  %v262 = vadd.f32 %v177, %v261
  %v263 = vpop.f32.mrf.mxu0
  %264 = vmatprep.mubr.f32.mxu0 %v98
  %265 = vmatmul.mubr.f32.gmra.mxu0 %v31
  %v266 = vpop.f32.mrf.mxu0
  %v267 = vadd.f32 %v182, %v266
  %v268 = vpop.f32.mrf.mxu0
  %269 = vdwg.mxu0
  %v270 = vld [vmem:[%s2] sm:$0xff]
  %v271 = vld [vmem:[%s2 + $0x8] sm:$0xff]
  %v272 = vld [vmem:[%s2 + $0x10] sm:$0xff]
  %v273 = vld [vmem:[%s2 + $0x18] sm:$0xff]
  %275 = vset.pattern.permute.xlu0 0
  %276 = vperm.xlu0 %275, %v270
  %v277 = vpop.permute.xlu0 %276
  %280 = vset.pattern.permute.xlu0 0
  %281 = vperm.xlu0 %280, %v271
  %v282 = vpop.permute.xlu0 %281
  %285 = vset.pattern.permute.xlu0 0
  %286 = vperm.xlu0 %285, %v272
  %v287 = vpop.permute.xlu0 %286
  %290 = vset.pattern.permute.xlu0 0
  %291 = vperm.xlu0 %290, %v273
  %v292 = vpop.permute.xlu0 %291
  %v294 = vmul.f32 %v252, %v277
  %v295 = vmul.f32 %v257, %v282
  %v296 = vmul.f32 %v262, %v287
  %v297 = vmul.f32 %v267, %v292
  %298 = vset.pattern.permute.xlu0 1
  %299 = vperm.xlu0 %298, %v270
  %v300 = vpop.permute.xlu0 %299
  %302 = vset.pattern.permute.xlu0 1
  %303 = vperm.xlu0 %302, %v271
  %v304 = vpop.permute.xlu0 %303
  %306 = vset.pattern.permute.xlu0 1
  %307 = vperm.xlu0 %306, %v272
  %v308 = vpop.permute.xlu0 %307
  %310 = vset.pattern.permute.xlu0 1
  %311 = vperm.xlu0 %310, %v273
  %v312 = vpop.permute.xlu0 %311
  %v314 = vadd.f32 %v294, %v300
  %v315 = vadd.f32 %v295, %v304
  %v316 = vadd.f32 %v296, %v308
  %v317 = vadd.f32 %v297, %v312
  %vm318 = vcmp.gt.f32.partialorder %v314, 0.0
  %vm319 = vcmp.gt.f32.partialorder %v315, 0.0
  %vm320 = vcmp.gt.f32.partialorder %v316, 0.0
  %vm321 = vcmp.gt.f32.partialorder %v317, 0.0
  %v322 = vmul.f32 %v314, 0.2
  %v323 = vmul.f32 %v315, 0.2
  %v324 = vmul.f32 %v316, 0.2
  %v325 = vmul.f32 %v317, 0.2
  %v326 = vsel %vm318, %v314, %v322
  %v327 = vsel %vm319, %v315, %v323
  %v328 = vsel %vm320, %v316, %v324
  %v329 = vsel %vm321, %v317, %v325
  %v330 = vld [vmem:[%s3] sm:$0xff]
  %v331 = vld [vmem:[%s3 + $0x8] sm:$0xff]
  %v332 = vld [vmem:[%s3 + $0x10] sm:$0xff]
  %v333 = vld [vmem:[%s3 + $0x18] sm:$0xff]
  %v334 = vadd.f32 %v326, %v330
  %v335 = vadd.f32 %v327, %v331
  %v336 = vadd.f32 %v328, %v332
  %v337 = vadd.f32 %v329, %v333
  %338 = vst [vmem:[%s4] sm:$0xff] %v334
  %339 = vst [vmem:[%s4 + $0x8] sm:$0xff] %v335
  %340 = vst [vmem:[%s4 + $0x10] sm:$0xff] %v336
  %341 = vst [vmem:[%s4 + $0x18] sm:$0xff] %v337
  // Predicated region
  $region18: #{encoder_forward.31} parent=0 // pred_check
    _
  $region19: #{encoder_forward.31} parent=0 // pred_check_branch
    %343 = sbr.rel (0) target = $region21
  $region20: #{encoder_forward.31} parent=0 // pred_region
    _
  $region21: #{encoder_forward.31} parent=0 // pred_fallthru
    _
  // Predicated region
  $region22: #{encoder_forward.31} parent=0 // pred_check
    _
  $region23: #{encoder_forward.31} parent=0 // pred_check_branch
    %345 = sbr.rel (0) target = $region25
  $region24: #{encoder_forward.31} parent=0 // pred_region
    _
  $region25: #{encoder_forward.31} parent=0 // pred_fallthru
    _

// kernel: encoder_forward.32
$region0: #{encoder_forward.32}
  #allocation0 [shape = 'u32[]', space=smem, size = 0x4, offset = 0x4, fixed_abs, tag = 'smem constant byte address 0x4 - core index']
  #allocation1 [shape = 'u32[144,128]{1,0:T(1,128)}', space=vmem, size = 0x12000, scoped, tag = 'internal scratch']
  %s0 = inlined_call_operand.vmem [shape: f32[128,32], index: 0, kind: input, shape index: {}]
  %s1 = inlined_call_operand.vmem [shape: f32[32,128], index: 1, kind: input, shape index: {}]
  %s2 = inlined_call_operand.vmem [shape: f32[128,2], index: 2, kind: input, shape index: {}]
  %s3 = inlined_call_operand.vmem [shape: f32[128,128], index: 3, kind: output, shape index: {}]
  %s4 = sld [smem:[#allocation0]]
  $region22: #{encoder_forward.32} parent=0
    _
  %s6 = ssub.s32 1, %s4
  %s7 = scalar_select 0, %s6, %s4
  // Predicated region
  $region2: #{encoder_forward.32} parent=0 // pred_check
    _
  $region3: #{encoder_forward.32} parent=0 // pred_check_branch
    %9 = sbr.rel (0) target = $region5
  $region4: #{encoder_forward.32} parent=0 // pred_region
    _
  $region5: #{encoder_forward.32} parent=0 // pred_fallthru
    _
  // Predicated region
  $region6: #{encoder_forward.32} parent=0 // pred_check
    _
  $region7: #{encoder_forward.32} parent=0 // pred_check_branch
    %11 = sbr.rel (0) target = $region9
  $region8: #{encoder_forward.32} parent=0 // pred_region
    _
  $region9: #{encoder_forward.32} parent=0 // pred_fallthru
    _
  // Predicated region
  $region10: #{encoder_forward.32} parent=0 // pred_check
    _
  $region11: #{encoder_forward.32} parent=0 // pred_check_branch
    %13 = sbr.rel (0) target = $region13
  $region12: #{encoder_forward.32} parent=0 // pred_region
    _
  $region13: #{encoder_forward.32} parent=0 // pred_fallthru
    _
  %v14 = vld [vmem:[%s0] sm:$0xff]
  %v15 = vld [vmem:[%s0 + $0x8] sm:$0xff]
  %v16 = vld [vmem:[%s0 + $0x10] sm:$0xff]
  %v17 = vld [vmem:[%s0 + $0x18] sm:$0xff]
  %v18 = vld [vmem:[%s0 + $0x20] sm:$0xff]
  %v19 = vld [vmem:[%s0 + $0x28] sm:$0xff]
  %v20 = vld [vmem:[%s0 + $0x30] sm:$0xff]
  %v21 = vld [vmem:[%s0 + $0x38] sm:$0xff]
  %v22 = vld [vmem:[%s0 + $0x40] sm:$0xff]
  %v23 = vld [vmem:[%s0 + $0x48] sm:$0xff]
  %v24 = vld [vmem:[%s0 + $0x50] sm:$0xff]
  %v25 = vld [vmem:[%s0 + $0x58] sm:$0xff]
  %v26 = vld [vmem:[%s0 + $0x60] sm:$0xff]
  %v27 = vld [vmem:[%s0 + $0x68] sm:$0xff]
  %v28 = vld [vmem:[%s0 + $0x70] sm:$0xff]
  %v29 = vld [vmem:[%s0 + $0x78] sm:$0xff]
  %v30 = vld [vmem:[%s1] sm:$0xff]
  %v31 = vld [vmem:[%s1 + $0x8] sm:$0xff]
  %v32 = vld [vmem:[%s1 + $0x10] sm:$0xff]
  %v33 = vld [vmem:[%s1 + $0x18] sm:$0xff]
  %vm34 = vcmask 261120
  %v36 = vsel %vm34, %v14, 0
  %v39 = vsel %vm34, %v15, 0
  %v42 = vsel %vm34, %v16, 0
  %v45 = vsel %vm34, %v17, 0
  %v48 = vsel %vm34, %v18, 0
  %v51 = vsel %vm34, %v19, 0
  %v54 = vsel %vm34, %v20, 0
  %v57 = vsel %vm34, %v21, 0
  %v60 = vsel %vm34, %v22, 0
  %v63 = vsel %vm34, %v23, 0
  %v66 = vsel %vm34, %v24, 0
  %v69 = vsel %vm34, %v25, 0
  %v72 = vsel %vm34, %v26, 0
  %v75 = vsel %vm34, %v27, 0
  %v78 = vsel %vm34, %v28, 0
  %v81 = vsel %vm34, %v29, 0
  %83 = vmatprep.subr.mxu0 0.0
  %84 = vmatpush1.msra.mxu0 0.0
  %85 = vmatprep.subr.mxu0 0.0
  %86 = vmatpush1.msra.mxu0 0.0
  %87 = vmatprep.subr.mxu0 0.0
  %88 = vmatpush1.msra.mxu0 0.0
  %89 = vmatprep.subr.mxu0 0.0
  %90 = vmatpush1.msra.mxu0 0.0
  %91 = vmatprep.subr.mxu0 0.0
  %92 = vmatpush1.msra.mxu0 0.0
  %93 = vmatprep.subr.mxu0 0.0
  %94 = vmatpush1.msra.mxu0 0.0
  %95 = vmatprep.subr.mxu0 0.0
  %96 = vmatpush1.msra.mxu0 0.0
  %97 = vmatprep.subr.mxu0 0.0
  %98 = vmatpush1.msra.mxu0 0.0
  %99 = vmatprep.subr.mxu0 0.0
  %100 = vmatpush1.msra.mxu0 0.0
  %101 = vmatprep.subr.mxu0 0.0
  %102 = vmatpush1.msra.mxu0 0.0
  %103 = vmatprep.subr.mxu0 0.0
  %104 = vmatpush1.msra.mxu0 0.0
  %105 = vmatprep.subr.mxu0 0.0
  %106 = vmatpush1.msra.mxu0 0.0
  %107 = vmatprep.subr.mxu0 0.0
  %108 = vmatpush1.msra.mxu0 %v33
  %109 = vmatprep.subr.mxu0 0.0
  %110 = vmatpush1.msra.mxu0 %v32
  %111 = vmatprep.subr.mxu0 0.0
  %112 = vmatpush1.msra.mxu0 %v31
  %113 = vmatprep.subr.mxu0 0.0
  %114 = vmatpush1.msra.mxu0 %v30
  %115 = vmatprep.subr.mxu0 0.0
  %116 = vmatpush2.msra.mxu0 0.0
  %117 = vmatprep.subr.mxu0 0.0
  %118 = vmatpush2.msra.mxu0 0.0
  %119 = vmatprep.subr.mxu0 0.0
  %120 = vmatpush2.msra.mxu0 0.0
  %121 = vmatprep.subr.mxu0 0.0
  %122 = vmatpush2.msra.mxu0 0.0
  %123 = vmatprep.subr.mxu0 0.0
  %124 = vmatpush2.msra.mxu0 0.0
  %125 = vmatprep.subr.mxu0 0.0
  %126 = vmatpush2.msra.mxu0 0.0
  %127 = vmatprep.subr.mxu0 0.0
  %128 = vmatpush2.msra.mxu0 0.0
  %129 = vmatprep.subr.mxu0 0.0
  %130 = vmatpush2.msra.mxu0 0.0
  %131 = vmatprep.subr.mxu0 0.0
  %132 = vmatpush2.msra.mxu0 0.0
  %133 = vmatprep.subr.mxu0 0.0
  %134 = vmatpush2.msra.mxu0 0.0
  %135 = vmatprep.subr.mxu0 0.0
  %136 = vmatpush2.msra.mxu0 0.0
  %137 = vmatprep.subr.mxu0 0.0
  %138 = vmatpush2.msra.mxu0 0.0
  %139 = vmatprep.subr.mxu0 0.0
  %140 = vmatpush2.msra.mxu0 0.0
  %141 = vmatprep.subr.mxu0 0.0
  %142 = vmatpush2.msra.mxu0 0.0
  %143 = vmatprep.subr.mxu0 0.0
  %144 = vmatpush2.msra.mxu0 0.0
  %145 = vmatprep.subr.mxu0 0.0
  %146 = vmatpush2.msra.mxu0 0.0
  %147 = vmatprep.mubr.f32.mxu0 0.0
  %148 = vmatmul.mubr.f32.gmra.mxu0 %v36
  %v149 = vpop.f32.mrf.mxu0
  %v150 = vadd.f32 0.0, %v149
  %v151 = vpop.f32.mrf.mxu0
  %152 = vmatprep.mubr.f32.mxu0 0.0
  %153 = vmatmul.mubr.f32.gmra.mxu0 %v39
  %v154 = vpop.f32.mrf.mxu0
  %v155 = vadd.f32 0.0, %v154
  %v156 = vpop.f32.mrf.mxu0
  %157 = vmatprep.mubr.f32.mxu0 0.0
  %158 = vmatmul.mubr.f32.gmra.mxu0 %v42
  %v159 = vpop.f32.mrf.mxu0
  %v160 = vadd.f32 0.0, %v159
  %v161 = vpop.f32.mrf.mxu0
  %162 = vmatprep.mubr.f32.mxu0 0.0
  %163 = vmatmul.mubr.f32.gmra.mxu0 %v45
  %v164 = vpop.f32.mrf.mxu0
  %v165 = vadd.f32 0.0, %v164
  %v166 = vpop.f32.mrf.mxu0
  %167 = vmatprep.mubr.f32.mxu0 0.0
  %168 = vmatmul.mubr.f32.gmra.mxu0 %v48
  %v169 = vpop.f32.mrf.mxu0
  %v170 = vadd.f32 0.0, %v169
  %v171 = vpop.f32.mrf.mxu0
  %172 = vmatprep.mubr.f32.mxu0 0.0
  %173 = vmatmul.mubr.f32.gmra.mxu0 %v51
  %v174 = vpop.f32.mrf.mxu0
  %v175 = vadd.f32 0.0, %v174
  %v176 = vpop.f32.mrf.mxu0
  %177 = vmatprep.mubr.f32.mxu0 0.0
  %178 = vmatmul.mubr.f32.gmra.mxu0 %v54
  %v179 = vpop.f32.mrf.mxu0
  %v180 = vadd.f32 0.0, %v179
  %v181 = vpop.f32.mrf.mxu0
  %182 = vmatprep.mubr.f32.mxu0 0.0
  %183 = vmatmul.mubr.f32.gmra.mxu0 %v57
  %v184 = vpop.f32.mrf.mxu0
  %v185 = vadd.f32 0.0, %v184
  %v186 = vpop.f32.mrf.mxu0
  %187 = vmatprep.mubr.f32.mxu0 0.0
  %188 = vmatmul.mubr.f32.gmra.mxu0 %v60
  %v189 = vpop.f32.mrf.mxu0
  %v190 = vadd.f32 0.0, %v189
  %v191 = vpop.f32.mrf.mxu0
  %192 = vmatprep.mubr.f32.mxu0 0.0
  %193 = vmatmul.mubr.f32.gmra.mxu0 %v63
  %v194 = vpop.f32.mrf.mxu0
  %v195 = vadd.f32 0.0, %v194
  %v196 = vpop.f32.mrf.mxu0
  %197 = vmatprep.mubr.f32.mxu0 0.0
  %198 = vmatmul.mubr.f32.gmra.mxu0 %v66
  %v199 = vpop.f32.mrf.mxu0
  %v200 = vadd.f32 0.0, %v199
  %v201 = vpop.f32.mrf.mxu0
  %202 = vmatprep.mubr.f32.mxu0 0.0
  %203 = vmatmul.mubr.f32.gmra.mxu0 %v69
  %v204 = vpop.f32.mrf.mxu0
  %v205 = vadd.f32 0.0, %v204
  %v206 = vpop.f32.mrf.mxu0
  %207 = vmatprep.mubr.f32.mxu0 0.0
  %208 = vmatmul.mubr.f32.gmra.mxu0 %v72
  %v209 = vpop.f32.mrf.mxu0
  %v210 = vadd.f32 0.0, %v209
  %v211 = vpop.f32.mrf.mxu0
  %212 = vmatprep.mubr.f32.mxu0 0.0
  %213 = vmatmul.mubr.f32.gmra.mxu0 %v75
  %v214 = vpop.f32.mrf.mxu0
  %v215 = vadd.f32 0.0, %v214
  %v216 = vpop.f32.mrf.mxu0
  %217 = vmatprep.mubr.f32.mxu0 0.0
  %218 = vmatmul.mubr.f32.gmra.mxu0 %v78
  %v219 = vpop.f32.mrf.mxu0
  %v220 = vadd.f32 0.0, %v219
  %v221 = vpop.f32.mrf.mxu0
  %222 = vmatprep.mubr.f32.mxu0 0.0
  %223 = vmatmul.mubr.f32.gmra.mxu0 %v81
  %v224 = vpop.f32.mrf.mxu0
  %v225 = vadd.f32 0.0, %v224
  %v226 = vpop.f32.mrf.mxu0
  %227 = vdwg.mxu0
  %v228 = vld [vmem:[%s2] sm:$0xff]
  %v229 = vld [vmem:[%s2 + $0x8] sm:$0xff]
  %v230 = vld [vmem:[%s2 + $0x10] sm:$0xff]
  %v231 = vld [vmem:[%s2 + $0x18] sm:$0xff]
  %v232 = vld [vmem:[%s2 + $0x20] sm:$0xff]
  %v233 = vld [vmem:[%s2 + $0x28] sm:$0xff]
  %v234 = vld [vmem:[%s2 + $0x30] sm:$0xff]
  %v235 = vld [vmem:[%s2 + $0x38] sm:$0xff]
  %v236 = vld [vmem:[%s2 + $0x40] sm:$0xff]
  %v237 = vld [vmem:[%s2 + $0x48] sm:$0xff]
  %v238 = vld [vmem:[%s2 + $0x50] sm:$0xff]
  %v239 = vld [vmem:[%s2 + $0x58] sm:$0xff]
  %v240 = vld [vmem:[%s2 + $0x60] sm:$0xff]
  %v241 = vld [vmem:[%s2 + $0x68] sm:$0xff]
  %v242 = vld [vmem:[%s2 + $0x70] sm:$0xff]
  %v243 = vld [vmem:[%s2 + $0x78] sm:$0xff]
  %245 = vset.pattern.permute.xlu0 0
  %246 = vperm.xlu0 %245, %v228
  %v247 = vpop.permute.xlu0 %246
  %250 = vset.pattern.permute.xlu0 0
  %251 = vperm.xlu0 %250, %v229
  %v252 = vpop.permute.xlu0 %251
  %255 = vset.pattern.permute.xlu0 0
  %256 = vperm.xlu0 %255, %v230
  %v257 = vpop.permute.xlu0 %256
  %260 = vset.pattern.permute.xlu0 0
  %261 = vperm.xlu0 %260, %v231
  %v262 = vpop.permute.xlu0 %261
  %265 = vset.pattern.permute.xlu0 0
  %266 = vperm.xlu0 %265, %v232
  %v267 = vpop.permute.xlu0 %266
  %270 = vset.pattern.permute.xlu0 0
  %271 = vperm.xlu0 %270, %v233
  %v272 = vpop.permute.xlu0 %271
  %275 = vset.pattern.permute.xlu0 0
  %276 = vperm.xlu0 %275, %v234
  %v277 = vpop.permute.xlu0 %276
  %280 = vset.pattern.permute.xlu0 0
  %281 = vperm.xlu0 %280, %v235
  %v282 = vpop.permute.xlu0 %281
  %285 = vset.pattern.permute.xlu0 0
  %286 = vperm.xlu0 %285, %v236
  %v287 = vpop.permute.xlu0 %286
  %290 = vset.pattern.permute.xlu0 0
  %291 = vperm.xlu0 %290, %v237
  %v292 = vpop.permute.xlu0 %291
  %295 = vset.pattern.permute.xlu0 0
  %296 = vperm.xlu0 %295, %v238
  %v297 = vpop.permute.xlu0 %296
  %300 = vset.pattern.permute.xlu0 0
  %301 = vperm.xlu0 %300, %v239
  %v302 = vpop.permute.xlu0 %301
  %305 = vset.pattern.permute.xlu0 0
  %306 = vperm.xlu0 %305, %v240
  %v307 = vpop.permute.xlu0 %306
  %310 = vset.pattern.permute.xlu0 0
  %311 = vperm.xlu0 %310, %v241
  %v312 = vpop.permute.xlu0 %311
  %315 = vset.pattern.permute.xlu0 0
  %316 = vperm.xlu0 %315, %v242
  %v317 = vpop.permute.xlu0 %316
  %320 = vset.pattern.permute.xlu0 0
  %321 = vperm.xlu0 %320, %v243
  %v322 = vpop.permute.xlu0 %321
  %v324 = vmul.f32 %v150, %v247
  %v325 = vmul.f32 %v155, %v252
  %v326 = vmul.f32 %v160, %v257
  %v327 = vmul.f32 %v165, %v262
  %v328 = vmul.f32 %v170, %v267
  %v329 = vmul.f32 %v175, %v272
  %v330 = vmul.f32 %v180, %v277
  %v331 = vmul.f32 %v185, %v282
  %v332 = vmul.f32 %v190, %v287
  %v333 = vmul.f32 %v195, %v292
  %v334 = vmul.f32 %v200, %v297
  %v335 = vmul.f32 %v205, %v302
  %v336 = vmul.f32 %v210, %v307
  %v337 = vmul.f32 %v215, %v312
  %v338 = vmul.f32 %v220, %v317
  %v339 = vmul.f32 %v225, %v322
  %340 = vset.pattern.permute.xlu0 1
  %341 = vperm.xlu0 %340, %v228
  %v342 = vpop.permute.xlu0 %341
  %344 = vset.pattern.permute.xlu0 1
  %345 = vperm.xlu0 %344, %v229
  %v346 = vpop.permute.xlu0 %345
  %348 = vset.pattern.permute.xlu0 1
  %349 = vperm.xlu0 %348, %v230
  %v350 = vpop.permute.xlu0 %349
  %352 = vset.pattern.permute.xlu0 1
  %353 = vperm.xlu0 %352, %v231
  %v354 = vpop.permute.xlu0 %353
  %356 = vset.pattern.permute.xlu0 1
  %357 = vperm.xlu0 %356, %v232
  %v358 = vpop.permute.xlu0 %357
  %360 = vset.pattern.permute.xlu0 1
  %361 = vperm.xlu0 %360, %v233
  %v362 = vpop.permute.xlu0 %361
  %364 = vset.pattern.permute.xlu0 1
  %365 = vperm.xlu0 %364, %v234
  %v366 = vpop.permute.xlu0 %365
  %368 = vset.pattern.permute.xlu0 1
  %369 = vperm.xlu0 %368, %v235
  %v370 = vpop.permute.xlu0 %369
  %372 = vset.pattern.permute.xlu0 1
  %373 = vperm.xlu0 %372, %v236
  %v374 = vpop.permute.xlu0 %373
  %376 = vset.pattern.permute.xlu0 1
  %377 = vperm.xlu0 %376, %v237
  %v378 = vpop.permute.xlu0 %377
  %380 = vset.pattern.permute.xlu0 1
  %381 = vperm.xlu0 %380, %v238
  %v382 = vpop.permute.xlu0 %381
  %384 = vset.pattern.permute.xlu0 1
  %385 = vperm.xlu0 %384, %v239
  %v386 = vpop.permute.xlu0 %385
  %388 = vset.pattern.permute.xlu0 1
  %389 = vperm.xlu0 %388, %v240
  %v390 = vpop.permute.xlu0 %389
  %392 = vset.pattern.permute.xlu0 1
  %393 = vperm.xlu0 %392, %v241
  %v394 = vpop.permute.xlu0 %393
  %396 = vset.pattern.permute.xlu0 1
  %397 = vperm.xlu0 %396, %v242
  %v398 = vpop.permute.xlu0 %397
  %400 = vset.pattern.permute.xlu0 1
  %401 = vperm.xlu0 %400, %v243
  %v402 = vpop.permute.xlu0 %401
  %v404 = vadd.f32 %v324, %v342
  %v405 = vadd.f32 %v325, %v346
  %v406 = vadd.f32 %v326, %v350
  %v407 = vadd.f32 %v327, %v354
  %v408 = vadd.f32 %v328, %v358
  %v409 = vadd.f32 %v329, %v362
  %v410 = vadd.f32 %v330, %v366
  %v411 = vadd.f32 %v331, %v370
  %v412 = vadd.f32 %v332, %v374
  %v413 = vadd.f32 %v333, %v378
  %v414 = vadd.f32 %v334, %v382
  %v415 = vadd.f32 %v335, %v386
  %v416 = vadd.f32 %v336, %v390
  %v417 = vadd.f32 %v337, %v394
  %v418 = vadd.f32 %v338, %v398
  %v419 = vadd.f32 %v339, %v402
  %420 = vst [vmem:[%s3] sm:$0xff] %v404
  %421 = vst [vmem:[%s3 + $0x8] sm:$0xff] %v405
  %422 = vst [vmem:[%s3 + $0x10] sm:$0xff] %v406
  %423 = vst [vmem:[%s3 + $0x18] sm:$0xff] %v407
  %424 = vst [vmem:[%s3 + $0x20] sm:$0xff] %v408
  %425 = vst [vmem:[%s3 + $0x28] sm:$0xff] %v409
  %426 = vst [vmem:[%s3 + $0x30] sm:$0xff] %v410
  %427 = vst [vmem:[%s3 + $0x38] sm:$0xff] %v411
  %428 = vst [vmem:[%s3 + $0x40] sm:$0xff] %v412
  %429 = vst [vmem:[%s3 + $0x48] sm:$0xff] %v413
  %430 = vst [vmem:[%s3 + $0x50] sm:$0xff] %v414
  %431 = vst [vmem:[%s3 + $0x58] sm:$0xff] %v415
  %432 = vst [vmem:[%s3 + $0x60] sm:$0xff] %v416
  %433 = vst [vmem:[%s3 + $0x68] sm:$0xff] %v417
  %434 = vst [vmem:[%s3 + $0x70] sm:$0xff] %v418
  %435 = vst [vmem:[%s3 + $0x78] sm:$0xff] %v419
  // Predicated region
  $region14: #{encoder_forward.32} parent=0 // pred_check
    _
  $region15: #{encoder_forward.32} parent=0 // pred_check_branch
    %437 = sbr.rel (0) target = $region17
  $region16: #{encoder_forward.32} parent=0 // pred_region
    _
  $region17: #{encoder_forward.32} parent=0 // pred_fallthru
    _
  // Predicated region
  $region18: #{encoder_forward.32} parent=0 // pred_check
    _
  $region19: #{encoder_forward.32} parent=0 // pred_check_branch
    %439 = sbr.rel (0) target = $region21
  $region20: #{encoder_forward.32} parent=0 // pred_region
    _
  $region21: #{encoder_forward.32} parent=0 // pred_fallthru
    _

// kernel: encoder_forward.34
$region0: #{encoder_forward.34}
  #allocation0 [shape = 'u32[]', space=smem, size = 0x4, offset = 0x4, fixed_abs, tag = 'smem constant byte address 0x4 - core index']
  #allocation1 [shape = 'u32[144,128]{1,0:T(1,128)}', space=vmem, size = 0x12000, scoped, tag = 'internal scratch']
  %s0 = inlined_call_operand.vmem [shape: f32[8,112], index: 0, kind: input, shape index: {}]
  %s1 = inlined_call_operand.vmem [shape: f32[112,8192], index: 1, kind: input, shape index: {}]
  %s2 = inlined_call_operand.vmem [shape: f32[8,2], index: 2, kind: input, shape index: {}]
  %s3 = inlined_call_operand.vmem [shape: f32[8,8192], index: 3, kind: output, shape index: {}]
  %s4 = sld [smem:[#allocation0]]
  $region68: #{encoder_forward.34} parent=0
    _
  %s6 = ssub.s32 1, %s4
  %s7 = scalar_select 0, %s6, %s4
  $region1: #{encoder_forward.34} parent=0
    #allocation2 [shape = 'u8[917504]{0}', space=vmem, size = 0xe0000, scoped, tag = 'input window, operand 1']
    loop: start=0, step=1, limit=10
    $region2: #{encoder_forward.34} parent=1 // loop_pre_header
      _
    $region3: #{encoder_forward.34} parent=1 // loop_header
      %s9 = sphi 0, %s13
      %p10 = scmp.ge.s32.totalorder %s9, 10
      %s17 = sphi 0, %s17
      %s19 = sphi 0, %s17
      %s20 = sphi 0, %s19
      %s34 = sphi 0, %s20
      %s40 = sphi 0, %s42
      %s43 = sphi 0, %s40
      %s44 = sphi 0, %s43
      %s60 = sphi 0, %s44
      %s64 = sphi 0, %s64
      %s66 = sphi 0, %s64
      %s67 = sphi 0, %s66
      %s81 = sphi 0, %s67
      %s87 = sphi 0, %s89
      %s90 = sphi 0, %s87
      %s91 = sphi 0, %s90
      %s107 = sphi 0, %s91
    $region4: #{encoder_forward.34} parent=1 // loop_header_branch
      %12 = sbr.rel (%p10) target = $region8
    $region5: #{encoder_forward.34} parent=1 // loop_body
      %s14 = ssub.s32 %s9, 1
      %s15 = ssub.s32 %s9, 2
      %s16 = sadd.s32 %s9, 1
      %s18 = sadd.s32 %s17, 1
      %p21 = scmp.eq.s32.totalorder %s9, 7
      %p22 = scmp.ne.s32.totalorder %s17, %s19
      %p23 = scmp.eq.s32.totalorder %s9, 0
      %p24 = por %p22, %p23
      %p25 = scmp.ne.s32.totalorder %s17, %s19
      %p26 = scmp.eq.s32.totalorder %s14, 7
      %p27 = por %p25, %p26
      %p28 = scmp.ne.s32.totalorder %s19, %s20
      %p29 = scmp.eq.s32.totalorder %s14, 0
      %p30 = por %p28, %p29
      %p31 = scmp.ne.s32.totalorder %s19, %s20
      %p32 = scmp.eq.s32.totalorder %s15, 7
      %p33 = por %p31, %p32
      %p35 = scmp.ne.s32.totalorder %s20, %s34
      %p36 = scmp.eq.s32.totalorder %s15, 0
      %p37 = por %p35, %p36
      %s38 = ssub.s32 %s9, %s16
      %p39 = scmp.eq.s32.totalorder %s38, 0
      %s41 = sadd.s32 %s40, 1
      %s42 = scalar_select %p39, %s40, %s41
      %p45 = pneg %p39
      %p46 = scmp.eq.s32.totalorder %s9, 7
      %p47 = por %p45, %p46
      %p48 = scmp.ne.s32.totalorder %s40, %s43
      %p49 = scmp.eq.s32.totalorder %s9, 0
      %p50 = por %p48, %p49
      %p51 = scmp.ne.s32.totalorder %s40, %s43
      %p52 = scmp.eq.s32.totalorder %s14, 7
      %p53 = por %p51, %p52
      %p54 = scmp.ne.s32.totalorder %s43, %s44
      %p55 = scmp.eq.s32.totalorder %s14, 0
      %p56 = por %p54, %p55
      %p57 = scmp.ne.s32.totalorder %s43, %s44
      %p58 = scmp.eq.s32.totalorder %s15, 7
      %p59 = por %p57, %p58
      %p61 = scmp.ne.s32.totalorder %s44, %s60
      %p62 = scmp.eq.s32.totalorder %s15, 0
      %p63 = por %p61, %p62
      %s65 = sadd.s32 %s64, 1
      %p68 = scmp.eq.s32.totalorder %s9, 7
      %p69 = scmp.ne.s32.totalorder %s64, %s66
      %p70 = scmp.eq.s32.totalorder %s9, 0
      %p71 = por %p69, %p70
      %p72 = scmp.ne.s32.totalorder %s64, %s66
      %p73 = scmp.eq.s32.totalorder %s14, 7
      %p74 = por %p72, %p73
      %p75 = scmp.ne.s32.totalorder %s66, %s67
      %p76 = scmp.eq.s32.totalorder %s14, 0
      %p77 = por %p75, %p76
      %p78 = scmp.ne.s32.totalorder %s66, %s67
      %p79 = scmp.eq.s32.totalorder %s15, 7
      %p80 = por %p78, %p79
      %p82 = scmp.ne.s32.totalorder %s67, %s81
      %p83 = scmp.eq.s32.totalorder %s15, 0
      %p84 = por %p82, %p83
      %s85 = ssub.s32 %s9, %s16
      %p86 = scmp.eq.s32.totalorder %s85, 0
      %s88 = sadd.s32 %s87, 1
      %s89 = scalar_select %p86, %s87, %s88
      %p92 = pneg %p86
      %p93 = scmp.eq.s32.totalorder %s9, 7
      %p94 = por %p92, %p93
      %p95 = scmp.ne.s32.totalorder %s87, %s90
      %p96 = scmp.eq.s32.totalorder %s9, 0
      %p97 = por %p95, %p96
      %p98 = scmp.ne.s32.totalorder %s87, %s90
      %p99 = scmp.eq.s32.totalorder %s14, 7
      %p100 = por %p98, %p99
      %p101 = scmp.ne.s32.totalorder %s90, %s91
      %p102 = scmp.eq.s32.totalorder %s14, 0
      %p103 = por %p101, %p102
      %p104 = scmp.ne.s32.totalorder %s90, %s91
      %p105 = scmp.eq.s32.totalorder %s15, 7
      %p106 = por %p104, %p105
      %p108 = scmp.ne.s32.totalorder %s91, %s107
      %p109 = scmp.eq.s32.totalorder %s15, 0
      %p110 = por %p108, %p109
      %p111 = scmp.le.s32.totalorder 1, %s9
      %p112 = scmp.lt.s32.totalorder %s9, 9
      %p113 = pnand %p111, %p112
      %p114 = pneg %p113
      // Predicated region
      $region9: #{encoder_forward.34} parent=5 // pred_check
        _
      $region10: #{encoder_forward.34} parent=5 // pred_check_branch
        %116 = sbr.rel (%p113) target = $region12
      $region11: #{encoder_forward.34} parent=5 // pred_region
        %s117 = ssub.s32 %s9, 1
        // Predicated region
        $region13: #{encoder_forward.34} parent=11 // pred_check
          %p118 = pneg %p30
        $region14: #{encoder_forward.34} parent=11 // pred_check_branch
          %120 = sbr.rel (%p118) target = $region16
        $region15: #{encoder_forward.34} parent=11 // pred_region
          _
        $region16: #{encoder_forward.34} parent=11 // pred_fallthru
          _
        // Predicated region
        $region17: #{encoder_forward.34} parent=11 // pred_check
          %p121 = pneg %p77
        $region18: #{encoder_forward.34} parent=11 // pred_check_branch
          %123 = sbr.rel (%p121) target = $region20
        $region19: #{encoder_forward.34} parent=11 // pred_region
          _
        $region20: #{encoder_forward.34} parent=11 // pred_fallthru
          _
      $region12: #{encoder_forward.34} parent=5 // pred_fallthru
        _
      %p124 = scmp.lt.s32.totalorder %s9, 8
      // Predicated region
      $region21: #{encoder_forward.34} parent=5 // pred_check
        %p125 = pneg %p124
      $region22: #{encoder_forward.34} parent=5 // pred_check_branch
        %127 = sbr.rel (%p125) target = $region24
      $region23: #{encoder_forward.34} parent=5 // pred_region
        // Predicated region
        $region25: #{encoder_forward.34} parent=23 // pred_check
          %p128 = pneg %p50
        $region26: #{encoder_forward.34} parent=23 // pred_check_branch
          %130 = sbr.rel (%p128) target = $region28
        $region27: #{encoder_forward.34} parent=23 // pred_region
          %s131 = sand.u32 %s40, 1
          %s132 = sand.u32 %s40, 1
          %s133 = smul.addr %s132, 896
          %s134 = scalar_lea.vmem [#allocation2], %s133
          %s135 = smul.u32 8, %s9
          %s136 = smul.addr %s135, 8
          %s137 = scalar_lea.vmem %s1, %s136
          // Predicated region
          $region29: #{encoder_forward.34} parent=27 // pred_check
            _
          $region30: #{encoder_forward.34} parent=27 // pred_check_branch
            %139 = sbr.rel (0) target = $region32
          $region31: #{encoder_forward.34} parent=27 // pred_region
            // Predicated region
            $region33: #{encoder_forward.34} parent=31 // pred_check
              _
            $region34: #{encoder_forward.34} parent=31 // pred_check_branch
              %141 = sbr.rel (0) target = $region36
            $region35: #{encoder_forward.34} parent=31 // pred_region
              loop: start=0, step=1, limit=1
              $region37: #{encoder_forward.34} parent=35 // loop_pre_header
                _
              $region38: #{encoder_forward.34} parent=35 // loop_header
                %s143 = sphi 0, %s147
                %p144 = scmp.ge.s32.totalorder %s143, 1
                %s148 = sphi %s137, %s137
                %s149 = sphi %s134, %s134
              $region39: #{encoder_forward.34} parent=35 // loop_header_branch
                %146 = sbr.rel (%p144) target = $region43
              $region40: #{encoder_forward.34} parent=35 // loop_body
                %v150 = vld [vmem:[%s148] sm:$0xff]
                %151 = vst [vmem:[%s149] sm:$0xff] %v150
                %v152 = vld [vmem:[%s148 + $0x8] sm:$0xff]
                %153 = vst [vmem:[%s149 + $0x8] sm:$0xff] %v152
                %v154 = vld [vmem:[%s148 + $0x10] sm:$0xff]
                %155 = vst [vmem:[%s149 + $0x10] sm:$0xff] %v154
                %v156 = vld [vmem:[%s148 + $0x18] sm:$0xff]
                %157 = vst [vmem:[%s149 + $0x18] sm:$0xff] %v156
                %v158 = vld [vmem:[%s148 + $0x20] sm:$0xff]
                %159 = vst [vmem:[%s149 + $0x20] sm:$0xff] %v158
                %v160 = vld [vmem:[%s148 + $0x28] sm:$0xff]
                %161 = vst [vmem:[%s149 + $0x28] sm:$0xff] %v160
                %v162 = vld [vmem:[%s148 + $0x30] sm:$0xff]
                %163 = vst [vmem:[%s149 + $0x30] sm:$0xff] %v162
                %v164 = vld [vmem:[%s148 + $0x38] sm:$0xff]
                %165 = vst [vmem:[%s149 + $0x38] sm:$0xff] %v164
                %v166 = vld [vmem:[%s148 + $0x200] sm:$0xff]
                %167 = vst [vmem:[%s149 + $0x40] sm:$0xff] %v166
                %v168 = vld [vmem:[%s148 + $0x208] sm:$0xff]
                %169 = vst [vmem:[%s149 + $0x48] sm:$0xff] %v168
                %v170 = vld [vmem:[%s148 + $0x210] sm:$0xff]
                %171 = vst [vmem:[%s149 + $0x50] sm:$0xff] %v170
                %v172 = vld [vmem:[%s148 + $0x218] sm:$0xff]
                %173 = vst [vmem:[%s149 + $0x58] sm:$0xff] %v172
                %v174 = vld [vmem:[%s148 + $0x220] sm:$0xff]
                %175 = vst [vmem:[%s149 + $0x60] sm:$0xff] %v174
                %v176 = vld [vmem:[%s148 + $0x228] sm:$0xff]
                %177 = vst [vmem:[%s149 + $0x68] sm:$0xff] %v176
                %v178 = vld [vmem:[%s148 + $0x230] sm:$0xff]
                %179 = vst [vmem:[%s149 + $0x70] sm:$0xff] %v178
                %v180 = vld [vmem:[%s148 + $0x238] sm:$0xff]
                %181 = vst [vmem:[%s149 + $0x78] sm:$0xff] %v180
                %v182 = vld [vmem:[%s148 + $0x400] sm:$0xff]
                %183 = vst [vmem:[%s149 + $0x80] sm:$0xff] %v182
                %v184 = vld [vmem:[%s148 + $0x408] sm:$0xff]
                %185 = vst [vmem:[%s149 + $0x88] sm:$0xff] %v184
                %v186 = vld [vmem:[%s148 + $0x410] sm:$0xff]
                %187 = vst [vmem:[%s149 + $0x90] sm:$0xff] %v186
                %v188 = vld [vmem:[%s148 + $0x418] sm:$0xff]
                %189 = vst [vmem:[%s149 + $0x98] sm:$0xff] %v188
                %v190 = vld [vmem:[%s148 + $0x420] sm:$0xff]
                %191 = vst [vmem:[%s149 + $0xa0] sm:$0xff] %v190
                %v192 = vld [vmem:[%s148 + $0x428] sm:$0xff]
                %193 = vst [vmem:[%s149 + $0xa8] sm:$0xff] %v192
                %v194 = vld [vmem:[%s148 + $0x430] sm:$0xff]
                %195 = vst [vmem:[%s149 + $0xb0] sm:$0xff] %v194
                %v196 = vld [vmem:[%s148 + $0x438] sm:$0xff]
                %197 = vst [vmem:[%s149 + $0xb8] sm:$0xff] %v196
                %v198 = vld [vmem:[%s148 + $0x600] sm:$0xff]
                %199 = vst [vmem:[%s149 + $0xc0] sm:$0xff] %v198
                %v200 = vld [vmem:[%s148 + $0x608] sm:$0xff]
                %201 = vst [vmem:[%s149 + $0xc8] sm:$0xff] %v200
                %v202 = vld [vmem:[%s148 + $0x610] sm:$0xff]
                %203 = vst [vmem:[%s149 + $0xd0] sm:$0xff] %v202
                %v204 = vld [vmem:[%s148 + $0x618] sm:$0xff]
                %205 = vst [vmem:[%s149 + $0xd8] sm:$0xff] %v204
                %v206 = vld [vmem:[%s148 + $0x620] sm:$0xff]
                %207 = vst [vmem:[%s149 + $0xe0] sm:$0xff] %v206
                %v208 = vld [vmem:[%s148 + $0x628] sm:$0xff]
                %209 = vst [vmem:[%s149 + $0xe8] sm:$0xff] %v208
                %v210 = vld [vmem:[%s148 + $0x630] sm:$0xff]
                %211 = vst [vmem:[%s149 + $0xf0] sm:$0xff] %v210
                %v212 = vld [vmem:[%s148 + $0x638] sm:$0xff]
                %213 = vst [vmem:[%s149 + $0xf8] sm:$0xff] %v212
                %v214 = vld [vmem:[%s148 + $0x800] sm:$0xff]
                %215 = vst [vmem:[%s149 + $0x100] sm:$0xff] %v214
                %v216 = vld [vmem:[%s148 + $0x808] sm:$0xff]
                %217 = vst [vmem:[%s149 + $0x108] sm:$0xff] %v216
                %v218 = vld [vmem:[%s148 + $0x810] sm:$0xff]
                %219 = vst [vmem:[%s149 + $0x110] sm:$0xff] %v218
                %v220 = vld [vmem:[%s148 + $0x818] sm:$0xff]
                %221 = vst [vmem:[%s149 + $0x118] sm:$0xff] %v220
                %v222 = vld [vmem:[%s148 + $0x820] sm:$0xff]
                %223 = vst [vmem:[%s149 + $0x120] sm:$0xff] %v222
                %v224 = vld [vmem:[%s148 + $0x828] sm:$0xff]
                %225 = vst [vmem:[%s149 + $0x128] sm:$0xff] %v224
                %v226 = vld [vmem:[%s148 + $0x830] sm:$0xff]
                %227 = vst [vmem:[%s149 + $0x130] sm:$0xff] %v226
                %v228 = vld [vmem:[%s148 + $0x838] sm:$0xff]
                %229 = vst [vmem:[%s149 + $0x138] sm:$0xff] %v228
                %v230 = vld [vmem:[%s148 + $0xa00] sm:$0xff]
                %231 = vst [vmem:[%s149 + $0x140] sm:$0xff] %v230
                %v232 = vld [vmem:[%s148 + $0xa08] sm:$0xff]
                %233 = vst [vmem:[%s149 + $0x148] sm:$0xff] %v232
                %v234 = vld [vmem:[%s148 + $0xa10] sm:$0xff]
                %235 = vst [vmem:[%s149 + $0x150] sm:$0xff] %v234
                %v236 = vld [vmem:[%s148 + $0xa18] sm:$0xff]
                %237 = vst [vmem:[%s149 + $0x158] sm:$0xff] %v236
                %v238 = vld [vmem:[%s148 + $0xa20] sm:$0xff]
                %239 = vst [vmem:[%s149 + $0x160] sm:$0xff] %v238
                %v240 = vld [vmem:[%s148 + $0xa28] sm:$0xff]
                %241 = vst [vmem:[%s149 + $0x168] sm:$0xff] %v240
                %v242 = vld [vmem:[%s148 + $0xa30] sm:$0xff]
                %243 = vst [vmem:[%s149 + $0x170] sm:$0xff] %v242
                %v244 = vld [vmem:[%s148 + $0xa38] sm:$0xff]
                %245 = vst [vmem:[%s149 + $0x178] sm:$0xff] %v244
                %v246 = vld [vmem:[%s148 + $0xc00] sm:$0xff]
                %247 = vst [vmem:[%s149 + $0x180] sm:$0xff] %v246
                %v248 = vld [vmem:[%s148 + $0xc08] sm:$0xff]
                %249 = vst [vmem:[%s149 + $0x188] sm:$0xff] %v248
                %v250 = vld [vmem:[%s148 + $0xc10] sm:$0xff]
                %251 = vst [vmem:[%s149 + $0x190] sm:$0xff] %v250
                %v252 = vld [vmem:[%s148 + $0xc18] sm:$0xff]
                %253 = vst [vmem:[%s149 + $0x198] sm:$0xff] %v252
                %v254 = vld [vmem:[%s148 + $0xc20] sm:$0xff]
                %255 = vst [vmem:[%s149 + $0x1a0] sm:$0xff] %v254
                %v256 = vld [vmem:[%s148 + $0xc28] sm:$0xff]
                %257 = vst [vmem:[%s149 + $0x1a8] sm:$0xff] %v256
                %v258 = vld [vmem:[%s148 + $0xc30] sm:$0xff]
                %259 = vst [vmem:[%s149 + $0x1b0] sm:$0xff] %v258
                %v260 = vld [vmem:[%s148 + $0xc38] sm:$0xff]
                %261 = vst [vmem:[%s149 + $0x1b8] sm:$0xff] %v260
                %v262 = vld [vmem:[%s148 + $0xe00] sm:$0xff]
                %263 = vst [vmem:[%s149 + $0x1c0] sm:$0xff] %v262
                %v264 = vld [vmem:[%s148 + $0xe08] sm:$0xff]
                %265 = vst [vmem:[%s149 + $0x1c8] sm:$0xff] %v264
                %v266 = vld [vmem:[%s148 + $0xe10] sm:$0xff]
                %267 = vst [vmem:[%s149 + $0x1d0] sm:$0xff] %v266
                %v268 = vld [vmem:[%s148 + $0xe18] sm:$0xff]
                %269 = vst [vmem:[%s149 + $0x1d8] sm:$0xff] %v268
                %v270 = vld [vmem:[%s148 + $0xe20] sm:$0xff]
                %271 = vst [vmem:[%s149 + $0x1e0] sm:$0xff] %v270
                %v272 = vld [vmem:[%s148 + $0xe28] sm:$0xff]
                %273 = vst [vmem:[%s149 + $0x1e8] sm:$0xff] %v272
                %v274 = vld [vmem:[%s148 + $0xe30] sm:$0xff]
                %275 = vst [vmem:[%s149 + $0x1f0] sm:$0xff] %v274
                %v276 = vld [vmem:[%s148 + $0xe38] sm:$0xff]
                %277 = vst [vmem:[%s149 + $0x1f8] sm:$0xff] %v276
                %v278 = vld [vmem:[%s148 + $0x1000] sm:$0xff]
                %279 = vst [vmem:[%s149 + $0x200] sm:$0xff] %v278
                %v280 = vld [vmem:[%s148 + $0x1008] sm:$0xff]
                %281 = vst [vmem:[%s149 + $0x208] sm:$0xff] %v280
                %v282 = vld [vmem:[%s148 + $0x1010] sm:$0xff]
                %283 = vst [vmem:[%s149 + $0x210] sm:$0xff] %v282
                %v284 = vld [vmem:[%s148 + $0x1018] sm:$0xff]
                %285 = vst [vmem:[%s149 + $0x218] sm:$0xff] %v284
                %v286 = vld [vmem:[%s148 + $0x1020] sm:$0xff]
                %287 = vst [vmem:[%s149 + $0x220] sm:$0xff] %v286
                %v288 = vld [vmem:[%s148 + $0x1028] sm:$0xff]
                %289 = vst [vmem:[%s149 + $0x228] sm:$0xff] %v288
                %v290 = vld [vmem:[%s148 + $0x1030] sm:$0xff]
                %291 = vst [vmem:[%s149 + $0x230] sm:$0xff] %v290
                %v292 = vld [vmem:[%s148 + $0x1038] sm:$0xff]
                %293 = vst [vmem:[%s149 + $0x238] sm:$0xff] %v292
                %v294 = vld [vmem:[%s148 + $0x1200] sm:$0xff]
                %295 = vst [vmem:[%s149 + $0x240] sm:$0xff] %v294
                %v296 = vld [vmem:[%s148 + $0x1208] sm:$0xff]
                %297 = vst [vmem:[%s149 + $0x248] sm:$0xff] %v296
                %v298 = vld [vmem:[%s148 + $0x1210] sm:$0xff]
                %299 = vst [vmem:[%s149 + $0x250] sm:$0xff] %v298
                %v300 = vld [vmem:[%s148 + $0x1218] sm:$0xff]
                %301 = vst [vmem:[%s149 + $0x258] sm:$0xff] %v300
                %v302 = vld [vmem:[%s148 + $0x1220] sm:$0xff]
                %303 = vst [vmem:[%s149 + $0x260] sm:$0xff] %v302
                %v304 = vld [vmem:[%s148 + $0x1228] sm:$0xff]
                %305 = vst [vmem:[%s149 + $0x268] sm:$0xff] %v304
                %v306 = vld [vmem:[%s148 + $0x1230] sm:$0xff]
                %307 = vst [vmem:[%s149 + $0x270] sm:$0xff] %v306
                %v308 = vld [vmem:[%s148 + $0x1238] sm:$0xff]
                %309 = vst [vmem:[%s149 + $0x278] sm:$0xff] %v308
                %v310 = vld [vmem:[%s148 + $0x1400] sm:$0xff]
                %311 = vst [vmem:[%s149 + $0x280] sm:$0xff] %v310
                %v312 = vld [vmem:[%s148 + $0x1408] sm:$0xff]
                %313 = vst [vmem:[%s149 + $0x288] sm:$0xff] %v312
                %v314 = vld [vmem:[%s148 + $0x1410] sm:$0xff]
                %315 = vst [vmem:[%s149 + $0x290] sm:$0xff] %v314
                %v316 = vld [vmem:[%s148 + $0x1418] sm:$0xff]
                %317 = vst [vmem:[%s149 + $0x298] sm:$0xff] %v316
                %v318 = vld [vmem:[%s148 + $0x1420] sm:$0xff]
                %319 = vst [vmem:[%s149 + $0x2a0] sm:$0xff] %v318
                %v320 = vld [vmem:[%s148 + $0x1428] sm:$0xff]
                %321 = vst [vmem:[%s149 + $0x2a8] sm:$0xff] %v320
                %v322 = vld [vmem:[%s148 + $0x1430] sm:$0xff]
                %323 = vst [vmem:[%s149 + $0x2b0] sm:$0xff] %v322
                %v324 = vld [vmem:[%s148 + $0x1438] sm:$0xff]
                %325 = vst [vmem:[%s149 + $0x2b8] sm:$0xff] %v324
                %v326 = vld [vmem:[%s148 + $0x1600] sm:$0xff]
                %327 = vst [vmem:[%s149 + $0x2c0] sm:$0xff] %v326
                %v328 = vld [vmem:[%s148 + $0x1608] sm:$0xff]
                %329 = vst [vmem:[%s149 + $0x2c8] sm:$0xff] %v328
                %v330 = vld [vmem:[%s148 + $0x1610] sm:$0xff]
                %331 = vst [vmem:[%s149 + $0x2d0] sm:$0xff] %v330
                %v332 = vld [vmem:[%s148 + $0x1618] sm:$0xff]
                %333 = vst [vmem:[%s149 + $0x2d8] sm:$0xff] %v332
                %v334 = vld [vmem:[%s148 + $0x1620] sm:$0xff]
                %335 = vst [vmem:[%s149 + $0x2e0] sm:$0xff] %v334
                %v336 = vld [vmem:[%s148 + $0x1628] sm:$0xff]
                %337 = vst [vmem:[%s149 + $0x2e8] sm:$0xff] %v336
                %v338 = vld [vmem:[%s148 + $0x1630] sm:$0xff]
                %339 = vst [vmem:[%s149 + $0x2f0] sm:$0xff] %v338
                %v340 = vld [vmem:[%s148 + $0x1638] sm:$0xff]
                %341 = vst [vmem:[%s149 + $0x2f8] sm:$0xff] %v340
                %v342 = vld [vmem:[%s148 + $0x1800] sm:$0xff]
                %343 = vst [vmem:[%s149 + $0x300] sm:$0xff] %v342
                %v344 = vld [vmem:[%s148 + $0x1808] sm:$0xff]
                %345 = vst [vmem:[%s149 + $0x308] sm:$0xff] %v344
                %v346 = vld [vmem:[%s148 + $0x1810] sm:$0xff]
                %347 = vst [vmem:[%s149 + $0x310] sm:$0xff] %v346
                %v348 = vld [vmem:[%s148 + $0x1818] sm:$0xff]
                %349 = vst [vmem:[%s149 + $0x318] sm:$0xff] %v348
                %v350 = vld [vmem:[%s148 + $0x1820] sm:$0xff]
                %351 = vst [vmem:[%s149 + $0x320] sm:$0xff] %v350
                %v352 = vld [vmem:[%s148 + $0x1828] sm:$0xff]
                %353 = vst [vmem:[%s149 + $0x328] sm:$0xff] %v352
                %v354 = vld [vmem:[%s148 + $0x1830] sm:$0xff]
                %355 = vst [vmem:[%s149 + $0x330] sm:$0xff] %v354
                %v356 = vld [vmem:[%s148 + $0x1838] sm:$0xff]
                %357 = vst [vmem:[%s149 + $0x338] sm:$0xff] %v356
                %v358 = vld [vmem:[%s148 + $0x1a00] sm:$0xff]
                %359 = vst [vmem:[%s149 + $0x340] sm:$0xff] %v358
                %v360 = vld [vmem:[%s148 + $0x1a08] sm:$0xff]
                %361 = vst [vmem:[%s149 + $0x348] sm:$0xff] %v360
                %v362 = vld [vmem:[%s148 + $0x1a10] sm:$0xff]
                %363 = vst [vmem:[%s149 + $0x350] sm:$0xff] %v362
                %v364 = vld [vmem:[%s148 + $0x1a18] sm:$0xff]
                %365 = vst [vmem:[%s149 + $0x358] sm:$0xff] %v364
                %v366 = vld [vmem:[%s148 + $0x1a20] sm:$0xff]
                %367 = vst [vmem:[%s149 + $0x360] sm:$0xff] %v366
                %v368 = vld [vmem:[%s148 + $0x1a28] sm:$0xff]
                %369 = vst [vmem:[%s149 + $0x368] sm:$0xff] %v368
                %v370 = vld [vmem:[%s148 + $0x1a30] sm:$0xff]
                %371 = vst [vmem:[%s149 + $0x370] sm:$0xff] %v370
                %v372 = vld [vmem:[%s148 + $0x1a38] sm:$0xff]
                %373 = vst [vmem:[%s149 + $0x378] sm:$0xff] %v372
              $region41: #{encoder_forward.34} parent=35 // loop_footer
                %s147 = sadd.s32 1, %s143
              $region42: #{encoder_forward.34} parent=35 // loop_footer_branch
                %142 = sbr.rel target = $region38
              $region43: #{encoder_forward.34} parent=35 // loop_exit
                _
            $region36: #{encoder_forward.34} parent=31 // pred_fallthru
              _
            // Predicated region
            $region44: #{encoder_forward.34} parent=31 // pred_check
              _
            $region45: #{encoder_forward.34} parent=31 // pred_check_branch
              %375 = sbr.rel target = $region47
            $region46: #{encoder_forward.34} parent=31 // pred_region
              _
            $region47: #{encoder_forward.34} parent=31 // pred_fallthru
              _
          $region32: #{encoder_forward.34} parent=27 // pred_fallthru
            _
          %376 = vnop
        $region28: #{encoder_forward.34} parent=23 // pred_fallthru
          _
      $region24: #{encoder_forward.34} parent=5 // pred_fallthru
        _
      %p377 = scmp.le.s32.totalorder 1, %s9
      %p378 = scmp.lt.s32.totalorder %s9, 9
      %p379 = pnand %p377, %p378
      %p380 = pneg %p379
      // Predicated region
      $region48: #{encoder_forward.34} parent=5 // pred_check
        _
      $region49: #{encoder_forward.34} parent=5 // pred_check_branch
        %382 = sbr.rel (%p379) target = $region51
      $region50: #{encoder_forward.34} parent=5 // pred_region
        %s383 = ssub.s32 %s9, 1
        %s384 = sand.u32 %s43, 1
        %s385 = sand.u32 %s43, 1
        %s386 = smul.addr %s385, 896
        %s387 = scalar_lea.vmem [#allocation2], %s386
        // Predicated region
        $region52: #{encoder_forward.34} parent=50 // pred_check
          %p388 = pneg %p56
        $region53: #{encoder_forward.34} parent=50 // pred_check_branch
          %390 = sbr.rel (%p388) target = $region55
        $region54: #{encoder_forward.34} parent=50 // pred_region
          _
        $region55: #{encoder_forward.34} parent=50 // pred_fallthru
          _
        %p391 = pneg %p30
        %p392 = pneg %p27
        %s393 = sand.u32 %s43, 1
        %s394 = sand.u32 %s43, 1
        %s395 = smul.addr %s394, 896
        %s396 = scalar_lea.vmem [#allocation2], %s395
        %p397 = pneg %p56
        %p398 = pneg %p53
        %p399 = pneg %p77
        %p400 = pneg %p74
        %p401 = pneg %p103
        %p402 = pneg %p100
        %s403 = smul.u32 8, %s14
        %p404 = scmp.lt.s32.totalorder %s403, 63
        %s405 = scalar_select %p404, %s403, 63
        %s406 = smul.addr %s405, 8
        %s407 = scalar_lea.vmem %s3, %s406
        %s408 = smul.u32 8, %s14
        %s409 = smul.u32 8, %s14
        %p410 = scmp.lt.s32.totalorder %s409, 63
        %s411 = scalar_select %p410, %s409, 63
        %s412 = smul.addr %s411, 8
        %s413 = scalar_lea.vmem %s3, %s412
        %s414 = smul.u32 8, %s14
        %v415 = vld [vmem:[%s0] sm:$0xff]
        %v416 = vld [vmem:[%s387] sm:$0xff]
        %v417 = vld [vmem:[%s387 + $0x8] sm:$0xff]
        %v418 = vld [vmem:[%s387 + $0x10] sm:$0xff]
        %v419 = vld [vmem:[%s387 + $0x18] sm:$0xff]
        %v420 = vld [vmem:[%s387 + $0x20] sm:$0xff]
        %v421 = vld [vmem:[%s387 + $0x28] sm:$0xff]
        %v422 = vld [vmem:[%s387 + $0x30] sm:$0xff]
        %v423 = vld [vmem:[%s387 + $0x38] sm:$0xff]
        %v424 = vld [vmem:[%s387 + $0x40] sm:$0xff]
        %v425 = vld [vmem:[%s387 + $0x48] sm:$0xff]
        %v426 = vld [vmem:[%s387 + $0x50] sm:$0xff]
        %v427 = vld [vmem:[%s387 + $0x58] sm:$0xff]
        %v428 = vld [vmem:[%s387 + $0x60] sm:$0xff]
        %v429 = vld [vmem:[%s387 + $0x68] sm:$0xff]
        %v430 = vld [vmem:[%s387 + $0x70] sm:$0xff]
        %v431 = vld [vmem:[%s387 + $0x78] sm:$0xff]
        %v432 = vld [vmem:[%s387 + $0x80] sm:$0xff]
        %v433 = vld [vmem:[%s387 + $0x88] sm:$0xff]
        %v434 = vld [vmem:[%s387 + $0x90] sm:$0xff]
        %v435 = vld [vmem:[%s387 + $0x98] sm:$0xff]
        %v436 = vld [vmem:[%s387 + $0xa0] sm:$0xff]
        %v437 = vld [vmem:[%s387 + $0xa8] sm:$0xff]
        %v438 = vld [vmem:[%s387 + $0xb0] sm:$0xff]
        %v439 = vld [vmem:[%s387 + $0xb8] sm:$0xff]
        %v440 = vld [vmem:[%s387 + $0xc0] sm:$0xff]
        %v441 = vld [vmem:[%s387 + $0xc8] sm:$0xff]
        %v442 = vld [vmem:[%s387 + $0xd0] sm:$0xff]
        %v443 = vld [vmem:[%s387 + $0xd8] sm:$0xff]
        %v444 = vld [vmem:[%s387 + $0xe0] sm:$0xff]
        %v445 = vld [vmem:[%s387 + $0xe8] sm:$0xff]
        %v446 = vld [vmem:[%s387 + $0xf0] sm:$0xff]
        %v447 = vld [vmem:[%s387 + $0xf8] sm:$0xff]
        %v448 = vld [vmem:[%s387 + $0x100] sm:$0xff]
        %v449 = vld [vmem:[%s387 + $0x108] sm:$0xff]
        %v450 = vld [vmem:[%s387 + $0x110] sm:$0xff]
        %v451 = vld [vmem:[%s387 + $0x118] sm:$0xff]
        %v452 = vld [vmem:[%s387 + $0x120] sm:$0xff]
        %v453 = vld [vmem:[%s387 + $0x128] sm:$0xff]
        %v454 = vld [vmem:[%s387 + $0x130] sm:$0xff]
        %v455 = vld [vmem:[%s387 + $0x138] sm:$0xff]
        %v456 = vld [vmem:[%s387 + $0x140] sm:$0xff]
        %v457 = vld [vmem:[%s387 + $0x148] sm:$0xff]
        %v458 = vld [vmem:[%s387 + $0x150] sm:$0xff]
        %v459 = vld [vmem:[%s387 + $0x158] sm:$0xff]
        %v460 = vld [vmem:[%s387 + $0x160] sm:$0xff]
        %v461 = vld [vmem:[%s387 + $0x168] sm:$0xff]
        %v462 = vld [vmem:[%s387 + $0x170] sm:$0xff]
        %v463 = vld [vmem:[%s387 + $0x178] sm:$0xff]
        %v464 = vld [vmem:[%s387 + $0x180] sm:$0xff]
        %v465 = vld [vmem:[%s387 + $0x188] sm:$0xff]
        %v466 = vld [vmem:[%s387 + $0x190] sm:$0xff]
        %v467 = vld [vmem:[%s387 + $0x198] sm:$0xff]
        %v468 = vld [vmem:[%s387 + $0x1a0] sm:$0xff]
        %v469 = vld [vmem:[%s387 + $0x1a8] sm:$0xff]
        %v470 = vld [vmem:[%s387 + $0x1b0] sm:$0xff]
        %v471 = vld [vmem:[%s387 + $0x1b8] sm:$0xff]
        %v472 = vld [vmem:[%s387 + $0x1c0] sm:$0xff]
        %v473 = vld [vmem:[%s387 + $0x1c8] sm:$0xff]
        %v474 = vld [vmem:[%s387 + $0x1d0] sm:$0xff]
        %v475 = vld [vmem:[%s387 + $0x1d8] sm:$0xff]
        %v476 = vld [vmem:[%s387 + $0x1e0] sm:$0xff]
        %v477 = vld [vmem:[%s387 + $0x1e8] sm:$0xff]
        %v478 = vld [vmem:[%s387 + $0x1f0] sm:$0xff]
        %v479 = vld [vmem:[%s387 + $0x1f8] sm:$0xff]
        %v480 = vld [vmem:[%s387 + $0x200] sm:$0xff]
        %v481 = vld [vmem:[%s387 + $0x208] sm:$0xff]
        %v482 = vld [vmem:[%s387 + $0x210] sm:$0xff]
        %v483 = vld [vmem:[%s387 + $0x218] sm:$0xff]
        %v484 = vld [vmem:[%s387 + $0x220] sm:$0xff]
        %v485 = vld [vmem:[%s387 + $0x228] sm:$0xff]
        %v486 = vld [vmem:[%s387 + $0x230] sm:$0xff]
        %v487 = vld [vmem:[%s387 + $0x238] sm:$0xff]
        %v488 = vld [vmem:[%s387 + $0x240] sm:$0xff]
        %v489 = vld [vmem:[%s387 + $0x248] sm:$0xff]
        %v490 = vld [vmem:[%s387 + $0x250] sm:$0xff]
        %v491 = vld [vmem:[%s387 + $0x258] sm:$0xff]
        %v492 = vld [vmem:[%s387 + $0x260] sm:$0xff]
        %v493 = vld [vmem:[%s387 + $0x268] sm:$0xff]
        %v494 = vld [vmem:[%s387 + $0x270] sm:$0xff]
        %v495 = vld [vmem:[%s387 + $0x278] sm:$0xff]
        %v496 = vld [vmem:[%s387 + $0x280] sm:$0xff]
        %v497 = vld [vmem:[%s387 + $0x288] sm:$0xff]
        %v498 = vld [vmem:[%s387 + $0x290] sm:$0xff]
        %v499 = vld [vmem:[%s387 + $0x298] sm:$0xff]
        %v500 = vld [vmem:[%s387 + $0x2a0] sm:$0xff]
        %v501 = vld [vmem:[%s387 + $0x2a8] sm:$0xff]
        %v502 = vld [vmem:[%s387 + $0x2b0] sm:$0xff]
        %v503 = vld [vmem:[%s387 + $0x2b8] sm:$0xff]
        %v504 = vld [vmem:[%s387 + $0x2c0] sm:$0xff]
        %v505 = vld [vmem:[%s387 + $0x2c8] sm:$0xff]
        %v506 = vld [vmem:[%s387 + $0x2d0] sm:$0xff]
        %v507 = vld [vmem:[%s387 + $0x2d8] sm:$0xff]
        %v508 = vld [vmem:[%s387 + $0x2e0] sm:$0xff]
        %v509 = vld [vmem:[%s387 + $0x2e8] sm:$0xff]
        %v510 = vld [vmem:[%s387 + $0x2f0] sm:$0xff]
        %v511 = vld [vmem:[%s387 + $0x2f8] sm:$0xff]
        %v512 = vld [vmem:[%s387 + $0x300] sm:$0xff]
        %v513 = vld [vmem:[%s387 + $0x308] sm:$0xff]
        %v514 = vld [vmem:[%s387 + $0x310] sm:$0xff]
        %v515 = vld [vmem:[%s387 + $0x318] sm:$0xff]
        %v516 = vld [vmem:[%s387 + $0x320] sm:$0xff]
        %v517 = vld [vmem:[%s387 + $0x328] sm:$0xff]
        %v518 = vld [vmem:[%s387 + $0x330] sm:$0xff]
        %v519 = vld [vmem:[%s387 + $0x338] sm:$0xff]
        %v520 = vld [vmem:[%s387 + $0x340] sm:$0xff]
        %v521 = vld [vmem:[%s387 + $0x348] sm:$0xff]
        %v522 = vld [vmem:[%s387 + $0x350] sm:$0xff]
        %v523 = vld [vmem:[%s387 + $0x358] sm:$0xff]
        %v524 = vld [vmem:[%s387 + $0x360] sm:$0xff]
        %v525 = vld [vmem:[%s387 + $0x368] sm:$0xff]
        %v526 = vld [vmem:[%s387 + $0x370] sm:$0xff]
        %v527 = vld [vmem:[%s387 + $0x378] sm:$0xff]
        %vm528 = vcmask 916480
        %v530 = vsel %vm528, %v415, 0
        %532 = vmatprep.subr.mxu0 0.0
        %533 = vmatpush1.msra.mxu0 0.0
        %534 = vmatprep.subr.mxu0 0.0
        %535 = vmatpush1.msra.mxu0 0.0
        %536 = vmatprep.subr.mxu0 %v521
        %537 = vmatpush1.msra.mxu0 %v520
        %538 = vmatprep.subr.mxu0 %v513
        %539 = vmatpush1.msra.mxu0 %v512
        %540 = vmatprep.subr.mxu0 %v505
        %541 = vmatpush1.msra.mxu0 %v504
        %542 = vmatprep.subr.mxu0 %v497
        %543 = vmatpush1.msra.mxu0 %v496
        %544 = vmatprep.subr.mxu0 %v489
        %545 = vmatpush1.msra.mxu0 %v488
        %546 = vmatprep.subr.mxu0 %v481
        %547 = vmatpush1.msra.mxu0 %v480
        %548 = vmatprep.subr.mxu0 %v473
        %549 = vmatpush1.msra.mxu0 %v472
        %550 = vmatprep.subr.mxu0 %v465
        %551 = vmatpush1.msra.mxu0 %v464
        %552 = vmatprep.subr.mxu0 %v457
        %553 = vmatpush1.msra.mxu0 %v456
        %554 = vmatprep.subr.mxu0 %v449
        %555 = vmatpush1.msra.mxu0 %v448
        %556 = vmatprep.subr.mxu0 %v441
        %557 = vmatpush1.msra.mxu0 %v440
        %558 = vmatprep.subr.mxu0 %v433
        %559 = vmatpush1.msra.mxu0 %v432
        %560 = vmatprep.subr.mxu0 %v425
        %561 = vmatpush1.msra.mxu0 %v424
        %562 = vmatprep.subr.mxu0 %v417
        %563 = vmatpush1.msra.mxu0 %v416
        %564 = vmatprep.subr.mxu0 0.0
        %565 = vmatpush2.msra.mxu0 0.0
        %566 = vmatprep.subr.mxu0 0.0
        %567 = vmatpush2.msra.mxu0 0.0
        %568 = vmatprep.subr.mxu0 0.0
        %569 = vmatpush2.msra.mxu0 0.0
        %570 = vmatprep.subr.mxu0 0.0
        %571 = vmatpush2.msra.mxu0 0.0
        %572 = vmatprep.subr.mxu0 0.0
        %573 = vmatpush2.msra.mxu0 0.0
        %574 = vmatprep.subr.mxu0 0.0
        %575 = vmatpush2.msra.mxu0 0.0
        %576 = vmatprep.subr.mxu0 0.0
        %577 = vmatpush2.msra.mxu0 0.0
        %578 = vmatprep.subr.mxu0 0.0
        %579 = vmatpush2.msra.mxu0 0.0
        %580 = vmatprep.subr.mxu0 0.0
        %581 = vmatpush2.msra.mxu0 0.0
        %582 = vmatprep.subr.mxu0 0.0
        %583 = vmatpush2.msra.mxu0 0.0
        %584 = vmatprep.subr.mxu0 0.0
        %585 = vmatpush2.msra.mxu0 0.0
        %586 = vmatprep.subr.mxu0 0.0
        %587 = vmatpush2.msra.mxu0 0.0
        %588 = vmatprep.subr.mxu0 0.0
        %589 = vmatpush2.msra.mxu0 0.0
        %590 = vmatprep.subr.mxu0 0.0
        %591 = vmatpush2.msra.mxu0 0.0
        %592 = vmatprep.subr.mxu0 0.0
        %593 = vmatpush2.msra.mxu0 0.0
        %594 = vmatprep.subr.mxu0 0.0
        %595 = vmatpush2.msra.mxu0 0.0
        %596 = vmatprep.mubr.f32.mxu0 0.0
        %597 = vmatmul.mubr.f32.gmra.mxu0 %v530
        %v598 = vpop.f32.mrf.mxu0
        %v599 = vadd.f32 0.0, %v598
        %v600 = vpop.f32.mrf.mxu0
        %v601 = vadd.f32 0.0, %v600
        %602 = vdwg.mxu0
        %603 = vmatprep.subr.mxu0 0.0
        %604 = vmatpush1.msra.mxu0 0.0
        %605 = vmatprep.subr.mxu0 0.0
        %606 = vmatpush1.msra.mxu0 0.0
        %607 = vmatprep.subr.mxu0 %v523
        %608 = vmatpush1.msra.mxu0 %v522
        %609 = vmatprep.subr.mxu0 %v515
        %610 = vmatpush1.msra.mxu0 %v514
        %611 = vmatprep.subr.mxu0 %v507
        %612 = vmatpush1.msra.mxu0 %v506
        %613 = vmatprep.subr.mxu0 %v499
        %614 = vmatpush1.msra.mxu0 %v498
        %615 = vmatprep.subr.mxu0 %v491
        %616 = vmatpush1.msra.mxu0 %v490
        %617 = vmatprep.subr.mxu0 %v483
        %618 = vmatpush1.msra.mxu0 %v482
        %619 = vmatprep.subr.mxu0 %v475
        %620 = vmatpush1.msra.mxu0 %v474
        %621 = vmatprep.subr.mxu0 %v467
        %622 = vmatpush1.msra.mxu0 %v466
        %623 = vmatprep.subr.mxu0 %v459
        %624 = vmatpush1.msra.mxu0 %v458
        %625 = vmatprep.subr.mxu0 %v451
        %626 = vmatpush1.msra.mxu0 %v450
        %627 = vmatprep.subr.mxu0 %v443
        %628 = vmatpush1.msra.mxu0 %v442
        %629 = vmatprep.subr.mxu0 %v435
        %630 = vmatpush1.msra.mxu0 %v434
        %631 = vmatprep.subr.mxu0 %v427
        %632 = vmatpush1.msra.mxu0 %v426
        %633 = vmatprep.subr.mxu0 %v419
        %634 = vmatpush1.msra.mxu0 %v418
        %635 = vmatprep.subr.mxu0 0.0
        %636 = vmatpush2.msra.mxu0 0.0
        %637 = vmatprep.subr.mxu0 0.0
        %638 = vmatpush2.msra.mxu0 0.0
        %639 = vmatprep.subr.mxu0 0.0
        %640 = vmatpush2.msra.mxu0 0.0
        %641 = vmatprep.subr.mxu0 0.0
        %642 = vmatpush2.msra.mxu0 0.0
        %643 = vmatprep.subr.mxu0 0.0
        %644 = vmatpush2.msra.mxu0 0.0
        %645 = vmatprep.subr.mxu0 0.0
        %646 = vmatpush2.msra.mxu0 0.0
        %647 = vmatprep.subr.mxu0 0.0
        %648 = vmatpush2.msra.mxu0 0.0
        %649 = vmatprep.subr.mxu0 0.0
        %650 = vmatpush2.msra.mxu0 0.0
        %651 = vmatprep.subr.mxu0 0.0
        %652 = vmatpush2.msra.mxu0 0.0
        %653 = vmatprep.subr.mxu0 0.0
        %654 = vmatpush2.msra.mxu0 0.0
        %655 = vmatprep.subr.mxu0 0.0
        %656 = vmatpush2.msra.mxu0 0.0
        %657 = vmatprep.subr.mxu0 0.0
        %658 = vmatpush2.msra.mxu0 0.0
        %659 = vmatprep.subr.mxu0 0.0
        %660 = vmatpush2.msra.mxu0 0.0
        %661 = vmatprep.subr.mxu0 0.0
        %662 = vmatpush2.msra.mxu0 0.0
        %663 = vmatprep.subr.mxu0 0.0
        %664 = vmatpush2.msra.mxu0 0.0
        %665 = vmatprep.subr.mxu0 0.0
        %666 = vmatpush2.msra.mxu0 0.0
        %667 = vmatprep.mubr.f32.mxu0 0.0
        %668 = vmatmul.mubr.f32.gmra.mxu0 %v530
        %v669 = vpop.f32.mrf.mxu0
        %v670 = vadd.f32 0.0, %v669
        %v671 = vpop.f32.mrf.mxu0
        %v672 = vadd.f32 0.0, %v671
        %673 = vdwg.mxu0
        %674 = vmatprep.subr.mxu0 0.0
        %675 = vmatpush1.msra.mxu0 0.0
        %676 = vmatprep.subr.mxu0 0.0
        %677 = vmatpush1.msra.mxu0 0.0
        %678 = vmatprep.subr.mxu0 %v525
        %679 = vmatpush1.msra.mxu0 %v524
        %680 = vmatprep.subr.mxu0 %v517
        %681 = vmatpush1.msra.mxu0 %v516
        %682 = vmatprep.subr.mxu0 %v509
        %683 = vmatpush1.msra.mxu0 %v508
        %684 = vmatprep.subr.mxu0 %v501
        %685 = vmatpush1.msra.mxu0 %v500
        %686 = vmatprep.subr.mxu0 %v493
        %687 = vmatpush1.msra.mxu0 %v492
        %688 = vmatprep.subr.mxu0 %v485
        %689 = vmatpush1.msra.mxu0 %v484
        %690 = vmatprep.subr.mxu0 %v477
        %691 = vmatpush1.msra.mxu0 %v476
        %692 = vmatprep.subr.mxu0 %v469
        %693 = vmatpush1.msra.mxu0 %v468
        %694 = vmatprep.subr.mxu0 %v461
        %695 = vmatpush1.msra.mxu0 %v460
        %696 = vmatprep.subr.mxu0 %v453
        %697 = vmatpush1.msra.mxu0 %v452
        %698 = vmatprep.subr.mxu0 %v445
        %699 = vmatpush1.msra.mxu0 %v444
        %700 = vmatprep.subr.mxu0 %v437
        %701 = vmatpush1.msra.mxu0 %v436
        %702 = vmatprep.subr.mxu0 %v429
        %703 = vmatpush1.msra.mxu0 %v428
        %704 = vmatprep.subr.mxu0 %v421
        %705 = vmatpush1.msra.mxu0 %v420
        %706 = vmatprep.subr.mxu0 0.0
        %707 = vmatpush2.msra.mxu0 0.0
        %708 = vmatprep.subr.mxu0 0.0
        %709 = vmatpush2.msra.mxu0 0.0
        %710 = vmatprep.subr.mxu0 0.0
        %711 = vmatpush2.msra.mxu0 0.0
        %712 = vmatprep.subr.mxu0 0.0
        %713 = vmatpush2.msra.mxu0 0.0
        %714 = vmatprep.subr.mxu0 0.0
        %715 = vmatpush2.msra.mxu0 0.0
        %716 = vmatprep.subr.mxu0 0.0
        %717 = vmatpush2.msra.mxu0 0.0
        %718 = vmatprep.subr.mxu0 0.0
        %719 = vmatpush2.msra.mxu0 0.0
        %720 = vmatprep.subr.mxu0 0.0
        %721 = vmatpush2.msra.mxu0 0.0
        %722 = vmatprep.subr.mxu0 0.0
        %723 = vmatpush2.msra.mxu0 0.0
        %724 = vmatprep.subr.mxu0 0.0
        %725 = vmatpush2.msra.mxu0 0.0
        %726 = vmatprep.subr.mxu0 0.0
        %727 = vmatpush2.msra.mxu0 0.0
        %728 = vmatprep.subr.mxu0 0.0
        %729 = vmatpush2.msra.mxu0 0.0
        %730 = vmatprep.subr.mxu0 0.0
        %731 = vmatpush2.msra.mxu0 0.0
        %732 = vmatprep.subr.mxu0 0.0
        %733 = vmatpush2.msra.mxu0 0.0
        %734 = vmatprep.subr.mxu0 0.0
        %735 = vmatpush2.msra.mxu0 0.0
        %736 = vmatprep.subr.mxu0 0.0
        %737 = vmatpush2.msra.mxu0 0.0
        %738 = vmatprep.mubr.f32.mxu0 0.0
        %739 = vmatmul.mubr.f32.gmra.mxu0 %v530
        %v740 = vpop.f32.mrf.mxu0
        %v741 = vadd.f32 0.0, %v740
        %v742 = vpop.f32.mrf.mxu0
        %v743 = vadd.f32 0.0, %v742
        %744 = vdwg.mxu0
        %745 = vmatprep.subr.mxu0 0.0
        %746 = vmatpush1.msra.mxu0 0.0
        %747 = vmatprep.subr.mxu0 0.0
        %748 = vmatpush1.msra.mxu0 0.0
        %749 = vmatprep.subr.mxu0 %v527
        %750 = vmatpush1.msra.mxu0 %v526
        %751 = vmatprep.subr.mxu0 %v519
        %752 = vmatpush1.msra.mxu0 %v518
        %753 = vmatprep.subr.mxu0 %v511
        %754 = vmatpush1.msra.mxu0 %v510
        %755 = vmatprep.subr.mxu0 %v503
        %756 = vmatpush1.msra.mxu0 %v502
        %757 = vmatprep.subr.mxu0 %v495
        %758 = vmatpush1.msra.mxu0 %v494
        %759 = vmatprep.subr.mxu0 %v487
        %760 = vmatpush1.msra.mxu0 %v486
        %761 = vmatprep.subr.mxu0 %v479
        %762 = vmatpush1.msra.mxu0 %v478
        %763 = vmatprep.subr.mxu0 %v471
        %764 = vmatpush1.msra.mxu0 %v470
        %765 = vmatprep.subr.mxu0 %v463
        %766 = vmatpush1.msra.mxu0 %v462
        %767 = vmatprep.subr.mxu0 %v455
        %768 = vmatpush1.msra.mxu0 %v454
        %769 = vmatprep.subr.mxu0 %v447
        %770 = vmatpush1.msra.mxu0 %v446
        %771 = vmatprep.subr.mxu0 %v439
        %772 = vmatpush1.msra.mxu0 %v438
        %773 = vmatprep.subr.mxu0 %v431
        %774 = vmatpush1.msra.mxu0 %v430
        %775 = vmatprep.subr.mxu0 %v423
        %776 = vmatpush1.msra.mxu0 %v422
        %777 = vmatprep.subr.mxu0 0.0
        %778 = vmatpush2.msra.mxu0 0.0
        %779 = vmatprep.subr.mxu0 0.0
        %780 = vmatpush2.msra.mxu0 0.0
        %781 = vmatprep.subr.mxu0 0.0
        %782 = vmatpush2.msra.mxu0 0.0
        %783 = vmatprep.subr.mxu0 0.0
        %784 = vmatpush2.msra.mxu0 0.0
        %785 = vmatprep.subr.mxu0 0.0
        %786 = vmatpush2.msra.mxu0 0.0
        %787 = vmatprep.subr.mxu0 0.0
        %788 = vmatpush2.msra.mxu0 0.0
        %789 = vmatprep.subr.mxu0 0.0
        %790 = vmatpush2.msra.mxu0 0.0
        %791 = vmatprep.subr.mxu0 0.0
        %792 = vmatpush2.msra.mxu0 0.0
        %793 = vmatprep.subr.mxu0 0.0
        %794 = vmatpush2.msra.mxu0 0.0
        %795 = vmatprep.subr.mxu0 0.0
        %796 = vmatpush2.msra.mxu0 0.0
        %797 = vmatprep.subr.mxu0 0.0
        %798 = vmatpush2.msra.mxu0 0.0
        %799 = vmatprep.subr.mxu0 0.0
        %800 = vmatpush2.msra.mxu0 0.0
        %801 = vmatprep.subr.mxu0 0.0
        %802 = vmatpush2.msra.mxu0 0.0
        %803 = vmatprep.subr.mxu0 0.0
        %804 = vmatpush2.msra.mxu0 0.0
        %805 = vmatprep.subr.mxu0 0.0
        %806 = vmatpush2.msra.mxu0 0.0
        %807 = vmatprep.subr.mxu0 0.0
        %808 = vmatpush2.msra.mxu0 0.0
        %809 = vmatprep.mubr.f32.mxu0 0.0
        %810 = vmatmul.mubr.f32.gmra.mxu0 %v530
        %v811 = vpop.f32.mrf.mxu0
        %v812 = vadd.f32 0.0, %v811
        %v813 = vpop.f32.mrf.mxu0
        %v814 = vadd.f32 0.0, %v813
        %815 = vdwg.mxu0
        %v816 = vld [vmem:[%s2] sm:$0xff]
        %818 = vset.pattern.permute.xlu0 0
        %819 = vperm.xlu0 %818, %v816
        %v820 = vpop.permute.xlu0 %819
        %v822 = vmul.f32 %v599, %v820
        %v823 = vmul.f32 %v601, %v820
        %v824 = vmul.f32 %v670, %v820
        %v825 = vmul.f32 %v672, %v820
        %v826 = vmul.f32 %v741, %v820
        %v827 = vmul.f32 %v743, %v820
        %v828 = vmul.f32 %v812, %v820
        %v829 = vmul.f32 %v814, %v820
        %830 = vset.pattern.permute.xlu0 1
        %831 = vperm.xlu0 %830, %v816
        %v832 = vpop.permute.xlu0 %831
        %v834 = vadd.f32 %v822, %v832
        %v835 = vadd.f32 %v823, %v832
        %v836 = vadd.f32 %v824, %v832
        %v837 = vadd.f32 %v825, %v832
        %v838 = vadd.f32 %v826, %v832
        %v839 = vadd.f32 %v827, %v832
        %v840 = vadd.f32 %v828, %v832
        %v841 = vadd.f32 %v829, %v832
        %vm842 = vcmp.gt.f32.partialorder %v834, 0.0
        %vm843 = vcmp.gt.f32.partialorder %v835, 0.0
        %vm844 = vcmp.gt.f32.partialorder %v836, 0.0
        %vm845 = vcmp.gt.f32.partialorder %v837, 0.0
        %vm846 = vcmp.gt.f32.partialorder %v838, 0.0
        %vm847 = vcmp.gt.f32.partialorder %v839, 0.0
        %vm848 = vcmp.gt.f32.partialorder %v840, 0.0
        %vm849 = vcmp.gt.f32.partialorder %v841, 0.0
        %v850 = vmul.f32 %v834, 0.2
        %v851 = vmul.f32 %v835, 0.2
        %v852 = vmul.f32 %v836, 0.2
        %v853 = vmul.f32 %v837, 0.2
        %v854 = vmul.f32 %v838, 0.2
        %v855 = vmul.f32 %v839, 0.2
        %v856 = vmul.f32 %v840, 0.2
        %v857 = vmul.f32 %v841, 0.2
        %v858 = vsel %vm842, %v834, %v850
        %v859 = vsel %vm843, %v835, %v851
        %v860 = vsel %vm844, %v836, %v852
        %v861 = vsel %vm845, %v837, %v853
        %v862 = vsel %vm846, %v838, %v854
        %v863 = vsel %vm847, %v839, %v855
        %v864 = vsel %vm848, %v840, %v856
        %v865 = vsel %vm849, %v841, %v857
        %866 = vst [vmem:[%s413] sm:$0xff] %v858
        %867 = vst [vmem:[%s413 + $0x8] sm:$0xff] %v859
        %868 = vst [vmem:[%s413 + $0x10] sm:$0xff] %v860
        %869 = vst [vmem:[%s413 + $0x18] sm:$0xff] %v861
        %870 = vst [vmem:[%s413 + $0x20] sm:$0xff] %v862
        %871 = vst [vmem:[%s413 + $0x28] sm:$0xff] %v863
        %872 = vst [vmem:[%s413 + $0x30] sm:$0xff] %v864
        %873 = vst [vmem:[%s413 + $0x38] sm:$0xff] %v865
        %s874 = smul.u32 8, %s14
        %p875 = scmp.lt.s32.totalorder %s874, 63
        %s876 = scalar_select %p875, %s874, 63
        %s877 = smul.addr %s876, 8
        %s878 = scalar_lea.vmem %s3, %s877
        // Predicated region
        $region56: #{encoder_forward.34} parent=50 // pred_check
          %p879 = pneg %p100
        $region57: #{encoder_forward.34} parent=50 // pred_check_branch
          %881 = sbr.rel (%p879) target = $region59
        $region58: #{encoder_forward.34} parent=50 // pred_region
          %s882 = smul.u32 8, %s14
        $region59: #{encoder_forward.34} parent=50 // pred_fallthru
          _
      $region51: #{encoder_forward.34} parent=5 // pred_fallthru
        _
      %p883 = scmp.le.s32.totalorder 2, %s9
      // Predicated region
      $region60: #{encoder_forward.34} parent=5 // pred_check
        %p884 = pneg %p883
      $region61: #{encoder_forward.34} parent=5 // pred_check_branch
        %886 = sbr.rel (%p884) target = $region63
      $region62: #{encoder_forward.34} parent=5 // pred_region
        %s887 = ssub.s32 %s9, 2
        // Predicated region
        $region64: #{encoder_forward.34} parent=62 // pred_check
          %p888 = pneg %p106
        $region65: #{encoder_forward.34} parent=62 // pred_check_branch
          %890 = sbr.rel (%p888) target = $region67
        $region66: #{encoder_forward.34} parent=62 // pred_region
          %s891 = smul.u32 8, %s15
          %p892 = scmp.lt.s32.totalorder %s891, 63
          %s893 = scalar_select %p892, %s891, 63
          %s894 = smul.addr %s893, 8
          %s895 = scalar_lea.vmem %s3, %s894
        $region67: #{encoder_forward.34} parent=62 // pred_fallthru
          _
      $region63: #{encoder_forward.34} parent=5 // pred_fallthru
        _
    $region6: #{encoder_forward.34} parent=1 // loop_footer
      %s13 = sadd.s32 1, %s9
    $region7: #{encoder_forward.34} parent=1 // loop_footer_branch
      %8 = sbr.rel target = $region3
    $region8: #{encoder_forward.34} parent=1 // loop_exit
      _

// kernel: encoder_forward.36
$region0: #{encoder_forward.36}
  #allocation0 [shape = 'u32[]', space=smem, size = 0x4, offset = 0x4, fixed_abs, tag = 'smem constant byte address 0x4 - core index']
  #allocation1 [shape = 'u32[144,128]{1,0:T(1,128)}', space=vmem, size = 0x12000, scoped, tag = 'internal scratch']
  %s0 = inlined_call_operand.vmem [shape: f32[8,216], index: 0, kind: input, shape index: {}]
  %s1 = inlined_call_operand.vmem [shape: f32[216,8192], index: 1, kind: input, shape index: {}]
  %s2 = inlined_call_operand.vmem [shape: f32[8,2], index: 2, kind: input, shape index: {}]
  %s3 = inlined_call_operand.vmem [shape: f32[8,8192], index: 3, kind: output, shape index: {}]
  %s4 = sld [smem:[#allocation0]]
  $region68: #{encoder_forward.36} parent=0
    _
  %s6 = ssub.s32 1, %s4
  %s7 = scalar_select 0, %s6, %s4
  $region1: #{encoder_forward.36} parent=0
    #allocation2 [shape = 'u8[1769472]{0}', space=vmem, size = 0x1b0000, scoped, tag = 'input window, operand 1']
    loop: start=0, step=1, limit=10
    $region2: #{encoder_forward.36} parent=1 // loop_pre_header
      _
    $region3: #{encoder_forward.36} parent=1 // loop_header
      %s9 = sphi 0, %s13
      %p10 = scmp.ge.s32.totalorder %s9, 10
      %s17 = sphi 0, %s17
      %s19 = sphi 0, %s17
      %s20 = sphi 0, %s19
      %s34 = sphi 0, %s20
      %s40 = sphi 0, %s42
      %s43 = sphi 0, %s40
      %s44 = sphi 0, %s43
      %s60 = sphi 0, %s44
      %s64 = sphi 0, %s64
      %s66 = sphi 0, %s64
      %s67 = sphi 0, %s66
      %s81 = sphi 0, %s67
      %s87 = sphi 0, %s89
      %s90 = sphi 0, %s87
      %s91 = sphi 0, %s90
      %s107 = sphi 0, %s91
    $region4: #{encoder_forward.36} parent=1 // loop_header_branch
      %12 = sbr.rel (%p10) target = $region8
    $region5: #{encoder_forward.36} parent=1 // loop_body
      %s14 = ssub.s32 %s9, 1
      %s15 = ssub.s32 %s9, 2
      %s16 = sadd.s32 %s9, 1
      %s18 = sadd.s32 %s17, 1
      %p21 = scmp.eq.s32.totalorder %s9, 7
      %p22 = scmp.ne.s32.totalorder %s17, %s19
      %p23 = scmp.eq.s32.totalorder %s9, 0
      %p24 = por %p22, %p23
      %p25 = scmp.ne.s32.totalorder %s17, %s19
      %p26 = scmp.eq.s32.totalorder %s14, 7
      %p27 = por %p25, %p26
      %p28 = scmp.ne.s32.totalorder %s19, %s20
      %p29 = scmp.eq.s32.totalorder %s14, 0
      %p30 = por %p28, %p29
      %p31 = scmp.ne.s32.totalorder %s19, %s20
      %p32 = scmp.eq.s32.totalorder %s15, 7
      %p33 = por %p31, %p32
      %p35 = scmp.ne.s32.totalorder %s20, %s34
      %p36 = scmp.eq.s32.totalorder %s15, 0
      %p37 = por %p35, %p36
      %s38 = ssub.s32 %s9, %s16
      %p39 = scmp.eq.s32.totalorder %s38, 0
      %s41 = sadd.s32 %s40, 1
      %s42 = scalar_select %p39, %s40, %s41
      %p45 = pneg %p39
      %p46 = scmp.eq.s32.totalorder %s9, 7
      %p47 = por %p45, %p46
      %p48 = scmp.ne.s32.totalorder %s40, %s43
      %p49 = scmp.eq.s32.totalorder %s9, 0
      %p50 = por %p48, %p49
      %p51 = scmp.ne.s32.totalorder %s40, %s43
      %p52 = scmp.eq.s32.totalorder %s14, 7
      %p53 = por %p51, %p52
      %p54 = scmp.ne.s32.totalorder %s43, %s44
      %p55 = scmp.eq.s32.totalorder %s14, 0
      %p56 = por %p54, %p55
      %p57 = scmp.ne.s32.totalorder %s43, %s44
      %p58 = scmp.eq.s32.totalorder %s15, 7
      %p59 = por %p57, %p58
      %p61 = scmp.ne.s32.totalorder %s44, %s60
      %p62 = scmp.eq.s32.totalorder %s15, 0
      %p63 = por %p61, %p62
      %s65 = sadd.s32 %s64, 1
      %p68 = scmp.eq.s32.totalorder %s9, 7
      %p69 = scmp.ne.s32.totalorder %s64, %s66
      %p70 = scmp.eq.s32.totalorder %s9, 0
      %p71 = por %p69, %p70
      %p72 = scmp.ne.s32.totalorder %s64, %s66
      %p73 = scmp.eq.s32.totalorder %s14, 7
      %p74 = por %p72, %p73
      %p75 = scmp.ne.s32.totalorder %s66, %s67
      %p76 = scmp.eq.s32.totalorder %s14, 0
      %p77 = por %p75, %p76
      %p78 = scmp.ne.s32.totalorder %s66, %s67
      %p79 = scmp.eq.s32.totalorder %s15, 7
      %p80 = por %p78, %p79
      %p82 = scmp.ne.s32.totalorder %s67, %s81
      %p83 = scmp.eq.s32.totalorder %s15, 0
      %p84 = por %p82, %p83
      %s85 = ssub.s32 %s9, %s16
      %p86 = scmp.eq.s32.totalorder %s85, 0
      %s88 = sadd.s32 %s87, 1
      %s89 = scalar_select %p86, %s87, %s88
      %p92 = pneg %p86
      %p93 = scmp.eq.s32.totalorder %s9, 7
      %p94 = por %p92, %p93
      %p95 = scmp.ne.s32.totalorder %s87, %s90
      %p96 = scmp.eq.s32.totalorder %s9, 0
      %p97 = por %p95, %p96
      %p98 = scmp.ne.s32.totalorder %s87, %s90
      %p99 = scmp.eq.s32.totalorder %s14, 7
      %p100 = por %p98, %p99
      %p101 = scmp.ne.s32.totalorder %s90, %s91
      %p102 = scmp.eq.s32.totalorder %s14, 0
      %p103 = por %p101, %p102
      %p104 = scmp.ne.s32.totalorder %s90, %s91
      %p105 = scmp.eq.s32.totalorder %s15, 7
      %p106 = por %p104, %p105
      %p108 = scmp.ne.s32.totalorder %s91, %s107
      %p109 = scmp.eq.s32.totalorder %s15, 0
      %p110 = por %p108, %p109
      %p111 = scmp.le.s32.totalorder 1, %s9
      %p112 = scmp.lt.s32.totalorder %s9, 9
      %p113 = pnand %p111, %p112
      %p114 = pneg %p113
      // Predicated region
      $region9: #{encoder_forward.36} parent=5 // pred_check
        _
      $region10: #{encoder_forward.36} parent=5 // pred_check_branch
        %116 = sbr.rel (%p113) target = $region12
      $region11: #{encoder_forward.36} parent=5 // pred_region
        %s117 = ssub.s32 %s9, 1
        // Predicated region
        $region13: #{encoder_forward.36} parent=11 // pred_check
          %p118 = pneg %p30
        $region14: #{encoder_forward.36} parent=11 // pred_check_branch
          %120 = sbr.rel (%p118) target = $region16
        $region15: #{encoder_forward.36} parent=11 // pred_region
          _
        $region16: #{encoder_forward.36} parent=11 // pred_fallthru
          _
        // Predicated region
        $region17: #{encoder_forward.36} parent=11 // pred_check
          %p121 = pneg %p77
        $region18: #{encoder_forward.36} parent=11 // pred_check_branch
          %123 = sbr.rel (%p121) target = $region20
        $region19: #{encoder_forward.36} parent=11 // pred_region
          _
        $region20: #{encoder_forward.36} parent=11 // pred_fallthru
          _
      $region12: #{encoder_forward.36} parent=5 // pred_fallthru
        _
      %p124 = scmp.lt.s32.totalorder %s9, 8
      // Predicated region
      $region21: #{encoder_forward.36} parent=5 // pred_check
        %p125 = pneg %p124
      $region22: #{encoder_forward.36} parent=5 // pred_check_branch
        %127 = sbr.rel (%p125) target = $region24
      $region23: #{encoder_forward.36} parent=5 // pred_region
        // Predicated region
        $region25: #{encoder_forward.36} parent=23 // pred_check
          %p128 = pneg %p50
        $region26: #{encoder_forward.36} parent=23 // pred_check_branch
          %130 = sbr.rel (%p128) target = $region28
        $region27: #{encoder_forward.36} parent=23 // pred_region
          %s131 = sand.u32 %s40, 1
          %s132 = sand.u32 %s40, 1
          %s133 = smul.addr %s132, 1728
          %s134 = scalar_lea.vmem [#allocation2], %s133
          %s135 = smul.u32 8, %s9
          %s136 = smul.addr %s135, 8
          %s137 = scalar_lea.vmem %s1, %s136
          // Predicated region
          $region29: #{encoder_forward.36} parent=27 // pred_check
            _
          $region30: #{encoder_forward.36} parent=27 // pred_check_branch
            %139 = sbr.rel (0) target = $region32
          $region31: #{encoder_forward.36} parent=27 // pred_region
            // Predicated region
            $region33: #{encoder_forward.36} parent=31 // pred_check
              _
            $region34: #{encoder_forward.36} parent=31 // pred_check_branch
              %141 = sbr.rel (0) target = $region36
            $region35: #{encoder_forward.36} parent=31 // pred_region
              loop: start=0, step=1, limit=1
              $region37: #{encoder_forward.36} parent=35 // loop_pre_header
                _
              $region38: #{encoder_forward.36} parent=35 // loop_header
                %s143 = sphi 0, %s147
                %p144 = scmp.ge.s32.totalorder %s143, 1
                %s148 = sphi %s137, %s137
                %s149 = sphi %s134, %s134
              $region39: #{encoder_forward.36} parent=35 // loop_header_branch
                %146 = sbr.rel (%p144) target = $region43
              $region40: #{encoder_forward.36} parent=35 // loop_body
                %v150 = vld [vmem:[%s148] sm:$0xff]
                %151 = vst [vmem:[%s149] sm:$0xff] %v150
                %v152 = vld [vmem:[%s148 + $0x8] sm:$0xff]
                %153 = vst [vmem:[%s149 + $0x8] sm:$0xff] %v152
                %v154 = vld [vmem:[%s148 + $0x10] sm:$0xff]
                %155 = vst [vmem:[%s149 + $0x10] sm:$0xff] %v154
                %v156 = vld [vmem:[%s148 + $0x18] sm:$0xff]
                %157 = vst [vmem:[%s149 + $0x18] sm:$0xff] %v156
                %v158 = vld [vmem:[%s148 + $0x20] sm:$0xff]
                %159 = vst [vmem:[%s149 + $0x20] sm:$0xff] %v158
                %v160 = vld [vmem:[%s148 + $0x28] sm:$0xff]
                %161 = vst [vmem:[%s149 + $0x28] sm:$0xff] %v160
                %v162 = vld [vmem:[%s148 + $0x30] sm:$0xff]
                %163 = vst [vmem:[%s149 + $0x30] sm:$0xff] %v162
                %v164 = vld [vmem:[%s148 + $0x38] sm:$0xff]
                %165 = vst [vmem:[%s149 + $0x38] sm:$0xff] %v164
                %v166 = vld [vmem:[%s148 + $0x200] sm:$0xff]
                %167 = vst [vmem:[%s149 + $0x40] sm:$0xff] %v166
                %v168 = vld [vmem:[%s148 + $0x208] sm:$0xff]
                %169 = vst [vmem:[%s149 + $0x48] sm:$0xff] %v168
                %v170 = vld [vmem:[%s148 + $0x210] sm:$0xff]
                %171 = vst [vmem:[%s149 + $0x50] sm:$0xff] %v170
                %v172 = vld [vmem:[%s148 + $0x218] sm:$0xff]
                %173 = vst [vmem:[%s149 + $0x58] sm:$0xff] %v172
                %v174 = vld [vmem:[%s148 + $0x220] sm:$0xff]
                %175 = vst [vmem:[%s149 + $0x60] sm:$0xff] %v174
                %v176 = vld [vmem:[%s148 + $0x228] sm:$0xff]
                %177 = vst [vmem:[%s149 + $0x68] sm:$0xff] %v176
                %v178 = vld [vmem:[%s148 + $0x230] sm:$0xff]
                %179 = vst [vmem:[%s149 + $0x70] sm:$0xff] %v178
                %v180 = vld [vmem:[%s148 + $0x238] sm:$0xff]
                %181 = vst [vmem:[%s149 + $0x78] sm:$0xff] %v180
                %v182 = vld [vmem:[%s148 + $0x400] sm:$0xff]
                %183 = vst [vmem:[%s149 + $0x80] sm:$0xff] %v182
                %v184 = vld [vmem:[%s148 + $0x408] sm:$0xff]
                %185 = vst [vmem:[%s149 + $0x88] sm:$0xff] %v184
                %v186 = vld [vmem:[%s148 + $0x410] sm:$0xff]
                %187 = vst [vmem:[%s149 + $0x90] sm:$0xff] %v186
                %v188 = vld [vmem:[%s148 + $0x418] sm:$0xff]
                %189 = vst [vmem:[%s149 + $0x98] sm:$0xff] %v188
                %v190 = vld [vmem:[%s148 + $0x420] sm:$0xff]
                %191 = vst [vmem:[%s149 + $0xa0] sm:$0xff] %v190
                %v192 = vld [vmem:[%s148 + $0x428] sm:$0xff]
                %193 = vst [vmem:[%s149 + $0xa8] sm:$0xff] %v192
                %v194 = vld [vmem:[%s148 + $0x430] sm:$0xff]
                %195 = vst [vmem:[%s149 + $0xb0] sm:$0xff] %v194
                %v196 = vld [vmem:[%s148 + $0x438] sm:$0xff]
                %197 = vst [vmem:[%s149 + $0xb8] sm:$0xff] %v196
                %v198 = vld [vmem:[%s148 + $0x600] sm:$0xff]
                %199 = vst [vmem:[%s149 + $0xc0] sm:$0xff] %v198
                %v200 = vld [vmem:[%s148 + $0x608] sm:$0xff]
                %201 = vst [vmem:[%s149 + $0xc8] sm:$0xff] %v200
                %v202 = vld [vmem:[%s148 + $0x610] sm:$0xff]
                %203 = vst [vmem:[%s149 + $0xd0] sm:$0xff] %v202
                %v204 = vld [vmem:[%s148 + $0x618] sm:$0xff]
                %205 = vst [vmem:[%s149 + $0xd8] sm:$0xff] %v204
                %v206 = vld [vmem:[%s148 + $0x620] sm:$0xff]
                %207 = vst [vmem:[%s149 + $0xe0] sm:$0xff] %v206
                %v208 = vld [vmem:[%s148 + $0x628] sm:$0xff]
                %209 = vst [vmem:[%s149 + $0xe8] sm:$0xff] %v208
                %v210 = vld [vmem:[%s148 + $0x630] sm:$0xff]
                %211 = vst [vmem:[%s149 + $0xf0] sm:$0xff] %v210
                %v212 = vld [vmem:[%s148 + $0x638] sm:$0xff]
                %213 = vst [vmem:[%s149 + $0xf8] sm:$0xff] %v212
                %v214 = vld [vmem:[%s148 + $0x800] sm:$0xff]
                %215 = vst [vmem:[%s149 + $0x100] sm:$0xff] %v214
                %v216 = vld [vmem:[%s148 + $0x808] sm:$0xff]
                %217 = vst [vmem:[%s149 + $0x108] sm:$0xff] %v216
                %v218 = vld [vmem:[%s148 + $0x810] sm:$0xff]
                %219 = vst [vmem:[%s149 + $0x110] sm:$0xff] %v218
                %v220 = vld [vmem:[%s148 + $0x818] sm:$0xff]
                %221 = vst [vmem:[%s149 + $0x118] sm:$0xff] %v220
                %v222 = vld [vmem:[%s148 + $0x820] sm:$0xff]
                %223 = vst [vmem:[%s149 + $0x120] sm:$0xff] %v222
                %v224 = vld [vmem:[%s148 + $0x828] sm:$0xff]
                %225 = vst [vmem:[%s149 + $0x128] sm:$0xff] %v224
                %v226 = vld [vmem:[%s148 + $0x830] sm:$0xff]
                %227 = vst [vmem:[%s149 + $0x130] sm:$0xff] %v226
                %v228 = vld [vmem:[%s148 + $0x838] sm:$0xff]
                %229 = vst [vmem:[%s149 + $0x138] sm:$0xff] %v228
                %v230 = vld [vmem:[%s148 + $0xa00] sm:$0xff]
                %231 = vst [vmem:[%s149 + $0x140] sm:$0xff] %v230
                %v232 = vld [vmem:[%s148 + $0xa08] sm:$0xff]
                %233 = vst [vmem:[%s149 + $0x148] sm:$0xff] %v232
                %v234 = vld [vmem:[%s148 + $0xa10] sm:$0xff]
                %235 = vst [vmem:[%s149 + $0x150] sm:$0xff] %v234
                %v236 = vld [vmem:[%s148 + $0xa18] sm:$0xff]
                %237 = vst [vmem:[%s149 + $0x158] sm:$0xff] %v236
                %v238 = vld [vmem:[%s148 + $0xa20] sm:$0xff]
                %239 = vst [vmem:[%s149 + $0x160] sm:$0xff] %v238
                %v240 = vld [vmem:[%s148 + $0xa28] sm:$0xff]
                %241 = vst [vmem:[%s149 + $0x168] sm:$0xff] %v240
                %v242 = vld [vmem:[%s148 + $0xa30] sm:$0xff]
                %243 = vst [vmem:[%s149 + $0x170] sm:$0xff] %v242
                %v244 = vld [vmem:[%s148 + $0xa38] sm:$0xff]
                %245 = vst [vmem:[%s149 + $0x178] sm:$0xff] %v244
                %v246 = vld [vmem:[%s148 + $0xc00] sm:$0xff]
                %247 = vst [vmem:[%s149 + $0x180] sm:$0xff] %v246
                %v248 = vld [vmem:[%s148 + $0xc08] sm:$0xff]
                %249 = vst [vmem:[%s149 + $0x188] sm:$0xff] %v248
                %v250 = vld [vmem:[%s148 + $0xc10] sm:$0xff]
                %251 = vst [vmem:[%s149 + $0x190] sm:$0xff] %v250
                %v252 = vld [vmem:[%s148 + $0xc18] sm:$0xff]
                %253 = vst [vmem:[%s149 + $0x198] sm:$0xff] %v252
                %v254 = vld [vmem:[%s148 + $0xc20] sm:$0xff]
                %255 = vst [vmem:[%s149 + $0x1a0] sm:$0xff] %v254
                %v256 = vld [vmem:[%s148 + $0xc28] sm:$0xff]
                %257 = vst [vmem:[%s149 + $0x1a8] sm:$0xff] %v256
                %v258 = vld [vmem:[%s148 + $0xc30] sm:$0xff]
                %259 = vst [vmem:[%s149 + $0x1b0] sm:$0xff] %v258
                %v260 = vld [vmem:[%s148 + $0xc38] sm:$0xff]
                %261 = vst [vmem:[%s149 + $0x1b8] sm:$0xff] %v260
                %v262 = vld [vmem:[%s148 + $0xe00] sm:$0xff]
                %263 = vst [vmem:[%s149 + $0x1c0] sm:$0xff] %v262
                %v264 = vld [vmem:[%s148 + $0xe08] sm:$0xff]
                %265 = vst [vmem:[%s149 + $0x1c8] sm:$0xff] %v264
                %v266 = vld [vmem:[%s148 + $0xe10] sm:$0xff]
                %267 = vst [vmem:[%s149 + $0x1d0] sm:$0xff] %v266
                %v268 = vld [vmem:[%s148 + $0xe18] sm:$0xff]
                %269 = vst [vmem:[%s149 + $0x1d8] sm:$0xff] %v268
                %v270 = vld [vmem:[%s148 + $0xe20] sm:$0xff]
                %271 = vst [vmem:[%s149 + $0x1e0] sm:$0xff] %v270
                %v272 = vld [vmem:[%s148 + $0xe28] sm:$0xff]
                %273 = vst [vmem:[%s149 + $0x1e8] sm:$0xff] %v272
                %v274 = vld [vmem:[%s148 + $0xe30] sm:$0xff]
                %275 = vst [vmem:[%s149 + $0x1f0] sm:$0xff] %v274
                %v276 = vld [vmem:[%s148 + $0xe38] sm:$0xff]
                %277 = vst [vmem:[%s149 + $0x1f8] sm:$0xff] %v276
                %v278 = vld [vmem:[%s148 + $0x1000] sm:$0xff]
                %279 = vst [vmem:[%s149 + $0x200] sm:$0xff] %v278
                %v280 = vld [vmem:[%s148 + $0x1008] sm:$0xff]
                %281 = vst [vmem:[%s149 + $0x208] sm:$0xff] %v280
                %v282 = vld [vmem:[%s148 + $0x1010] sm:$0xff]
                %283 = vst [vmem:[%s149 + $0x210] sm:$0xff] %v282
                %v284 = vld [vmem:[%s148 + $0x1018] sm:$0xff]
                %285 = vst [vmem:[%s149 + $0x218] sm:$0xff] %v284
                %v286 = vld [vmem:[%s148 + $0x1020] sm:$0xff]
                %287 = vst [vmem:[%s149 + $0x220] sm:$0xff] %v286
                %v288 = vld [vmem:[%s148 + $0x1028] sm:$0xff]
                %289 = vst [vmem:[%s149 + $0x228] sm:$0xff] %v288
                %v290 = vld [vmem:[%s148 + $0x1030] sm:$0xff]
                %291 = vst [vmem:[%s149 + $0x230] sm:$0xff] %v290
                %v292 = vld [vmem:[%s148 + $0x1038] sm:$0xff]
                %293 = vst [vmem:[%s149 + $0x238] sm:$0xff] %v292
                %v294 = vld [vmem:[%s148 + $0x1200] sm:$0xff]
                %295 = vst [vmem:[%s149 + $0x240] sm:$0xff] %v294
                %v296 = vld [vmem:[%s148 + $0x1208] sm:$0xff]
                %297 = vst [vmem:[%s149 + $0x248] sm:$0xff] %v296
                %v298 = vld [vmem:[%s148 + $0x1210] sm:$0xff]
                %299 = vst [vmem:[%s149 + $0x250] sm:$0xff] %v298
                %v300 = vld [vmem:[%s148 + $0x1218] sm:$0xff]
                %301 = vst [vmem:[%s149 + $0x258] sm:$0xff] %v300
                %v302 = vld [vmem:[%s148 + $0x1220] sm:$0xff]
                %303 = vst [vmem:[%s149 + $0x260] sm:$0xff] %v302
                %v304 = vld [vmem:[%s148 + $0x1228] sm:$0xff]
                %305 = vst [vmem:[%s149 + $0x268] sm:$0xff] %v304
                %v306 = vld [vmem:[%s148 + $0x1230] sm:$0xff]
                %307 = vst [vmem:[%s149 + $0x270] sm:$0xff] %v306
                %v308 = vld [vmem:[%s148 + $0x1238] sm:$0xff]
                %309 = vst [vmem:[%s149 + $0x278] sm:$0xff] %v308
                %v310 = vld [vmem:[%s148 + $0x1400] sm:$0xff]
                %311 = vst [vmem:[%s149 + $0x280] sm:$0xff] %v310
                %v312 = vld [vmem:[%s148 + $0x1408] sm:$0xff]
                %313 = vst [vmem:[%s149 + $0x288] sm:$0xff] %v312
                %v314 = vld [vmem:[%s148 + $0x1410] sm:$0xff]
                %315 = vst [vmem:[%s149 + $0x290] sm:$0xff] %v314
                %v316 = vld [vmem:[%s148 + $0x1418] sm:$0xff]
                %317 = vst [vmem:[%s149 + $0x298] sm:$0xff] %v316
                %v318 = vld [vmem:[%s148 + $0x1420] sm:$0xff]
                %319 = vst [vmem:[%s149 + $0x2a0] sm:$0xff] %v318
                %v320 = vld [vmem:[%s148 + $0x1428] sm:$0xff]
                %321 = vst [vmem:[%s149 + $0x2a8] sm:$0xff] %v320
                %v322 = vld [vmem:[%s148 + $0x1430] sm:$0xff]
                %323 = vst [vmem:[%s149 + $0x2b0] sm:$0xff] %v322
                %v324 = vld [vmem:[%s148 + $0x1438] sm:$0xff]
                %325 = vst [vmem:[%s149 + $0x2b8] sm:$0xff] %v324
                %v326 = vld [vmem:[%s148 + $0x1600] sm:$0xff]
                %327 = vst [vmem:[%s149 + $0x2c0] sm:$0xff] %v326
                %v328 = vld [vmem:[%s148 + $0x1608] sm:$0xff]
                %329 = vst [vmem:[%s149 + $0x2c8] sm:$0xff] %v328
                %v330 = vld [vmem:[%s148 + $0x1610] sm:$0xff]
                %331 = vst [vmem:[%s149 + $0x2d0] sm:$0xff] %v330
                %v332 = vld [vmem:[%s148 + $0x1618] sm:$0xff]
                %333 = vst [vmem:[%s149 + $0x2d8] sm:$0xff] %v332
                %v334 = vld [vmem:[%s148 + $0x1620] sm:$0xff]
                %335 = vst [vmem:[%s149 + $0x2e0] sm:$0xff] %v334
                %v336 = vld [vmem:[%s148 + $0x1628] sm:$0xff]
                %337 = vst [vmem:[%s149 + $0x2e8] sm:$0xff] %v336
                %v338 = vld [vmem:[%s148 + $0x1630] sm:$0xff]
                %339 = vst [vmem:[%s149 + $0x2f0] sm:$0xff] %v338
                %v340 = vld [vmem:[%s148 + $0x1638] sm:$0xff]
                %341 = vst [vmem:[%s149 + $0x2f8] sm:$0xff] %v340
                %v342 = vld [vmem:[%s148 + $0x1800] sm:$0xff]
                %343 = vst [vmem:[%s149 + $0x300] sm:$0xff] %v342
                %v344 = vld [vmem:[%s148 + $0x1808] sm:$0xff]
                %345 = vst [vmem:[%s149 + $0x308] sm:$0xff] %v344
                %v346 = vld [vmem:[%s148 + $0x1810] sm:$0xff]
                %347 = vst [vmem:[%s149 + $0x310] sm:$0xff] %v346
                %v348 = vld [vmem:[%s148 + $0x1818] sm:$0xff]
                %349 = vst [vmem:[%s149 + $0x318] sm:$0xff] %v348
                %v350 = vld [vmem:[%s148 + $0x1820] sm:$0xff]
                %351 = vst [vmem:[%s149 + $0x320] sm:$0xff] %v350
                %v352 = vld [vmem:[%s148 + $0x1828] sm:$0xff]
                %353 = vst [vmem:[%s149 + $0x328] sm:$0xff] %v352
                %v354 = vld [vmem:[%s148 + $0x1830] sm:$0xff]
                %355 = vst [vmem:[%s149 + $0x330] sm:$0xff] %v354
                %v356 = vld [vmem:[%s148 + $0x1838] sm:$0xff]
                %357 = vst [vmem:[%s149 + $0x338] sm:$0xff] %v356
                %v358 = vld [vmem:[%s148 + $0x1a00] sm:$0xff]
                %359 = vst [vmem:[%s149 + $0x340] sm:$0xff] %v358
                %v360 = vld [vmem:[%s148 + $0x1a08] sm:$0xff]
                %361 = vst [vmem:[%s149 + $0x348] sm:$0xff] %v360
                %v362 = vld [vmem:[%s148 + $0x1a10] sm:$0xff]
                %363 = vst [vmem:[%s149 + $0x350] sm:$0xff] %v362
                %v364 = vld [vmem:[%s148 + $0x1a18] sm:$0xff]
                %365 = vst [vmem:[%s149 + $0x358] sm:$0xff] %v364
                %v366 = vld [vmem:[%s148 + $0x1a20] sm:$0xff]
                %367 = vst [vmem:[%s149 + $0x360] sm:$0xff] %v366
                %v368 = vld [vmem:[%s148 + $0x1a28] sm:$0xff]
                %369 = vst [vmem:[%s149 + $0x368] sm:$0xff] %v368
                %v370 = vld [vmem:[%s148 + $0x1a30] sm:$0xff]
                %371 = vst [vmem:[%s149 + $0x370] sm:$0xff] %v370
                %v372 = vld [vmem:[%s148 + $0x1a38] sm:$0xff]
                %373 = vst [vmem:[%s149 + $0x378] sm:$0xff] %v372
                %v374 = vld [vmem:[%s148 + $0x1c00] sm:$0xff]
                %375 = vst [vmem:[%s149 + $0x380] sm:$0xff] %v374
                %v376 = vld [vmem:[%s148 + $0x1c08] sm:$0xff]
                %377 = vst [vmem:[%s149 + $0x388] sm:$0xff] %v376
                %v378 = vld [vmem:[%s148 + $0x1c10] sm:$0xff]
                %379 = vst [vmem:[%s149 + $0x390] sm:$0xff] %v378
                %v380 = vld [vmem:[%s148 + $0x1c18] sm:$0xff]
                %381 = vst [vmem:[%s149 + $0x398] sm:$0xff] %v380
                %v382 = vld [vmem:[%s148 + $0x1c20] sm:$0xff]
                %383 = vst [vmem:[%s149 + $0x3a0] sm:$0xff] %v382
                %v384 = vld [vmem:[%s148 + $0x1c28] sm:$0xff]
                %385 = vst [vmem:[%s149 + $0x3a8] sm:$0xff] %v384
                %v386 = vld [vmem:[%s148 + $0x1c30] sm:$0xff]
                %387 = vst [vmem:[%s149 + $0x3b0] sm:$0xff] %v386
                %v388 = vld [vmem:[%s148 + $0x1c38] sm:$0xff]
                %389 = vst [vmem:[%s149 + $0x3b8] sm:$0xff] %v388
                %v390 = vld [vmem:[%s148 + $0x1e00] sm:$0xff]
                %391 = vst [vmem:[%s149 + $0x3c0] sm:$0xff] %v390
                %v392 = vld [vmem:[%s148 + $0x1e08] sm:$0xff]
                %393 = vst [vmem:[%s149 + $0x3c8] sm:$0xff] %v392
                %v394 = vld [vmem:[%s148 + $0x1e10] sm:$0xff]
                %395 = vst [vmem:[%s149 + $0x3d0] sm:$0xff] %v394
                %v396 = vld [vmem:[%s148 + $0x1e18] sm:$0xff]
                %397 = vst [vmem:[%s149 + $0x3d8] sm:$0xff] %v396
                %v398 = vld [vmem:[%s148 + $0x1e20] sm:$0xff]
                %399 = vst [vmem:[%s149 + $0x3e0] sm:$0xff] %v398
                %v400 = vld [vmem:[%s148 + $0x1e28] sm:$0xff]
                %401 = vst [vmem:[%s149 + $0x3e8] sm:$0xff] %v400
                %v402 = vld [vmem:[%s148 + $0x1e30] sm:$0xff]
                %403 = vst [vmem:[%s149 + $0x3f0] sm:$0xff] %v402
                %v404 = vld [vmem:[%s148 + $0x1e38] sm:$0xff]
                %405 = vst [vmem:[%s149 + $0x3f8] sm:$0xff] %v404
                %v406 = vld [vmem:[%s148 + $0x2000] sm:$0xff]
                %407 = vst [vmem:[%s149 + $0x400] sm:$0xff] %v406
                %v408 = vld [vmem:[%s148 + $0x2008] sm:$0xff]
                %409 = vst [vmem:[%s149 + $0x408] sm:$0xff] %v408
                %v410 = vld [vmem:[%s148 + $0x2010] sm:$0xff]
                %411 = vst [vmem:[%s149 + $0x410] sm:$0xff] %v410
                %v412 = vld [vmem:[%s148 + $0x2018] sm:$0xff]
                %413 = vst [vmem:[%s149 + $0x418] sm:$0xff] %v412
                %v414 = vld [vmem:[%s148 + $0x2020] sm:$0xff]
                %415 = vst [vmem:[%s149 + $0x420] sm:$0xff] %v414
                %v416 = vld [vmem:[%s148 + $0x2028] sm:$0xff]
                %417 = vst [vmem:[%s149 + $0x428] sm:$0xff] %v416
                %v418 = vld [vmem:[%s148 + $0x2030] sm:$0xff]
                %419 = vst [vmem:[%s149 + $0x430] sm:$0xff] %v418
                %v420 = vld [vmem:[%s148 + $0x2038] sm:$0xff]
                %421 = vst [vmem:[%s149 + $0x438] sm:$0xff] %v420
                %v422 = vld [vmem:[%s148 + $0x2200] sm:$0xff]
                %423 = vst [vmem:[%s149 + $0x440] sm:$0xff] %v422
                %v424 = vld [vmem:[%s148 + $0x2208] sm:$0xff]
                %425 = vst [vmem:[%s149 + $0x448] sm:$0xff] %v424
                %v426 = vld [vmem:[%s148 + $0x2210] sm:$0xff]
                %427 = vst [vmem:[%s149 + $0x450] sm:$0xff] %v426
                %v428 = vld [vmem:[%s148 + $0x2218] sm:$0xff]
                %429 = vst [vmem:[%s149 + $0x458] sm:$0xff] %v428
                %v430 = vld [vmem:[%s148 + $0x2220] sm:$0xff]
                %431 = vst [vmem:[%s149 + $0x460] sm:$0xff] %v430
                %v432 = vld [vmem:[%s148 + $0x2228] sm:$0xff]
                %433 = vst [vmem:[%s149 + $0x468] sm:$0xff] %v432
                %v434 = vld [vmem:[%s148 + $0x2230] sm:$0xff]
                %435 = vst [vmem:[%s149 + $0x470] sm:$0xff] %v434
                %v436 = vld [vmem:[%s148 + $0x2238] sm:$0xff]
                %437 = vst [vmem:[%s149 + $0x478] sm:$0xff] %v436
                %v438 = vld [vmem:[%s148 + $0x2400] sm:$0xff]
                %439 = vst [vmem:[%s149 + $0x480] sm:$0xff] %v438
                %v440 = vld [vmem:[%s148 + $0x2408] sm:$0xff]
                %441 = vst [vmem:[%s149 + $0x488] sm:$0xff] %v440
                %v442 = vld [vmem:[%s148 + $0x2410] sm:$0xff]
                %443 = vst [vmem:[%s149 + $0x490] sm:$0xff] %v442
                %v444 = vld [vmem:[%s148 + $0x2418] sm:$0xff]
                %445 = vst [vmem:[%s149 + $0x498] sm:$0xff] %v444
                %v446 = vld [vmem:[%s148 + $0x2420] sm:$0xff]
                %447 = vst [vmem:[%s149 + $0x4a0] sm:$0xff] %v446
                %v448 = vld [vmem:[%s148 + $0x2428] sm:$0xff]
                %449 = vst [vmem:[%s149 + $0x4a8] sm:$0xff] %v448
                %v450 = vld [vmem:[%s148 + $0x2430] sm:$0xff]
                %451 = vst [vmem:[%s149 + $0x4b0] sm:$0xff] %v450
                %v452 = vld [vmem:[%s148 + $0x2438] sm:$0xff]
                %453 = vst [vmem:[%s149 + $0x4b8] sm:$0xff] %v452
                %v454 = vld [vmem:[%s148 + $0x2600] sm:$0xff]
                %455 = vst [vmem:[%s149 + $0x4c0] sm:$0xff] %v454
                %v456 = vld [vmem:[%s148 + $0x2608] sm:$0xff]
                %457 = vst [vmem:[%s149 + $0x4c8] sm:$0xff] %v456
                %v458 = vld [vmem:[%s148 + $0x2610] sm:$0xff]
                %459 = vst [vmem:[%s149 + $0x4d0] sm:$0xff] %v458
                %v460 = vld [vmem:[%s148 + $0x2618] sm:$0xff]
                %461 = vst [vmem:[%s149 + $0x4d8] sm:$0xff] %v460
                %v462 = vld [vmem:[%s148 + $0x2620] sm:$0xff]
                %463 = vst [vmem:[%s149 + $0x4e0] sm:$0xff] %v462
                %v464 = vld [vmem:[%s148 + $0x2628] sm:$0xff]
                %465 = vst [vmem:[%s149 + $0x4e8] sm:$0xff] %v464
                %v466 = vld [vmem:[%s148 + $0x2630] sm:$0xff]
                %467 = vst [vmem:[%s149 + $0x4f0] sm:$0xff] %v466
                %v468 = vld [vmem:[%s148 + $0x2638] sm:$0xff]
                %469 = vst [vmem:[%s149 + $0x4f8] sm:$0xff] %v468
                %v470 = vld [vmem:[%s148 + $0x2800] sm:$0xff]
                %471 = vst [vmem:[%s149 + $0x500] sm:$0xff] %v470
                %v472 = vld [vmem:[%s148 + $0x2808] sm:$0xff]
                %473 = vst [vmem:[%s149 + $0x508] sm:$0xff] %v472
                %v474 = vld [vmem:[%s148 + $0x2810] sm:$0xff]
                %475 = vst [vmem:[%s149 + $0x510] sm:$0xff] %v474
                %v476 = vld [vmem:[%s148 + $0x2818] sm:$0xff]
                %477 = vst [vmem:[%s149 + $0x518] sm:$0xff] %v476
                %v478 = vld [vmem:[%s148 + $0x2820] sm:$0xff]
                %479 = vst [vmem:[%s149 + $0x520] sm:$0xff] %v478
                %v480 = vld [vmem:[%s148 + $0x2828] sm:$0xff]
                %481 = vst [vmem:[%s149 + $0x528] sm:$0xff] %v480
                %v482 = vld [vmem:[%s148 + $0x2830] sm:$0xff]
                %483 = vst [vmem:[%s149 + $0x530] sm:$0xff] %v482
                %v484 = vld [vmem:[%s148 + $0x2838] sm:$0xff]
                %485 = vst [vmem:[%s149 + $0x538] sm:$0xff] %v484
                %v486 = vld [vmem:[%s148 + $0x2a00] sm:$0xff]
                %487 = vst [vmem:[%s149 + $0x540] sm:$0xff] %v486
                %v488 = vld [vmem:[%s148 + $0x2a08] sm:$0xff]
                %489 = vst [vmem:[%s149 + $0x548] sm:$0xff] %v488
                %v490 = vld [vmem:[%s148 + $0x2a10] sm:$0xff]
                %491 = vst [vmem:[%s149 + $0x550] sm:$0xff] %v490
                %v492 = vld [vmem:[%s148 + $0x2a18] sm:$0xff]
                %493 = vst [vmem:[%s149 + $0x558] sm:$0xff] %v492
                %v494 = vld [vmem:[%s148 + $0x2a20] sm:$0xff]
                %495 = vst [vmem:[%s149 + $0x560] sm:$0xff] %v494
                %v496 = vld [vmem:[%s148 + $0x2a28] sm:$0xff]
                %497 = vst [vmem:[%s149 + $0x568] sm:$0xff] %v496
                %v498 = vld [vmem:[%s148 + $0x2a30] sm:$0xff]
                %499 = vst [vmem:[%s149 + $0x570] sm:$0xff] %v498
                %v500 = vld [vmem:[%s148 + $0x2a38] sm:$0xff]
                %501 = vst [vmem:[%s149 + $0x578] sm:$0xff] %v500
                %v502 = vld [vmem:[%s148 + $0x2c00] sm:$0xff]
                %503 = vst [vmem:[%s149 + $0x580] sm:$0xff] %v502
                %v504 = vld [vmem:[%s148 + $0x2c08] sm:$0xff]
                %505 = vst [vmem:[%s149 + $0x588] sm:$0xff] %v504
                %v506 = vld [vmem:[%s148 + $0x2c10] sm:$0xff]
                %507 = vst [vmem:[%s149 + $0x590] sm:$0xff] %v506
                %v508 = vld [vmem:[%s148 + $0x2c18] sm:$0xff]
                %509 = vst [vmem:[%s149 + $0x598] sm:$0xff] %v508
                %v510 = vld [vmem:[%s148 + $0x2c20] sm:$0xff]
                %511 = vst [vmem:[%s149 + $0x5a0] sm:$0xff] %v510
                %v512 = vld [vmem:[%s148 + $0x2c28] sm:$0xff]
                %513 = vst [vmem:[%s149 + $0x5a8] sm:$0xff] %v512
                %v514 = vld [vmem:[%s148 + $0x2c30] sm:$0xff]
                %515 = vst [vmem:[%s149 + $0x5b0] sm:$0xff] %v514
                %v516 = vld [vmem:[%s148 + $0x2c38] sm:$0xff]
                %517 = vst [vmem:[%s149 + $0x5b8] sm:$0xff] %v516
                %v518 = vld [vmem:[%s148 + $0x2e00] sm:$0xff]
                %519 = vst [vmem:[%s149 + $0x5c0] sm:$0xff] %v518
                %v520 = vld [vmem:[%s148 + $0x2e08] sm:$0xff]
                %521 = vst [vmem:[%s149 + $0x5c8] sm:$0xff] %v520
                %v522 = vld [vmem:[%s148 + $0x2e10] sm:$0xff]
                %523 = vst [vmem:[%s149 + $0x5d0] sm:$0xff] %v522
                %v524 = vld [vmem:[%s148 + $0x2e18] sm:$0xff]
                %525 = vst [vmem:[%s149 + $0x5d8] sm:$0xff] %v524
                %v526 = vld [vmem:[%s148 + $0x2e20] sm:$0xff]
                %527 = vst [vmem:[%s149 + $0x5e0] sm:$0xff] %v526
                %v528 = vld [vmem:[%s148 + $0x2e28] sm:$0xff]
                %529 = vst [vmem:[%s149 + $0x5e8] sm:$0xff] %v528
                %v530 = vld [vmem:[%s148 + $0x2e30] sm:$0xff]
                %531 = vst [vmem:[%s149 + $0x5f0] sm:$0xff] %v530
                %v532 = vld [vmem:[%s148 + $0x2e38] sm:$0xff]
                %533 = vst [vmem:[%s149 + $0x5f8] sm:$0xff] %v532
                %v534 = vld [vmem:[%s148 + $0x3000] sm:$0xff]
                %535 = vst [vmem:[%s149 + $0x600] sm:$0xff] %v534
                %v536 = vld [vmem:[%s148 + $0x3008] sm:$0xff]
                %537 = vst [vmem:[%s149 + $0x608] sm:$0xff] %v536
                %v538 = vld [vmem:[%s148 + $0x3010] sm:$0xff]
                %539 = vst [vmem:[%s149 + $0x610] sm:$0xff] %v538
                %v540 = vld [vmem:[%s148 + $0x3018] sm:$0xff]
                %541 = vst [vmem:[%s149 + $0x618] sm:$0xff] %v540
                %v542 = vld [vmem:[%s148 + $0x3020] sm:$0xff]
                %543 = vst [vmem:[%s149 + $0x620] sm:$0xff] %v542
                %v544 = vld [vmem:[%s148 + $0x3028] sm:$0xff]
                %545 = vst [vmem:[%s149 + $0x628] sm:$0xff] %v544
                %v546 = vld [vmem:[%s148 + $0x3030] sm:$0xff]
                %547 = vst [vmem:[%s149 + $0x630] sm:$0xff] %v546
                %v548 = vld [vmem:[%s148 + $0x3038] sm:$0xff]
                %549 = vst [vmem:[%s149 + $0x638] sm:$0xff] %v548
                %v550 = vld [vmem:[%s148 + $0x3200] sm:$0xff]
                %551 = vst [vmem:[%s149 + $0x640] sm:$0xff] %v550
                %v552 = vld [vmem:[%s148 + $0x3208] sm:$0xff]
                %553 = vst [vmem:[%s149 + $0x648] sm:$0xff] %v552
                %v554 = vld [vmem:[%s148 + $0x3210] sm:$0xff]
                %555 = vst [vmem:[%s149 + $0x650] sm:$0xff] %v554
                %v556 = vld [vmem:[%s148 + $0x3218] sm:$0xff]
                %557 = vst [vmem:[%s149 + $0x658] sm:$0xff] %v556
                %v558 = vld [vmem:[%s148 + $0x3220] sm:$0xff]
                %559 = vst [vmem:[%s149 + $0x660] sm:$0xff] %v558
                %v560 = vld [vmem:[%s148 + $0x3228] sm:$0xff]
                %561 = vst [vmem:[%s149 + $0x668] sm:$0xff] %v560
                %v562 = vld [vmem:[%s148 + $0x3230] sm:$0xff]
                %563 = vst [vmem:[%s149 + $0x670] sm:$0xff] %v562
                %v564 = vld [vmem:[%s148 + $0x3238] sm:$0xff]
                %565 = vst [vmem:[%s149 + $0x678] sm:$0xff] %v564
                %v566 = vld [vmem:[%s148 + $0x3400] sm:$0xff]
                %567 = vst [vmem:[%s149 + $0x680] sm:$0xff] %v566
                %v568 = vld [vmem:[%s148 + $0x3408] sm:$0xff]
                %569 = vst [vmem:[%s149 + $0x688] sm:$0xff] %v568
                %v570 = vld [vmem:[%s148 + $0x3410] sm:$0xff]
                %571 = vst [vmem:[%s149 + $0x690] sm:$0xff] %v570
                %v572 = vld [vmem:[%s148 + $0x3418] sm:$0xff]
                %573 = vst [vmem:[%s149 + $0x698] sm:$0xff] %v572
                %v574 = vld [vmem:[%s148 + $0x3420] sm:$0xff]
                %575 = vst [vmem:[%s149 + $0x6a0] sm:$0xff] %v574
                %v576 = vld [vmem:[%s148 + $0x3428] sm:$0xff]
                %577 = vst [vmem:[%s149 + $0x6a8] sm:$0xff] %v576
                %v578 = vld [vmem:[%s148 + $0x3430] sm:$0xff]
                %579 = vst [vmem:[%s149 + $0x6b0] sm:$0xff] %v578
                %v580 = vld [vmem:[%s148 + $0x3438] sm:$0xff]
                %581 = vst [vmem:[%s149 + $0x6b8] sm:$0xff] %v580
              $region41: #{encoder_forward.36} parent=35 // loop_footer
                %s147 = sadd.s32 1, %s143
              $region42: #{encoder_forward.36} parent=35 // loop_footer_branch
                %142 = sbr.rel target = $region38
              $region43: #{encoder_forward.36} parent=35 // loop_exit
                _
            $region36: #{encoder_forward.36} parent=31 // pred_fallthru
              _
            // Predicated region
            $region44: #{encoder_forward.36} parent=31 // pred_check
              _
            $region45: #{encoder_forward.36} parent=31 // pred_check_branch
              %583 = sbr.rel target = $region47
            $region46: #{encoder_forward.36} parent=31 // pred_region
              _
            $region47: #{encoder_forward.36} parent=31 // pred_fallthru
              _
          $region32: #{encoder_forward.36} parent=27 // pred_fallthru
            _
          %584 = vnop
        $region28: #{encoder_forward.36} parent=23 // pred_fallthru
          _
      $region24: #{encoder_forward.36} parent=5 // pred_fallthru
        _
      %p585 = scmp.le.s32.totalorder 1, %s9
      %p586 = scmp.lt.s32.totalorder %s9, 9
      %p587 = pnand %p585, %p586
      %p588 = pneg %p587
      // Predicated region
      $region48: #{encoder_forward.36} parent=5 // pred_check
        _
      $region49: #{encoder_forward.36} parent=5 // pred_check_branch
        %590 = sbr.rel (%p587) target = $region51
      $region50: #{encoder_forward.36} parent=5 // pred_region
        %s591 = ssub.s32 %s9, 1
        %s592 = sand.u32 %s43, 1
        %s593 = sand.u32 %s43, 1
        %s594 = smul.addr %s593, 1728
        %s595 = scalar_lea.vmem [#allocation2], %s594
        // Predicated region
        $region52: #{encoder_forward.36} parent=50 // pred_check
          %p596 = pneg %p56
        $region53: #{encoder_forward.36} parent=50 // pred_check_branch
          %598 = sbr.rel (%p596) target = $region55
        $region54: #{encoder_forward.36} parent=50 // pred_region
          _
        $region55: #{encoder_forward.36} parent=50 // pred_fallthru
          _
        %p599 = pneg %p30
        %p600 = pneg %p27
        %s601 = sand.u32 %s43, 1
        %s602 = sand.u32 %s43, 1
        %s603 = smul.addr %s602, 1728
        %s604 = scalar_lea.vmem [#allocation2], %s603
        %p605 = pneg %p56
        %p606 = pneg %p53
        %p607 = pneg %p77
        %p608 = pneg %p74
        %p609 = pneg %p103
        %p610 = pneg %p100
        %s611 = smul.u32 8, %s14
        %p612 = scmp.lt.s32.totalorder %s611, 63
        %s613 = scalar_select %p612, %s611, 63
        %s614 = smul.addr %s613, 8
        %s615 = scalar_lea.vmem %s3, %s614
        %s616 = smul.u32 8, %s14
        %s617 = smul.u32 8, %s14
        %p618 = scmp.lt.s32.totalorder %s617, 63
        %s619 = scalar_select %p618, %s617, 63
        %s620 = smul.addr %s619, 8
        %s621 = scalar_lea.vmem %s3, %s620
        %s622 = smul.u32 8, %s14
        %v623 = vld [vmem:[%s0] sm:$0xff]
        %v624 = vld [vmem:[%s0 + $0x8] sm:$0xff]
        %v625 = vld [vmem:[%s595] sm:$0xff]
        %v626 = vld [vmem:[%s595 + $0x8] sm:$0xff]
        %v627 = vld [vmem:[%s595 + $0x10] sm:$0xff]
        %v628 = vld [vmem:[%s595 + $0x18] sm:$0xff]
        %v629 = vld [vmem:[%s595 + $0x20] sm:$0xff]
        %v630 = vld [vmem:[%s595 + $0x28] sm:$0xff]
        %v631 = vld [vmem:[%s595 + $0x30] sm:$0xff]
        %v632 = vld [vmem:[%s595 + $0x38] sm:$0xff]
        %v633 = vld [vmem:[%s595 + $0x40] sm:$0xff]
        %v634 = vld [vmem:[%s595 + $0x48] sm:$0xff]
        %v635 = vld [vmem:[%s595 + $0x50] sm:$0xff]
        %v636 = vld [vmem:[%s595 + $0x58] sm:$0xff]
        %v637 = vld [vmem:[%s595 + $0x60] sm:$0xff]
        %v638 = vld [vmem:[%s595 + $0x68] sm:$0xff]
        %v639 = vld [vmem:[%s595 + $0x70] sm:$0xff]
        %v640 = vld [vmem:[%s595 + $0x78] sm:$0xff]
        %v641 = vld [vmem:[%s595 + $0x80] sm:$0xff]
        %v642 = vld [vmem:[%s595 + $0x88] sm:$0xff]
        %v643 = vld [vmem:[%s595 + $0x90] sm:$0xff]
        %v644 = vld [vmem:[%s595 + $0x98] sm:$0xff]
        %v645 = vld [vmem:[%s595 + $0xa0] sm:$0xff]
        %v646 = vld [vmem:[%s595 + $0xa8] sm:$0xff]
        %v647 = vld [vmem:[%s595 + $0xb0] sm:$0xff]
        %v648 = vld [vmem:[%s595 + $0xb8] sm:$0xff]
        %v649 = vld [vmem:[%s595 + $0xc0] sm:$0xff]
        %v650 = vld [vmem:[%s595 + $0xc8] sm:$0xff]
        %v651 = vld [vmem:[%s595 + $0xd0] sm:$0xff]
        %v652 = vld [vmem:[%s595 + $0xd8] sm:$0xff]
        %v653 = vld [vmem:[%s595 + $0xe0] sm:$0xff]
        %v654 = vld [vmem:[%s595 + $0xe8] sm:$0xff]
        %v655 = vld [vmem:[%s595 + $0xf0] sm:$0xff]
        %v656 = vld [vmem:[%s595 + $0xf8] sm:$0xff]
        %v657 = vld [vmem:[%s595 + $0x100] sm:$0xff]
        %v658 = vld [vmem:[%s595 + $0x108] sm:$0xff]
        %v659 = vld [vmem:[%s595 + $0x110] sm:$0xff]
        %v660 = vld [vmem:[%s595 + $0x118] sm:$0xff]
        %v661 = vld [vmem:[%s595 + $0x120] sm:$0xff]
        %v662 = vld [vmem:[%s595 + $0x128] sm:$0xff]
        %v663 = vld [vmem:[%s595 + $0x130] sm:$0xff]
        %v664 = vld [vmem:[%s595 + $0x138] sm:$0xff]
        %v665 = vld [vmem:[%s595 + $0x140] sm:$0xff]
        %v666 = vld [vmem:[%s595 + $0x148] sm:$0xff]
        %v667 = vld [vmem:[%s595 + $0x150] sm:$0xff]
        %v668 = vld [vmem:[%s595 + $0x158] sm:$0xff]
        %v669 = vld [vmem:[%s595 + $0x160] sm:$0xff]
        %v670 = vld [vmem:[%s595 + $0x168] sm:$0xff]
        %v671 = vld [vmem:[%s595 + $0x170] sm:$0xff]
        %v672 = vld [vmem:[%s595 + $0x178] sm:$0xff]
        %v673 = vld [vmem:[%s595 + $0x180] sm:$0xff]
        %v674 = vld [vmem:[%s595 + $0x188] sm:$0xff]
        %v675 = vld [vmem:[%s595 + $0x190] sm:$0xff]
        %v676 = vld [vmem:[%s595 + $0x198] sm:$0xff]
        %v677 = vld [vmem:[%s595 + $0x1a0] sm:$0xff]
        %v678 = vld [vmem:[%s595 + $0x1a8] sm:$0xff]
        %v679 = vld [vmem:[%s595 + $0x1b0] sm:$0xff]
        %v680 = vld [vmem:[%s595 + $0x1b8] sm:$0xff]
        %v681 = vld [vmem:[%s595 + $0x1c0] sm:$0xff]
        %v682 = vld [vmem:[%s595 + $0x1c8] sm:$0xff]
        %v683 = vld [vmem:[%s595 + $0x1d0] sm:$0xff]
        %v684 = vld [vmem:[%s595 + $0x1d8] sm:$0xff]
        %v685 = vld [vmem:[%s595 + $0x1e0] sm:$0xff]
        %v686 = vld [vmem:[%s595 + $0x1e8] sm:$0xff]
        %v687 = vld [vmem:[%s595 + $0x1f0] sm:$0xff]
        %v688 = vld [vmem:[%s595 + $0x1f8] sm:$0xff]
        %v689 = vld [vmem:[%s595 + $0x200] sm:$0xff]
        %v690 = vld [vmem:[%s595 + $0x208] sm:$0xff]
        %v691 = vld [vmem:[%s595 + $0x210] sm:$0xff]
        %v692 = vld [vmem:[%s595 + $0x218] sm:$0xff]
        %v693 = vld [vmem:[%s595 + $0x220] sm:$0xff]
        %v694 = vld [vmem:[%s595 + $0x228] sm:$0xff]
        %v695 = vld [vmem:[%s595 + $0x230] sm:$0xff]
        %v696 = vld [vmem:[%s595 + $0x238] sm:$0xff]
        %v697 = vld [vmem:[%s595 + $0x240] sm:$0xff]
        %v698 = vld [vmem:[%s595 + $0x248] sm:$0xff]
        %v699 = vld [vmem:[%s595 + $0x250] sm:$0xff]
        %v700 = vld [vmem:[%s595 + $0x258] sm:$0xff]
        %v701 = vld [vmem:[%s595 + $0x260] sm:$0xff]
        %v702 = vld [vmem:[%s595 + $0x268] sm:$0xff]
        %v703 = vld [vmem:[%s595 + $0x270] sm:$0xff]
        %v704 = vld [vmem:[%s595 + $0x278] sm:$0xff]
        %v705 = vld [vmem:[%s595 + $0x280] sm:$0xff]
        %v706 = vld [vmem:[%s595 + $0x288] sm:$0xff]
        %v707 = vld [vmem:[%s595 + $0x290] sm:$0xff]
        %v708 = vld [vmem:[%s595 + $0x298] sm:$0xff]
        %v709 = vld [vmem:[%s595 + $0x2a0] sm:$0xff]
        %v710 = vld [vmem:[%s595 + $0x2a8] sm:$0xff]
        %v711 = vld [vmem:[%s595 + $0x2b0] sm:$0xff]
        %v712 = vld [vmem:[%s595 + $0x2b8] sm:$0xff]
        %v713 = vld [vmem:[%s595 + $0x2c0] sm:$0xff]
        %v714 = vld [vmem:[%s595 + $0x2c8] sm:$0xff]
        %v715 = vld [vmem:[%s595 + $0x2d0] sm:$0xff]
        %v716 = vld [vmem:[%s595 + $0x2d8] sm:$0xff]
        %v717 = vld [vmem:[%s595 + $0x2e0] sm:$0xff]
        %v718 = vld [vmem:[%s595 + $0x2e8] sm:$0xff]
        %v719 = vld [vmem:[%s595 + $0x2f0] sm:$0xff]
        %v720 = vld [vmem:[%s595 + $0x2f8] sm:$0xff]
        %v721 = vld [vmem:[%s595 + $0x300] sm:$0xff]
        %v722 = vld [vmem:[%s595 + $0x308] sm:$0xff]
        %v723 = vld [vmem:[%s595 + $0x310] sm:$0xff]
        %v724 = vld [vmem:[%s595 + $0x318] sm:$0xff]
        %v725 = vld [vmem:[%s595 + $0x320] sm:$0xff]
        %v726 = vld [vmem:[%s595 + $0x328] sm:$0xff]
        %v727 = vld [vmem:[%s595 + $0x330] sm:$0xff]
        %v728 = vld [vmem:[%s595 + $0x338] sm:$0xff]
        %v729 = vld [vmem:[%s595 + $0x340] sm:$0xff]
        %v730 = vld [vmem:[%s595 + $0x348] sm:$0xff]
        %v731 = vld [vmem:[%s595 + $0x350] sm:$0xff]
        %v732 = vld [vmem:[%s595 + $0x358] sm:$0xff]
        %v733 = vld [vmem:[%s595 + $0x360] sm:$0xff]
        %v734 = vld [vmem:[%s595 + $0x368] sm:$0xff]
        %v735 = vld [vmem:[%s595 + $0x370] sm:$0xff]
        %v736 = vld [vmem:[%s595 + $0x378] sm:$0xff]
        %v737 = vld [vmem:[%s595 + $0x380] sm:$0xff]
        %v738 = vld [vmem:[%s595 + $0x388] sm:$0xff]
        %v739 = vld [vmem:[%s595 + $0x390] sm:$0xff]
        %v740 = vld [vmem:[%s595 + $0x398] sm:$0xff]
        %v741 = vld [vmem:[%s595 + $0x3a0] sm:$0xff]
        %v742 = vld [vmem:[%s595 + $0x3a8] sm:$0xff]
        %v743 = vld [vmem:[%s595 + $0x3b0] sm:$0xff]
        %v744 = vld [vmem:[%s595 + $0x3b8] sm:$0xff]
        %v745 = vld [vmem:[%s595 + $0x3c0] sm:$0xff]
        %v746 = vld [vmem:[%s595 + $0x3c8] sm:$0xff]
        %v747 = vld [vmem:[%s595 + $0x3d0] sm:$0xff]
        %v748 = vld [vmem:[%s595 + $0x3d8] sm:$0xff]
        %v749 = vld [vmem:[%s595 + $0x3e0] sm:$0xff]
        %v750 = vld [vmem:[%s595 + $0x3e8] sm:$0xff]
        %v751 = vld [vmem:[%s595 + $0x3f0] sm:$0xff]
        %v752 = vld [vmem:[%s595 + $0x3f8] sm:$0xff]
        %v753 = vld [vmem:[%s595 + $0x400] sm:$0xff]
        %v754 = vld [vmem:[%s595 + $0x408] sm:$0xff]
        %v755 = vld [vmem:[%s595 + $0x410] sm:$0xff]
        %v756 = vld [vmem:[%s595 + $0x418] sm:$0xff]
        %v757 = vld [vmem:[%s595 + $0x420] sm:$0xff]
        %v758 = vld [vmem:[%s595 + $0x428] sm:$0xff]
        %v759 = vld [vmem:[%s595 + $0x430] sm:$0xff]
        %v760 = vld [vmem:[%s595 + $0x438] sm:$0xff]
        %v761 = vld [vmem:[%s595 + $0x440] sm:$0xff]
        %v762 = vld [vmem:[%s595 + $0x448] sm:$0xff]
        %v763 = vld [vmem:[%s595 + $0x450] sm:$0xff]
        %v764 = vld [vmem:[%s595 + $0x458] sm:$0xff]
        %v765 = vld [vmem:[%s595 + $0x460] sm:$0xff]
        %v766 = vld [vmem:[%s595 + $0x468] sm:$0xff]
        %v767 = vld [vmem:[%s595 + $0x470] sm:$0xff]
        %v768 = vld [vmem:[%s595 + $0x478] sm:$0xff]
        %v769 = vld [vmem:[%s595 + $0x480] sm:$0xff]
        %v770 = vld [vmem:[%s595 + $0x488] sm:$0xff]
        %v771 = vld [vmem:[%s595 + $0x490] sm:$0xff]
        %v772 = vld [vmem:[%s595 + $0x498] sm:$0xff]
        %v773 = vld [vmem:[%s595 + $0x4a0] sm:$0xff]
        %v774 = vld [vmem:[%s595 + $0x4a8] sm:$0xff]
        %v775 = vld [vmem:[%s595 + $0x4b0] sm:$0xff]
        %v776 = vld [vmem:[%s595 + $0x4b8] sm:$0xff]
        %v777 = vld [vmem:[%s595 + $0x4c0] sm:$0xff]
        %v778 = vld [vmem:[%s595 + $0x4c8] sm:$0xff]
        %v779 = vld [vmem:[%s595 + $0x4d0] sm:$0xff]
        %v780 = vld [vmem:[%s595 + $0x4d8] sm:$0xff]
        %v781 = vld [vmem:[%s595 + $0x4e0] sm:$0xff]
        %v782 = vld [vmem:[%s595 + $0x4e8] sm:$0xff]
        %v783 = vld [vmem:[%s595 + $0x4f0] sm:$0xff]
        %v784 = vld [vmem:[%s595 + $0x4f8] sm:$0xff]
        %v785 = vld [vmem:[%s595 + $0x500] sm:$0xff]
        %v786 = vld [vmem:[%s595 + $0x508] sm:$0xff]
        %v787 = vld [vmem:[%s595 + $0x510] sm:$0xff]
        %v788 = vld [vmem:[%s595 + $0x518] sm:$0xff]
        %v789 = vld [vmem:[%s595 + $0x520] sm:$0xff]
        %v790 = vld [vmem:[%s595 + $0x528] sm:$0xff]
        %v791 = vld [vmem:[%s595 + $0x530] sm:$0xff]
        %v792 = vld [vmem:[%s595 + $0x538] sm:$0xff]
        %v793 = vld [vmem:[%s595 + $0x540] sm:$0xff]
        %v794 = vld [vmem:[%s595 + $0x548] sm:$0xff]
        %v795 = vld [vmem:[%s595 + $0x550] sm:$0xff]
        %v796 = vld [vmem:[%s595 + $0x558] sm:$0xff]
        %v797 = vld [vmem:[%s595 + $0x560] sm:$0xff]
        %v798 = vld [vmem:[%s595 + $0x568] sm:$0xff]
        %v799 = vld [vmem:[%s595 + $0x570] sm:$0xff]
        %v800 = vld [vmem:[%s595 + $0x578] sm:$0xff]
        %v801 = vld [vmem:[%s595 + $0x580] sm:$0xff]
        %v802 = vld [vmem:[%s595 + $0x588] sm:$0xff]
        %v803 = vld [vmem:[%s595 + $0x590] sm:$0xff]
        %v804 = vld [vmem:[%s595 + $0x598] sm:$0xff]
        %v805 = vld [vmem:[%s595 + $0x5a0] sm:$0xff]
        %v806 = vld [vmem:[%s595 + $0x5a8] sm:$0xff]
        %v807 = vld [vmem:[%s595 + $0x5b0] sm:$0xff]
        %v808 = vld [vmem:[%s595 + $0x5b8] sm:$0xff]
        %v809 = vld [vmem:[%s595 + $0x5c0] sm:$0xff]
        %v810 = vld [vmem:[%s595 + $0x5c8] sm:$0xff]
        %v811 = vld [vmem:[%s595 + $0x5d0] sm:$0xff]
        %v812 = vld [vmem:[%s595 + $0x5d8] sm:$0xff]
        %v813 = vld [vmem:[%s595 + $0x5e0] sm:$0xff]
        %v814 = vld [vmem:[%s595 + $0x5e8] sm:$0xff]
        %v815 = vld [vmem:[%s595 + $0x5f0] sm:$0xff]
        %v816 = vld [vmem:[%s595 + $0x5f8] sm:$0xff]
        %v817 = vld [vmem:[%s595 + $0x600] sm:$0xff]
        %v818 = vld [vmem:[%s595 + $0x608] sm:$0xff]
        %v819 = vld [vmem:[%s595 + $0x610] sm:$0xff]
        %v820 = vld [vmem:[%s595 + $0x618] sm:$0xff]
        %v821 = vld [vmem:[%s595 + $0x620] sm:$0xff]
        %v822 = vld [vmem:[%s595 + $0x628] sm:$0xff]
        %v823 = vld [vmem:[%s595 + $0x630] sm:$0xff]
        %v824 = vld [vmem:[%s595 + $0x638] sm:$0xff]
        %v825 = vld [vmem:[%s595 + $0x640] sm:$0xff]
        %v826 = vld [vmem:[%s595 + $0x648] sm:$0xff]
        %v827 = vld [vmem:[%s595 + $0x650] sm:$0xff]
        %v828 = vld [vmem:[%s595 + $0x658] sm:$0xff]
        %v829 = vld [vmem:[%s595 + $0x660] sm:$0xff]
        %v830 = vld [vmem:[%s595 + $0x668] sm:$0xff]
        %v831 = vld [vmem:[%s595 + $0x670] sm:$0xff]
        %v832 = vld [vmem:[%s595 + $0x678] sm:$0xff]
        %v833 = vld [vmem:[%s595 + $0x680] sm:$0xff]
        %v834 = vld [vmem:[%s595 + $0x688] sm:$0xff]
        %v835 = vld [vmem:[%s595 + $0x690] sm:$0xff]
        %v836 = vld [vmem:[%s595 + $0x698] sm:$0xff]
        %v837 = vld [vmem:[%s595 + $0x6a0] sm:$0xff]
        %v838 = vld [vmem:[%s595 + $0x6a8] sm:$0xff]
        %v839 = vld [vmem:[%s595 + $0x6b0] sm:$0xff]
        %v840 = vld [vmem:[%s595 + $0x6b8] sm:$0xff]
        %vm841 = vcmask 719872
        %v843 = vsel %vm841, %v624, 0
        %845 = vmatprep.subr.mxu0 %v746
        %846 = vmatpush1.msra.mxu0 %v745
        %847 = vmatprep.subr.mxu0 %v738
        %848 = vmatpush1.msra.mxu0 %v737
        %849 = vmatprep.subr.mxu0 %v730
        %850 = vmatpush1.msra.mxu0 %v729
        %851 = vmatprep.subr.mxu0 %v722
        %852 = vmatpush1.msra.mxu0 %v721
        %853 = vmatprep.subr.mxu0 %v714
        %854 = vmatpush1.msra.mxu0 %v713
        %855 = vmatprep.subr.mxu0 %v706
        %856 = vmatpush1.msra.mxu0 %v705
        %857 = vmatprep.subr.mxu0 %v698
        %858 = vmatpush1.msra.mxu0 %v697
        %859 = vmatprep.subr.mxu0 %v690
        %860 = vmatpush1.msra.mxu0 %v689
        %861 = vmatprep.subr.mxu0 %v682
        %862 = vmatpush1.msra.mxu0 %v681
        %863 = vmatprep.subr.mxu0 %v674
        %864 = vmatpush1.msra.mxu0 %v673
        %865 = vmatprep.subr.mxu0 %v666
        %866 = vmatpush1.msra.mxu0 %v665
        %867 = vmatprep.subr.mxu0 %v658
        %868 = vmatpush1.msra.mxu0 %v657
        %869 = vmatprep.subr.mxu0 %v650
        %870 = vmatpush1.msra.mxu0 %v649
        %871 = vmatprep.subr.mxu0 %v642
        %872 = vmatpush1.msra.mxu0 %v641
        %873 = vmatprep.subr.mxu0 %v634
        %874 = vmatpush1.msra.mxu0 %v633
        %875 = vmatprep.subr.mxu0 %v626
        %876 = vmatpush1.msra.mxu0 %v625
        %877 = vmatprep.subr.mxu0 0.0
        %878 = vmatpush2.msra.mxu0 0.0
        %879 = vmatprep.subr.mxu0 0.0
        %880 = vmatpush2.msra.mxu0 0.0
        %881 = vmatprep.subr.mxu0 0.0
        %882 = vmatpush2.msra.mxu0 0.0
        %883 = vmatprep.subr.mxu0 0.0
        %884 = vmatpush2.msra.mxu0 0.0
        %885 = vmatprep.subr.mxu0 0.0
        %886 = vmatpush2.msra.mxu0 0.0
        %887 = vmatprep.subr.mxu0 %v834
        %888 = vmatpush2.msra.mxu0 %v833
        %889 = vmatprep.subr.mxu0 %v826
        %890 = vmatpush2.msra.mxu0 %v825
        %891 = vmatprep.subr.mxu0 %v818
        %892 = vmatpush2.msra.mxu0 %v817
        %893 = vmatprep.subr.mxu0 %v810
        %894 = vmatpush2.msra.mxu0 %v809
        %895 = vmatprep.subr.mxu0 %v802
        %896 = vmatpush2.msra.mxu0 %v801
        %897 = vmatprep.subr.mxu0 %v794
        %898 = vmatpush2.msra.mxu0 %v793
        %899 = vmatprep.subr.mxu0 %v786
        %900 = vmatpush2.msra.mxu0 %v785
        %901 = vmatprep.subr.mxu0 %v778
        %902 = vmatpush2.msra.mxu0 %v777
        %903 = vmatprep.subr.mxu0 %v770
        %904 = vmatpush2.msra.mxu0 %v769
        %905 = vmatprep.subr.mxu0 %v762
        %906 = vmatpush2.msra.mxu0 %v761
        %907 = vmatprep.subr.mxu0 %v754
        %908 = vmatpush2.msra.mxu0 %v753
        %909 = vmatprep.mubr.f32.mxu0 %v843
        %910 = vmatmul.mubr.f32.gmra.mxu0 %v623
        %v911 = vpop.f32.mrf.mxu0
        %v912 = vadd.f32 0.0, %v911
        %v913 = vpop.f32.mrf.mxu0
        %v914 = vadd.f32 0.0, %v913
        %915 = vdwg.mxu0
        %916 = vmatprep.subr.mxu0 %v748
        %917 = vmatpush1.msra.mxu0 %v747
        %918 = vmatprep.subr.mxu0 %v740
        %919 = vmatpush1.msra.mxu0 %v739
        %920 = vmatprep.subr.mxu0 %v732
        %921 = vmatpush1.msra.mxu0 %v731
        %922 = vmatprep.subr.mxu0 %v724
        %923 = vmatpush1.msra.mxu0 %v723
        %924 = vmatprep.subr.mxu0 %v716
        %925 = vmatpush1.msra.mxu0 %v715
        %926 = vmatprep.subr.mxu0 %v708
        %927 = vmatpush1.msra.mxu0 %v707
        %928 = vmatprep.subr.mxu0 %v700
        %929 = vmatpush1.msra.mxu0 %v699
        %930 = vmatprep.subr.mxu0 %v692
        %931 = vmatpush1.msra.mxu0 %v691
        %932 = vmatprep.subr.mxu0 %v684
        %933 = vmatpush1.msra.mxu0 %v683
        %934 = vmatprep.subr.mxu0 %v676
        %935 = vmatpush1.msra.mxu0 %v675
        %936 = vmatprep.subr.mxu0 %v668
        %937 = vmatpush1.msra.mxu0 %v667
        %938 = vmatprep.subr.mxu0 %v660
        %939 = vmatpush1.msra.mxu0 %v659
        %940 = vmatprep.subr.mxu0 %v652
        %941 = vmatpush1.msra.mxu0 %v651
        %942 = vmatprep.subr.mxu0 %v644
        %943 = vmatpush1.msra.mxu0 %v643
        %944 = vmatprep.subr.mxu0 %v636
        %945 = vmatpush1.msra.mxu0 %v635
        %946 = vmatprep.subr.mxu0 %v628
        %947 = vmatpush1.msra.mxu0 %v627
        %948 = vmatprep.subr.mxu0 0.0
        %949 = vmatpush2.msra.mxu0 0.0
        %950 = vmatprep.subr.mxu0 0.0
        %951 = vmatpush2.msra.mxu0 0.0
        %952 = vmatprep.subr.mxu0 0.0
        %953 = vmatpush2.msra.mxu0 0.0
        %954 = vmatprep.subr.mxu0 0.0
        %955 = vmatpush2.msra.mxu0 0.0
        %956 = vmatprep.subr.mxu0 0.0
        %957 = vmatpush2.msra.mxu0 0.0
        %958 = vmatprep.subr.mxu0 %v836
        %959 = vmatpush2.msra.mxu0 %v835
        %960 = vmatprep.subr.mxu0 %v828
        %961 = vmatpush2.msra.mxu0 %v827
        %962 = vmatprep.subr.mxu0 %v820
        %963 = vmatpush2.msra.mxu0 %v819
        %964 = vmatprep.subr.mxu0 %v812
        %965 = vmatpush2.msra.mxu0 %v811
        %966 = vmatprep.subr.mxu0 %v804
        %967 = vmatpush2.msra.mxu0 %v803
        %968 = vmatprep.subr.mxu0 %v796
        %969 = vmatpush2.msra.mxu0 %v795
        %970 = vmatprep.subr.mxu0 %v788
        %971 = vmatpush2.msra.mxu0 %v787
        %972 = vmatprep.subr.mxu0 %v780
        %973 = vmatpush2.msra.mxu0 %v779
        %974 = vmatprep.subr.mxu0 %v772
        %975 = vmatpush2.msra.mxu0 %v771
        %976 = vmatprep.subr.mxu0 %v764
        %977 = vmatpush2.msra.mxu0 %v763
        %978 = vmatprep.subr.mxu0 %v756
        %979 = vmatpush2.msra.mxu0 %v755
        %980 = vmatprep.mubr.f32.mxu0 %v843
        %981 = vmatmul.mubr.f32.gmra.mxu0 %v623
        %v982 = vpop.f32.mrf.mxu0
        %v983 = vadd.f32 0.0, %v982
        %v984 = vpop.f32.mrf.mxu0
        %v985 = vadd.f32 0.0, %v984
        %986 = vdwg.mxu0
        %987 = vmatprep.subr.mxu0 %v750
        %988 = vmatpush1.msra.mxu0 %v749
        %989 = vmatprep.subr.mxu0 %v742
        %990 = vmatpush1.msra.mxu0 %v741
        %991 = vmatprep.subr.mxu0 %v734
        %992 = vmatpush1.msra.mxu0 %v733
        %993 = vmatprep.subr.mxu0 %v726
        %994 = vmatpush1.msra.mxu0 %v725
        %995 = vmatprep.subr.mxu0 %v718
        %996 = vmatpush1.msra.mxu0 %v717
        %997 = vmatprep.subr.mxu0 %v710
        %998 = vmatpush1.msra.mxu0 %v709
        %999 = vmatprep.subr.mxu0 %v702
        %1000 = vmatpush1.msra.mxu0 %v701
        %1001 = vmatprep.subr.mxu0 %v694
        %1002 = vmatpush1.msra.mxu0 %v693
        %1003 = vmatprep.subr.mxu0 %v686
        %1004 = vmatpush1.msra.mxu0 %v685
        %1005 = vmatprep.subr.mxu0 %v678
        %1006 = vmatpush1.msra.mxu0 %v677
        %1007 = vmatprep.subr.mxu0 %v670
        %1008 = vmatpush1.msra.mxu0 %v669
        %1009 = vmatprep.subr.mxu0 %v662
        %1010 = vmatpush1.msra.mxu0 %v661
        %1011 = vmatprep.subr.mxu0 %v654
        %1012 = vmatpush1.msra.mxu0 %v653
        %1013 = vmatprep.subr.mxu0 %v646
        %1014 = vmatpush1.msra.mxu0 %v645
        %1015 = vmatprep.subr.mxu0 %v638
        %1016 = vmatpush1.msra.mxu0 %v637
        %1017 = vmatprep.subr.mxu0 %v630
        %1018 = vmatpush1.msra.mxu0 %v629
        %1019 = vmatprep.subr.mxu0 0.0
        %1020 = vmatpush2.msra.mxu0 0.0
        %1021 = vmatprep.subr.mxu0 0.0
        %1022 = vmatpush2.msra.mxu0 0.0
        %1023 = vmatprep.subr.mxu0 0.0
        %1024 = vmatpush2.msra.mxu0 0.0
        %1025 = vmatprep.subr.mxu0 0.0
        %1026 = vmatpush2.msra.mxu0 0.0
        %1027 = vmatprep.subr.mxu0 0.0
        %1028 = vmatpush2.msra.mxu0 0.0
        %1029 = vmatprep.subr.mxu0 %v838
        %1030 = vmatpush2.msra.mxu0 %v837
        %1031 = vmatprep.subr.mxu0 %v830
        %1032 = vmatpush2.msra.mxu0 %v829
        %1033 = vmatprep.subr.mxu0 %v822
        %1034 = vmatpush2.msra.mxu0 %v821
        %1035 = vmatprep.subr.mxu0 %v814
        %1036 = vmatpush2.msra.mxu0 %v813
        %1037 = vmatprep.subr.mxu0 %v806
        %1038 = vmatpush2.msra.mxu0 %v805
        %1039 = vmatprep.subr.mxu0 %v798
        %1040 = vmatpush2.msra.mxu0 %v797
        %1041 = vmatprep.subr.mxu0 %v790
        %1042 = vmatpush2.msra.mxu0 %v789
        %1043 = vmatprep.subr.mxu0 %v782
        %1044 = vmatpush2.msra.mxu0 %v781
        %1045 = vmatprep.subr.mxu0 %v774
        %1046 = vmatpush2.msra.mxu0 %v773
        %1047 = vmatprep.subr.mxu0 %v766
        %1048 = vmatpush2.msra.mxu0 %v765
        %1049 = vmatprep.subr.mxu0 %v758
        %1050 = vmatpush2.msra.mxu0 %v757
        %1051 = vmatprep.mubr.f32.mxu0 %v843
        %1052 = vmatmul.mubr.f32.gmra.mxu0 %v623
        %v1053 = vpop.f32.mrf.mxu0
        %v1054 = vadd.f32 0.0, %v1053
        %v1055 = vpop.f32.mrf.mxu0
        %v1056 = vadd.f32 0.0, %v1055
        %1057 = vdwg.mxu0
        %1058 = vmatprep.subr.mxu0 %v752
        %1059 = vmatpush1.msra.mxu0 %v751
        %1060 = vmatprep.subr.mxu0 %v744
        %1061 = vmatpush1.msra.mxu0 %v743
        %1062 = vmatprep.subr.mxu0 %v736
        %1063 = vmatpush1.msra.mxu0 %v735
        %1064 = vmatprep.subr.mxu0 %v728
        %1065 = vmatpush1.msra.mxu0 %v727
        %1066 = vmatprep.subr.mxu0 %v720
        %1067 = vmatpush1.msra.mxu0 %v719
        %1068 = vmatprep.subr.mxu0 %v712
        %1069 = vmatpush1.msra.mxu0 %v711
        %1070 = vmatprep.subr.mxu0 %v704
        %1071 = vmatpush1.msra.mxu0 %v703
        %1072 = vmatprep.subr.mxu0 %v696
        %1073 = vmatpush1.msra.mxu0 %v695
        %1074 = vmatprep.subr.mxu0 %v688
        %1075 = vmatpush1.msra.mxu0 %v687
        %1076 = vmatprep.subr.mxu0 %v680
        %1077 = vmatpush1.msra.mxu0 %v679
        %1078 = vmatprep.subr.mxu0 %v672
        %1079 = vmatpush1.msra.mxu0 %v671
        %1080 = vmatprep.subr.mxu0 %v664
        %1081 = vmatpush1.msra.mxu0 %v663
        %1082 = vmatprep.subr.mxu0 %v656
        %1083 = vmatpush1.msra.mxu0 %v655
        %1084 = vmatprep.subr.mxu0 %v648
        %1085 = vmatpush1.msra.mxu0 %v647
        %1086 = vmatprep.subr.mxu0 %v640
        %1087 = vmatpush1.msra.mxu0 %v639
        %1088 = vmatprep.subr.mxu0 %v632
        %1089 = vmatpush1.msra.mxu0 %v631
        %1090 = vmatprep.subr.mxu0 0.0
        %1091 = vmatpush2.msra.mxu0 0.0
        %1092 = vmatprep.subr.mxu0 0.0
        %1093 = vmatpush2.msra.mxu0 0.0
        %1094 = vmatprep.subr.mxu0 0.0
        %1095 = vmatpush2.msra.mxu0 0.0
        %1096 = vmatprep.subr.mxu0 0.0
        %1097 = vmatpush2.msra.mxu0 0.0
        %1098 = vmatprep.subr.mxu0 0.0
        %1099 = vmatpush2.msra.mxu0 0.0
        %1100 = vmatprep.subr.mxu0 %v840
        %1101 = vmatpush2.msra.mxu0 %v839
        %1102 = vmatprep.subr.mxu0 %v832
        %1103 = vmatpush2.msra.mxu0 %v831
        %1104 = vmatprep.subr.mxu0 %v824
        %1105 = vmatpush2.msra.mxu0 %v823
        %1106 = vmatprep.subr.mxu0 %v816
        %1107 = vmatpush2.msra.mxu0 %v815
        %1108 = vmatprep.subr.mxu0 %v808
        %1109 = vmatpush2.msra.mxu0 %v807
        %1110 = vmatprep.subr.mxu0 %v800
        %1111 = vmatpush2.msra.mxu0 %v799
        %1112 = vmatprep.subr.mxu0 %v792
        %1113 = vmatpush2.msra.mxu0 %v791
        %1114 = vmatprep.subr.mxu0 %v784
        %1115 = vmatpush2.msra.mxu0 %v783
        %1116 = vmatprep.subr.mxu0 %v776
        %1117 = vmatpush2.msra.mxu0 %v775
        %1118 = vmatprep.subr.mxu0 %v768
        %1119 = vmatpush2.msra.mxu0 %v767
        %1120 = vmatprep.subr.mxu0 %v760
        %1121 = vmatpush2.msra.mxu0 %v759
        %1122 = vmatprep.mubr.f32.mxu0 %v843
        %1123 = vmatmul.mubr.f32.gmra.mxu0 %v623
        %v1124 = vpop.f32.mrf.mxu0
        %v1125 = vadd.f32 0.0, %v1124
        %v1126 = vpop.f32.mrf.mxu0
        %v1127 = vadd.f32 0.0, %v1126
        %1128 = vdwg.mxu0
        %v1129 = vld [vmem:[%s2] sm:$0xff]
        %1131 = vset.pattern.permute.xlu0 0
        %1132 = vperm.xlu0 %1131, %v1129
        %v1133 = vpop.permute.xlu0 %1132
        %v1135 = vmul.f32 %v912, %v1133
        %v1136 = vmul.f32 %v914, %v1133
        %v1137 = vmul.f32 %v983, %v1133
        %v1138 = vmul.f32 %v985, %v1133
        %v1139 = vmul.f32 %v1054, %v1133
        %v1140 = vmul.f32 %v1056, %v1133
        %v1141 = vmul.f32 %v1125, %v1133
        %v1142 = vmul.f32 %v1127, %v1133
        %1143 = vset.pattern.permute.xlu0 1
        %1144 = vperm.xlu0 %1143, %v1129
        %v1145 = vpop.permute.xlu0 %1144
        %v1147 = vadd.f32 %v1135, %v1145
        %v1148 = vadd.f32 %v1136, %v1145
        %v1149 = vadd.f32 %v1137, %v1145
        %v1150 = vadd.f32 %v1138, %v1145
        %v1151 = vadd.f32 %v1139, %v1145
        %v1152 = vadd.f32 %v1140, %v1145
        %v1153 = vadd.f32 %v1141, %v1145
        %v1154 = vadd.f32 %v1142, %v1145
        %vm1155 = vcmp.gt.f32.partialorder %v1147, 0.0
        %vm1156 = vcmp.gt.f32.partialorder %v1148, 0.0
        %vm1157 = vcmp.gt.f32.partialorder %v1149, 0.0
        %vm1158 = vcmp.gt.f32.partialorder %v1150, 0.0
        %vm1159 = vcmp.gt.f32.partialorder %v1151, 0.0
        %vm1160 = vcmp.gt.f32.partialorder %v1152, 0.0
        %vm1161 = vcmp.gt.f32.partialorder %v1153, 0.0
        %vm1162 = vcmp.gt.f32.partialorder %v1154, 0.0
        %v1163 = vmul.f32 %v1147, 0.2
        %v1164 = vmul.f32 %v1148, 0.2
        %v1165 = vmul.f32 %v1149, 0.2
        %v1166 = vmul.f32 %v1150, 0.2
        %v1167 = vmul.f32 %v1151, 0.2
        %v1168 = vmul.f32 %v1152, 0.2
        %v1169 = vmul.f32 %v1153, 0.2
        %v1170 = vmul.f32 %v1154, 0.2
        %v1171 = vsel %vm1155, %v1147, %v1163
        %v1172 = vsel %vm1156, %v1148, %v1164
        %v1173 = vsel %vm1157, %v1149, %v1165
        %v1174 = vsel %vm1158, %v1150, %v1166
        %v1175 = vsel %vm1159, %v1151, %v1167
        %v1176 = vsel %vm1160, %v1152, %v1168
        %v1177 = vsel %vm1161, %v1153, %v1169
        %v1178 = vsel %vm1162, %v1154, %v1170
        %1179 = vst [vmem:[%s621] sm:$0xff] %v1171
        %1180 = vst [vmem:[%s621 + $0x8] sm:$0xff] %v1172
        %1181 = vst [vmem:[%s621 + $0x10] sm:$0xff] %v1173
        %1182 = vst [vmem:[%s621 + $0x18] sm:$0xff] %v1174
        %1183 = vst [vmem:[%s621 + $0x20] sm:$0xff] %v1175
        %1184 = vst [vmem:[%s621 + $0x28] sm:$0xff] %v1176
        %1185 = vst [vmem:[%s621 + $0x30] sm:$0xff] %v1177
        %1186 = vst [vmem:[%s621 + $0x38] sm:$0xff] %v1178
        %s1187 = smul.u32 8, %s14
        %p1188 = scmp.lt.s32.totalorder %s1187, 63
        %s1189 = scalar_select %p1188, %s1187, 63
        %s1190 = smul.addr %s1189, 8
        %s1191 = scalar_lea.vmem %s3, %s1190
        // Predicated region
        $region56: #{encoder_forward.36} parent=50 // pred_check
          %p1192 = pneg %p100
        $region57: #{encoder_forward.36} parent=50 // pred_check_branch
          %1194 = sbr.rel (%p1192) target = $region59
        $region58: #{encoder_forward.36} parent=50 // pred_region
          %s1195 = smul.u32 8, %s14
        $region59: #{encoder_forward.36} parent=50 // pred_fallthru
          _
      $region51: #{encoder_forward.36} parent=5 // pred_fallthru
        _
      %p1196 = scmp.le.s32.totalorder 2, %s9
      // Predicated region
      $region60: #{encoder_forward.36} parent=5 // pred_check
        %p1197 = pneg %p1196
      $region61: #{encoder_forward.36} parent=5 // pred_check_branch
        %1199 = sbr.rel (%p1197) target = $region63
      $region62: #{encoder_forward.36} parent=5 // pred_region
        %s1200 = ssub.s32 %s9, 2
        // Predicated region
        $region64: #{encoder_forward.36} parent=62 // pred_check
          %p1201 = pneg %p106
        $region65: #{encoder_forward.36} parent=62 // pred_check_branch
          %1203 = sbr.rel (%p1201) target = $region67
        $region66: #{encoder_forward.36} parent=62 // pred_region
          %s1204 = smul.u32 8, %s15
          %p1205 = scmp.lt.s32.totalorder %s1204, 63
          %s1206 = scalar_select %p1205, %s1204, 63
          %s1207 = smul.addr %s1206, 8
          %s1208 = scalar_lea.vmem %s3, %s1207
        $region67: #{encoder_forward.36} parent=62 // pred_fallthru
          _
      $region63: #{encoder_forward.36} parent=5 // pred_fallthru
        _
    $region6: #{encoder_forward.36} parent=1 // loop_footer
      %s13 = sadd.s32 1, %s9
    $region7: #{encoder_forward.36} parent=1 // loop_footer_branch
      %8 = sbr.rel target = $region3
    $region8: #{encoder_forward.36} parent=1 // loop_exit
      _

// kernel: encoder_forward.37
$region0: #{encoder_forward.37}
  #allocation0 [shape = 'u32[]', space=smem, size = 0x4, offset = 0x4, fixed_abs, tag = 'smem constant byte address 0x4 - core index']
  #allocation1 [shape = 'u32[144,128]{1,0:T(1,128)}', space=vmem, size = 0x12000, scoped, tag = 'internal scratch']
  %s0 = inlined_call_operand.vmem [shape: f32[8,112], index: 0, kind: input, shape index: {}]
  %s1 = inlined_call_operand.vmem [shape: f32[112,8192], index: 1, kind: input, shape index: {}]
  %s2 = inlined_call_operand.vmem [shape: f32[8,2], index: 2, kind: input, shape index: {}]
  %s3 = inlined_call_operand.vmem [shape: f32[8,8192], index: 3, kind: output, shape index: {}]
  %s4 = sld [smem:[#allocation0]]
  $region68: #{encoder_forward.37} parent=0
    _
  %s6 = ssub.s32 1, %s4
  %s7 = scalar_select 0, %s6, %s4
  $region1: #{encoder_forward.37} parent=0
    #allocation2 [shape = 'u8[917504]{0}', space=vmem, size = 0xe0000, scoped, tag = 'input window, operand 1']
    loop: start=0, step=1, limit=10
    $region2: #{encoder_forward.37} parent=1 // loop_pre_header
      _
    $region3: #{encoder_forward.37} parent=1 // loop_header
      %s9 = sphi 0, %s13
      %p10 = scmp.ge.s32.totalorder %s9, 10
      %s17 = sphi 0, %s17
      %s19 = sphi 0, %s17
      %s20 = sphi 0, %s19
      %s34 = sphi 0, %s20
      %s40 = sphi 0, %s42
      %s43 = sphi 0, %s40
      %s44 = sphi 0, %s43
      %s60 = sphi 0, %s44
      %s64 = sphi 0, %s64
      %s66 = sphi 0, %s64
      %s67 = sphi 0, %s66
      %s81 = sphi 0, %s67
      %s87 = sphi 0, %s89
      %s90 = sphi 0, %s87
      %s91 = sphi 0, %s90
      %s107 = sphi 0, %s91
    $region4: #{encoder_forward.37} parent=1 // loop_header_branch
      %12 = sbr.rel (%p10) target = $region8
    $region5: #{encoder_forward.37} parent=1 // loop_body
      %s14 = ssub.s32 %s9, 1
      %s15 = ssub.s32 %s9, 2
      %s16 = sadd.s32 %s9, 1
      %s18 = sadd.s32 %s17, 1
      %p21 = scmp.eq.s32.totalorder %s9, 7
      %p22 = scmp.ne.s32.totalorder %s17, %s19
      %p23 = scmp.eq.s32.totalorder %s9, 0
      %p24 = por %p22, %p23
      %p25 = scmp.ne.s32.totalorder %s17, %s19
      %p26 = scmp.eq.s32.totalorder %s14, 7
      %p27 = por %p25, %p26
      %p28 = scmp.ne.s32.totalorder %s19, %s20
      %p29 = scmp.eq.s32.totalorder %s14, 0
      %p30 = por %p28, %p29
      %p31 = scmp.ne.s32.totalorder %s19, %s20
      %p32 = scmp.eq.s32.totalorder %s15, 7
      %p33 = por %p31, %p32
      %p35 = scmp.ne.s32.totalorder %s20, %s34
      %p36 = scmp.eq.s32.totalorder %s15, 0
      %p37 = por %p35, %p36
      %s38 = ssub.s32 %s9, %s16
      %p39 = scmp.eq.s32.totalorder %s38, 0
      %s41 = sadd.s32 %s40, 1
      %s42 = scalar_select %p39, %s40, %s41
      %p45 = pneg %p39
      %p46 = scmp.eq.s32.totalorder %s9, 7
      %p47 = por %p45, %p46
      %p48 = scmp.ne.s32.totalorder %s40, %s43
      %p49 = scmp.eq.s32.totalorder %s9, 0
      %p50 = por %p48, %p49
      %p51 = scmp.ne.s32.totalorder %s40, %s43
      %p52 = scmp.eq.s32.totalorder %s14, 7
      %p53 = por %p51, %p52
      %p54 = scmp.ne.s32.totalorder %s43, %s44
      %p55 = scmp.eq.s32.totalorder %s14, 0
      %p56 = por %p54, %p55
      %p57 = scmp.ne.s32.totalorder %s43, %s44
      %p58 = scmp.eq.s32.totalorder %s15, 7
      %p59 = por %p57, %p58
      %p61 = scmp.ne.s32.totalorder %s44, %s60
      %p62 = scmp.eq.s32.totalorder %s15, 0
      %p63 = por %p61, %p62
      %s65 = sadd.s32 %s64, 1
      %p68 = scmp.eq.s32.totalorder %s9, 7
      %p69 = scmp.ne.s32.totalorder %s64, %s66
      %p70 = scmp.eq.s32.totalorder %s9, 0
      %p71 = por %p69, %p70
      %p72 = scmp.ne.s32.totalorder %s64, %s66
      %p73 = scmp.eq.s32.totalorder %s14, 7
      %p74 = por %p72, %p73
      %p75 = scmp.ne.s32.totalorder %s66, %s67
      %p76 = scmp.eq.s32.totalorder %s14, 0
      %p77 = por %p75, %p76
      %p78 = scmp.ne.s32.totalorder %s66, %s67
      %p79 = scmp.eq.s32.totalorder %s15, 7
      %p80 = por %p78, %p79
      %p82 = scmp.ne.s32.totalorder %s67, %s81
      %p83 = scmp.eq.s32.totalorder %s15, 0
      %p84 = por %p82, %p83
      %s85 = ssub.s32 %s9, %s16
      %p86 = scmp.eq.s32.totalorder %s85, 0
      %s88 = sadd.s32 %s87, 1
      %s89 = scalar_select %p86, %s87, %s88
      %p92 = pneg %p86
      %p93 = scmp.eq.s32.totalorder %s9, 7
      %p94 = por %p92, %p93
      %p95 = scmp.ne.s32.totalorder %s87, %s90
      %p96 = scmp.eq.s32.totalorder %s9, 0
      %p97 = por %p95, %p96
      %p98 = scmp.ne.s32.totalorder %s87, %s90
      %p99 = scmp.eq.s32.totalorder %s14, 7
      %p100 = por %p98, %p99
      %p101 = scmp.ne.s32.totalorder %s90, %s91
      %p102 = scmp.eq.s32.totalorder %s14, 0
      %p103 = por %p101, %p102
      %p104 = scmp.ne.s32.totalorder %s90, %s91
      %p105 = scmp.eq.s32.totalorder %s15, 7
      %p106 = por %p104, %p105
      %p108 = scmp.ne.s32.totalorder %s91, %s107
      %p109 = scmp.eq.s32.totalorder %s15, 0
      %p110 = por %p108, %p109
      %p111 = scmp.le.s32.totalorder 1, %s9
      %p112 = scmp.lt.s32.totalorder %s9, 9
      %p113 = pnand %p111, %p112
      %p114 = pneg %p113
      // Predicated region
      $region9: #{encoder_forward.37} parent=5 // pred_check
        _
      $region10: #{encoder_forward.37} parent=5 // pred_check_branch
        %116 = sbr.rel (%p113) target = $region12
      $region11: #{encoder_forward.37} parent=5 // pred_region
        %s117 = ssub.s32 %s9, 1
        // Predicated region
        $region13: #{encoder_forward.37} parent=11 // pred_check
          %p118 = pneg %p30
        $region14: #{encoder_forward.37} parent=11 // pred_check_branch
          %120 = sbr.rel (%p118) target = $region16
        $region15: #{encoder_forward.37} parent=11 // pred_region
          _
        $region16: #{encoder_forward.37} parent=11 // pred_fallthru
          _
        // Predicated region
        $region17: #{encoder_forward.37} parent=11 // pred_check
          %p121 = pneg %p77
        $region18: #{encoder_forward.37} parent=11 // pred_check_branch
          %123 = sbr.rel (%p121) target = $region20
        $region19: #{encoder_forward.37} parent=11 // pred_region
          _
        $region20: #{encoder_forward.37} parent=11 // pred_fallthru
          _
      $region12: #{encoder_forward.37} parent=5 // pred_fallthru
        _
      %p124 = scmp.lt.s32.totalorder %s9, 8
      // Predicated region
      $region21: #{encoder_forward.37} parent=5 // pred_check
        %p125 = pneg %p124
      $region22: #{encoder_forward.37} parent=5 // pred_check_branch
        %127 = sbr.rel (%p125) target = $region24
      $region23: #{encoder_forward.37} parent=5 // pred_region
        // Predicated region
        $region25: #{encoder_forward.37} parent=23 // pred_check
          %p128 = pneg %p50
        $region26: #{encoder_forward.37} parent=23 // pred_check_branch
          %130 = sbr.rel (%p128) target = $region28
        $region27: #{encoder_forward.37} parent=23 // pred_region
          %s131 = sand.u32 %s40, 1
          %s132 = sand.u32 %s40, 1
          %s133 = smul.addr %s132, 896
          %s134 = scalar_lea.vmem [#allocation2], %s133
          %s135 = smul.u32 8, %s9
          %s136 = smul.addr %s135, 8
          %s137 = scalar_lea.vmem %s1, %s136
          // Predicated region
          $region29: #{encoder_forward.37} parent=27 // pred_check
            _
          $region30: #{encoder_forward.37} parent=27 // pred_check_branch
            %139 = sbr.rel (0) target = $region32
          $region31: #{encoder_forward.37} parent=27 // pred_region
            // Predicated region
            $region33: #{encoder_forward.37} parent=31 // pred_check
              _
            $region34: #{encoder_forward.37} parent=31 // pred_check_branch
              %141 = sbr.rel (0) target = $region36
            $region35: #{encoder_forward.37} parent=31 // pred_region
              loop: start=0, step=1, limit=1
              $region37: #{encoder_forward.37} parent=35 // loop_pre_header
                _
              $region38: #{encoder_forward.37} parent=35 // loop_header
                %s143 = sphi 0, %s147
                %p144 = scmp.ge.s32.totalorder %s143, 1
                %s148 = sphi %s137, %s137
                %s149 = sphi %s134, %s134
              $region39: #{encoder_forward.37} parent=35 // loop_header_branch
                %146 = sbr.rel (%p144) target = $region43
              $region40: #{encoder_forward.37} parent=35 // loop_body
                %v150 = vld [vmem:[%s148] sm:$0xff]
                %151 = vst [vmem:[%s149] sm:$0xff] %v150
                %v152 = vld [vmem:[%s148 + $0x8] sm:$0xff]
                %153 = vst [vmem:[%s149 + $0x8] sm:$0xff] %v152
                %v154 = vld [vmem:[%s148 + $0x10] sm:$0xff]
                %155 = vst [vmem:[%s149 + $0x10] sm:$0xff] %v154
                %v156 = vld [vmem:[%s148 + $0x18] sm:$0xff]
                %157 = vst [vmem:[%s149 + $0x18] sm:$0xff] %v156
                %v158 = vld [vmem:[%s148 + $0x20] sm:$0xff]
                %159 = vst [vmem:[%s149 + $0x20] sm:$0xff] %v158
                %v160 = vld [vmem:[%s148 + $0x28] sm:$0xff]
                %161 = vst [vmem:[%s149 + $0x28] sm:$0xff] %v160
                %v162 = vld [vmem:[%s148 + $0x30] sm:$0xff]
                %163 = vst [vmem:[%s149 + $0x30] sm:$0xff] %v162
                %v164 = vld [vmem:[%s148 + $0x38] sm:$0xff]
                %165 = vst [vmem:[%s149 + $0x38] sm:$0xff] %v164
                %v166 = vld [vmem:[%s148 + $0x200] sm:$0xff]
                %167 = vst [vmem:[%s149 + $0x40] sm:$0xff] %v166
                %v168 = vld [vmem:[%s148 + $0x208] sm:$0xff]
                %169 = vst [vmem:[%s149 + $0x48] sm:$0xff] %v168
                %v170 = vld [vmem:[%s148 + $0x210] sm:$0xff]
                %171 = vst [vmem:[%s149 + $0x50] sm:$0xff] %v170
                %v172 = vld [vmem:[%s148 + $0x218] sm:$0xff]
                %173 = vst [vmem:[%s149 + $0x58] sm:$0xff] %v172
                %v174 = vld [vmem:[%s148 + $0x220] sm:$0xff]
                %175 = vst [vmem:[%s149 + $0x60] sm:$0xff] %v174
                %v176 = vld [vmem:[%s148 + $0x228] sm:$0xff]
                %177 = vst [vmem:[%s149 + $0x68] sm:$0xff] %v176
                %v178 = vld [vmem:[%s148 + $0x230] sm:$0xff]
                %179 = vst [vmem:[%s149 + $0x70] sm:$0xff] %v178
                %v180 = vld [vmem:[%s148 + $0x238] sm:$0xff]
                %181 = vst [vmem:[%s149 + $0x78] sm:$0xff] %v180
                %v182 = vld [vmem:[%s148 + $0x400] sm:$0xff]
                %183 = vst [vmem:[%s149 + $0x80] sm:$0xff] %v182
                %v184 = vld [vmem:[%s148 + $0x408] sm:$0xff]
                %185 = vst [vmem:[%s149 + $0x88] sm:$0xff] %v184
                %v186 = vld [vmem:[%s148 + $0x410] sm:$0xff]
                %187 = vst [vmem:[%s149 + $0x90] sm:$0xff] %v186
                %v188 = vld [vmem:[%s148 + $0x418] sm:$0xff]
                %189 = vst [vmem:[%s149 + $0x98] sm:$0xff] %v188
                %v190 = vld [vmem:[%s148 + $0x420] sm:$0xff]
                %191 = vst [vmem:[%s149 + $0xa0] sm:$0xff] %v190
                %v192 = vld [vmem:[%s148 + $0x428] sm:$0xff]
                %193 = vst [vmem:[%s149 + $0xa8] sm:$0xff] %v192
                %v194 = vld [vmem:[%s148 + $0x430] sm:$0xff]
                %195 = vst [vmem:[%s149 + $0xb0] sm:$0xff] %v194
                %v196 = vld [vmem:[%s148 + $0x438] sm:$0xff]
                %197 = vst [vmem:[%s149 + $0xb8] sm:$0xff] %v196
                %v198 = vld [vmem:[%s148 + $0x600] sm:$0xff]
                %199 = vst [vmem:[%s149 + $0xc0] sm:$0xff] %v198
                %v200 = vld [vmem:[%s148 + $0x608] sm:$0xff]
                %201 = vst [vmem:[%s149 + $0xc8] sm:$0xff] %v200
                %v202 = vld [vmem:[%s148 + $0x610] sm:$0xff]
                %203 = vst [vmem:[%s149 + $0xd0] sm:$0xff] %v202
                %v204 = vld [vmem:[%s148 + $0x618] sm:$0xff]
                %205 = vst [vmem:[%s149 + $0xd8] sm:$0xff] %v204
                %v206 = vld [vmem:[%s148 + $0x620] sm:$0xff]
                %207 = vst [vmem:[%s149 + $0xe0] sm:$0xff] %v206
                %v208 = vld [vmem:[%s148 + $0x628] sm:$0xff]
                %209 = vst [vmem:[%s149 + $0xe8] sm:$0xff] %v208
                %v210 = vld [vmem:[%s148 + $0x630] sm:$0xff]
                %211 = vst [vmem:[%s149 + $0xf0] sm:$0xff] %v210
                %v212 = vld [vmem:[%s148 + $0x638] sm:$0xff]
                %213 = vst [vmem:[%s149 + $0xf8] sm:$0xff] %v212
                %v214 = vld [vmem:[%s148 + $0x800] sm:$0xff]
                %215 = vst [vmem:[%s149 + $0x100] sm:$0xff] %v214
                %v216 = vld [vmem:[%s148 + $0x808] sm:$0xff]
                %217 = vst [vmem:[%s149 + $0x108] sm:$0xff] %v216
                %v218 = vld [vmem:[%s148 + $0x810] sm:$0xff]
                %219 = vst [vmem:[%s149 + $0x110] sm:$0xff] %v218
                %v220 = vld [vmem:[%s148 + $0x818] sm:$0xff]
                %221 = vst [vmem:[%s149 + $0x118] sm:$0xff] %v220
                %v222 = vld [vmem:[%s148 + $0x820] sm:$0xff]
                %223 = vst [vmem:[%s149 + $0x120] sm:$0xff] %v222
                %v224 = vld [vmem:[%s148 + $0x828] sm:$0xff]
                %225 = vst [vmem:[%s149 + $0x128] sm:$0xff] %v224
                %v226 = vld [vmem:[%s148 + $0x830] sm:$0xff]
                %227 = vst [vmem:[%s149 + $0x130] sm:$0xff] %v226
                %v228 = vld [vmem:[%s148 + $0x838] sm:$0xff]
                %229 = vst [vmem:[%s149 + $0x138] sm:$0xff] %v228
                %v230 = vld [vmem:[%s148 + $0xa00] sm:$0xff]
                %231 = vst [vmem:[%s149 + $0x140] sm:$0xff] %v230
                %v232 = vld [vmem:[%s148 + $0xa08] sm:$0xff]
                %233 = vst [vmem:[%s149 + $0x148] sm:$0xff] %v232
                %v234 = vld [vmem:[%s148 + $0xa10] sm:$0xff]
                %235 = vst [vmem:[%s149 + $0x150] sm:$0xff] %v234
                %v236 = vld [vmem:[%s148 + $0xa18] sm:$0xff]
                %237 = vst [vmem:[%s149 + $0x158] sm:$0xff] %v236
                %v238 = vld [vmem:[%s148 + $0xa20] sm:$0xff]
                %239 = vst [vmem:[%s149 + $0x160] sm:$0xff] %v238
                %v240 = vld [vmem:[%s148 + $0xa28] sm:$0xff]
                %241 = vst [vmem:[%s149 + $0x168] sm:$0xff] %v240
                %v242 = vld [vmem:[%s148 + $0xa30] sm:$0xff]
                %243 = vst [vmem:[%s149 + $0x170] sm:$0xff] %v242
                %v244 = vld [vmem:[%s148 + $0xa38] sm:$0xff]
                %245 = vst [vmem:[%s149 + $0x178] sm:$0xff] %v244
                %v246 = vld [vmem:[%s148 + $0xc00] sm:$0xff]
                %247 = vst [vmem:[%s149 + $0x180] sm:$0xff] %v246
                %v248 = vld [vmem:[%s148 + $0xc08] sm:$0xff]
                %249 = vst [vmem:[%s149 + $0x188] sm:$0xff] %v248
                %v250 = vld [vmem:[%s148 + $0xc10] sm:$0xff]
                %251 = vst [vmem:[%s149 + $0x190] sm:$0xff] %v250
                %v252 = vld [vmem:[%s148 + $0xc18] sm:$0xff]
                %253 = vst [vmem:[%s149 + $0x198] sm:$0xff] %v252
                %v254 = vld [vmem:[%s148 + $0xc20] sm:$0xff]
                %255 = vst [vmem:[%s149 + $0x1a0] sm:$0xff] %v254
                %v256 = vld [vmem:[%s148 + $0xc28] sm:$0xff]
                %257 = vst [vmem:[%s149 + $0x1a8] sm:$0xff] %v256
                %v258 = vld [vmem:[%s148 + $0xc30] sm:$0xff]
                %259 = vst [vmem:[%s149 + $0x1b0] sm:$0xff] %v258
                %v260 = vld [vmem:[%s148 + $0xc38] sm:$0xff]
                %261 = vst [vmem:[%s149 + $0x1b8] sm:$0xff] %v260
                %v262 = vld [vmem:[%s148 + $0xe00] sm:$0xff]
                %263 = vst [vmem:[%s149 + $0x1c0] sm:$0xff] %v262
                %v264 = vld [vmem:[%s148 + $0xe08] sm:$0xff]
                %265 = vst [vmem:[%s149 + $0x1c8] sm:$0xff] %v264
                %v266 = vld [vmem:[%s148 + $0xe10] sm:$0xff]
                %267 = vst [vmem:[%s149 + $0x1d0] sm:$0xff] %v266
                %v268 = vld [vmem:[%s148 + $0xe18] sm:$0xff]
                %269 = vst [vmem:[%s149 + $0x1d8] sm:$0xff] %v268
                %v270 = vld [vmem:[%s148 + $0xe20] sm:$0xff]
                %271 = vst [vmem:[%s149 + $0x1e0] sm:$0xff] %v270
                %v272 = vld [vmem:[%s148 + $0xe28] sm:$0xff]
                %273 = vst [vmem:[%s149 + $0x1e8] sm:$0xff] %v272
                %v274 = vld [vmem:[%s148 + $0xe30] sm:$0xff]
                %275 = vst [vmem:[%s149 + $0x1f0] sm:$0xff] %v274
                %v276 = vld [vmem:[%s148 + $0xe38] sm:$0xff]
                %277 = vst [vmem:[%s149 + $0x1f8] sm:$0xff] %v276
                %v278 = vld [vmem:[%s148 + $0x1000] sm:$0xff]
                %279 = vst [vmem:[%s149 + $0x200] sm:$0xff] %v278
                %v280 = vld [vmem:[%s148 + $0x1008] sm:$0xff]
                %281 = vst [vmem:[%s149 + $0x208] sm:$0xff] %v280
                %v282 = vld [vmem:[%s148 + $0x1010] sm:$0xff]
                %283 = vst [vmem:[%s149 + $0x210] sm:$0xff] %v282
                %v284 = vld [vmem:[%s148 + $0x1018] sm:$0xff]
                %285 = vst [vmem:[%s149 + $0x218] sm:$0xff] %v284
                %v286 = vld [vmem:[%s148 + $0x1020] sm:$0xff]
                %287 = vst [vmem:[%s149 + $0x220] sm:$0xff] %v286
                %v288 = vld [vmem:[%s148 + $0x1028] sm:$0xff]
                %289 = vst [vmem:[%s149 + $0x228] sm:$0xff] %v288
                %v290 = vld [vmem:[%s148 + $0x1030] sm:$0xff]
                %291 = vst [vmem:[%s149 + $0x230] sm:$0xff] %v290
                %v292 = vld [vmem:[%s148 + $0x1038] sm:$0xff]
                %293 = vst [vmem:[%s149 + $0x238] sm:$0xff] %v292
                %v294 = vld [vmem:[%s148 + $0x1200] sm:$0xff]
                %295 = vst [vmem:[%s149 + $0x240] sm:$0xff] %v294
                %v296 = vld [vmem:[%s148 + $0x1208] sm:$0xff]
                %297 = vst [vmem:[%s149 + $0x248] sm:$0xff] %v296
                %v298 = vld [vmem:[%s148 + $0x1210] sm:$0xff]
                %299 = vst [vmem:[%s149 + $0x250] sm:$0xff] %v298
                %v300 = vld [vmem:[%s148 + $0x1218] sm:$0xff]
                %301 = vst [vmem:[%s149 + $0x258] sm:$0xff] %v300
                %v302 = vld [vmem:[%s148 + $0x1220] sm:$0xff]
                %303 = vst [vmem:[%s149 + $0x260] sm:$0xff] %v302
                %v304 = vld [vmem:[%s148 + $0x1228] sm:$0xff]
                %305 = vst [vmem:[%s149 + $0x268] sm:$0xff] %v304
                %v306 = vld [vmem:[%s148 + $0x1230] sm:$0xff]
                %307 = vst [vmem:[%s149 + $0x270] sm:$0xff] %v306
                %v308 = vld [vmem:[%s148 + $0x1238] sm:$0xff]
                %309 = vst [vmem:[%s149 + $0x278] sm:$0xff] %v308
                %v310 = vld [vmem:[%s148 + $0x1400] sm:$0xff]
                %311 = vst [vmem:[%s149 + $0x280] sm:$0xff] %v310
                %v312 = vld [vmem:[%s148 + $0x1408] sm:$0xff]
                %313 = vst [vmem:[%s149 + $0x288] sm:$0xff] %v312
                %v314 = vld [vmem:[%s148 + $0x1410] sm:$0xff]
                %315 = vst [vmem:[%s149 + $0x290] sm:$0xff] %v314
                %v316 = vld [vmem:[%s148 + $0x1418] sm:$0xff]
                %317 = vst [vmem:[%s149 + $0x298] sm:$0xff] %v316
                %v318 = vld [vmem:[%s148 + $0x1420] sm:$0xff]
                %319 = vst [vmem:[%s149 + $0x2a0] sm:$0xff] %v318
                %v320 = vld [vmem:[%s148 + $0x1428] sm:$0xff]
                %321 = vst [vmem:[%s149 + $0x2a8] sm:$0xff] %v320
                %v322 = vld [vmem:[%s148 + $0x1430] sm:$0xff]
                %323 = vst [vmem:[%s149 + $0x2b0] sm:$0xff] %v322
                %v324 = vld [vmem:[%s148 + $0x1438] sm:$0xff]
                %325 = vst [vmem:[%s149 + $0x2b8] sm:$0xff] %v324
                %v326 = vld [vmem:[%s148 + $0x1600] sm:$0xff]
                %327 = vst [vmem:[%s149 + $0x2c0] sm:$0xff] %v326
                %v328 = vld [vmem:[%s148 + $0x1608] sm:$0xff]
                %329 = vst [vmem:[%s149 + $0x2c8] sm:$0xff] %v328
                %v330 = vld [vmem:[%s148 + $0x1610] sm:$0xff]
                %331 = vst [vmem:[%s149 + $0x2d0] sm:$0xff] %v330
                %v332 = vld [vmem:[%s148 + $0x1618] sm:$0xff]
                %333 = vst [vmem:[%s149 + $0x2d8] sm:$0xff] %v332
                %v334 = vld [vmem:[%s148 + $0x1620] sm:$0xff]
                %335 = vst [vmem:[%s149 + $0x2e0] sm:$0xff] %v334
                %v336 = vld [vmem:[%s148 + $0x1628] sm:$0xff]
                %337 = vst [vmem:[%s149 + $0x2e8] sm:$0xff] %v336
                %v338 = vld [vmem:[%s148 + $0x1630] sm:$0xff]
                %339 = vst [vmem:[%s149 + $0x2f0] sm:$0xff] %v338
                %v340 = vld [vmem:[%s148 + $0x1638] sm:$0xff]
                %341 = vst [vmem:[%s149 + $0x2f8] sm:$0xff] %v340
                %v342 = vld [vmem:[%s148 + $0x1800] sm:$0xff]
                %343 = vst [vmem:[%s149 + $0x300] sm:$0xff] %v342
                %v344 = vld [vmem:[%s148 + $0x1808] sm:$0xff]
                %345 = vst [vmem:[%s149 + $0x308] sm:$0xff] %v344
                %v346 = vld [vmem:[%s148 + $0x1810] sm:$0xff]
                %347 = vst [vmem:[%s149 + $0x310] sm:$0xff] %v346
                %v348 = vld [vmem:[%s148 + $0x1818] sm:$0xff]
                %349 = vst [vmem:[%s149 + $0x318] sm:$0xff] %v348
                %v350 = vld [vmem:[%s148 + $0x1820] sm:$0xff]
                %351 = vst [vmem:[%s149 + $0x320] sm:$0xff] %v350
                %v352 = vld [vmem:[%s148 + $0x1828] sm:$0xff]
                %353 = vst [vmem:[%s149 + $0x328] sm:$0xff] %v352
                %v354 = vld [vmem:[%s148 + $0x1830] sm:$0xff]
                %355 = vst [vmem:[%s149 + $0x330] sm:$0xff] %v354
                %v356 = vld [vmem:[%s148 + $0x1838] sm:$0xff]
                %357 = vst [vmem:[%s149 + $0x338] sm:$0xff] %v356
                %v358 = vld [vmem:[%s148 + $0x1a00] sm:$0xff]
                %359 = vst [vmem:[%s149 + $0x340] sm:$0xff] %v358
                %v360 = vld [vmem:[%s148 + $0x1a08] sm:$0xff]
                %361 = vst [vmem:[%s149 + $0x348] sm:$0xff] %v360
                %v362 = vld [vmem:[%s148 + $0x1a10] sm:$0xff]
                %363 = vst [vmem:[%s149 + $0x350] sm:$0xff] %v362
                %v364 = vld [vmem:[%s148 + $0x1a18] sm:$0xff]
                %365 = vst [vmem:[%s149 + $0x358] sm:$0xff] %v364
                %v366 = vld [vmem:[%s148 + $0x1a20] sm:$0xff]
                %367 = vst [vmem:[%s149 + $0x360] sm:$0xff] %v366
                %v368 = vld [vmem:[%s148 + $0x1a28] sm:$0xff]
                %369 = vst [vmem:[%s149 + $0x368] sm:$0xff] %v368
                %v370 = vld [vmem:[%s148 + $0x1a30] sm:$0xff]
                %371 = vst [vmem:[%s149 + $0x370] sm:$0xff] %v370
                %v372 = vld [vmem:[%s148 + $0x1a38] sm:$0xff]
                %373 = vst [vmem:[%s149 + $0x378] sm:$0xff] %v372
              $region41: #{encoder_forward.37} parent=35 // loop_footer
                %s147 = sadd.s32 1, %s143
              $region42: #{encoder_forward.37} parent=35 // loop_footer_branch
                %142 = sbr.rel target = $region38
              $region43: #{encoder_forward.37} parent=35 // loop_exit
                _
            $region36: #{encoder_forward.37} parent=31 // pred_fallthru
              _
            // Predicated region
            $region44: #{encoder_forward.37} parent=31 // pred_check
              _
            $region45: #{encoder_forward.37} parent=31 // pred_check_branch
              %375 = sbr.rel target = $region47
            $region46: #{encoder_forward.37} parent=31 // pred_region
              _
            $region47: #{encoder_forward.37} parent=31 // pred_fallthru
              _
          $region32: #{encoder_forward.37} parent=27 // pred_fallthru
            _
          %376 = vnop
        $region28: #{encoder_forward.37} parent=23 // pred_fallthru
          _
      $region24: #{encoder_forward.37} parent=5 // pred_fallthru
        _
      %p377 = scmp.le.s32.totalorder 1, %s9
      %p378 = scmp.lt.s32.totalorder %s9, 9
      %p379 = pnand %p377, %p378
      %p380 = pneg %p379
      // Predicated region
      $region48: #{encoder_forward.37} parent=5 // pred_check
        _
      $region49: #{encoder_forward.37} parent=5 // pred_check_branch
        %382 = sbr.rel (%p379) target = $region51
      $region50: #{encoder_forward.37} parent=5 // pred_region
        %s383 = ssub.s32 %s9, 1
        %s384 = sand.u32 %s43, 1
        %s385 = sand.u32 %s43, 1
        %s386 = smul.addr %s385, 896
        %s387 = scalar_lea.vmem [#allocation2], %s386
        // Predicated region
        $region52: #{encoder_forward.37} parent=50 // pred_check
          %p388 = pneg %p56
        $region53: #{encoder_forward.37} parent=50 // pred_check_branch
          %390 = sbr.rel (%p388) target = $region55
        $region54: #{encoder_forward.37} parent=50 // pred_region
          _
        $region55: #{encoder_forward.37} parent=50 // pred_fallthru
          _
        %p391 = pneg %p30
        %p392 = pneg %p27
        %s393 = sand.u32 %s43, 1
        %s394 = sand.u32 %s43, 1
        %s395 = smul.addr %s394, 896
        %s396 = scalar_lea.vmem [#allocation2], %s395
        %p397 = pneg %p56
        %p398 = pneg %p53
        %p399 = pneg %p77
        %p400 = pneg %p74
        %p401 = pneg %p103
        %p402 = pneg %p100
        %s403 = smul.u32 8, %s14
        %p404 = scmp.lt.s32.totalorder %s403, 63
        %s405 = scalar_select %p404, %s403, 63
        %s406 = smul.addr %s405, 8
        %s407 = scalar_lea.vmem %s3, %s406
        %s408 = smul.u32 8, %s14
        %s409 = smul.u32 8, %s14
        %p410 = scmp.lt.s32.totalorder %s409, 63
        %s411 = scalar_select %p410, %s409, 63
        %s412 = smul.addr %s411, 8
        %s413 = scalar_lea.vmem %s3, %s412
        %s414 = smul.u32 8, %s14
        %v415 = vld [vmem:[%s0] sm:$0xff]
        %v416 = vld [vmem:[%s387] sm:$0xff]
        %v417 = vld [vmem:[%s387 + $0x8] sm:$0xff]
        %v418 = vld [vmem:[%s387 + $0x10] sm:$0xff]
        %v419 = vld [vmem:[%s387 + $0x18] sm:$0xff]
        %v420 = vld [vmem:[%s387 + $0x20] sm:$0xff]
        %v421 = vld [vmem:[%s387 + $0x28] sm:$0xff]
        %v422 = vld [vmem:[%s387 + $0x30] sm:$0xff]
        %v423 = vld [vmem:[%s387 + $0x38] sm:$0xff]
        %v424 = vld [vmem:[%s387 + $0x40] sm:$0xff]
        %v425 = vld [vmem:[%s387 + $0x48] sm:$0xff]
        %v426 = vld [vmem:[%s387 + $0x50] sm:$0xff]
        %v427 = vld [vmem:[%s387 + $0x58] sm:$0xff]
        %v428 = vld [vmem:[%s387 + $0x60] sm:$0xff]
        %v429 = vld [vmem:[%s387 + $0x68] sm:$0xff]
        %v430 = vld [vmem:[%s387 + $0x70] sm:$0xff]
        %v431 = vld [vmem:[%s387 + $0x78] sm:$0xff]
        %v432 = vld [vmem:[%s387 + $0x80] sm:$0xff]
        %v433 = vld [vmem:[%s387 + $0x88] sm:$0xff]
        %v434 = vld [vmem:[%s387 + $0x90] sm:$0xff]
        %v435 = vld [vmem:[%s387 + $0x98] sm:$0xff]
        %v436 = vld [vmem:[%s387 + $0xa0] sm:$0xff]
        %v437 = vld [vmem:[%s387 + $0xa8] sm:$0xff]
        %v438 = vld [vmem:[%s387 + $0xb0] sm:$0xff]
        %v439 = vld [vmem:[%s387 + $0xb8] sm:$0xff]
        %v440 = vld [vmem:[%s387 + $0xc0] sm:$0xff]
        %v441 = vld [vmem:[%s387 + $0xc8] sm:$0xff]
        %v442 = vld [vmem:[%s387 + $0xd0] sm:$0xff]
        %v443 = vld [vmem:[%s387 + $0xd8] sm:$0xff]
        %v444 = vld [vmem:[%s387 + $0xe0] sm:$0xff]
        %v445 = vld [vmem:[%s387 + $0xe8] sm:$0xff]
        %v446 = vld [vmem:[%s387 + $0xf0] sm:$0xff]
        %v447 = vld [vmem:[%s387 + $0xf8] sm:$0xff]
        %v448 = vld [vmem:[%s387 + $0x100] sm:$0xff]
        %v449 = vld [vmem:[%s387 + $0x108] sm:$0xff]
        %v450 = vld [vmem:[%s387 + $0x110] sm:$0xff]
        %v451 = vld [vmem:[%s387 + $0x118] sm:$0xff]
        %v452 = vld [vmem:[%s387 + $0x120] sm:$0xff]
        %v453 = vld [vmem:[%s387 + $0x128] sm:$0xff]
        %v454 = vld [vmem:[%s387 + $0x130] sm:$0xff]
        %v455 = vld [vmem:[%s387 + $0x138] sm:$0xff]
        %v456 = vld [vmem:[%s387 + $0x140] sm:$0xff]
        %v457 = vld [vmem:[%s387 + $0x148] sm:$0xff]
        %v458 = vld [vmem:[%s387 + $0x150] sm:$0xff]
        %v459 = vld [vmem:[%s387 + $0x158] sm:$0xff]
        %v460 = vld [vmem:[%s387 + $0x160] sm:$0xff]
        %v461 = vld [vmem:[%s387 + $0x168] sm:$0xff]
        %v462 = vld [vmem:[%s387 + $0x170] sm:$0xff]
        %v463 = vld [vmem:[%s387 + $0x178] sm:$0xff]
        %v464 = vld [vmem:[%s387 + $0x180] sm:$0xff]
        %v465 = vld [vmem:[%s387 + $0x188] sm:$0xff]
        %v466 = vld [vmem:[%s387 + $0x190] sm:$0xff]
        %v467 = vld [vmem:[%s387 + $0x198] sm:$0xff]
        %v468 = vld [vmem:[%s387 + $0x1a0] sm:$0xff]
        %v469 = vld [vmem:[%s387 + $0x1a8] sm:$0xff]
        %v470 = vld [vmem:[%s387 + $0x1b0] sm:$0xff]
        %v471 = vld [vmem:[%s387 + $0x1b8] sm:$0xff]
        %v472 = vld [vmem:[%s387 + $0x1c0] sm:$0xff]
        %v473 = vld [vmem:[%s387 + $0x1c8] sm:$0xff]
        %v474 = vld [vmem:[%s387 + $0x1d0] sm:$0xff]
        %v475 = vld [vmem:[%s387 + $0x1d8] sm:$0xff]
        %v476 = vld [vmem:[%s387 + $0x1e0] sm:$0xff]
        %v477 = vld [vmem:[%s387 + $0x1e8] sm:$0xff]
        %v478 = vld [vmem:[%s387 + $0x1f0] sm:$0xff]
        %v479 = vld [vmem:[%s387 + $0x1f8] sm:$0xff]
        %v480 = vld [vmem:[%s387 + $0x200] sm:$0xff]
        %v481 = vld [vmem:[%s387 + $0x208] sm:$0xff]
        %v482 = vld [vmem:[%s387 + $0x210] sm:$0xff]
        %v483 = vld [vmem:[%s387 + $0x218] sm:$0xff]
        %v484 = vld [vmem:[%s387 + $0x220] sm:$0xff]
        %v485 = vld [vmem:[%s387 + $0x228] sm:$0xff]
        %v486 = vld [vmem:[%s387 + $0x230] sm:$0xff]
        %v487 = vld [vmem:[%s387 + $0x238] sm:$0xff]
        %v488 = vld [vmem:[%s387 + $0x240] sm:$0xff]
        %v489 = vld [vmem:[%s387 + $0x248] sm:$0xff]
        %v490 = vld [vmem:[%s387 + $0x250] sm:$0xff]
        %v491 = vld [vmem:[%s387 + $0x258] sm:$0xff]
        %v492 = vld [vmem:[%s387 + $0x260] sm:$0xff]
        %v493 = vld [vmem:[%s387 + $0x268] sm:$0xff]
        %v494 = vld [vmem:[%s387 + $0x270] sm:$0xff]
        %v495 = vld [vmem:[%s387 + $0x278] sm:$0xff]
        %v496 = vld [vmem:[%s387 + $0x280] sm:$0xff]
        %v497 = vld [vmem:[%s387 + $0x288] sm:$0xff]
        %v498 = vld [vmem:[%s387 + $0x290] sm:$0xff]
        %v499 = vld [vmem:[%s387 + $0x298] sm:$0xff]
        %v500 = vld [vmem:[%s387 + $0x2a0] sm:$0xff]
        %v501 = vld [vmem:[%s387 + $0x2a8] sm:$0xff]
        %v502 = vld [vmem:[%s387 + $0x2b0] sm:$0xff]
        %v503 = vld [vmem:[%s387 + $0x2b8] sm:$0xff]
        %v504 = vld [vmem:[%s387 + $0x2c0] sm:$0xff]
        %v505 = vld [vmem:[%s387 + $0x2c8] sm:$0xff]
        %v506 = vld [vmem:[%s387 + $0x2d0] sm:$0xff]
        %v507 = vld [vmem:[%s387 + $0x2d8] sm:$0xff]
        %v508 = vld [vmem:[%s387 + $0x2e0] sm:$0xff]
        %v509 = vld [vmem:[%s387 + $0x2e8] sm:$0xff]
        %v510 = vld [vmem:[%s387 + $0x2f0] sm:$0xff]
        %v511 = vld [vmem:[%s387 + $0x2f8] sm:$0xff]
        %v512 = vld [vmem:[%s387 + $0x300] sm:$0xff]
        %v513 = vld [vmem:[%s387 + $0x308] sm:$0xff]
        %v514 = vld [vmem:[%s387 + $0x310] sm:$0xff]
        %v515 = vld [vmem:[%s387 + $0x318] sm:$0xff]
        %v516 = vld [vmem:[%s387 + $0x320] sm:$0xff]
        %v517 = vld [vmem:[%s387 + $0x328] sm:$0xff]
        %v518 = vld [vmem:[%s387 + $0x330] sm:$0xff]
        %v519 = vld [vmem:[%s387 + $0x338] sm:$0xff]
        %v520 = vld [vmem:[%s387 + $0x340] sm:$0xff]
        %v521 = vld [vmem:[%s387 + $0x348] sm:$0xff]
        %v522 = vld [vmem:[%s387 + $0x350] sm:$0xff]
        %v523 = vld [vmem:[%s387 + $0x358] sm:$0xff]
        %v524 = vld [vmem:[%s387 + $0x360] sm:$0xff]
        %v525 = vld [vmem:[%s387 + $0x368] sm:$0xff]
        %v526 = vld [vmem:[%s387 + $0x370] sm:$0xff]
        %v527 = vld [vmem:[%s387 + $0x378] sm:$0xff]
        %vm528 = vcmask 916480
        %v530 = vsel %vm528, %v415, 0
        %532 = vmatprep.subr.mxu0 0.0
        %533 = vmatpush1.msra.mxu0 0.0
        %534 = vmatprep.subr.mxu0 0.0
        %535 = vmatpush1.msra.mxu0 0.0
        %536 = vmatprep.subr.mxu0 %v521
        %537 = vmatpush1.msra.mxu0 %v520
        %538 = vmatprep.subr.mxu0 %v513
        %539 = vmatpush1.msra.mxu0 %v512
        %540 = vmatprep.subr.mxu0 %v505
        %541 = vmatpush1.msra.mxu0 %v504
        %542 = vmatprep.subr.mxu0 %v497
        %543 = vmatpush1.msra.mxu0 %v496
        %544 = vmatprep.subr.mxu0 %v489
        %545 = vmatpush1.msra.mxu0 %v488
        %546 = vmatprep.subr.mxu0 %v481
        %547 = vmatpush1.msra.mxu0 %v480
        %548 = vmatprep.subr.mxu0 %v473
        %549 = vmatpush1.msra.mxu0 %v472
        %550 = vmatprep.subr.mxu0 %v465
        %551 = vmatpush1.msra.mxu0 %v464
        %552 = vmatprep.subr.mxu0 %v457
        %553 = vmatpush1.msra.mxu0 %v456
        %554 = vmatprep.subr.mxu0 %v449
        %555 = vmatpush1.msra.mxu0 %v448
        %556 = vmatprep.subr.mxu0 %v441
        %557 = vmatpush1.msra.mxu0 %v440
        %558 = vmatprep.subr.mxu0 %v433
        %559 = vmatpush1.msra.mxu0 %v432
        %560 = vmatprep.subr.mxu0 %v425
        %561 = vmatpush1.msra.mxu0 %v424
        %562 = vmatprep.subr.mxu0 %v417
        %563 = vmatpush1.msra.mxu0 %v416
        %564 = vmatprep.subr.mxu0 0.0
        %565 = vmatpush2.msra.mxu0 0.0
        %566 = vmatprep.subr.mxu0 0.0
        %567 = vmatpush2.msra.mxu0 0.0
        %568 = vmatprep.subr.mxu0 0.0
        %569 = vmatpush2.msra.mxu0 0.0
        %570 = vmatprep.subr.mxu0 0.0
        %571 = vmatpush2.msra.mxu0 0.0
        %572 = vmatprep.subr.mxu0 0.0
        %573 = vmatpush2.msra.mxu0 0.0
        %574 = vmatprep.subr.mxu0 0.0
        %575 = vmatpush2.msra.mxu0 0.0
        %576 = vmatprep.subr.mxu0 0.0
        %577 = vmatpush2.msra.mxu0 0.0
        %578 = vmatprep.subr.mxu0 0.0
        %579 = vmatpush2.msra.mxu0 0.0
        %580 = vmatprep.subr.mxu0 0.0
        %581 = vmatpush2.msra.mxu0 0.0
        %582 = vmatprep.subr.mxu0 0.0
        %583 = vmatpush2.msra.mxu0 0.0
        %584 = vmatprep.subr.mxu0 0.0
        %585 = vmatpush2.msra.mxu0 0.0
        %586 = vmatprep.subr.mxu0 0.0
        %587 = vmatpush2.msra.mxu0 0.0
        %588 = vmatprep.subr.mxu0 0.0
        %589 = vmatpush2.msra.mxu0 0.0
        %590 = vmatprep.subr.mxu0 0.0
        %591 = vmatpush2.msra.mxu0 0.0
        %592 = vmatprep.subr.mxu0 0.0
        %593 = vmatpush2.msra.mxu0 0.0
        %594 = vmatprep.subr.mxu0 0.0
        %595 = vmatpush2.msra.mxu0 0.0
        %596 = vmatprep.mubr.f32.mxu0 0.0
        %597 = vmatmul.mubr.f32.gmra.mxu0 %v530
        %v598 = vpop.f32.mrf.mxu0
        %v599 = vadd.f32 0.0, %v598
        %v600 = vpop.f32.mrf.mxu0
        %v601 = vadd.f32 0.0, %v600
        %602 = vdwg.mxu0
        %603 = vmatprep.subr.mxu0 0.0
        %604 = vmatpush1.msra.mxu0 0.0
        %605 = vmatprep.subr.mxu0 0.0
        %606 = vmatpush1.msra.mxu0 0.0
        %607 = vmatprep.subr.mxu0 %v523
        %608 = vmatpush1.msra.mxu0 %v522
        %609 = vmatprep.subr.mxu0 %v515
        %610 = vmatpush1.msra.mxu0 %v514
        %611 = vmatprep.subr.mxu0 %v507
        %612 = vmatpush1.msra.mxu0 %v506
        %613 = vmatprep.subr.mxu0 %v499
        %614 = vmatpush1.msra.mxu0 %v498
        %615 = vmatprep.subr.mxu0 %v491
        %616 = vmatpush1.msra.mxu0 %v490
        %617 = vmatprep.subr.mxu0 %v483
        %618 = vmatpush1.msra.mxu0 %v482
        %619 = vmatprep.subr.mxu0 %v475
        %620 = vmatpush1.msra.mxu0 %v474
        %621 = vmatprep.subr.mxu0 %v467
        %622 = vmatpush1.msra.mxu0 %v466
        %623 = vmatprep.subr.mxu0 %v459
        %624 = vmatpush1.msra.mxu0 %v458
        %625 = vmatprep.subr.mxu0 %v451
        %626 = vmatpush1.msra.mxu0 %v450
        %627 = vmatprep.subr.mxu0 %v443
        %628 = vmatpush1.msra.mxu0 %v442
        %629 = vmatprep.subr.mxu0 %v435
        %630 = vmatpush1.msra.mxu0 %v434
        %631 = vmatprep.subr.mxu0 %v427
        %632 = vmatpush1.msra.mxu0 %v426
        %633 = vmatprep.subr.mxu0 %v419
        %634 = vmatpush1.msra.mxu0 %v418
        %635 = vmatprep.subr.mxu0 0.0
        %636 = vmatpush2.msra.mxu0 0.0
        %637 = vmatprep.subr.mxu0 0.0
        %638 = vmatpush2.msra.mxu0 0.0
        %639 = vmatprep.subr.mxu0 0.0
        %640 = vmatpush2.msra.mxu0 0.0
        %641 = vmatprep.subr.mxu0 0.0
        %642 = vmatpush2.msra.mxu0 0.0
        %643 = vmatprep.subr.mxu0 0.0
        %644 = vmatpush2.msra.mxu0 0.0
        %645 = vmatprep.subr.mxu0 0.0
        %646 = vmatpush2.msra.mxu0 0.0
        %647 = vmatprep.subr.mxu0 0.0
        %648 = vmatpush2.msra.mxu0 0.0
        %649 = vmatprep.subr.mxu0 0.0
        %650 = vmatpush2.msra.mxu0 0.0
        %651 = vmatprep.subr.mxu0 0.0
        %652 = vmatpush2.msra.mxu0 0.0
        %653 = vmatprep.subr.mxu0 0.0
        %654 = vmatpush2.msra.mxu0 0.0
        %655 = vmatprep.subr.mxu0 0.0
        %656 = vmatpush2.msra.mxu0 0.0
        %657 = vmatprep.subr.mxu0 0.0
        %658 = vmatpush2.msra.mxu0 0.0
        %659 = vmatprep.subr.mxu0 0.0
        %660 = vmatpush2.msra.mxu0 0.0
        %661 = vmatprep.subr.mxu0 0.0
        %662 = vmatpush2.msra.mxu0 0.0
        %663 = vmatprep.subr.mxu0 0.0
        %664 = vmatpush2.msra.mxu0 0.0
        %665 = vmatprep.subr.mxu0 0.0
        %666 = vmatpush2.msra.mxu0 0.0
        %667 = vmatprep.mubr.f32.mxu0 0.0
        %668 = vmatmul.mubr.f32.gmra.mxu0 %v530
        %v669 = vpop.f32.mrf.mxu0
        %v670 = vadd.f32 0.0, %v669
        %v671 = vpop.f32.mrf.mxu0
        %v672 = vadd.f32 0.0, %v671
        %673 = vdwg.mxu0
        %674 = vmatprep.subr.mxu0 0.0
        %675 = vmatpush1.msra.mxu0 0.0
        %676 = vmatprep.subr.mxu0 0.0
        %677 = vmatpush1.msra.mxu0 0.0
        %678 = vmatprep.subr.mxu0 %v525
        %679 = vmatpush1.msra.mxu0 %v524
        %680 = vmatprep.subr.mxu0 %v517
        %681 = vmatpush1.msra.mxu0 %v516
        %682 = vmatprep.subr.mxu0 %v509
        %683 = vmatpush1.msra.mxu0 %v508
        %684 = vmatprep.subr.mxu0 %v501
        %685 = vmatpush1.msra.mxu0 %v500
        %686 = vmatprep.subr.mxu0 %v493
        %687 = vmatpush1.msra.mxu0 %v492
        %688 = vmatprep.subr.mxu0 %v485
        %689 = vmatpush1.msra.mxu0 %v484
        %690 = vmatprep.subr.mxu0 %v477
        %691 = vmatpush1.msra.mxu0 %v476
        %692 = vmatprep.subr.mxu0 %v469
        %693 = vmatpush1.msra.mxu0 %v468
        %694 = vmatprep.subr.mxu0 %v461
        %695 = vmatpush1.msra.mxu0 %v460
        %696 = vmatprep.subr.mxu0 %v453
        %697 = vmatpush1.msra.mxu0 %v452
        %698 = vmatprep.subr.mxu0 %v445
        %699 = vmatpush1.msra.mxu0 %v444
        %700 = vmatprep.subr.mxu0 %v437
        %701 = vmatpush1.msra.mxu0 %v436
        %702 = vmatprep.subr.mxu0 %v429
        %703 = vmatpush1.msra.mxu0 %v428
        %704 = vmatprep.subr.mxu0 %v421
        %705 = vmatpush1.msra.mxu0 %v420
        %706 = vmatprep.subr.mxu0 0.0
        %707 = vmatpush2.msra.mxu0 0.0
        %708 = vmatprep.subr.mxu0 0.0
        %709 = vmatpush2.msra.mxu0 0.0
        %710 = vmatprep.subr.mxu0 0.0
        %711 = vmatpush2.msra.mxu0 0.0
        %712 = vmatprep.subr.mxu0 0.0
        %713 = vmatpush2.msra.mxu0 0.0
        %714 = vmatprep.subr.mxu0 0.0
        %715 = vmatpush2.msra.mxu0 0.0
        %716 = vmatprep.subr.mxu0 0.0
        %717 = vmatpush2.msra.mxu0 0.0
        %718 = vmatprep.subr.mxu0 0.0
        %719 = vmatpush2.msra.mxu0 0.0
        %720 = vmatprep.subr.mxu0 0.0
        %721 = vmatpush2.msra.mxu0 0.0
        %722 = vmatprep.subr.mxu0 0.0
        %723 = vmatpush2.msra.mxu0 0.0
        %724 = vmatprep.subr.mxu0 0.0
        %725 = vmatpush2.msra.mxu0 0.0
        %726 = vmatprep.subr.mxu0 0.0
        %727 = vmatpush2.msra.mxu0 0.0
        %728 = vmatprep.subr.mxu0 0.0
        %729 = vmatpush2.msra.mxu0 0.0
        %730 = vmatprep.subr.mxu0 0.0
        %731 = vmatpush2.msra.mxu0 0.0
        %732 = vmatprep.subr.mxu0 0.0
        %733 = vmatpush2.msra.mxu0 0.0
        %734 = vmatprep.subr.mxu0 0.0
        %735 = vmatpush2.msra.mxu0 0.0
        %736 = vmatprep.subr.mxu0 0.0
        %737 = vmatpush2.msra.mxu0 0.0
        %738 = vmatprep.mubr.f32.mxu0 0.0
        %739 = vmatmul.mubr.f32.gmra.mxu0 %v530
        %v740 = vpop.f32.mrf.mxu0
        %v741 = vadd.f32 0.0, %v740
        %v742 = vpop.f32.mrf.mxu0
        %v743 = vadd.f32 0.0, %v742
        %744 = vdwg.mxu0
        %745 = vmatprep.subr.mxu0 0.0
        %746 = vmatpush1.msra.mxu0 0.0
        %747 = vmatprep.subr.mxu0 0.0
        %748 = vmatpush1.msra.mxu0 0.0
        %749 = vmatprep.subr.mxu0 %v527
        %750 = vmatpush1.msra.mxu0 %v526
        %751 = vmatprep.subr.mxu0 %v519
        %752 = vmatpush1.msra.mxu0 %v518
        %753 = vmatprep.subr.mxu0 %v511
        %754 = vmatpush1.msra.mxu0 %v510
        %755 = vmatprep.subr.mxu0 %v503
        %756 = vmatpush1.msra.mxu0 %v502
        %757 = vmatprep.subr.mxu0 %v495
        %758 = vmatpush1.msra.mxu0 %v494
        %759 = vmatprep.subr.mxu0 %v487
        %760 = vmatpush1.msra.mxu0 %v486
        %761 = vmatprep.subr.mxu0 %v479
        %762 = vmatpush1.msra.mxu0 %v478
        %763 = vmatprep.subr.mxu0 %v471
        %764 = vmatpush1.msra.mxu0 %v470
        %765 = vmatprep.subr.mxu0 %v463
        %766 = vmatpush1.msra.mxu0 %v462
        %767 = vmatprep.subr.mxu0 %v455
        %768 = vmatpush1.msra.mxu0 %v454
        %769 = vmatprep.subr.mxu0 %v447
        %770 = vmatpush1.msra.mxu0 %v446
        %771 = vmatprep.subr.mxu0 %v439
        %772 = vmatpush1.msra.mxu0 %v438
        %773 = vmatprep.subr.mxu0 %v431
        %774 = vmatpush1.msra.mxu0 %v430
        %775 = vmatprep.subr.mxu0 %v423
        %776 = vmatpush1.msra.mxu0 %v422
        %777 = vmatprep.subr.mxu0 0.0
        %778 = vmatpush2.msra.mxu0 0.0
        %779 = vmatprep.subr.mxu0 0.0
        %780 = vmatpush2.msra.mxu0 0.0
        %781 = vmatprep.subr.mxu0 0.0
        %782 = vmatpush2.msra.mxu0 0.0
        %783 = vmatprep.subr.mxu0 0.0
        %784 = vmatpush2.msra.mxu0 0.0
        %785 = vmatprep.subr.mxu0 0.0
        %786 = vmatpush2.msra.mxu0 0.0
        %787 = vmatprep.subr.mxu0 0.0
        %788 = vmatpush2.msra.mxu0 0.0
        %789 = vmatprep.subr.mxu0 0.0
        %790 = vmatpush2.msra.mxu0 0.0
        %791 = vmatprep.subr.mxu0 0.0
        %792 = vmatpush2.msra.mxu0 0.0
        %793 = vmatprep.subr.mxu0 0.0
        %794 = vmatpush2.msra.mxu0 0.0
        %795 = vmatprep.subr.mxu0 0.0
        %796 = vmatpush2.msra.mxu0 0.0
        %797 = vmatprep.subr.mxu0 0.0
        %798 = vmatpush2.msra.mxu0 0.0
        %799 = vmatprep.subr.mxu0 0.0
        %800 = vmatpush2.msra.mxu0 0.0
        %801 = vmatprep.subr.mxu0 0.0
        %802 = vmatpush2.msra.mxu0 0.0
        %803 = vmatprep.subr.mxu0 0.0
        %804 = vmatpush2.msra.mxu0 0.0
        %805 = vmatprep.subr.mxu0 0.0
        %806 = vmatpush2.msra.mxu0 0.0
        %807 = vmatprep.subr.mxu0 0.0
        %808 = vmatpush2.msra.mxu0 0.0
        %809 = vmatprep.mubr.f32.mxu0 0.0
        %810 = vmatmul.mubr.f32.gmra.mxu0 %v530
        %v811 = vpop.f32.mrf.mxu0
        %v812 = vadd.f32 0.0, %v811
        %v813 = vpop.f32.mrf.mxu0
        %v814 = vadd.f32 0.0, %v813
        %815 = vdwg.mxu0
        %v816 = vld [vmem:[%s2] sm:$0xff]
        %818 = vset.pattern.permute.xlu0 0
        %819 = vperm.xlu0 %818, %v816
        %v820 = vpop.permute.xlu0 %819
        %v822 = vmul.f32 %v599, %v820
        %v823 = vmul.f32 %v601, %v820
        %v824 = vmul.f32 %v670, %v820
        %v825 = vmul.f32 %v672, %v820
        %v826 = vmul.f32 %v741, %v820
        %v827 = vmul.f32 %v743, %v820
        %v828 = vmul.f32 %v812, %v820
        %v829 = vmul.f32 %v814, %v820
        %830 = vset.pattern.permute.xlu0 1
        %831 = vperm.xlu0 %830, %v816
        %v832 = vpop.permute.xlu0 %831
        %v834 = vadd.f32 %v822, %v832
        %v835 = vadd.f32 %v823, %v832
        %v836 = vadd.f32 %v824, %v832
        %v837 = vadd.f32 %v825, %v832
        %v838 = vadd.f32 %v826, %v832
        %v839 = vadd.f32 %v827, %v832
        %v840 = vadd.f32 %v828, %v832
        %v841 = vadd.f32 %v829, %v832
        %842 = vst [vmem:[%s413] sm:$0xff] %v834
        %843 = vst [vmem:[%s413 + $0x8] sm:$0xff] %v835
        %844 = vst [vmem:[%s413 + $0x10] sm:$0xff] %v836
        %845 = vst [vmem:[%s413 + $0x18] sm:$0xff] %v837
        %846 = vst [vmem:[%s413 + $0x20] sm:$0xff] %v838
        %847 = vst [vmem:[%s413 + $0x28] sm:$0xff] %v839
        %848 = vst [vmem:[%s413 + $0x30] sm:$0xff] %v840
        %849 = vst [vmem:[%s413 + $0x38] sm:$0xff] %v841
        %s850 = smul.u32 8, %s14
        %p851 = scmp.lt.s32.totalorder %s850, 63
        %s852 = scalar_select %p851, %s850, 63
        %s853 = smul.addr %s852, 8
        %s854 = scalar_lea.vmem %s3, %s853
        // Predicated region
        $region56: #{encoder_forward.37} parent=50 // pred_check
          %p855 = pneg %p100
        $region57: #{encoder_forward.37} parent=50 // pred_check_branch
          %857 = sbr.rel (%p855) target = $region59
        $region58: #{encoder_forward.37} parent=50 // pred_region
          %s858 = smul.u32 8, %s14
        $region59: #{encoder_forward.37} parent=50 // pred_fallthru
          _
      $region51: #{encoder_forward.37} parent=5 // pred_fallthru
        _
      %p859 = scmp.le.s32.totalorder 2, %s9
      // Predicated region
      $region60: #{encoder_forward.37} parent=5 // pred_check
        %p860 = pneg %p859
      $region61: #{encoder_forward.37} parent=5 // pred_check_branch
        %862 = sbr.rel (%p860) target = $region63
      $region62: #{encoder_forward.37} parent=5 // pred_region
        %s863 = ssub.s32 %s9, 2
        // Predicated region
        $region64: #{encoder_forward.37} parent=62 // pred_check
          %p864 = pneg %p106
        $region65: #{encoder_forward.37} parent=62 // pred_check_branch
          %866 = sbr.rel (%p864) target = $region67
        $region66: #{encoder_forward.37} parent=62 // pred_region
          %s867 = smul.u32 8, %s15
          %p868 = scmp.lt.s32.totalorder %s867, 63
          %s869 = scalar_select %p868, %s867, 63
          %s870 = smul.addr %s869, 8
          %s871 = scalar_lea.vmem %s3, %s870
        $region67: #{encoder_forward.37} parent=62 // pred_fallthru
          _
      $region63: #{encoder_forward.37} parent=5 // pred_fallthru
        _
    $region6: #{encoder_forward.37} parent=1 // loop_footer
      %s13 = sadd.s32 1, %s9
    $region7: #{encoder_forward.37} parent=1 // loop_footer_branch
      %8 = sbr.rel target = $region3
    $region8: #{encoder_forward.37} parent=1 // loop_exit
      _

</llo_original>
